<compile_context>
chip_gen: v6e
topology: v6e:2x2x1
jax: 0.10.0
libtpu: 0.0.40
codegen_flags: <defaults>
</compile_context>

<pallas_src>
import functools

import jax
import jax.numpy as jnp
from jax.experimental import pallas as pl
from jax.experimental.pallas import tpu as pltpu

LANE = 128                       # channel padding -> lane-dense stores
VMEM_LIMIT = 32 * 1024 * 1024    # explicit scoped-VMEM limit (safe on v5e/v6e/v7x)


def _compiler_params():
    return pltpu.CompilerParams(
        dimension_semantics=("parallel",),
        vmem_limit_bytes=VMEM_LIMIT,
    )


# ----------------------------------------------------------------------------
# Pallas kernels
# ----------------------------------------------------------------------------
def _conv3x3_relu_kernel(x_ref, w_ref, b_ref, o_ref, *, h, w, cin):
    """Fused 3x3 SAME conv + bias + ReLU for one image (im2col done in VMEM).

    x_ref : (1, h+2, w+2, cin)  halo-padded NHWC input block (f32 or bf16)
    w_ref : (9, cin, coutp)     taps in (dy, dx) order, coutp lane-padded
    b_ref : (1, coutp)          f32 bias (zero-padded)
    o_ref : (1, h*w, coutp)     conv output rows in (y, x) order
    """
    coutp = o_ref.shape[-1]
    acc = jnp.zeros((h * w, coutp), jnp.float32)
    for dy in range(3):
        # Full-width / full-lane load at a major-dim offset (layout friendly);
        # the dx shift is a static slice of the f32 value.
        rows = x_ref[0, dy:dy + h, :, :].astype(jnp.float32)     # (h, w+2, cin)
        for dx in range(3):
            xs = rows[:, dx:dx + w, :].reshape(h * w, cin)
            acc = acc + jnp.dot(
                xs, w_ref[3 * dy + dx].astype(jnp.float32),
                preferred_element_type=jnp.float32)
    acc = jnp.maximum(acc + b_ref[...], 0.0)       # f32 epilogue (v5e-safe)
    o_ref[0] = acc.astype(o_ref.dtype)             # lane-dense (h*w, 128) store


def _maxpool2x2_kernel(x_ref, o_ref, *, ho, cp):
    """2x2 / stride-2 max pool for one image.

    x_ref : (1, 2*ho, wo, 2*cp)  lanes [0:cp] / [cp:2cp] = even / odd column
    o_ref : (1, ho, wo, cp)
    """
    for j in range(ho):
        v = jnp.maximum(x_ref[0, 2 * j], x_ref[0, 2 * j + 1])    # vertical max
        o_ref[0, j] = jnp.maximum(v[:, :cp], v[:, cp:])          # horizontal max


def _linear_kernel(x_ref, w_ref, b_ref, o_ref):
    acc = jnp.dot(x_ref[...], w_ref[...], preferred_element_type=jnp.float32)
    o_ref[...] = (acc + b_ref[...]).astype(o_ref.dtype)


# ----------------------------------------------------------------------------
# Wrappers (pallas_call + BlockSpecs)
# ----------------------------------------------------------------------------
def conv3x3_relu(x_nhwc, w9, b):
    """(N,H,W,Cin) -> (N,H,W,Coutp).  Grid over images ('parallel')."""
    N, H, W, Cin = x_nhwc.shape
    Coutp = w9.shape[-1]
    xp = jnp.pad(x_nhwc, ((0, 0), (1, 1), (1, 1), (0, 0)))   # 1-px halo only
    kernel = functools.partial(_conv3x3_relu_kernel, h=H, w=W, cin=Cin)
    out = pl.pallas_call(
        kernel,
        out_shape=jax.ShapeDtypeStruct((N, H * W, Coutp), x_nhwc.dtype),
        grid=(N,),
        in_specs=[
            pl.BlockSpec((1, H + 2, W + 2, Cin), lambda n: (n, 0, 0, 0)),
            pl.BlockSpec((9, Cin, Coutp), lambda n: (0, 0, 0)),
            pl.BlockSpec((1, Coutp), lambda n: (0, 0)),
        ],
        out_specs=pl.BlockSpec((1, H * W, Coutp), lambda n: (n, 0, 0)),
        compiler_params=_compiler_params(),
    )(xp, w9, b)
    return out.reshape(N, H, W, Coutp)       # free (metadata-only) reshape


def maxpool2x2(x_nhwc):
    N, H, W, C = x_nhwc.shape
    Ho, Wo = H // 2, W // 2
    # Free reshape: adjacent column pairs become a 2*C lane dim, so the
    # horizontal max inside the kernel is a lane-aligned slice.
    xr = x_nhwc.reshape(N, H, Wo, 2 * C)
    kernel = functools.partial(_maxpool2x2_kernel, ho=Ho, cp=C)
    return pl.pallas_call(
        kernel,
        out_shape=jax.ShapeDtypeStruct((N, Ho, Wo, C), x_nhwc.dtype),
        grid=(N,),
        in_specs=[pl.BlockSpec((1, H, Wo, 2 * C), lambda n: (n, 0, 0, 0))],
        out_specs=pl.BlockSpec((1, Ho, Wo, C), lambda n: (n, 0, 0, 0)),
        compiler_params=_compiler_params(),
    )(xr)


def linear(x, w, b):
    """x:(M,K) @ w:(K,Np) + b ; Np is lane-padded, caller slices the logits."""
    M, K = x.shape
    _, Np = w.shape
    return pl.pallas_call(
        _linear_kernel,
        out_shape=jax.ShapeDtypeStruct((M, Np), jnp.float32),
        grid=(1,),
        in_specs=[
            pl.BlockSpec((M, K), lambda i: (0, 0)),
            pl.BlockSpec((K, Np), lambda i: (0, 0)),
            pl.BlockSpec((1, Np), lambda i: (0, 0)),
        ],
        out_specs=pl.BlockSpec((M, Np), lambda i: (0, 0)),
        compiler_params=pltpu.CompilerParams(
            dimension_semantics=("arbitrary",),
            vmem_limit_bytes=VMEM_LIMIT),
    )(x, w, b)


# ----------------------------------------------------------------------------
# One-time parameter relayout (hoisted out of the forward pass)
# ----------------------------------------------------------------------------
def preprocess_params(params, img_size, num_classes, compute_dtype=jnp.float32):
    """Pack PyTorch-layout weights into kernel layout.

    Conv weights -> (9, Cin_pad, 128) taps; FC weight rows re-ordered to the
    NHWC flatten of the channel-padded feature map; all out-channel dims are
    zero-padded to LANE so kernel stores are lane-dense.
    """
    def pack_conv(w_oihw, bias, cin_pad):
        cout, cin = w_oihw.shape[0], w_oihw.shape[1]
        w9 = jnp.transpose(w_oihw, (2, 3, 1, 0)).reshape(9, cin, cout)
        w9 = jnp.pad(w9, ((0, 0), (0, cin_pad - cin), (0, LANE - cout)))
        bp = jnp.pad(bias, (0, LANE - cout)).reshape(1, LANE).astype(jnp.float32)
        return w9.astype(compute_dtype), bp

    H, W = img_size
    Ho, Wo = H // 4, W // 4
    nc = num_classes
    packed = {
        "conv1_1": pack_conv(params["conv1_1_w"], params["conv1_1_b"], cin_pad=3),
        "conv1_2": pack_conv(params["conv1_2_w"], params["conv1_2_b"], cin_pad=LANE),
        "conv2_1": pack_conv(params["conv2_1_w"], params["conv2_1_b"], cin_pad=LANE),
        "conv2_2": pack_conv(params["conv2_2_w"], params["conv2_2_b"], cin_pad=LANE),
    }
    # FC: PyTorch flattens NCHW (c*Ho*Wo + h*Wo + w); re-index rows to the
    # kernel's NHWC flatten over the channel-padded (Ho, Wo, LANE) feature map.
    w4 = params["fc_w"].reshape(nc, 64, Ho, Wo)
    w4 = jnp.transpose(w4, (2, 3, 1, 0))                         # (Ho, Wo, C, nc)
    w4 = jnp.pad(w4, ((0, 0), (0, 0), (0, LANE - 64), (0, LANE - nc)))
    packed["fc_w"] = w4.reshape(Ho * Wo * LANE, LANE).astype(compute_dtype)
    packed["fc_b"] = (jnp.pad(params["fc_b"], (0, LANE - nc))
                      .reshape(1, LANE).astype(jnp.float32))
    return packed


# ----------------------------------------------------------------------------
# Forward pass
# ----------------------------------------------------------------------------
def net_forward(x_nchw, pp, *, num_classes):
    """Pallas implementation of Net.forward (input NCHW like PyTorch)."""
    compute_dtype = pp["conv1_1"][0].dtype
    x = jnp.transpose(x_nchw, (0, 2, 3, 1)).astype(compute_dtype)   # NHWC
    x = conv3x3_relu(x, *pp["conv1_1"])          # (N, H,   W,   128)
    x = conv3x3_relu(x, *pp["conv1_2"])
    x = maxpool2x2(x)                            # (N, H/2, W/2, 128)
    x = conv3x3_relu(x, *pp["conv2_1"])
    x = conv3x3_relu(x, *pp["conv2_2"])
    x = maxpool2x2(x)                            # (N, H/4, W/4, 128)
    n = x.shape[0]
    feats = x.reshape(n, -1)                     # free NHWC flatten (padded C)
    logits = linear(feats, pp["fc_w"], pp["fc_b"])          # (N, 128) f32
    return logits[:, :num_classes]


def init_params(key, img_size, num_classes):
    """Deterministic synthetic parameters with the nn.Module's shapes."""
    ks = jax.random.split(key, 10)

    def w(k, shape, scale=0.05):
        return (scale * jax.random.normal(k, shape)).astype(jnp.float32)

    fc_in = (img_size[0] // 4) * (img_size[1] // 4) * 64
    return {
        "conv1_1_w": w(ks[0], (32, 3, 3, 3)),   "conv1_1_b": w(ks[1], (32,)),
        "conv1_2_w": w(ks[2], (32, 32, 3, 3)),  "conv1_2_b": w(ks[3], (32,)),
        "conv2_1_w": w(ks[4], (64, 32, 3, 3)),  "conv2_1_b": w(ks[5], (64,)),
        "conv2_2_w": w(ks[6], (64, 64, 3, 3)),  "conv2_2_b": w(ks[7], (64,)),
        "fc_w": w(ks[8], (num_classes, fc_in)), "fc_b": w(ks[9], (num_classes,)),
    }


# ----------------------------------------------------------------------------
# Pure-JAX reference (sanity check of the Pallas path)
# ----------------------------------------------------------------------------
def net_forward_ref(x_nchw, params):
    def conv(x, w, b):
        y = jax.lax.conv_general_dilated(
            x, w, window_strides=(1, 1), padding="SAME",
            dimension_numbers=("NCHW", "OIHW", "NCHW"))
        return jnp.maximum(y + b[None, :, None, None], 0.0)

    def pool(x):
        N, C, H, W = x.shape
        return jnp.max(x.reshape(N, C, H // 2, 2, W // 2, 2), axis=(3, 5))

    x = conv(x_nchw, params["conv1_1_w"], params["conv1_1_b"])
    x = conv(x, params["conv1_2_w"], params["conv1_2_b"])
    x = pool(x)
    x = conv(x, params["conv2_1_w"], params["conv2_1_b"])
    x = conv(x, params["conv2_2_w"], params["conv2_2_b"])
    x = pool(x)
    x = x.reshape(x.shape[0], -1)
    return x @ params["fc_w"].T + params["fc_b"]


if __name__ == "__main__":
    img_size = (16, 16)    # module assumes H, W divisible by 4
    num_classes = 2        # cats vs dogs
    batch = 2

    key = jax.random.PRNGKey(0)
    k_x, k_p = jax.random.split(key)
    x = jax.random.normal(k_x, (batch, 3, img_size[0], img_size[1]),
                          dtype=jnp.float32)
    params = init_params(k_p, img_size, num_classes)
    ref = net_forward_ref(x, params)

    fwd = jax.jit(functools.partial(net_forward, num_classes=num_classes))

    # f32 path: tight check against the XLA reference.
    pp_f32 = preprocess_params(params, img_size, num_classes, jnp.float32)
    out_f32 = jax.block_until_ready(fwd(x, pp_f32))
    assert out_f32.shape == (batch, num_classes)
    assert jnp.allclose(out_f32, ref, atol=2e-3, rtol=2e-3)

    # bf16 storage path (recommended on v6e / v7x): activations and weights
    # live in bf16 in HBM/VMEM (half the DMA bytes); accumulation and the
    # bias/ReLU epilogue stay in f32.
    pp_bf16 = preprocess_params(params, img_size, num_classes, jnp.bfloat16)
    out_bf16 = jax.block_until_ready(fwd(x, pp_bf16))
    assert out_bf16.shape == (batch, num_classes)
    assert jnp.allclose(out_bf16, ref, atol=5e-2, rtol=5e-2)

    print("KERNEL_OK")
</pallas_src>

<mosaic_0001>
module attributes {stable_mosaic.version = 11 : i64} {
  func.func @_conv3x3_relu_kernel(%arg0: i32, %arg1: memref<1x18x18x3xf32, #tpu.memory_space<vmem>>, %arg2: memref<9x3x128xf32, #tpu.memory_space<vmem>>, %arg3: memref<1x128xf32, #tpu.memory_space<vmem>>, %arg4: memref<1x256x128xf32, #tpu.memory_space<vmem>>) attributes {dimension_semantics = [#tpu.dimension_semantics<parallel>], iteration_bounds = array<i64: 2>, scalar_prefetch = 0 : i64, scratch_operands = 0 : i64, tpu.core_type = #tpu.core_type<tc>, window_params = [{transform_indices = @transform_0, window_bounds = array<i64: 1, 18, 18, 3>}, {pipeline_mode = #tpu.pipeline_mode<synchronous>, transform_indices = @transform_1, window_bounds = array<i64: 9, 3, 128>}, {pipeline_mode = #tpu.pipeline_mode<synchronous>, transform_indices = @transform_2, window_bounds = array<i64: 1, 128>}, {transform_indices = @transform_3, window_bounds = array<i64: 1, 256, 128>}]} {
    %cst = arith.constant 0.000000e+00 : f32
    %0 = vector.broadcast %cst : f32 to vector<256x128xf32>
    %c0 = arith.constant 0 : index
    %c0_0 = arith.constant 0 : index
    %c0_1 = arith.constant 0 : index
    %c0_2 = arith.constant 0 : index
    %1 = vector.load %arg1[%c0, %c0_0, %c0_1, %c0_2] : memref<1x18x18x3xf32, #tpu.memory_space<vmem>>, vector<1x16x18x3xf32>
    %2 = vector.shape_cast %1 : vector<1x16x18x3xf32> to vector<16x18x3xf32>
    %3 = vector.extract_strided_slice %2 {offsets = [0, 0, 0], sizes = [16, 16, 3], strides = [1, 1, 1]} : vector<16x18x3xf32> to vector<16x16x3xf32>
    %4 = vector.shape_cast %3 : vector<16x16x3xf32> to vector<256x3xf32>
    %c0_3 = arith.constant 0 : index
    %c0_4 = arith.constant 0 : index
    %c0_5 = arith.constant 0 : index
    %5 = vector.load %arg2[%c0_3, %c0_4, %c0_5] : memref<9x3x128xf32, #tpu.memory_space<vmem>>, vector<1x3x128xf32>
    %6 = vector.shape_cast %5 : vector<1x3x128xf32> to vector<3x128xf32>
    %cst_6 = arith.constant dense<0.000000e+00> : vector<256x128xf32>
    %7 = tpu.matmul %4, %6, %cst_6 {dimension_numbers = #tpu.dot_dimension_numbers<[1], [0], [0], [1], [0, 0, 1, 1], [], []>} : vector<256x3xf32>, vector<3x128xf32>, vector<256x128xf32> -> vector<256x128xf32>
    %8 = arith.addf %0, %7 : vector<256x128xf32>
    %9 = vector.extract_strided_slice %2 {offsets = [0, 1, 0], sizes = [16, 16, 3], strides = [1, 1, 1]} : vector<16x18x3xf32> to vector<16x16x3xf32>
    %10 = vector.shape_cast %9 : vector<16x16x3xf32> to vector<256x3xf32>
    %c1 = arith.constant 1 : index
    %c0_7 = arith.constant 0 : index
    %c0_8 = arith.constant 0 : index
    %11 = vector.load %arg2[%c1, %c0_7, %c0_8] : memref<9x3x128xf32, #tpu.memory_space<vmem>>, vector<1x3x128xf32>
    %12 = vector.shape_cast %11 : vector<1x3x128xf32> to vector<3x128xf32>
    %cst_9 = arith.constant dense<0.000000e+00> : vector<256x128xf32>
    %13 = tpu.matmul %10, %12, %cst_9 {dimension_numbers = #tpu.dot_dimension_numbers<[1], [0], [0], [1], [0, 0, 1, 1], [], []>} : vector<256x3xf32>, vector<3x128xf32>, vector<256x128xf32> -> vector<256x128xf32>
    %14 = arith.addf %8, %13 : vector<256x128xf32>
    %15 = vector.extract_strided_slice %2 {offsets = [0, 2, 0], sizes = [16, 16, 3], strides = [1, 1, 1]} : vector<16x18x3xf32> to vector<16x16x3xf32>
    %16 = vector.shape_cast %15 : vector<16x16x3xf32> to vector<256x3xf32>
    %c2 = arith.constant 2 : index
    %c0_10 = arith.constant 0 : index
    %c0_11 = arith.constant 0 : index
    %17 = vector.load %arg2[%c2, %c0_10, %c0_11] : memref<9x3x128xf32, #tpu.memory_space<vmem>>, vector<1x3x128xf32>
    %18 = vector.shape_cast %17 : vector<1x3x128xf32> to vector<3x128xf32>
    %cst_12 = arith.constant dense<0.000000e+00> : vector<256x128xf32>
    %19 = tpu.matmul %16, %18, %cst_12 {dimension_numbers = #tpu.dot_dimension_numbers<[1], [0], [0], [1], [0, 0, 1, 1], [], []>} : vector<256x3xf32>, vector<3x128xf32>, vector<256x128xf32> -> vector<256x128xf32>
    %20 = arith.addf %14, %19 : vector<256x128xf32>
    %c0_13 = arith.constant 0 : index
    %c1_14 = arith.constant 1 : index
    %c0_15 = arith.constant 0 : index
    %c0_16 = arith.constant 0 : index
    %21 = vector.load %arg1[%c0_13, %c1_14, %c0_15, %c0_16] : memref<1x18x18x3xf32, #tpu.memory_space<vmem>>, vector<1x16x18x3xf32>
    %22 = vector.shape_cast %21 : vector<1x16x18x3xf32> to vector<16x18x3xf32>
    %23 = vector.extract_strided_slice %22 {offsets = [0, 0, 0], sizes = [16, 16, 3], strides = [1, 1, 1]} : vector<16x18x3xf32> to vector<16x16x3xf32>
    %24 = vector.shape_cast %23 : vector<16x16x3xf32> to vector<256x3xf32>
    %c3 = arith.constant 3 : index
    %c0_17 = arith.constant 0 : index
    %c0_18 = arith.constant 0 : index
    %25 = vector.load %arg2[%c3, %c0_17, %c0_18] : memref<9x3x128xf32, #tpu.memory_space<vmem>>, vector<1x3x128xf32>
    %26 = vector.shape_cast %25 : vector<1x3x128xf32> to vector<3x128xf32>
    %cst_19 = arith.constant dense<0.000000e+00> : vector<256x128xf32>
    %27 = tpu.matmul %24, %26, %cst_19 {dimension_numbers = #tpu.dot_dimension_numbers<[1], [0], [0], [1], [0, 0, 1, 1], [], []>} : vector<256x3xf32>, vector<3x128xf32>, vector<256x128xf32> -> vector<256x128xf32>
    %28 = arith.addf %20, %27 : vector<256x128xf32>
    %29 = vector.extract_strided_slice %22 {offsets = [0, 1, 0], sizes = [16, 16, 3], strides = [1, 1, 1]} : vector<16x18x3xf32> to vector<16x16x3xf32>
    %30 = vector.shape_cast %29 : vector<16x16x3xf32> to vector<256x3xf32>
    %c4 = arith.constant 4 : index
    %c0_20 = arith.constant 0 : index
    %c0_21 = arith.constant 0 : index
    %31 = vector.load %arg2[%c4, %c0_20, %c0_21] : memref<9x3x128xf32, #tpu.memory_space<vmem>>, vector<1x3x128xf32>
    %32 = vector.shape_cast %31 : vector<1x3x128xf32> to vector<3x128xf32>
    %cst_22 = arith.constant dense<0.000000e+00> : vector<256x128xf32>
    %33 = tpu.matmul %30, %32, %cst_22 {dimension_numbers = #tpu.dot_dimension_numbers<[1], [0], [0], [1], [0, 0, 1, 1], [], []>} : vector<256x3xf32>, vector<3x128xf32>, vector<256x128xf32> -> vector<256x128xf32>
    %34 = arith.addf %28, %33 : vector<256x128xf32>
    %35 = vector.extract_strided_slice %22 {offsets = [0, 2, 0], sizes = [16, 16, 3], strides = [1, 1, 1]} : vector<16x18x3xf32> to vector<16x16x3xf32>
    %36 = vector.shape_cast %35 : vector<16x16x3xf32> to vector<256x3xf32>
    %c5 = arith.constant 5 : index
    %c0_23 = arith.constant 0 : index
    %c0_24 = arith.constant 0 : index
    %37 = vector.load %arg2[%c5, %c0_23, %c0_24] : memref<9x3x128xf32, #tpu.memory_space<vmem>>, vector<1x3x128xf32>
    %38 = vector.shape_cast %37 : vector<1x3x128xf32> to vector<3x128xf32>
    %cst_25 = arith.constant dense<0.000000e+00> : vector<256x128xf32>
    %39 = tpu.matmul %36, %38, %cst_25 {dimension_numbers = #tpu.dot_dimension_numbers<[1], [0], [0], [1], [0, 0, 1, 1], [], []>} : vector<256x3xf32>, vector<3x128xf32>, vector<256x128xf32> -> vector<256x128xf32>
    %40 = arith.addf %34, %39 : vector<256x128xf32>
    %c0_26 = arith.constant 0 : index
    %c2_27 = arith.constant 2 : index
    %c0_28 = arith.constant 0 : index
    %c0_29 = arith.constant 0 : index
    %41 = vector.load %arg1[%c0_26, %c2_27, %c0_28, %c0_29] : memref<1x18x18x3xf32, #tpu.memory_space<vmem>>, vector<1x16x18x3xf32>
    %42 = vector.shape_cast %41 : vector<1x16x18x3xf32> to vector<16x18x3xf32>
    %43 = vector.extract_strided_slice %42 {offsets = [0, 0, 0], sizes = [16, 16, 3], strides = [1, 1, 1]} : vector<16x18x3xf32> to vector<16x16x3xf32>
    %44 = vector.shape_cast %43 : vector<16x16x3xf32> to vector<256x3xf32>
    %c6 = arith.constant 6 : index
    %c0_30 = arith.constant 0 : index
    %c0_31 = arith.constant 0 : index
    %45 = vector.load %arg2[%c6, %c0_30, %c0_31] : memref<9x3x128xf32, #tpu.memory_space<vmem>>, vector<1x3x128xf32>
    %46 = vector.shape_cast %45 : vector<1x3x128xf32> to vector<3x128xf32>
    %cst_32 = arith.constant dense<0.000000e+00> : vector<256x128xf32>
    %47 = tpu.matmul %44, %46, %cst_32 {dimension_numbers = #tpu.dot_dimension_numbers<[1], [0], [0], [1], [0, 0, 1, 1], [], []>} : vector<256x3xf32>, vector<3x128xf32>, vector<256x128xf32> -> vector<256x128xf32>
    %48 = arith.addf %40, %47 : vector<256x128xf32>
    %49 = vector.extract_strided_slice %42 {offsets = [0, 1, 0], sizes = [16, 16, 3], strides = [1, 1, 1]} : vector<16x18x3xf32> to vector<16x16x3xf32>
    %50 = vector.shape_cast %49 : vector<16x16x3xf32> to vector<256x3xf32>
    %c7 = arith.constant 7 : index
    %c0_33 = arith.constant 0 : index
    %c0_34 = arith.constant 0 : index
    %51 = vector.load %arg2[%c7, %c0_33, %c0_34] : memref<9x3x128xf32, #tpu.memory_space<vmem>>, vector<1x3x128xf32>
    %52 = vector.shape_cast %51 : vector<1x3x128xf32> to vector<3x128xf32>
    %cst_35 = arith.constant dense<0.000000e+00> : vector<256x128xf32>
    %53 = tpu.matmul %50, %52, %cst_35 {dimension_numbers = #tpu.dot_dimension_numbers<[1], [0], [0], [1], [0, 0, 1, 1], [], []>} : vector<256x3xf32>, vector<3x128xf32>, vector<256x128xf32> -> vector<256x128xf32>
    %54 = arith.addf %48, %53 : vector<256x128xf32>
    %55 = vector.extract_strided_slice %42 {offsets = [0, 2, 0], sizes = [16, 16, 3], strides = [1, 1, 1]} : vector<16x18x3xf32> to vector<16x16x3xf32>
    %56 = vector.shape_cast %55 : vector<16x16x3xf32> to vector<256x3xf32>
    %c8 = arith.constant 8 : index
    %c0_36 = arith.constant 0 : index
    %c0_37 = arith.constant 0 : index
    %57 = vector.load %arg2[%c8, %c0_36, %c0_37] : memref<9x3x128xf32, #tpu.memory_space<vmem>>, vector<1x3x128xf32>
    %58 = vector.shape_cast %57 : vector<1x3x128xf32> to vector<3x128xf32>
    %cst_38 = arith.constant dense<0.000000e+00> : vector<256x128xf32>
    %59 = tpu.matmul %56, %58, %cst_38 {dimension_numbers = #tpu.dot_dimension_numbers<[1], [0], [0], [1], [0, 0, 1, 1], [], []>} : vector<256x3xf32>, vector<3x128xf32>, vector<256x128xf32> -> vector<256x128xf32>
    %60 = arith.addf %54, %59 : vector<256x128xf32>
    %c0_39 = arith.constant 0 : index
    %c0_40 = arith.constant 0 : index
    %61 = vector.load %arg3[%c0_39, %c0_40] : memref<1x128xf32, #tpu.memory_space<vmem>>, vector<1x128xf32>
    %62 = vector.broadcast %61 : vector<1x128xf32> to vector<256x128xf32>
    %63 = arith.addf %60, %62 : vector<256x128xf32>
    %cst_41 = arith.constant 0.000000e+00 : f32
    %64 = vector.broadcast %cst_41 : f32 to vector<256x128xf32>
    %65 = arith.maximumf %63, %64 : vector<256x128xf32>
    %c0_42 = arith.constant 0 : index
    %c0_43 = arith.constant 0 : index
    %c0_44 = arith.constant 0 : index
    %66 = vector.load %arg4[%c0_42, %c0_43, %c0_44] : memref<1x256x128xf32, #tpu.memory_space<vmem>>, vector<1x256x128xf32>
    %67 = vector.shape_cast %66 : vector<1x256x128xf32> to vector<256x128xf32>
    %68 = vector.shape_cast %65 : vector<256x128xf32> to vector<1x256x128xf32>
    tpu.vector_store %arg4[%c0_42, %c0_43, %c0_44], %68 {strides = array<i32>} : memref<1x256x128xf32, #tpu.memory_space<vmem>>, vector<1x256x128xf32>,
    return
  }
  func.func @transform_0(%arg0: i32) -> (i32, i32, i32, i32) {
    %c0_i32 = arith.constant 0 : i32
    %c0_i32_0 = arith.constant 0 : i32
    %c0_i32_1 = arith.constant 0 : i32
    %c0_i32_2 = arith.constant 0 : i32
    return %arg0, %c0_i32, %c0_i32_0, %c0_i32_1 : i32, i32, i32, i32
  }
  func.func @transform_1(%arg0: i32) -> (i32, i32, i32) {
    %c0_i32 = arith.constant 0 : i32
    %c0_i32_0 = arith.constant 0 : i32
    %c0_i32_1 = arith.constant 0 : i32
    %c0_i32_2 = arith.constant 0 : i32
    return %c0_i32, %c0_i32_0, %c0_i32_1 : i32, i32, i32
  }
  func.func @transform_2(%arg0: i32) -> (i32, i32) {
    %c0_i32 = arith.constant 0 : i32
    %c0_i32_0 = arith.constant 0 : i32
    %c0_i32_1 = arith.constant 0 : i32
    return %c0_i32, %c0_i32_0 : i32, i32
  }
  func.func @transform_3(%arg0: i32) -> (i32, i32, i32) {
    %c0_i32 = arith.constant 0 : i32
    %c0_i32_0 = arith.constant 0 : i32
    %c0_i32_1 = arith.constant 0 : i32
    return %arg0, %c0_i32, %c0_i32_0 : i32, i32, i32
  }
}

module attributes {stable_mosaic.version = 11 : i64} {
  func.func @_conv3x3_relu_kernel(%arg0: i32, %arg1: memref<1x18x18x128xf32, #tpu.memory_space<vmem>>, %arg2: memref<9x128x128xf32, #tpu.memory_space<vmem>>, %arg3: memref<1x128xf32, #tpu.memory_space<vmem>>, %arg4: memref<1x256x128xf32, #tpu.memory_space<vmem>>) attributes {dimension_semantics = [#tpu.dimension_semantics<parallel>], iteration_bounds = array<i64: 2>, scalar_prefetch = 0 : i64, scratch_operands = 0 : i64, tpu.core_type = #tpu.core_type<tc>, window_params = [{transform_indices = @transform_0, window_bounds = array<i64: 1, 18, 18, 128>}, {pipeline_mode = #tpu.pipeline_mode<synchronous>, transform_indices = @transform_1, window_bounds = array<i64: 9, 128, 128>}, {pipeline_mode = #tpu.pipeline_mode<synchronous>, transform_indices = @transform_2, window_bounds = array<i64: 1, 128>}, {transform_indices = @transform_3, window_bounds = array<i64: 1, 256, 128>}]} {
    %cst = arith.constant 0.000000e+00 : f32
    %0 = vector.broadcast %cst : f32 to vector<256x128xf32>
    %c0 = arith.constant 0 : index
    %c0_0 = arith.constant 0 : index
    %c0_1 = arith.constant 0 : index
    %c0_2 = arith.constant 0 : index
    %1 = vector.load %arg1[%c0, %c0_0, %c0_1, %c0_2] : memref<1x18x18x128xf32, #tpu.memory_space<vmem>>, vector<1x16x18x128xf32>
    %2 = vector.shape_cast %1 : vector<1x16x18x128xf32> to vector<16x18x128xf32>
    %3 = vector.extract_strided_slice %2 {offsets = [0, 0, 0], sizes = [16, 16, 128], strides = [1, 1, 1]} : vector<16x18x128xf32> to vector<16x16x128xf32>
    %4 = vector.shape_cast %3 : vector<16x16x128xf32> to vector<256x128xf32>
    %c0_3 = arith.constant 0 : index
    %c0_4 = arith.constant 0 : index
    %c0_5 = arith.constant 0 : index
    %5 = vector.load %arg2[%c0_3, %c0_4, %c0_5] : memref<9x128x128xf32, #tpu.memory_space<vmem>>, vector<1x128x128xf32>
    %6 = vector.shape_cast %5 : vector<1x128x128xf32> to vector<128x128xf32>
    %cst_6 = arith.constant dense<0.000000e+00> : vector<256x128xf32>
    %7 = tpu.matmul %4, %6, %cst_6 {dimension_numbers = #tpu.dot_dimension_numbers<[1], [0], [0], [1], [0, 0, 1, 1], [], []>} : vector<256x128xf32>, vector<128x128xf32>, vector<256x128xf32> -> vector<256x128xf32>
    %8 = arith.addf %0, %7 : vector<256x128xf32>
    %9 = vector.extract_strided_slice %2 {offsets = [0, 1, 0], sizes = [16, 16, 128], strides = [1, 1, 1]} : vector<16x18x128xf32> to vector<16x16x128xf32>
    %10 = vector.shape_cast %9 : vector<16x16x128xf32> to vector<256x128xf32>
    %c1 = arith.constant 1 : index
    %c0_7 = arith.constant 0 : index
    %c0_8 = arith.constant 0 : index
    %11 = vector.load %arg2[%c1, %c0_7, %c0_8] : memref<9x128x128xf32, #tpu.memory_space<vmem>>, vector<1x128x128xf32>
    %12 = vector.shape_cast %11 : vector<1x128x128xf32> to vector<128x128xf32>
    %cst_9 = arith.constant dense<0.000000e+00> : vector<256x128xf32>
    %13 = tpu.matmul %10, %12, %cst_9 {dimension_numbers = #tpu.dot_dimension_numbers<[1], [0], [0], [1], [0, 0, 1, 1], [], []>} : vector<256x128xf32>, vector<128x128xf32>, vector<256x128xf32> -> vector<256x128xf32>
    %14 = arith.addf %8, %13 : vector<256x128xf32>
    %15 = vector.extract_strided_slice %2 {offsets = [0, 2, 0], sizes = [16, 16, 128], strides = [1, 1, 1]} : vector<16x18x128xf32> to vector<16x16x128xf32>
    %16 = vector.shape_cast %15 : vector<16x16x128xf32> to vector<256x128xf32>
    %c2 = arith.constant 2 : index
    %c0_10 = arith.constant 0 : index
    %c0_11 = arith.constant 0 : index
    %17 = vector.load %arg2[%c2, %c0_10, %c0_11] : memref<9x128x128xf32, #tpu.memory_space<vmem>>, vector<1x128x128xf32>
    %18 = vector.shape_cast %17 : vector<1x128x128xf32> to vector<128x128xf32>
    %cst_12 = arith.constant dense<0.000000e+00> : vector<256x128xf32>
    %19 = tpu.matmul %16, %18, %cst_12 {dimension_numbers = #tpu.dot_dimension_numbers<[1], [0], [0], [1], [0, 0, 1, 1], [], []>} : vector<256x128xf32>, vector<128x128xf32>, vector<256x128xf32> -> vector<256x128xf32>
    %20 = arith.addf %14, %19 : vector<256x128xf32>
    %c0_13 = arith.constant 0 : index
    %c1_14 = arith.constant 1 : index
    %c0_15 = arith.constant 0 : index
    %c0_16 = arith.constant 0 : index
    %21 = vector.load %arg1[%c0_13, %c1_14, %c0_15, %c0_16] : memref<1x18x18x128xf32, #tpu.memory_space<vmem>>, vector<1x16x18x128xf32>
    %22 = vector.shape_cast %21 : vector<1x16x18x128xf32> to vector<16x18x128xf32>
    %23 = vector.extract_strided_slice %22 {offsets = [0, 0, 0], sizes = [16, 16, 128], strides = [1, 1, 1]} : vector<16x18x128xf32> to vector<16x16x128xf32>
    %24 = vector.shape_cast %23 : vector<16x16x128xf32> to vector<256x128xf32>
    %c3 = arith.constant 3 : index
    %c0_17 = arith.constant 0 : index
    %c0_18 = arith.constant 0 : index
    %25 = vector.load %arg2[%c3, %c0_17, %c0_18] : memref<9x128x128xf32, #tpu.memory_space<vmem>>, vector<1x128x128xf32>
    %26 = vector.shape_cast %25 : vector<1x128x128xf32> to vector<128x128xf32>
    %cst_19 = arith.constant dense<0.000000e+00> : vector<256x128xf32>
    %27 = tpu.matmul %24, %26, %cst_19 {dimension_numbers = #tpu.dot_dimension_numbers<[1], [0], [0], [1], [0, 0, 1, 1], [], []>} : vector<256x128xf32>, vector<128x128xf32>, vector<256x128xf32> -> vector<256x128xf32>
    %28 = arith.addf %20, %27 : vector<256x128xf32>
    %29 = vector.extract_strided_slice %22 {offsets = [0, 1, 0], sizes = [16, 16, 128], strides = [1, 1, 1]} : vector<16x18x128xf32> to vector<16x16x128xf32>
    %30 = vector.shape_cast %29 : vector<16x16x128xf32> to vector<256x128xf32>
    %c4 = arith.constant 4 : index
    %c0_20 = arith.constant 0 : index
    %c0_21 = arith.constant 0 : index
    %31 = vector.load %arg2[%c4, %c0_20, %c0_21] : memref<9x128x128xf32, #tpu.memory_space<vmem>>, vector<1x128x128xf32>
    %32 = vector.shape_cast %31 : vector<1x128x128xf32> to vector<128x128xf32>
    %cst_22 = arith.constant dense<0.000000e+00> : vector<256x128xf32>
    %33 = tpu.matmul %30, %32, %cst_22 {dimension_numbers = #tpu.dot_dimension_numbers<[1], [0], [0], [1], [0, 0, 1, 1], [], []>} : vector<256x128xf32>, vector<128x128xf32>, vector<256x128xf32> -> vector<256x128xf32>
    %34 = arith.addf %28, %33 : vector<256x128xf32>
    %35 = vector.extract_strided_slice %22 {offsets = [0, 2, 0], sizes = [16, 16, 128], strides = [1, 1, 1]} : vector<16x18x128xf32> to vector<16x16x128xf32>
    %36 = vector.shape_cast %35 : vector<16x16x128xf32> to vector<256x128xf32>
    %c5 = arith.constant 5 : index
    %c0_23 = arith.constant 0 : index
    %c0_24 = arith.constant 0 : index
    %37 = vector.load %arg2[%c5, %c0_23, %c0_24] : memref<9x128x128xf32, #tpu.memory_space<vmem>>, vector<1x128x128xf32>
    %38 = vector.shape_cast %37 : vector<1x128x128xf32> to vector<128x128xf32>
    %cst_25 = arith.constant dense<0.000000e+00> : vector<256x128xf32>
    %39 = tpu.matmul %36, %38, %cst_25 {dimension_numbers = #tpu.dot_dimension_numbers<[1], [0], [0], [1], [0, 0, 1, 1], [], []>} : vector<256x128xf32>, vector<128x128xf32>, vector<256x128xf32> -> vector<256x128xf32>
    %40 = arith.addf %34, %39 : vector<256x128xf32>
    %c0_26 = arith.constant 0 : index
    %c2_27 = arith.constant 2 : index
    %c0_28 = arith.constant 0 : index
    %c0_29 = arith.constant 0 : index
    %41 = vector.load %arg1[%c0_26, %c2_27, %c0_28, %c0_29] : memref<1x18x18x128xf32, #tpu.memory_space<vmem>>, vector<1x16x18x128xf32>
    %42 = vector.shape_cast %41 : vector<1x16x18x128xf32> to vector<16x18x128xf32>
    %43 = vector.extract_strided_slice %42 {offsets = [0, 0, 0], sizes = [16, 16, 128], strides = [1, 1, 1]} : vector<16x18x128xf32> to vector<16x16x128xf32>
    %44 = vector.shape_cast %43 : vector<16x16x128xf32> to vector<256x128xf32>
    %c6 = arith.constant 6 : index
    %c0_30 = arith.constant 0 : index
    %c0_31 = arith.constant 0 : index
    %45 = vector.load %arg2[%c6, %c0_30, %c0_31] : memref<9x128x128xf32, #tpu.memory_space<vmem>>, vector<1x128x128xf32>
    %46 = vector.shape_cast %45 : vector<1x128x128xf32> to vector<128x128xf32>
    %cst_32 = arith.constant dense<0.000000e+00> : vector<256x128xf32>
    %47 = tpu.matmul %44, %46, %cst_32 {dimension_numbers = #tpu.dot_dimension_numbers<[1], [0], [0], [1], [0, 0, 1, 1], [], []>} : vector<256x128xf32>, vector<128x128xf32>, vector<256x128xf32> -> vector<256x128xf32>
    %48 = arith.addf %40, %47 : vector<256x128xf32>
    %49 = vector.extract_strided_slice %42 {offsets = [0, 1, 0], sizes = [16, 16, 128], strides = [1, 1, 1]} : vector<16x18x128xf32> to vector<16x16x128xf32>
    %50 = vector.shape_cast %49 : vector<16x16x128xf32> to vector<256x128xf32>
    %c7 = arith.constant 7 : index
    %c0_33 = arith.constant 0 : index
    %c0_34 = arith.constant 0 : index
    %51 = vector.load %arg2[%c7, %c0_33, %c0_34] : memref<9x128x128xf32, #tpu.memory_space<vmem>>, vector<1x128x128xf32>
    %52 = vector.shape_cast %51 : vector<1x128x128xf32> to vector<128x128xf32>
    %cst_35 = arith.constant dense<0.000000e+00> : vector<256x128xf32>
    %53 = tpu.matmul %50, %52, %cst_35 {dimension_numbers = #tpu.dot_dimension_numbers<[1], [0], [0], [1], [0, 0, 1, 1], [], []>} : vector<256x128xf32>, vector<128x128xf32>, vector<256x128xf32> -> vector<256x128xf32>
    %54 = arith.addf %48, %53 : vector<256x128xf32>
    %55 = vector.extract_strided_slice %42 {offsets = [0, 2, 0], sizes = [16, 16, 128], strides = [1, 1, 1]} : vector<16x18x128xf32> to vector<16x16x128xf32>
    %56 = vector.shape_cast %55 : vector<16x16x128xf32> to vector<256x128xf32>
    %c8 = arith.constant 8 : index
    %c0_36 = arith.constant 0 : index
    %c0_37 = arith.constant 0 : index
    %57 = vector.load %arg2[%c8, %c0_36, %c0_37] : memref<9x128x128xf32, #tpu.memory_space<vmem>>, vector<1x128x128xf32>
    %58 = vector.shape_cast %57 : vector<1x128x128xf32> to vector<128x128xf32>
    %cst_38 = arith.constant dense<0.000000e+00> : vector<256x128xf32>
    %59 = tpu.matmul %56, %58, %cst_38 {dimension_numbers = #tpu.dot_dimension_numbers<[1], [0], [0], [1], [0, 0, 1, 1], [], []>} : vector<256x128xf32>, vector<128x128xf32>, vector<256x128xf32> -> vector<256x128xf32>
    %60 = arith.addf %54, %59 : vector<256x128xf32>
    %c0_39 = arith.constant 0 : index
    %c0_40 = arith.constant 0 : index
    %61 = vector.load %arg3[%c0_39, %c0_40] : memref<1x128xf32, #tpu.memory_space<vmem>>, vector<1x128xf32>
    %62 = vector.broadcast %61 : vector<1x128xf32> to vector<256x128xf32>
    %63 = arith.addf %60, %62 : vector<256x128xf32>
    %cst_41 = arith.constant 0.000000e+00 : f32
    %64 = vector.broadcast %cst_41 : f32 to vector<256x128xf32>
    %65 = arith.maximumf %63, %64 : vector<256x128xf32>
    %c0_42 = arith.constant 0 : index
    %c0_43 = arith.constant 0 : index
    %c0_44 = arith.constant 0 : index
    %66 = vector.load %arg4[%c0_42, %c0_43, %c0_44] : memref<1x256x128xf32, #tpu.memory_space<vmem>>, vector<1x256x128xf32>
    %67 = vector.shape_cast %66 : vector<1x256x128xf32> to vector<256x128xf32>
    %68 = vector.shape_cast %65 : vector<256x128xf32> to vector<1x256x128xf32>
    tpu.vector_store %arg4[%c0_42, %c0_43, %c0_44], %68 {strides = array<i32>} : memref<1x256x128xf32, #tpu.memory_space<vmem>>, vector<1x256x128xf32>,
    return
  }
  func.func @transform_0(%arg0: i32) -> (i32, i32, i32, i32) {
    %c0_i32 = arith.constant 0 : i32
    %c0_i32_0 = arith.constant 0 : i32
    %c0_i32_1 = arith.constant 0 : i32
    %c0_i32_2 = arith.constant 0 : i32
    return %arg0, %c0_i32, %c0_i32_0, %c0_i32_1 : i32, i32, i32, i32
  }
  func.func @transform_1(%arg0: i32) -> (i32, i32, i32) {
    %c0_i32 = arith.constant 0 : i32
    %c0_i32_0 = arith.constant 0 : i32
    %c0_i32_1 = arith.constant 0 : i32
    %c0_i32_2 = arith.constant 0 : i32
    return %c0_i32, %c0_i32_0, %c0_i32_1 : i32, i32, i32
  }
  func.func @transform_2(%arg0: i32) -> (i32, i32) {
    %c0_i32 = arith.constant 0 : i32
    %c0_i32_0 = arith.constant 0 : i32
    %c0_i32_1 = arith.constant 0 : i32
    return %c0_i32, %c0_i32_0 : i32, i32
  }
  func.func @transform_3(%arg0: i32) -> (i32, i32, i32) {
    %c0_i32 = arith.constant 0 : i32
    %c0_i32_0 = arith.constant 0 : i32
    %c0_i32_1 = arith.constant 0 : i32
    return %arg0, %c0_i32, %c0_i32_0 : i32, i32, i32
  }
}

module attributes {stable_mosaic.version = 11 : i64} {
  func.func @_maxpool2x2_kernel(%arg0: i32, %arg1: memref<1x16x8x256xf32, #tpu.memory_space<vmem>>, %arg2: memref<1x8x8x128xf32, #tpu.memory_space<vmem>>) attributes {dimension_semantics = [#tpu.dimension_semantics<parallel>], iteration_bounds = array<i64: 2>, scalar_prefetch = 0 : i64, scratch_operands = 0 : i64, tpu.core_type = #tpu.core_type<tc>, window_params = [{transform_indices = @transform_0, window_bounds = array<i64: 1, 16, 8, 256>}, {transform_indices = @transform_1, window_bounds = array<i64: 1, 8, 8, 128>}]} {
    %c0 = arith.constant 0 : index
    %c0_0 = arith.constant 0 : index
    %c0_1 = arith.constant 0 : index
    %c0_2 = arith.constant 0 : index
    %0 = vector.load %arg1[%c0, %c0_0, %c0_1, %c0_2] : memref<1x16x8x256xf32, #tpu.memory_space<vmem>>, vector<1x1x8x256xf32>
    %1 = vector.shape_cast %0 : vector<1x1x8x256xf32> to vector<8x256xf32>
    %c0_3 = arith.constant 0 : index
    %c1 = arith.constant 1 : index
    %c0_4 = arith.constant 0 : index
    %c0_5 = arith.constant 0 : index
    %2 = vector.load %arg1[%c0_3, %c1, %c0_4, %c0_5] : memref<1x16x8x256xf32, #tpu.memory_space<vmem>>, vector<1x1x8x256xf32>
    %3 = vector.shape_cast %2 : vector<1x1x8x256xf32> to vector<8x256xf32>
    %4 = arith.maximumf %1, %3 : vector<8x256xf32>
    %5 = vector.extract_strided_slice %4 {offsets = [0, 0], sizes = [8, 128], strides = [1, 1]} : vector<8x256xf32> to vector<8x128xf32>
    %6 = vector.extract_strided_slice %4 {offsets = [0, 128], sizes = [8, 128], strides = [1, 1]} : vector<8x256xf32> to vector<8x128xf32>
    %7 = arith.maximumf %5, %6 : vector<8x128xf32>
    %c0_6 = arith.constant 0 : index
    %c0_7 = arith.constant 0 : index
    %c0_8 = arith.constant 0 : index
    %c0_9 = arith.constant 0 : index
    %8 = vector.load %arg2[%c0_6, %c0_7, %c0_8, %c0_9] : memref<1x8x8x128xf32, #tpu.memory_space<vmem>>, vector<1x1x8x128xf32>
    %9 = vector.shape_cast %8 : vector<1x1x8x128xf32> to vector<8x128xf32>
    %10 = vector.shape_cast %7 : vector<8x128xf32> to vector<1x1x8x128xf32>
    tpu.vector_store %arg2[%c0_6, %c0_7, %c0_8, %c0_9], %10 {strides = array<i32>} : memref<1x8x8x128xf32, #tpu.memory_space<vmem>>, vector<1x1x8x128xf32>,
    %c0_10 = arith.constant 0 : index
    %c2 = arith.constant 2 : index
    %c0_11 = arith.constant 0 : index
    %c0_12 = arith.constant 0 : index
    %11 = vector.load %arg1[%c0_10, %c2, %c0_11, %c0_12] : memref<1x16x8x256xf32, #tpu.memory_space<vmem>>, vector<1x1x8x256xf32>
    %12 = vector.shape_cast %11 : vector<1x1x8x256xf32> to vector<8x256xf32>
    %c0_13 = arith.constant 0 : index
    %c3 = arith.constant 3 : index
    %c0_14 = arith.constant 0 : index
    %c0_15 = arith.constant 0 : index
    %13 = vector.load %arg1[%c0_13, %c3, %c0_14, %c0_15] : memref<1x16x8x256xf32, #tpu.memory_space<vmem>>, vector<1x1x8x256xf32>
    %14 = vector.shape_cast %13 : vector<1x1x8x256xf32> to vector<8x256xf32>
    %15 = arith.maximumf %12, %14 : vector<8x256xf32>
    %16 = vector.extract_strided_slice %15 {offsets = [0, 0], sizes = [8, 128], strides = [1, 1]} : vector<8x256xf32> to vector<8x128xf32>
    %17 = vector.extract_strided_slice %15 {offsets = [0, 128], sizes = [8, 128], strides = [1, 1]} : vector<8x256xf32> to vector<8x128xf32>
    %18 = arith.maximumf %16, %17 : vector<8x128xf32>
    %c0_16 = arith.constant 0 : index
    %c1_17 = arith.constant 1 : index
    %c0_18 = arith.constant 0 : index
    %c0_19 = arith.constant 0 : index
    %19 = vector.load %arg2[%c0_16, %c1_17, %c0_18, %c0_19] : memref<1x8x8x128xf32, #tpu.memory_space<vmem>>, vector<1x1x8x128xf32>
    %20 = vector.shape_cast %19 : vector<1x1x8x128xf32> to vector<8x128xf32>
    %21 = vector.shape_cast %18 : vector<8x128xf32> to vector<1x1x8x128xf32>
    tpu.vector_store %arg2[%c0_16, %c1_17, %c0_18, %c0_19], %21 {strides = array<i32>} : memref<1x8x8x128xf32, #tpu.memory_space<vmem>>, vector<1x1x8x128xf32>,
    %c0_20 = arith.constant 0 : index
    %c4 = arith.constant 4 : index
    %c0_21 = arith.constant 0 : index
    %c0_22 = arith.constant 0 : index
    %22 = vector.load %arg1[%c0_20, %c4, %c0_21, %c0_22] : memref<1x16x8x256xf32, #tpu.memory_space<vmem>>, vector<1x1x8x256xf32>
    %23 = vector.shape_cast %22 : vector<1x1x8x256xf32> to vector<8x256xf32>
    %c0_23 = arith.constant 0 : index
    %c5 = arith.constant 5 : index
    %c0_24 = arith.constant 0 : index
    %c0_25 = arith.constant 0 : index
    %24 = vector.load %arg1[%c0_23, %c5, %c0_24, %c0_25] : memref<1x16x8x256xf32, #tpu.memory_space<vmem>>, vector<1x1x8x256xf32>
    %25 = vector.shape_cast %24 : vector<1x1x8x256xf32> to vector<8x256xf32>
    %26 = arith.maximumf %23, %25 : vector<8x256xf32>
    %27 = vector.extract_strided_slice %26 {offsets = [0, 0], sizes = [8, 128], strides = [1, 1]} : vector<8x256xf32> to vector<8x128xf32>
    %28 = vector.extract_strided_slice %26 {offsets = [0, 128], sizes = [8, 128], strides = [1, 1]} : vector<8x256xf32> to vector<8x128xf32>
    %29 = arith.maximumf %27, %28 : vector<8x128xf32>
    %c0_26 = arith.constant 0 : index
    %c2_27 = arith.constant 2 : index
    %c0_28 = arith.constant 0 : index
    %c0_29 = arith.constant 0 : index
    %30 = vector.load %arg2[%c0_26, %c2_27, %c0_28, %c0_29] : memref<1x8x8x128xf32, #tpu.memory_space<vmem>>, vector<1x1x8x128xf32>
    %31 = vector.shape_cast %30 : vector<1x1x8x128xf32> to vector<8x128xf32>
    %32 = vector.shape_cast %29 : vector<8x128xf32> to vector<1x1x8x128xf32>
    tpu.vector_store %arg2[%c0_26, %c2_27, %c0_28, %c0_29], %32 {strides = array<i32>} : memref<1x8x8x128xf32, #tpu.memory_space<vmem>>, vector<1x1x8x128xf32>,
    %c0_30 = arith.constant 0 : index
    %c6 = arith.constant 6 : index
    %c0_31 = arith.constant 0 : index
    %c0_32 = arith.constant 0 : index
    %33 = vector.load %arg1[%c0_30, %c6, %c0_31, %c0_32] : memref<1x16x8x256xf32, #tpu.memory_space<vmem>>, vector<1x1x8x256xf32>
    %34 = vector.shape_cast %33 : vector<1x1x8x256xf32> to vector<8x256xf32>
    %c0_33 = arith.constant 0 : index
    %c7 = arith.constant 7 : index
    %c0_34 = arith.constant 0 : index
    %c0_35 = arith.constant 0 : index
    %35 = vector.load %arg1[%c0_33, %c7, %c0_34, %c0_35] : memref<1x16x8x256xf32, #tpu.memory_space<vmem>>, vector<1x1x8x256xf32>
    %36 = vector.shape_cast %35 : vector<1x1x8x256xf32> to vector<8x256xf32>
    %37 = arith.maximumf %34, %36 : vector<8x256xf32>
    %38 = vector.extract_strided_slice %37 {offsets = [0, 0], sizes = [8, 128], strides = [1, 1]} : vector<8x256xf32> to vector<8x128xf32>
    %39 = vector.extract_strided_slice %37 {offsets = [0, 128], sizes = [8, 128], strides = [1, 1]} : vector<8x256xf32> to vector<8x128xf32>
    %40 = arith.maximumf %38, %39 : vector<8x128xf32>
    %c0_36 = arith.constant 0 : index
    %c3_37 = arith.constant 3 : index
    %c0_38 = arith.constant 0 : index
    %c0_39 = arith.constant 0 : index
    %41 = vector.load %arg2[%c0_36, %c3_37, %c0_38, %c0_39] : memref<1x8x8x128xf32, #tpu.memory_space<vmem>>, vector<1x1x8x128xf32>
    %42 = vector.shape_cast %41 : vector<1x1x8x128xf32> to vector<8x128xf32>
    %43 = vector.shape_cast %40 : vector<8x128xf32> to vector<1x1x8x128xf32>
    tpu.vector_store %arg2[%c0_36, %c3_37, %c0_38, %c0_39], %43 {strides = array<i32>} : memref<1x8x8x128xf32, #tpu.memory_space<vmem>>, vector<1x1x8x128xf32>,
    %c0_40 = arith.constant 0 : index
    %c8 = arith.constant 8 : index
    %c0_41 = arith.constant 0 : index
    %c0_42 = arith.constant 0 : index
    %44 = vector.load %arg1[%c0_40, %c8, %c0_41, %c0_42] : memref<1x16x8x256xf32, #tpu.memory_space<vmem>>, vector<1x1x8x256xf32>
    %45 = vector.shape_cast %44 : vector<1x1x8x256xf32> to vector<8x256xf32>
    %c0_43 = arith.constant 0 : index
    %c9 = arith.constant 9 : index
    %c0_44 = arith.constant 0 : index
    %c0_45 = arith.constant 0 : index
    %46 = vector.load %arg1[%c0_43, %c9, %c0_44, %c0_45] : memref<1x16x8x256xf32, #tpu.memory_space<vmem>>, vector<1x1x8x256xf32>
    %47 = vector.shape_cast %46 : vector<1x1x8x256xf32> to vector<8x256xf32>
    %48 = arith.maximumf %45, %47 : vector<8x256xf32>
    %49 = vector.extract_strided_slice %48 {offsets = [0, 0], sizes = [8, 128], strides = [1, 1]} : vector<8x256xf32> to vector<8x128xf32>
    %50 = vector.extract_strided_slice %48 {offsets = [0, 128], sizes = [8, 128], strides = [1, 1]} : vector<8x256xf32> to vector<8x128xf32>
    %51 = arith.maximumf %49, %50 : vector<8x128xf32>
    %c0_46 = arith.constant 0 : index
    %c4_47 = arith.constant 4 : index
    %c0_48 = arith.constant 0 : index
    %c0_49 = arith.constant 0 : index
    %52 = vector.load %arg2[%c0_46, %c4_47, %c0_48, %c0_49] : memref<1x8x8x128xf32, #tpu.memory_space<vmem>>, vector<1x1x8x128xf32>
    %53 = vector.shape_cast %52 : vector<1x1x8x128xf32> to vector<8x128xf32>
    %54 = vector.shape_cast %51 : vector<8x128xf32> to vector<1x1x8x128xf32>
    tpu.vector_store %arg2[%c0_46, %c4_47, %c0_48, %c0_49], %54 {strides = array<i32>} : memref<1x8x8x128xf32, #tpu.memory_space<vmem>>, vector<1x1x8x128xf32>,
    %c0_50 = arith.constant 0 : index
    %c10 = arith.constant 10 : index
    %c0_51 = arith.constant 0 : index
    %c0_52 = arith.constant 0 : index
    %55 = vector.load %arg1[%c0_50, %c10, %c0_51, %c0_52] : memref<1x16x8x256xf32, #tpu.memory_space<vmem>>, vector<1x1x8x256xf32>
    %56 = vector.shape_cast %55 : vector<1x1x8x256xf32> to vector<8x256xf32>
    %c0_53 = arith.constant 0 : index
    %c11 = arith.constant 11 : index
    %c0_54 = arith.constant 0 : index
    %c0_55 = arith.constant 0 : index
    %57 = vector.load %arg1[%c0_53, %c11, %c0_54, %c0_55] : memref<1x16x8x256xf32, #tpu.memory_space<vmem>>, vector<1x1x8x256xf32>
    %58 = vector.shape_cast %57 : vector<1x1x8x256xf32> to vector<8x256xf32>
    %59 = arith.maximumf %56, %58 : vector<8x256xf32>
    %60 = vector.extract_strided_slice %59 {offsets = [0, 0], sizes = [8, 128], strides = [1, 1]} : vector<8x256xf32> to vector<8x128xf32>
    %61 = vector.extract_strided_slice %59 {offsets = [0, 128], sizes = [8, 128], strides = [1, 1]} : vector<8x256xf32> to vector<8x128xf32>
    %62 = arith.maximumf %60, %61 : vector<8x128xf32>
    %c0_56 = arith.constant 0 : index
    %c5_57 = arith.constant 5 : index
    %c0_58 = arith.constant 0 : index
    %c0_59 = arith.constant 0 : index
    %63 = vector.load %arg2[%c0_56, %c5_57, %c0_58, %c0_59] : memref<1x8x8x128xf32, #tpu.memory_space<vmem>>, vector<1x1x8x128xf32>
    %64 = vector.shape_cast %63 : vector<1x1x8x128xf32> to vector<8x128xf32>
    %65 = vector.shape_cast %62 : vector<8x128xf32> to vector<1x1x8x128xf32>
    tpu.vector_store %arg2[%c0_56, %c5_57, %c0_58, %c0_59], %65 {strides = array<i32>} : memref<1x8x8x128xf32, #tpu.memory_space<vmem>>, vector<1x1x8x128xf32>,
    %c0_60 = arith.constant 0 : index
    %c12 = arith.constant 12 : index
    %c0_61 = arith.constant 0 : index
    %c0_62 = arith.constant 0 : index
    %66 = vector.load %arg1[%c0_60, %c12, %c0_61, %c0_62] : memref<1x16x8x256xf32, #tpu.memory_space<vmem>>, vector<1x1x8x256xf32>
    %67 = vector.shape_cast %66 : vector<1x1x8x256xf32> to vector<8x256xf32>
    %c0_63 = arith.constant 0 : index
    %c13 = arith.constant 13 : index
    %c0_64 = arith.constant 0 : index
    %c0_65 = arith.constant 0 : index
    %68 = vector.load %arg1[%c0_63, %c13, %c0_64, %c0_65] : memref<1x16x8x256xf32, #tpu.memory_space<vmem>>, vector<1x1x8x256xf32>
    %69 = vector.shape_cast %68 : vector<1x1x8x256xf32> to vector<8x256xf32>
    %70 = arith.maximumf %67, %69 : vector<8x256xf32>
    %71 = vector.extract_strided_slice %70 {offsets = [0, 0], sizes = [8, 128], strides = [1, 1]} : vector<8x256xf32> to vector<8x128xf32>
    %72 = vector.extract_strided_slice %70 {offsets = [0, 128], sizes = [8, 128], strides = [1, 1]} : vector<8x256xf32> to vector<8x128xf32>
    %73 = arith.maximumf %71, %72 : vector<8x128xf32>
    %c0_66 = arith.constant 0 : index
    %c6_67 = arith.constant 6 : index
    %c0_68 = arith.constant 0 : index
    %c0_69 = arith.constant 0 : index
    %74 = vector.load %arg2[%c0_66, %c6_67, %c0_68, %c0_69] : memref<1x8x8x128xf32, #tpu.memory_space<vmem>>, vector<1x1x8x128xf32>
    %75 = vector.shape_cast %74 : vector<1x1x8x128xf32> to vector<8x128xf32>
    %76 = vector.shape_cast %73 : vector<8x128xf32> to vector<1x1x8x128xf32>
    tpu.vector_store %arg2[%c0_66, %c6_67, %c0_68, %c0_69], %76 {strides = array<i32>} : memref<1x8x8x128xf32, #tpu.memory_space<vmem>>, vector<1x1x8x128xf32>,
    %c0_70 = arith.constant 0 : index
    %c14 = arith.constant 14 : index
    %c0_71 = arith.constant 0 : index
    %c0_72 = arith.constant 0 : index
    %77 = vector.load %arg1[%c0_70, %c14, %c0_71, %c0_72] : memref<1x16x8x256xf32, #tpu.memory_space<vmem>>, vector<1x1x8x256xf32>
    %78 = vector.shape_cast %77 : vector<1x1x8x256xf32> to vector<8x256xf32>
    %c0_73 = arith.constant 0 : index
    %c15 = arith.constant 15 : index
    %c0_74 = arith.constant 0 : index
    %c0_75 = arith.constant 0 : index
    %79 = vector.load %arg1[%c0_73, %c15, %c0_74, %c0_75] : memref<1x16x8x256xf32, #tpu.memory_space<vmem>>, vector<1x1x8x256xf32>
    %80 = vector.shape_cast %79 : vector<1x1x8x256xf32> to vector<8x256xf32>
    %81 = arith.maximumf %78, %80 : vector<8x256xf32>
    %82 = vector.extract_strided_slice %81 {offsets = [0, 0], sizes = [8, 128], strides = [1, 1]} : vector<8x256xf32> to vector<8x128xf32>
    %83 = vector.extract_strided_slice %81 {offsets = [0, 128], sizes = [8, 128], strides = [1, 1]} : vector<8x256xf32> to vector<8x128xf32>
    %84 = arith.maximumf %82, %83 : vector<8x128xf32>
    %c0_76 = arith.constant 0 : index
    %c7_77 = arith.constant 7 : index
    %c0_78 = arith.constant 0 : index
    %c0_79 = arith.constant 0 : index
    %85 = vector.load %arg2[%c0_76, %c7_77, %c0_78, %c0_79] : memref<1x8x8x128xf32, #tpu.memory_space<vmem>>, vector<1x1x8x128xf32>
    %86 = vector.shape_cast %85 : vector<1x1x8x128xf32> to vector<8x128xf32>
    %87 = vector.shape_cast %84 : vector<8x128xf32> to vector<1x1x8x128xf32>
    tpu.vector_store %arg2[%c0_76, %c7_77, %c0_78, %c0_79], %87 {strides = array<i32>} : memref<1x8x8x128xf32, #tpu.memory_space<vmem>>, vector<1x1x8x128xf32>,
    return
  }
  func.func @transform_0(%arg0: i32) -> (i32, i32, i32, i32) {
    %c0_i32 = arith.constant 0 : i32
    %c0_i32_0 = arith.constant 0 : i32
    %c0_i32_1 = arith.constant 0 : i32
    %c0_i32_2 = arith.constant 0 : i32
    return %arg0, %c0_i32, %c0_i32_0, %c0_i32_1 : i32, i32, i32, i32
  }
  func.func @transform_1(%arg0: i32) -> (i32, i32, i32, i32) {
    %c0_i32 = arith.constant 0 : i32
    %c0_i32_0 = arith.constant 0 : i32
    %c0_i32_1 = arith.constant 0 : i32
    %c0_i32_2 = arith.constant 0 : i32
    return %arg0, %c0_i32, %c0_i32_0, %c0_i32_1 : i32, i32, i32, i32
  }
}

module attributes {stable_mosaic.version = 11 : i64} {
  func.func @_conv3x3_relu_kernel(%arg0: i32, %arg1: memref<1x10x10x128xf32, #tpu.memory_space<vmem>>, %arg2: memref<9x128x128xf32, #tpu.memory_space<vmem>>, %arg3: memref<1x128xf32, #tpu.memory_space<vmem>>, %arg4: memref<1x64x128xf32, #tpu.memory_space<vmem>>) attributes {dimension_semantics = [#tpu.dimension_semantics<parallel>], iteration_bounds = array<i64: 2>, scalar_prefetch = 0 : i64, scratch_operands = 0 : i64, tpu.core_type = #tpu.core_type<tc>, window_params = [{transform_indices = @transform_0, window_bounds = array<i64: 1, 10, 10, 128>}, {pipeline_mode = #tpu.pipeline_mode<synchronous>, transform_indices = @transform_1, window_bounds = array<i64: 9, 128, 128>}, {pipeline_mode = #tpu.pipeline_mode<synchronous>, transform_indices = @transform_2, window_bounds = array<i64: 1, 128>}, {transform_indices = @transform_3, window_bounds = array<i64: 1, 64, 128>}]} {
    %cst = arith.constant 0.000000e+00 : f32
    %0 = vector.broadcast %cst : f32 to vector<64x128xf32>
    %c0 = arith.constant 0 : index
    %c0_0 = arith.constant 0 : index
    %c0_1 = arith.constant 0 : index
    %c0_2 = arith.constant 0 : index
    %1 = vector.load %arg1[%c0, %c0_0, %c0_1, %c0_2] : memref<1x10x10x128xf32, #tpu.memory_space<vmem>>, vector<1x8x10x128xf32>
    %2 = vector.shape_cast %1 : vector<1x8x10x128xf32> to vector<8x10x128xf32>
    %3 = vector.extract_strided_slice %2 {offsets = [0, 0, 0], sizes = [8, 8, 128], strides = [1, 1, 1]} : vector<8x10x128xf32> to vector<8x8x128xf32>
    %4 = vector.shape_cast %3 : vector<8x8x128xf32> to vector<64x128xf32>
    %c0_3 = arith.constant 0 : index
    %c0_4 = arith.constant 0 : index
    %c0_5 = arith.constant 0 : index
    %5 = vector.load %arg2[%c0_3, %c0_4, %c0_5] : memref<9x128x128xf32, #tpu.memory_space<vmem>>, vector<1x128x128xf32>
    %6 = vector.shape_cast %5 : vector<1x128x128xf32> to vector<128x128xf32>
    %cst_6 = arith.constant dense<0.000000e+00> : vector<64x128xf32>
    %7 = tpu.matmul %4, %6, %cst_6 {dimension_numbers = #tpu.dot_dimension_numbers<[1], [0], [0], [1], [0, 0, 1, 1], [], []>} : vector<64x128xf32>, vector<128x128xf32>, vector<64x128xf32> -> vector<64x128xf32>
    %8 = arith.addf %0, %7 : vector<64x128xf32>
    %9 = vector.extract_strided_slice %2 {offsets = [0, 1, 0], sizes = [8, 8, 128], strides = [1, 1, 1]} : vector<8x10x128xf32> to vector<8x8x128xf32>
    %10 = vector.shape_cast %9 : vector<8x8x128xf32> to vector<64x128xf32>
    %c1 = arith.constant 1 : index
    %c0_7 = arith.constant 0 : index
    %c0_8 = arith.constant 0 : index
    %11 = vector.load %arg2[%c1, %c0_7, %c0_8] : memref<9x128x128xf32, #tpu.memory_space<vmem>>, vector<1x128x128xf32>
    %12 = vector.shape_cast %11 : vector<1x128x128xf32> to vector<128x128xf32>
    %cst_9 = arith.constant dense<0.000000e+00> : vector<64x128xf32>
    %13 = tpu.matmul %10, %12, %cst_9 {dimension_numbers = #tpu.dot_dimension_numbers<[1], [0], [0], [1], [0, 0, 1, 1], [], []>} : vector<64x128xf32>, vector<128x128xf32>, vector<64x128xf32> -> vector<64x128xf32>
    %14 = arith.addf %8, %13 : vector<64x128xf32>
    %15 = vector.extract_strided_slice %2 {offsets = [0, 2, 0], sizes = [8, 8, 128], strides = [1, 1, 1]} : vector<8x10x128xf32> to vector<8x8x128xf32>
    %16 = vector.shape_cast %15 : vector<8x8x128xf32> to vector<64x128xf32>
    %c2 = arith.constant 2 : index
    %c0_10 = arith.constant 0 : index
    %c0_11 = arith.constant 0 : index
    %17 = vector.load %arg2[%c2, %c0_10, %c0_11] : memref<9x128x128xf32, #tpu.memory_space<vmem>>, vector<1x128x128xf32>
    %18 = vector.shape_cast %17 : vector<1x128x128xf32> to vector<128x128xf32>
    %cst_12 = arith.constant dense<0.000000e+00> : vector<64x128xf32>
    %19 = tpu.matmul %16, %18, %cst_12 {dimension_numbers = #tpu.dot_dimension_numbers<[1], [0], [0], [1], [0, 0, 1, 1], [], []>} : vector<64x128xf32>, vector<128x128xf32>, vector<64x128xf32> -> vector<64x128xf32>
    %20 = arith.addf %14, %19 : vector<64x128xf32>
    %c0_13 = arith.constant 0 : index
    %c1_14 = arith.constant 1 : index
    %c0_15 = arith.constant 0 : index
    %c0_16 = arith.constant 0 : index
    %21 = vector.load %arg1[%c0_13, %c1_14, %c0_15, %c0_16] : memref<1x10x10x128xf32, #tpu.memory_space<vmem>>, vector<1x8x10x128xf32>
    %22 = vector.shape_cast %21 : vector<1x8x10x128xf32> to vector<8x10x128xf32>
    %23 = vector.extract_strided_slice %22 {offsets = [0, 0, 0], sizes = [8, 8, 128], strides = [1, 1, 1]} : vector<8x10x128xf32> to vector<8x8x128xf32>
    %24 = vector.shape_cast %23 : vector<8x8x128xf32> to vector<64x128xf32>
    %c3 = arith.constant 3 : index
    %c0_17 = arith.constant 0 : index
    %c0_18 = arith.constant 0 : index
    %25 = vector.load %arg2[%c3, %c0_17, %c0_18] : memref<9x128x128xf32, #tpu.memory_space<vmem>>, vector<1x128x128xf32>
    %26 = vector.shape_cast %25 : vector<1x128x128xf32> to vector<128x128xf32>
    %cst_19 = arith.constant dense<0.000000e+00> : vector<64x128xf32>
    %27 = tpu.matmul %24, %26, %cst_19 {dimension_numbers = #tpu.dot_dimension_numbers<[1], [0], [0], [1], [0, 0, 1, 1], [], []>} : vector<64x128xf32>, vector<128x128xf32>, vector<64x128xf32> -> vector<64x128xf32>
    %28 = arith.addf %20, %27 : vector<64x128xf32>
    %29 = vector.extract_strided_slice %22 {offsets = [0, 1, 0], sizes = [8, 8, 128], strides = [1, 1, 1]} : vector<8x10x128xf32> to vector<8x8x128xf32>
    %30 = vector.shape_cast %29 : vector<8x8x128xf32> to vector<64x128xf32>
    %c4 = arith.constant 4 : index
    %c0_20 = arith.constant 0 : index
    %c0_21 = arith.constant 0 : index
    %31 = vector.load %arg2[%c4, %c0_20, %c0_21] : memref<9x128x128xf32, #tpu.memory_space<vmem>>, vector<1x128x128xf32>
    %32 = vector.shape_cast %31 : vector<1x128x128xf32> to vector<128x128xf32>
    %cst_22 = arith.constant dense<0.000000e+00> : vector<64x128xf32>
    %33 = tpu.matmul %30, %32, %cst_22 {dimension_numbers = #tpu.dot_dimension_numbers<[1], [0], [0], [1], [0, 0, 1, 1], [], []>} : vector<64x128xf32>, vector<128x128xf32>, vector<64x128xf32> -> vector<64x128xf32>
    %34 = arith.addf %28, %33 : vector<64x128xf32>
    %35 = vector.extract_strided_slice %22 {offsets = [0, 2, 0], sizes = [8, 8, 128], strides = [1, 1, 1]} : vector<8x10x128xf32> to vector<8x8x128xf32>
    %36 = vector.shape_cast %35 : vector<8x8x128xf32> to vector<64x128xf32>
    %c5 = arith.constant 5 : index
    %c0_23 = arith.constant 0 : index
    %c0_24 = arith.constant 0 : index
    %37 = vector.load %arg2[%c5, %c0_23, %c0_24] : memref<9x128x128xf32, #tpu.memory_space<vmem>>, vector<1x128x128xf32>
    %38 = vector.shape_cast %37 : vector<1x128x128xf32> to vector<128x128xf32>
    %cst_25 = arith.constant dense<0.000000e+00> : vector<64x128xf32>
    %39 = tpu.matmul %36, %38, %cst_25 {dimension_numbers = #tpu.dot_dimension_numbers<[1], [0], [0], [1], [0, 0, 1, 1], [], []>} : vector<64x128xf32>, vector<128x128xf32>, vector<64x128xf32> -> vector<64x128xf32>
    %40 = arith.addf %34, %39 : vector<64x128xf32>
    %c0_26 = arith.constant 0 : index
    %c2_27 = arith.constant 2 : index
    %c0_28 = arith.constant 0 : index
    %c0_29 = arith.constant 0 : index
    %41 = vector.load %arg1[%c0_26, %c2_27, %c0_28, %c0_29] : memref<1x10x10x128xf32, #tpu.memory_space<vmem>>, vector<1x8x10x128xf32>
    %42 = vector.shape_cast %41 : vector<1x8x10x128xf32> to vector<8x10x128xf32>
    %43 = vector.extract_strided_slice %42 {offsets = [0, 0, 0], sizes = [8, 8, 128], strides = [1, 1, 1]} : vector<8x10x128xf32> to vector<8x8x128xf32>
    %44 = vector.shape_cast %43 : vector<8x8x128xf32> to vector<64x128xf32>
    %c6 = arith.constant 6 : index
    %c0_30 = arith.constant 0 : index
    %c0_31 = arith.constant 0 : index
    %45 = vector.load %arg2[%c6, %c0_30, %c0_31] : memref<9x128x128xf32, #tpu.memory_space<vmem>>, vector<1x128x128xf32>
    %46 = vector.shape_cast %45 : vector<1x128x128xf32> to vector<128x128xf32>
    %cst_32 = arith.constant dense<0.000000e+00> : vector<64x128xf32>
    %47 = tpu.matmul %44, %46, %cst_32 {dimension_numbers = #tpu.dot_dimension_numbers<[1], [0], [0], [1], [0, 0, 1, 1], [], []>} : vector<64x128xf32>, vector<128x128xf32>, vector<64x128xf32> -> vector<64x128xf32>
    %48 = arith.addf %40, %47 : vector<64x128xf32>
    %49 = vector.extract_strided_slice %42 {offsets = [0, 1, 0], sizes = [8, 8, 128], strides = [1, 1, 1]} : vector<8x10x128xf32> to vector<8x8x128xf32>
    %50 = vector.shape_cast %49 : vector<8x8x128xf32> to vector<64x128xf32>
    %c7 = arith.constant 7 : index
    %c0_33 = arith.constant 0 : index
    %c0_34 = arith.constant 0 : index
    %51 = vector.load %arg2[%c7, %c0_33, %c0_34] : memref<9x128x128xf32, #tpu.memory_space<vmem>>, vector<1x128x128xf32>
    %52 = vector.shape_cast %51 : vector<1x128x128xf32> to vector<128x128xf32>
    %cst_35 = arith.constant dense<0.000000e+00> : vector<64x128xf32>
    %53 = tpu.matmul %50, %52, %cst_35 {dimension_numbers = #tpu.dot_dimension_numbers<[1], [0], [0], [1], [0, 0, 1, 1], [], []>} : vector<64x128xf32>, vector<128x128xf32>, vector<64x128xf32> -> vector<64x128xf32>
    %54 = arith.addf %48, %53 : vector<64x128xf32>
    %55 = vector.extract_strided_slice %42 {offsets = [0, 2, 0], sizes = [8, 8, 128], strides = [1, 1, 1]} : vector<8x10x128xf32> to vector<8x8x128xf32>
    %56 = vector.shape_cast %55 : vector<8x8x128xf32> to vector<64x128xf32>
    %c8 = arith.constant 8 : index
    %c0_36 = arith.constant 0 : index
    %c0_37 = arith.constant 0 : index
    %57 = vector.load %arg2[%c8, %c0_36, %c0_37] : memref<9x128x128xf32, #tpu.memory_space<vmem>>, vector<1x128x128xf32>
    %58 = vector.shape_cast %57 : vector<1x128x128xf32> to vector<128x128xf32>
    %cst_38 = arith.constant dense<0.000000e+00> : vector<64x128xf32>
    %59 = tpu.matmul %56, %58, %cst_38 {dimension_numbers = #tpu.dot_dimension_numbers<[1], [0], [0], [1], [0, 0, 1, 1], [], []>} : vector<64x128xf32>, vector<128x128xf32>, vector<64x128xf32> -> vector<64x128xf32>
    %60 = arith.addf %54, %59 : vector<64x128xf32>
    %c0_39 = arith.constant 0 : index
    %c0_40 = arith.constant 0 : index
    %61 = vector.load %arg3[%c0_39, %c0_40] : memref<1x128xf32, #tpu.memory_space<vmem>>, vector<1x128xf32>
    %62 = vector.broadcast %61 : vector<1x128xf32> to vector<64x128xf32>
    %63 = arith.addf %60, %62 : vector<64x128xf32>
    %cst_41 = arith.constant 0.000000e+00 : f32
    %64 = vector.broadcast %cst_41 : f32 to vector<64x128xf32>
    %65 = arith.maximumf %63, %64 : vector<64x128xf32>
    %c0_42 = arith.constant 0 : index
    %c0_43 = arith.constant 0 : index
    %c0_44 = arith.constant 0 : index
    %66 = vector.load %arg4[%c0_42, %c0_43, %c0_44] : memref<1x64x128xf32, #tpu.memory_space<vmem>>, vector<1x64x128xf32>
    %67 = vector.shape_cast %66 : vector<1x64x128xf32> to vector<64x128xf32>
    %68 = vector.shape_cast %65 : vector<64x128xf32> to vector<1x64x128xf32>
    tpu.vector_store %arg4[%c0_42, %c0_43, %c0_44], %68 {strides = array<i32>} : memref<1x64x128xf32, #tpu.memory_space<vmem>>, vector<1x64x128xf32>,
    return
  }
  func.func @transform_0(%arg0: i32) -> (i32, i32, i32, i32) {
    %c0_i32 = arith.constant 0 : i32
    %c0_i32_0 = arith.constant 0 : i32
    %c0_i32_1 = arith.constant 0 : i32
    %c0_i32_2 = arith.constant 0 : i32
    return %arg0, %c0_i32, %c0_i32_0, %c0_i32_1 : i32, i32, i32, i32
  }
  func.func @transform_1(%arg0: i32) -> (i32, i32, i32) {
    %c0_i32 = arith.constant 0 : i32
    %c0_i32_0 = arith.constant 0 : i32
    %c0_i32_1 = arith.constant 0 : i32
    %c0_i32_2 = arith.constant 0 : i32
    return %c0_i32, %c0_i32_0, %c0_i32_1 : i32, i32, i32
  }
  func.func @transform_2(%arg0: i32) -> (i32, i32) {
    %c0_i32 = arith.constant 0 : i32
    %c0_i32_0 = arith.constant 0 : i32
    %c0_i32_1 = arith.constant 0 : i32
    return %c0_i32, %c0_i32_0 : i32, i32
  }
  func.func @transform_3(%arg0: i32) -> (i32, i32, i32) {
    %c0_i32 = arith.constant 0 : i32
    %c0_i32_0 = arith.constant 0 : i32
    %c0_i32_1 = arith.constant 0 : i32
    return %arg0, %c0_i32, %c0_i32_0 : i32, i32, i32
  }
}

module attributes {stable_mosaic.version = 11 : i64} {
  func.func @_maxpool2x2_kernel(%arg0: i32, %arg1: memref<1x8x4x256xf32, #tpu.memory_space<vmem>>, %arg2: memref<1x4x4x128xf32, #tpu.memory_space<vmem>>) attributes {dimension_semantics = [#tpu.dimension_semantics<parallel>], iteration_bounds = array<i64: 2>, scalar_prefetch = 0 : i64, scratch_operands = 0 : i64, tpu.core_type = #tpu.core_type<tc>, window_params = [{transform_indices = @transform_0, window_bounds = array<i64: 1, 8, 4, 256>}, {transform_indices = @transform_1, window_bounds = array<i64: 1, 4, 4, 128>}]} {
    %c0 = arith.constant 0 : index
    %c0_0 = arith.constant 0 : index
    %c0_1 = arith.constant 0 : index
    %c0_2 = arith.constant 0 : index
    %0 = vector.load %arg1[%c0, %c0_0, %c0_1, %c0_2] : memref<1x8x4x256xf32, #tpu.memory_space<vmem>>, vector<1x1x4x256xf32>
    %1 = vector.shape_cast %0 : vector<1x1x4x256xf32> to vector<4x256xf32>
    %c0_3 = arith.constant 0 : index
    %c1 = arith.constant 1 : index
    %c0_4 = arith.constant 0 : index
    %c0_5 = arith.constant 0 : index
    %2 = vector.load %arg1[%c0_3, %c1, %c0_4, %c0_5] : memref<1x8x4x256xf32, #tpu.memory_space<vmem>>, vector<1x1x4x256xf32>
    %3 = vector.shape_cast %2 : vector<1x1x4x256xf32> to vector<4x256xf32>
    %4 = arith.maximumf %1, %3 : vector<4x256xf32>
    %5 = vector.extract_strided_slice %4 {offsets = [0, 0], sizes = [4, 128], strides = [1, 1]} : vector<4x256xf32> to vector<4x128xf32>
    %6 = vector.extract_strided_slice %4 {offsets = [0, 128], sizes = [4, 128], strides = [1, 1]} : vector<4x256xf32> to vector<4x128xf32>
    %7 = arith.maximumf %5, %6 : vector<4x128xf32>
    %c0_6 = arith.constant 0 : index
    %c0_7 = arith.constant 0 : index
    %c0_8 = arith.constant 0 : index
    %c0_9 = arith.constant 0 : index
    %8 = vector.load %arg2[%c0_6, %c0_7, %c0_8, %c0_9] : memref<1x4x4x128xf32, #tpu.memory_space<vmem>>, vector<1x1x4x128xf32>
    %9 = vector.shape_cast %8 : vector<1x1x4x128xf32> to vector<4x128xf32>
    %10 = vector.shape_cast %7 : vector<4x128xf32> to vector<1x1x4x128xf32>
    tpu.vector_store %arg2[%c0_6, %c0_7, %c0_8, %c0_9], %10 {strides = array<i32>} : memref<1x4x4x128xf32, #tpu.memory_space<vmem>>, vector<1x1x4x128xf32>,
    %c0_10 = arith.constant 0 : index
    %c2 = arith.constant 2 : index
    %c0_11 = arith.constant 0 : index
    %c0_12 = arith.constant 0 : index
    %11 = vector.load %arg1[%c0_10, %c2, %c0_11, %c0_12] : memref<1x8x4x256xf32, #tpu.memory_space<vmem>>, vector<1x1x4x256xf32>
    %12 = vector.shape_cast %11 : vector<1x1x4x256xf32> to vector<4x256xf32>
    %c0_13 = arith.constant 0 : index
    %c3 = arith.constant 3 : index
    %c0_14 = arith.constant 0 : index
    %c0_15 = arith.constant 0 : index
    %13 = vector.load %arg1[%c0_13, %c3, %c0_14, %c0_15] : memref<1x8x4x256xf32, #tpu.memory_space<vmem>>, vector<1x1x4x256xf32>
    %14 = vector.shape_cast %13 : vector<1x1x4x256xf32> to vector<4x256xf32>
    %15 = arith.maximumf %12, %14 : vector<4x256xf32>
    %16 = vector.extract_strided_slice %15 {offsets = [0, 0], sizes = [4, 128], strides = [1, 1]} : vector<4x256xf32> to vector<4x128xf32>
    %17 = vector.extract_strided_slice %15 {offsets = [0, 128], sizes = [4, 128], strides = [1, 1]} : vector<4x256xf32> to vector<4x128xf32>
    %18 = arith.maximumf %16, %17 : vector<4x128xf32>
    %c0_16 = arith.constant 0 : index
    %c1_17 = arith.constant 1 : index
    %c0_18 = arith.constant 0 : index
    %c0_19 = arith.constant 0 : index
    %19 = vector.load %arg2[%c0_16, %c1_17, %c0_18, %c0_19] : memref<1x4x4x128xf32, #tpu.memory_space<vmem>>, vector<1x1x4x128xf32>
    %20 = vector.shape_cast %19 : vector<1x1x4x128xf32> to vector<4x128xf32>
    %21 = vector.shape_cast %18 : vector<4x128xf32> to vector<1x1x4x128xf32>
    tpu.vector_store %arg2[%c0_16, %c1_17, %c0_18, %c0_19], %21 {strides = array<i32>} : memref<1x4x4x128xf32, #tpu.memory_space<vmem>>, vector<1x1x4x128xf32>,
    %c0_20 = arith.constant 0 : index
    %c4 = arith.constant 4 : index
    %c0_21 = arith.constant 0 : index
    %c0_22 = arith.constant 0 : index
    %22 = vector.load %arg1[%c0_20, %c4, %c0_21, %c0_22] : memref<1x8x4x256xf32, #tpu.memory_space<vmem>>, vector<1x1x4x256xf32>
    %23 = vector.shape_cast %22 : vector<1x1x4x256xf32> to vector<4x256xf32>
    %c0_23 = arith.constant 0 : index
    %c5 = arith.constant 5 : index
    %c0_24 = arith.constant 0 : index
    %c0_25 = arith.constant 0 : index
    %24 = vector.load %arg1[%c0_23, %c5, %c0_24, %c0_25] : memref<1x8x4x256xf32, #tpu.memory_space<vmem>>, vector<1x1x4x256xf32>
    %25 = vector.shape_cast %24 : vector<1x1x4x256xf32> to vector<4x256xf32>
    %26 = arith.maximumf %23, %25 : vector<4x256xf32>
    %27 = vector.extract_strided_slice %26 {offsets = [0, 0], sizes = [4, 128], strides = [1, 1]} : vector<4x256xf32> to vector<4x128xf32>
    %28 = vector.extract_strided_slice %26 {offsets = [0, 128], sizes = [4, 128], strides = [1, 1]} : vector<4x256xf32> to vector<4x128xf32>
    %29 = arith.maximumf %27, %28 : vector<4x128xf32>
    %c0_26 = arith.constant 0 : index
    %c2_27 = arith.constant 2 : index
    %c0_28 = arith.constant 0 : index
    %c0_29 = arith.constant 0 : index
    %30 = vector.load %arg2[%c0_26, %c2_27, %c0_28, %c0_29] : memref<1x4x4x128xf32, #tpu.memory_space<vmem>>, vector<1x1x4x128xf32>
    %31 = vector.shape_cast %30 : vector<1x1x4x128xf32> to vector<4x128xf32>
    %32 = vector.shape_cast %29 : vector<4x128xf32> to vector<1x1x4x128xf32>
    tpu.vector_store %arg2[%c0_26, %c2_27, %c0_28, %c0_29], %32 {strides = array<i32>} : memref<1x4x4x128xf32, #tpu.memory_space<vmem>>, vector<1x1x4x128xf32>,
    %c0_30 = arith.constant 0 : index
    %c6 = arith.constant 6 : index
    %c0_31 = arith.constant 0 : index
    %c0_32 = arith.constant 0 : index
    %33 = vector.load %arg1[%c0_30, %c6, %c0_31, %c0_32] : memref<1x8x4x256xf32, #tpu.memory_space<vmem>>, vector<1x1x4x256xf32>
    %34 = vector.shape_cast %33 : vector<1x1x4x256xf32> to vector<4x256xf32>
    %c0_33 = arith.constant 0 : index
    %c7 = arith.constant 7 : index
    %c0_34 = arith.constant 0 : index
    %c0_35 = arith.constant 0 : index
    %35 = vector.load %arg1[%c0_33, %c7, %c0_34, %c0_35] : memref<1x8x4x256xf32, #tpu.memory_space<vmem>>, vector<1x1x4x256xf32>
    %36 = vector.shape_cast %35 : vector<1x1x4x256xf32> to vector<4x256xf32>
    %37 = arith.maximumf %34, %36 : vector<4x256xf32>
    %38 = vector.extract_strided_slice %37 {offsets = [0, 0], sizes = [4, 128], strides = [1, 1]} : vector<4x256xf32> to vector<4x128xf32>
    %39 = vector.extract_strided_slice %37 {offsets = [0, 128], sizes = [4, 128], strides = [1, 1]} : vector<4x256xf32> to vector<4x128xf32>
    %40 = arith.maximumf %38, %39 : vector<4x128xf32>
    %c0_36 = arith.constant 0 : index
    %c3_37 = arith.constant 3 : index
    %c0_38 = arith.constant 0 : index
    %c0_39 = arith.constant 0 : index
    %41 = vector.load %arg2[%c0_36, %c3_37, %c0_38, %c0_39] : memref<1x4x4x128xf32, #tpu.memory_space<vmem>>, vector<1x1x4x128xf32>
    %42 = vector.shape_cast %41 : vector<1x1x4x128xf32> to vector<4x128xf32>
    %43 = vector.shape_cast %40 : vector<4x128xf32> to vector<1x1x4x128xf32>
    tpu.vector_store %arg2[%c0_36, %c3_37, %c0_38, %c0_39], %43 {strides = array<i32>} : memref<1x4x4x128xf32, #tpu.memory_space<vmem>>, vector<1x1x4x128xf32>,
    return
  }
  func.func @transform_0(%arg0: i32) -> (i32, i32, i32, i32) {
    %c0_i32 = arith.constant 0 : i32
    %c0_i32_0 = arith.constant 0 : i32
    %c0_i32_1 = arith.constant 0 : i32
    %c0_i32_2 = arith.constant 0 : i32
    return %arg0, %c0_i32, %c0_i32_0, %c0_i32_1 : i32, i32, i32, i32
  }
  func.func @transform_1(%arg0: i32) -> (i32, i32, i32, i32) {
    %c0_i32 = arith.constant 0 : i32
    %c0_i32_0 = arith.constant 0 : i32
    %c0_i32_1 = arith.constant 0 : i32
    %c0_i32_2 = arith.constant 0 : i32
    return %arg0, %c0_i32, %c0_i32_0, %c0_i32_1 : i32, i32, i32, i32
  }
}

module attributes {stable_mosaic.version = 11 : i64} {
  func.func @_linear_kernel(%arg0: i32, %arg1: memref<2x2048xf32, #tpu.memory_space<vmem>>, %arg2: memref<2048x128xf32, #tpu.memory_space<vmem>>, %arg3: memref<1x128xf32, #tpu.memory_space<vmem>>, %arg4: memref<2x128xf32, #tpu.memory_space<vmem>>) attributes {dimension_semantics = [#tpu.dimension_semantics<arbitrary>], iteration_bounds = array<i64: 1>, scalar_prefetch = 0 : i64, scratch_operands = 0 : i64, tpu.core_type = #tpu.core_type<tc>, window_params = [{pipeline_mode = #tpu.pipeline_mode<synchronous>, transform_indices = @transform_0, window_bounds = array<i64: 2, 2048>}, {pipeline_mode = #tpu.pipeline_mode<synchronous>, transform_indices = @transform_1, window_bounds = array<i64: 2048, 128>}, {pipeline_mode = #tpu.pipeline_mode<synchronous>, transform_indices = @transform_2, window_bounds = array<i64: 1, 128>}, {pipeline_mode = #tpu.pipeline_mode<synchronous>, transform_indices = @transform_3, window_bounds = array<i64: 2, 128>}]} {
    %c0 = arith.constant 0 : index
    %c0_0 = arith.constant 0 : index
    %0 = vector.load %arg1[%c0, %c0_0] : memref<2x2048xf32, #tpu.memory_space<vmem>>, vector<2x2048xf32>
    %c0_1 = arith.constant 0 : index
    %c0_2 = arith.constant 0 : index
    %1 = vector.load %arg2[%c0_1, %c0_2] : memref<2048x128xf32, #tpu.memory_space<vmem>>, vector<2048x128xf32>
    %cst = arith.constant dense<0.000000e+00> : vector<2x128xf32>
    %2 = tpu.matmul %0, %1, %cst {dimension_numbers = #tpu.dot_dimension_numbers<[1], [0], [0], [1], [0, 0, 1, 1], [], []>} : vector<2x2048xf32>, vector<2048x128xf32>, vector<2x128xf32> -> vector<2x128xf32>
    %c0_3 = arith.constant 0 : index
    %c0_4 = arith.constant 0 : index
    %3 = vector.load %arg3[%c0_3, %c0_4] : memref<1x128xf32, #tpu.memory_space<vmem>>, vector<1x128xf32>
    %4 = vector.broadcast %3 : vector<1x128xf32> to vector<2x128xf32>
    %5 = arith.addf %2, %4 : vector<2x128xf32>
    %c0_5 = arith.constant 0 : index
    %c0_6 = arith.constant 0 : index
    %6 = vector.load %arg4[%c0_5, %c0_6] : memref<2x128xf32, #tpu.memory_space<vmem>>, vector<2x128xf32>
    tpu.vector_store %arg4[%c0_5, %c0_6], %5 {strides = array<i32>} : memref<2x128xf32, #tpu.memory_space<vmem>>, vector<2x128xf32>,
    return
  }
  func.func @transform_0(%arg0: i32) -> (i32, i32) {
    %c0_i32 = arith.constant 0 : i32
    %c0_i32_0 = arith.constant 0 : i32
    %c0_i32_1 = arith.constant 0 : i32
    return %c0_i32, %c0_i32_0 : i32, i32
  }
  func.func @transform_1(%arg0: i32) -> (i32, i32) {
    %c0_i32 = arith.constant 0 : i32
    %c0_i32_0 = arith.constant 0 : i32
    %c0_i32_1 = arith.constant 0 : i32
    return %c0_i32, %c0_i32_0 : i32, i32
  }
  func.func @transform_2(%arg0: i32) -> (i32, i32) {
    %c0_i32 = arith.constant 0 : i32
    %c0_i32_0 = arith.constant 0 : i32
    %c0_i32_1 = arith.constant 0 : i32
    return %c0_i32, %c0_i32_0 : i32, i32
  }
  func.func @transform_3(%arg0: i32) -> (i32, i32) {
    %c0_i32 = arith.constant 0 : i32
    %c0_i32_0 = arith.constant 0 : i32
    %c0_i32_1 = arith.constant 0 : i32
    return %c0_i32, %c0_i32_0 : i32, i32
  }
}

</mosaic_0001>

<llo_original>
// kernel: net_forward.9
$region0: #{net_forward.9}
  #allocation0 [shape = 'u32[]', space=smem, size = 0x4, offset = 0x4, fixed_abs, tag = 'smem constant byte address 0x4 - core index']
  #allocation1 [shape = 'u32[144,128]{1,0:T(1,128)}', space=vmem, size = 0x12000, scoped, tag = 'internal scratch']
  %s0 = inlined_call_operand.vmem [shape: f32[2,16,8,256], index: 0, kind: input, shape index: {}]
  %s1 = inlined_call_operand.vmem [shape: f32[2,8,8,128], index: 1, kind: output, shape index: {}]
  %s2 = sld [smem:[#allocation0]]
  $region37: #{net_forward.9} parent=0
    _
  %s4 = ssub.s32 1, %s2
  %s5 = scalar_select 0, %s4, %s2
  loop: start=0, step=1, limit=4
  $region2: #{net_forward.9} parent=0 // loop_pre_header
    _
  $region3: #{net_forward.9} parent=0 // loop_header
    %s7 = sphi 0, %s11
    %p8 = scmp.ge.s32.totalorder %s7, 4
    %s17 = sphi 0, %s19
    %s20 = sphi 0, %s17
    %s21 = sphi 0, %s20
    %s37 = sphi 0, %s21
    %s43 = sphi 0, %s45
    %s46 = sphi 0, %s43
    %s47 = sphi 0, %s46
    %s63 = sphi 0, %s47
  $region4: #{net_forward.9} parent=0 // loop_header_branch
    %10 = sbr.rel (%p8) target = $region8
  $region5: #{net_forward.9} parent=0 // loop_body
    %s12 = ssub.s32 %s7, 1
    %s13 = ssub.s32 %s7, 2
    %s14 = sadd.s32 %s7, 1
    %s15 = ssub.s32 %s7, %s14
    %p16 = scmp.eq.s32.totalorder %s15, 0
    %s18 = sadd.s32 %s17, 1
    %s19 = scalar_select %p16, %s17, %s18
    %p22 = pneg %p16
    %p23 = scmp.eq.s32.totalorder %s7, 1
    %p24 = por %p22, %p23
    %p25 = scmp.ne.s32.totalorder %s17, %s20
    %p26 = scmp.eq.s32.totalorder %s7, 0
    %p27 = por %p25, %p26
    %p28 = scmp.ne.s32.totalorder %s17, %s20
    %p29 = scmp.eq.s32.totalorder %s12, 1
    %p30 = por %p28, %p29
    %p31 = scmp.ne.s32.totalorder %s20, %s21
    %p32 = scmp.eq.s32.totalorder %s12, 0
    %p33 = por %p31, %p32
    %p34 = scmp.ne.s32.totalorder %s20, %s21
    %p35 = scmp.eq.s32.totalorder %s13, 1
    %p36 = por %p34, %p35
    %p38 = scmp.ne.s32.totalorder %s21, %s37
    %p39 = scmp.eq.s32.totalorder %s13, 0
    %p40 = por %p38, %p39
    %s41 = ssub.s32 %s7, %s14
    %p42 = scmp.eq.s32.totalorder %s41, 0
    %s44 = sadd.s32 %s43, 1
    %s45 = scalar_select %p42, %s43, %s44
    %p48 = pneg %p42
    %p49 = scmp.eq.s32.totalorder %s7, 1
    %p50 = por %p48, %p49
    %p51 = scmp.ne.s32.totalorder %s43, %s46
    %p52 = scmp.eq.s32.totalorder %s7, 0
    %p53 = por %p51, %p52
    %p54 = scmp.ne.s32.totalorder %s43, %s46
    %p55 = scmp.eq.s32.totalorder %s12, 1
    %p56 = por %p54, %p55
    %p57 = scmp.ne.s32.totalorder %s46, %s47
    %p58 = scmp.eq.s32.totalorder %s12, 0
    %p59 = por %p57, %p58
    %p60 = scmp.ne.s32.totalorder %s46, %s47
    %p61 = scmp.eq.s32.totalorder %s13, 1
    %p62 = por %p60, %p61
    %p64 = scmp.ne.s32.totalorder %s47, %s63
    %p65 = scmp.eq.s32.totalorder %s13, 0
    %p66 = por %p64, %p65
    %p67 = scmp.le.s32.totalorder 1, %s7
    %p68 = scmp.lt.s32.totalorder %s7, 3
    %p69 = pnand %p67, %p68
    %p70 = pneg %p69
    // Predicated region
    $region9: #{net_forward.9} parent=5 // pred_check
      _
    $region10: #{net_forward.9} parent=5 // pred_check_branch
      %72 = sbr.rel (%p69) target = $region12
    $region11: #{net_forward.9} parent=5 // pred_region
      %s73 = ssub.s32 %s7, 1
    $region12: #{net_forward.9} parent=5 // pred_fallthru
      _
    %p74 = scmp.lt.s32.totalorder %s7, 2
    // Predicated region
    $region13: #{net_forward.9} parent=5 // pred_check
      %p75 = pneg %p74
    $region14: #{net_forward.9} parent=5 // pred_check_branch
      %77 = sbr.rel (%p75) target = $region16
    $region15: #{net_forward.9} parent=5 // pred_region
      // Predicated region
      $region17: #{net_forward.9} parent=15 // pred_check
        %p78 = pneg %p27
      $region18: #{net_forward.9} parent=15 // pred_check_branch
        %80 = sbr.rel (%p78) target = $region20
      $region19: #{net_forward.9} parent=15 // pred_region
        %p81 = scmp.lt.s32.totalorder %s7, 1
        %s82 = scalar_select %p81, %s7, 1
        %s83 = smul.addr %s82, 32
        %s84 = smul.addr %s83, 8
        %s85 = scalar_lea.vmem %s0, %s84
      $region20: #{net_forward.9} parent=15 // pred_fallthru
        _
    $region16: #{net_forward.9} parent=5 // pred_fallthru
      _
    %p86 = scmp.le.s32.totalorder 1, %s7
    %p87 = scmp.lt.s32.totalorder %s7, 3
    %p88 = pnand %p86, %p87
    %p89 = pneg %p88
    // Predicated region
    $region21: #{net_forward.9} parent=5 // pred_check
      _
    $region22: #{net_forward.9} parent=5 // pred_check_branch
      %91 = sbr.rel (%p88) target = $region24
    $region23: #{net_forward.9} parent=5 // pred_region
      %s92 = ssub.s32 %s7, 1
      %p93 = scmp.lt.s32.totalorder %s12, 1
      %s94 = scalar_select %p93, %s12, 1
      %s95 = smul.addr %s94, 32
      %s96 = smul.addr %s95, 8
      %s97 = scalar_lea.vmem %s0, %s96
      %p98 = pneg %p33
      %p99 = pneg %p30
      %p100 = pneg %p59
      %p101 = pneg %p56
      %p102 = scmp.lt.s32.totalorder %s12, 1
      %s103 = scalar_select %p102, %s12, 1
      %s104 = smul.addr %s103, 8
      %s105 = smul.addr %s104, 8
      %s106 = scalar_lea.vmem %s1, %s105
      %p107 = scmp.lt.s32.totalorder %s12, 1
      %s108 = scalar_select %p107, %s12, 1
      %s109 = smul.addr %s108, 32
      %s110 = smul.addr %s109, 8
      %s111 = scalar_lea.vmem %s0, %s110
      %p112 = scmp.lt.s32.totalorder %s12, 1
      %s113 = scalar_select %p112, %s12, 1
      %s114 = smul.addr %s113, 8
      %s115 = smul.addr %s114, 8
      %s116 = scalar_lea.vmem %s1, %s115
      %v117 = vld [vmem:[%s111] sm:$0xff]
      %v118 = vld [vmem:[%s111 + $0x8] sm:$0xff]
      %s119 = scalar_lea.vmem %s111, 16
      %v120 = vld [vmem:[%s119] sm:$0xff]
      %v121 = vld [vmem:[%s119 + $0x8] sm:$0xff]
      %v122 = vmax.f32 %v117, %v120
      %v123 = vmax.f32 %v118, %v121
      %v124 = vmax.f32 %v122, %v123
      %125 = vst [vmem:[%s116] sm:$0xff] %v124
      %s126 = scalar_lea.vmem %s111, 32
      %v127 = vld [vmem:[%s126] sm:$0xff]
      %v128 = vld [vmem:[%s126 + $0x8] sm:$0xff]
      %s129 = scalar_lea.vmem %s111, 48
      %v130 = vld [vmem:[%s129] sm:$0xff]
      %v131 = vld [vmem:[%s129 + $0x8] sm:$0xff]
      %v132 = vmax.f32 %v127, %v130
      %v133 = vmax.f32 %v128, %v131
      %v134 = vmax.f32 %v132, %v133
      %s135 = scalar_lea.vmem %s116, 8
      %136 = vst [vmem:[%s135] sm:$0xff] %v134
      %s137 = scalar_lea.vmem %s111, 64
      %v138 = vld [vmem:[%s137] sm:$0xff]
      %v139 = vld [vmem:[%s137 + $0x8] sm:$0xff]
      %s140 = scalar_lea.vmem %s111, 80
      %v141 = vld [vmem:[%s140] sm:$0xff]
      %v142 = vld [vmem:[%s140 + $0x8] sm:$0xff]
      %v143 = vmax.f32 %v138, %v141
      %v144 = vmax.f32 %v139, %v142
      %v145 = vmax.f32 %v143, %v144
      %s146 = scalar_lea.vmem %s116, 16
      %147 = vst [vmem:[%s146] sm:$0xff] %v145
      %s148 = scalar_lea.vmem %s111, 96
      %v149 = vld [vmem:[%s148] sm:$0xff]
      %v150 = vld [vmem:[%s148 + $0x8] sm:$0xff]
      %s151 = scalar_lea.vmem %s111, 112
      %v152 = vld [vmem:[%s151] sm:$0xff]
      %v153 = vld [vmem:[%s151 + $0x8] sm:$0xff]
      %v154 = vmax.f32 %v149, %v152
      %v155 = vmax.f32 %v150, %v153
      %v156 = vmax.f32 %v154, %v155
      %s157 = scalar_lea.vmem %s116, 24
      %158 = vst [vmem:[%s157] sm:$0xff] %v156
      %s159 = scalar_lea.vmem %s111, 128
      %v160 = vld [vmem:[%s159] sm:$0xff]
      %v161 = vld [vmem:[%s159 + $0x8] sm:$0xff]
      %s162 = scalar_lea.vmem %s111, 144
      %v163 = vld [vmem:[%s162] sm:$0xff]
      %v164 = vld [vmem:[%s162 + $0x8] sm:$0xff]
      %v165 = vmax.f32 %v160, %v163
      %v166 = vmax.f32 %v161, %v164
      %v167 = vmax.f32 %v165, %v166
      %s168 = scalar_lea.vmem %s116, 32
      %169 = vst [vmem:[%s168] sm:$0xff] %v167
      %s170 = scalar_lea.vmem %s111, 160
      %v171 = vld [vmem:[%s170] sm:$0xff]
      %v172 = vld [vmem:[%s170 + $0x8] sm:$0xff]
      %s173 = scalar_lea.vmem %s111, 176
      %v174 = vld [vmem:[%s173] sm:$0xff]
      %v175 = vld [vmem:[%s173 + $0x8] sm:$0xff]
      %v176 = vmax.f32 %v171, %v174
      %v177 = vmax.f32 %v172, %v175
      %v178 = vmax.f32 %v176, %v177
      %s179 = scalar_lea.vmem %s116, 40
      %180 = vst [vmem:[%s179] sm:$0xff] %v178
      %s181 = scalar_lea.vmem %s111, 192
      %v182 = vld [vmem:[%s181] sm:$0xff]
      %v183 = vld [vmem:[%s181 + $0x8] sm:$0xff]
      %s184 = scalar_lea.vmem %s111, 208
      %v185 = vld [vmem:[%s184] sm:$0xff]
      %v186 = vld [vmem:[%s184 + $0x8] sm:$0xff]
      %v187 = vmax.f32 %v182, %v185
      %v188 = vmax.f32 %v183, %v186
      %v189 = vmax.f32 %v187, %v188
      %s190 = scalar_lea.vmem %s116, 48
      %191 = vst [vmem:[%s190] sm:$0xff] %v189
      %s192 = scalar_lea.vmem %s111, 224
      %v193 = vld [vmem:[%s192] sm:$0xff]
      %v194 = vld [vmem:[%s192 + $0x8] sm:$0xff]
      %s195 = scalar_lea.vmem %s111, 240
      %v196 = vld [vmem:[%s195] sm:$0xff]
      %v197 = vld [vmem:[%s195 + $0x8] sm:$0xff]
      %v198 = vmax.f32 %v193, %v196
      %v199 = vmax.f32 %v194, %v197
      %v200 = vmax.f32 %v198, %v199
      %s201 = scalar_lea.vmem %s116, 56
      %202 = vst [vmem:[%s201] sm:$0xff] %v200
      %p203 = scmp.lt.s32.totalorder %s12, 1
      %s204 = scalar_select %p203, %s12, 1
      %s205 = smul.addr %s204, 8
      %s206 = smul.addr %s205, 8
      %s207 = scalar_lea.vmem %s1, %s206
      // Predicated region
      $region25: #{net_forward.9} parent=23 // pred_check
        %p208 = pneg %p56
      $region26: #{net_forward.9} parent=23 // pred_check_branch
        %210 = sbr.rel (%p208) target = $region28
      $region27: #{net_forward.9} parent=23 // pred_region
        _
      $region28: #{net_forward.9} parent=23 // pred_fallthru
        _
    $region24: #{net_forward.9} parent=5 // pred_fallthru
      _
    %p211 = scmp.le.s32.totalorder 2, %s7
    // Predicated region
    $region29: #{net_forward.9} parent=5 // pred_check
      %p212 = pneg %p211
    $region30: #{net_forward.9} parent=5 // pred_check_branch
      %214 = sbr.rel (%p212) target = $region32
    $region31: #{net_forward.9} parent=5 // pred_region
      %s215 = ssub.s32 %s7, 2
      // Predicated region
      $region33: #{net_forward.9} parent=31 // pred_check
        %p216 = pneg %p62
      $region34: #{net_forward.9} parent=31 // pred_check_branch
        %218 = sbr.rel (%p216) target = $region36
      $region35: #{net_forward.9} parent=31 // pred_region
        %p219 = scmp.lt.s32.totalorder %s13, 1
        %s220 = scalar_select %p219, %s13, 1
        %s221 = smul.addr %s220, 8
        %s222 = smul.addr %s221, 8
        %s223 = scalar_lea.vmem %s1, %s222
      $region36: #{net_forward.9} parent=31 // pred_fallthru
        _
    $region32: #{net_forward.9} parent=5 // pred_fallthru
      _
  $region6: #{net_forward.9} parent=0 // loop_footer
    %s11 = sadd.s32 1, %s7
  $region7: #{net_forward.9} parent=0 // loop_footer_branch
    %6 = sbr.rel target = $region3
  $region8: #{net_forward.9} parent=0 // loop_exit
    _

// kernel: net_forward.12
$region0: #{net_forward.12}
  #allocation0 [shape = 'u32[]', space=smem, size = 0x4, offset = 0x4, fixed_abs, tag = 'smem constant byte address 0x4 - core index']
  #allocation1 [shape = 'u32[144,128]{1,0:T(1,128)}', space=vmem, size = 0x12000, scoped, tag = 'internal scratch']
  %s0 = inlined_call_operand.vmem [shape: f32[2,8,4,256], index: 0, kind: input, shape index: {}]
  %s1 = inlined_call_operand.vmem [shape: f32[2,4,4,128], index: 1, kind: output, shape index: {}]
  %s2 = sld [smem:[#allocation0]]
  $region37: #{net_forward.12} parent=0
    _
  %s4 = ssub.s32 1, %s2
  %s5 = scalar_select 0, %s4, %s2
  loop: start=0, step=1, limit=4
  $region2: #{net_forward.12} parent=0 // loop_pre_header
    _
  $region3: #{net_forward.12} parent=0 // loop_header
    %s7 = sphi 0, %s11
    %p8 = scmp.ge.s32.totalorder %s7, 4
    %s17 = sphi 0, %s19
    %s20 = sphi 0, %s17
    %s21 = sphi 0, %s20
    %s37 = sphi 0, %s21
    %s43 = sphi 0, %s45
    %s46 = sphi 0, %s43
    %s47 = sphi 0, %s46
    %s63 = sphi 0, %s47
  $region4: #{net_forward.12} parent=0 // loop_header_branch
    %10 = sbr.rel (%p8) target = $region8
  $region5: #{net_forward.12} parent=0 // loop_body
    %s12 = ssub.s32 %s7, 1
    %s13 = ssub.s32 %s7, 2
    %s14 = sadd.s32 %s7, 1
    %s15 = ssub.s32 %s7, %s14
    %p16 = scmp.eq.s32.totalorder %s15, 0
    %s18 = sadd.s32 %s17, 1
    %s19 = scalar_select %p16, %s17, %s18
    %p22 = pneg %p16
    %p23 = scmp.eq.s32.totalorder %s7, 1
    %p24 = por %p22, %p23
    %p25 = scmp.ne.s32.totalorder %s17, %s20
    %p26 = scmp.eq.s32.totalorder %s7, 0
    %p27 = por %p25, %p26
    %p28 = scmp.ne.s32.totalorder %s17, %s20
    %p29 = scmp.eq.s32.totalorder %s12, 1
    %p30 = por %p28, %p29
    %p31 = scmp.ne.s32.totalorder %s20, %s21
    %p32 = scmp.eq.s32.totalorder %s12, 0
    %p33 = por %p31, %p32
    %p34 = scmp.ne.s32.totalorder %s20, %s21
    %p35 = scmp.eq.s32.totalorder %s13, 1
    %p36 = por %p34, %p35
    %p38 = scmp.ne.s32.totalorder %s21, %s37
    %p39 = scmp.eq.s32.totalorder %s13, 0
    %p40 = por %p38, %p39
    %s41 = ssub.s32 %s7, %s14
    %p42 = scmp.eq.s32.totalorder %s41, 0
    %s44 = sadd.s32 %s43, 1
    %s45 = scalar_select %p42, %s43, %s44
    %p48 = pneg %p42
    %p49 = scmp.eq.s32.totalorder %s7, 1
    %p50 = por %p48, %p49
    %p51 = scmp.ne.s32.totalorder %s43, %s46
    %p52 = scmp.eq.s32.totalorder %s7, 0
    %p53 = por %p51, %p52
    %p54 = scmp.ne.s32.totalorder %s43, %s46
    %p55 = scmp.eq.s32.totalorder %s12, 1
    %p56 = por %p54, %p55
    %p57 = scmp.ne.s32.totalorder %s46, %s47
    %p58 = scmp.eq.s32.totalorder %s12, 0
    %p59 = por %p57, %p58
    %p60 = scmp.ne.s32.totalorder %s46, %s47
    %p61 = scmp.eq.s32.totalorder %s13, 1
    %p62 = por %p60, %p61
    %p64 = scmp.ne.s32.totalorder %s47, %s63
    %p65 = scmp.eq.s32.totalorder %s13, 0
    %p66 = por %p64, %p65
    %p67 = scmp.le.s32.totalorder 1, %s7
    %p68 = scmp.lt.s32.totalorder %s7, 3
    %p69 = pnand %p67, %p68
    %p70 = pneg %p69
    // Predicated region
    $region9: #{net_forward.12} parent=5 // pred_check
      _
    $region10: #{net_forward.12} parent=5 // pred_check_branch
      %72 = sbr.rel (%p69) target = $region12
    $region11: #{net_forward.12} parent=5 // pred_region
      %s73 = ssub.s32 %s7, 1
    $region12: #{net_forward.12} parent=5 // pred_fallthru
      _
    %p74 = scmp.lt.s32.totalorder %s7, 2
    // Predicated region
    $region13: #{net_forward.12} parent=5 // pred_check
      %p75 = pneg %p74
    $region14: #{net_forward.12} parent=5 // pred_check_branch
      %77 = sbr.rel (%p75) target = $region16
    $region15: #{net_forward.12} parent=5 // pred_region
      // Predicated region
      $region17: #{net_forward.12} parent=15 // pred_check
        %p78 = pneg %p27
      $region18: #{net_forward.12} parent=15 // pred_check_branch
        %80 = sbr.rel (%p78) target = $region20
      $region19: #{net_forward.12} parent=15 // pred_region
        %p81 = scmp.lt.s32.totalorder %s7, 1
        %s82 = scalar_select %p81, %s7, 1
        %s83 = smul.addr %s82, 16
        %s84 = smul.addr %s83, 4
        %s85 = scalar_lea.vmem %s0, %s84
      $region20: #{net_forward.12} parent=15 // pred_fallthru
        _
    $region16: #{net_forward.12} parent=5 // pred_fallthru
      _
    %p86 = scmp.le.s32.totalorder 1, %s7
    %p87 = scmp.lt.s32.totalorder %s7, 3
    %p88 = pnand %p86, %p87
    %p89 = pneg %p88
    // Predicated region
    $region21: #{net_forward.12} parent=5 // pred_check
      _
    $region22: #{net_forward.12} parent=5 // pred_check_branch
      %91 = sbr.rel (%p88) target = $region24
    $region23: #{net_forward.12} parent=5 // pred_region
      %s92 = ssub.s32 %s7, 1
      %p93 = scmp.lt.s32.totalorder %s12, 1
      %s94 = scalar_select %p93, %s12, 1
      %s95 = smul.addr %s94, 16
      %s96 = smul.addr %s95, 4
      %s97 = scalar_lea.vmem %s0, %s96
      %p98 = pneg %p33
      %p99 = pneg %p30
      %p100 = pneg %p59
      %p101 = pneg %p56
      %p102 = scmp.lt.s32.totalorder %s12, 1
      %s103 = scalar_select %p102, %s12, 1
      %s104 = smul.addr %s103, 4
      %s105 = smul.addr %s104, 4
      %s106 = scalar_lea.vmem %s1, %s105
      %p107 = scmp.lt.s32.totalorder %s12, 1
      %s108 = scalar_select %p107, %s12, 1
      %s109 = smul.addr %s108, 16
      %s110 = smul.addr %s109, 4
      %s111 = scalar_lea.vmem %s0, %s110
      %p112 = scmp.lt.s32.totalorder %s12, 1
      %s113 = scalar_select %p112, %s12, 1
      %s114 = smul.addr %s113, 4
      %s115 = smul.addr %s114, 4
      %s116 = scalar_lea.vmem %s1, %s115
      %v117 = vld [vmem:[%s111] sm:$0xff]
      %s118 = scalar_lea.vmem %s111, 8
      %v119 = vld [vmem:[%s118] sm:$0xff]
      %v120 = vmax.f32 %v117, %v119
      %v122 = vrot.slane %v120, 4
      %v124 = vmax.f32 %v120, %v122
      %125 = vst [vmem:[%s116] sm:$0xf] %v124
      %s126 = scalar_lea.vmem %s111, 16
      %v127 = vld [vmem:[%s126] sm:$0xff]
      %s128 = scalar_lea.vmem %s111, 24
      %v129 = vld [vmem:[%s128] sm:$0xff]
      %v130 = vmax.f32 %v127, %v129
      %v132 = vrot.slane %v130, 4
      %v134 = vmax.f32 %v130, %v132
      %s135 = scalar_lea.vmem %s116, 4
      %136 = vst [vmem:[%s135] sm:$0xf] %v134
      %s137 = scalar_lea.vmem %s111, 32
      %v138 = vld [vmem:[%s137] sm:$0xff]
      %s139 = scalar_lea.vmem %s111, 40
      %v140 = vld [vmem:[%s139] sm:$0xff]
      %v141 = vmax.f32 %v138, %v140
      %v143 = vrot.slane %v141, 4
      %v145 = vmax.f32 %v141, %v143
      %s146 = scalar_lea.vmem %s116, 8
      %147 = vst [vmem:[%s146] sm:$0xf] %v145
      %s148 = scalar_lea.vmem %s111, 48
      %v149 = vld [vmem:[%s148] sm:$0xff]
      %s150 = scalar_lea.vmem %s111, 56
      %v151 = vld [vmem:[%s150] sm:$0xff]
      %v152 = vmax.f32 %v149, %v151
      %v154 = vrot.slane %v152, 4
      %v156 = vmax.f32 %v152, %v154
      %s157 = scalar_lea.vmem %s116, 12
      %158 = vst [vmem:[%s157] sm:$0xf] %v156
      %p159 = scmp.lt.s32.totalorder %s12, 1
      %s160 = scalar_select %p159, %s12, 1
      %s161 = smul.addr %s160, 4
      %s162 = smul.addr %s161, 4
      %s163 = scalar_lea.vmem %s1, %s162
      // Predicated region
      $region25: #{net_forward.12} parent=23 // pred_check
        %p164 = pneg %p56
      $region26: #{net_forward.12} parent=23 // pred_check_branch
        %166 = sbr.rel (%p164) target = $region28
      $region27: #{net_forward.12} parent=23 // pred_region
        _
      $region28: #{net_forward.12} parent=23 // pred_fallthru
        _
    $region24: #{net_forward.12} parent=5 // pred_fallthru
      _
    %p167 = scmp.le.s32.totalorder 2, %s7
    // Predicated region
    $region29: #{net_forward.12} parent=5 // pred_check
      %p168 = pneg %p167
    $region30: #{net_forward.12} parent=5 // pred_check_branch
      %170 = sbr.rel (%p168) target = $region32
    $region31: #{net_forward.12} parent=5 // pred_region
      %s171 = ssub.s32 %s7, 2
      // Predicated region
      $region33: #{net_forward.12} parent=31 // pred_check
        %p172 = pneg %p62
      $region34: #{net_forward.12} parent=31 // pred_check_branch
        %174 = sbr.rel (%p172) target = $region36
      $region35: #{net_forward.12} parent=31 // pred_region
        %p175 = scmp.lt.s32.totalorder %s13, 1
        %s176 = scalar_select %p175, %s13, 1
        %s177 = smul.addr %s176, 4
        %s178 = smul.addr %s177, 4
        %s179 = scalar_lea.vmem %s1, %s178
      $region36: #{net_forward.12} parent=31 // pred_fallthru
        _
    $region32: #{net_forward.12} parent=5 // pred_fallthru
      _
  $region6: #{net_forward.12} parent=0 // loop_footer
    %s11 = sadd.s32 1, %s7
  $region7: #{net_forward.12} parent=0 // loop_footer_branch
    %6 = sbr.rel target = $region3
  $region8: #{net_forward.12} parent=0 // loop_exit
    _

// kernel: net_forward.8
$region0: #{net_forward.8}
  #allocation0 [shape = 'u32[]', space=smem, size = 0x4, offset = 0x4, fixed_abs, tag = 'smem constant byte address 0x4 - core index']
  #allocation1 [shape = 'u32[144,128]{1,0:T(1,128)}', space=vmem, size = 0x12000, scoped, tag = 'internal scratch']
  %s0 = inlined_call_operand.vmem [shape: f32[2,18,18,128], index: 0, kind: input, shape index: {}]
  %s1 = inlined_call_operand.vmem [shape: f32[9,128,128], index: 1, kind: input, shape index: {}]
  %s2 = inlined_call_operand.vmem [shape: f32[1,128], index: 2, kind: input, shape index: {}]
  %s3 = inlined_call_operand.vmem [shape: f32[2,256,128], index: 3, kind: output, shape index: {}]
  %s4 = sld [smem:[#allocation0]]
  $region45: #{net_forward.8} parent=0
    _
  %s6 = ssub.s32 1, %s4
  %s7 = scalar_select 0, %s6, %s4
  loop: start=0, step=1, limit=4
  $region2: #{net_forward.8} parent=0 // loop_pre_header
    _
  $region3: #{net_forward.8} parent=0 // loop_header
    %s9 = sphi 0, %s13
    %p10 = scmp.ge.s32.totalorder %s9, 4
    %s19 = sphi 0, %s21
    %s22 = sphi 0, %s19
    %s23 = sphi 0, %s22
    %s39 = sphi 0, %s23
    %s43 = sphi 0, %s43
    %s45 = sphi 0, %s43
    %s46 = sphi 0, %s45
    %s60 = sphi 0, %s46
    %s64 = sphi 0, %s64
    %s66 = sphi 0, %s64
    %s67 = sphi 0, %s66
    %s81 = sphi 0, %s67
    %s87 = sphi 0, %s89
    %s90 = sphi 0, %s87
    %s91 = sphi 0, %s90
    %s107 = sphi 0, %s91
  $region4: #{net_forward.8} parent=0 // loop_header_branch
    %12 = sbr.rel (%p10) target = $region8
  $region5: #{net_forward.8} parent=0 // loop_body
    %s14 = ssub.s32 %s9, 1
    %s15 = ssub.s32 %s9, 2
    %s16 = sadd.s32 %s9, 1
    %s17 = ssub.s32 %s9, %s16
    %p18 = scmp.eq.s32.totalorder %s17, 0
    %s20 = sadd.s32 %s19, 1
    %s21 = scalar_select %p18, %s19, %s20
    %p24 = pneg %p18
    %p25 = scmp.eq.s32.totalorder %s9, 1
    %p26 = por %p24, %p25
    %p27 = scmp.ne.s32.totalorder %s19, %s22
    %p28 = scmp.eq.s32.totalorder %s9, 0
    %p29 = por %p27, %p28
    %p30 = scmp.ne.s32.totalorder %s19, %s22
    %p31 = scmp.eq.s32.totalorder %s14, 1
    %p32 = por %p30, %p31
    %p33 = scmp.ne.s32.totalorder %s22, %s23
    %p34 = scmp.eq.s32.totalorder %s14, 0
    %p35 = por %p33, %p34
    %p36 = scmp.ne.s32.totalorder %s22, %s23
    %p37 = scmp.eq.s32.totalorder %s15, 1
    %p38 = por %p36, %p37
    %p40 = scmp.ne.s32.totalorder %s23, %s39
    %p41 = scmp.eq.s32.totalorder %s15, 0
    %p42 = por %p40, %p41
    %s44 = sadd.s32 %s43, 1
    %p47 = scmp.eq.s32.totalorder %s9, 1
    %p48 = scmp.ne.s32.totalorder %s43, %s45
    %p49 = scmp.eq.s32.totalorder %s9, 0
    %p50 = por %p48, %p49
    %p51 = scmp.ne.s32.totalorder %s43, %s45
    %p52 = scmp.eq.s32.totalorder %s14, 1
    %p53 = por %p51, %p52
    %p54 = scmp.ne.s32.totalorder %s45, %s46
    %p55 = scmp.eq.s32.totalorder %s14, 0
    %p56 = por %p54, %p55
    %p57 = scmp.ne.s32.totalorder %s45, %s46
    %p58 = scmp.eq.s32.totalorder %s15, 1
    %p59 = por %p57, %p58
    %p61 = scmp.ne.s32.totalorder %s46, %s60
    %p62 = scmp.eq.s32.totalorder %s15, 0
    %p63 = por %p61, %p62
    %s65 = sadd.s32 %s64, 1
    %p68 = scmp.eq.s32.totalorder %s9, 1
    %p69 = scmp.ne.s32.totalorder %s64, %s66
    %p70 = scmp.eq.s32.totalorder %s9, 0
    %p71 = por %p69, %p70
    %p72 = scmp.ne.s32.totalorder %s64, %s66
    %p73 = scmp.eq.s32.totalorder %s14, 1
    %p74 = por %p72, %p73
    %p75 = scmp.ne.s32.totalorder %s66, %s67
    %p76 = scmp.eq.s32.totalorder %s14, 0
    %p77 = por %p75, %p76
    %p78 = scmp.ne.s32.totalorder %s66, %s67
    %p79 = scmp.eq.s32.totalorder %s15, 1
    %p80 = por %p78, %p79
    %p82 = scmp.ne.s32.totalorder %s67, %s81
    %p83 = scmp.eq.s32.totalorder %s15, 0
    %p84 = por %p82, %p83
    %s85 = ssub.s32 %s9, %s16
    %p86 = scmp.eq.s32.totalorder %s85, 0
    %s88 = sadd.s32 %s87, 1
    %s89 = scalar_select %p86, %s87, %s88
    %p92 = pneg %p86
    %p93 = scmp.eq.s32.totalorder %s9, 1
    %p94 = por %p92, %p93
    %p95 = scmp.ne.s32.totalorder %s87, %s90
    %p96 = scmp.eq.s32.totalorder %s9, 0
    %p97 = por %p95, %p96
    %p98 = scmp.ne.s32.totalorder %s87, %s90
    %p99 = scmp.eq.s32.totalorder %s14, 1
    %p100 = por %p98, %p99
    %p101 = scmp.ne.s32.totalorder %s90, %s91
    %p102 = scmp.eq.s32.totalorder %s14, 0
    %p103 = por %p101, %p102
    %p104 = scmp.ne.s32.totalorder %s90, %s91
    %p105 = scmp.eq.s32.totalorder %s15, 1
    %p106 = por %p104, %p105
    %p108 = scmp.ne.s32.totalorder %s91, %s107
    %p109 = scmp.eq.s32.totalorder %s15, 0
    %p110 = por %p108, %p109
    %p111 = scmp.le.s32.totalorder 1, %s9
    %p112 = scmp.lt.s32.totalorder %s9, 3
    %p113 = pnand %p111, %p112
    %p114 = pneg %p113
    // Predicated region
    $region9: #{net_forward.8} parent=5 // pred_check
      _
    $region10: #{net_forward.8} parent=5 // pred_check_branch
      %116 = sbr.rel (%p113) target = $region12
    $region11: #{net_forward.8} parent=5 // pred_region
      %s117 = ssub.s32 %s9, 1
      // Predicated region
      $region13: #{net_forward.8} parent=11 // pred_check
        %p118 = pneg %p56
      $region14: #{net_forward.8} parent=11 // pred_check_branch
        %120 = sbr.rel (%p118) target = $region16
      $region15: #{net_forward.8} parent=11 // pred_region
        _
      $region16: #{net_forward.8} parent=11 // pred_fallthru
        _
      // Predicated region
      $region17: #{net_forward.8} parent=11 // pred_check
        %p121 = pneg %p77
      $region18: #{net_forward.8} parent=11 // pred_check_branch
        %123 = sbr.rel (%p121) target = $region20
      $region19: #{net_forward.8} parent=11 // pred_region
        _
      $region20: #{net_forward.8} parent=11 // pred_fallthru
        _
    $region12: #{net_forward.8} parent=5 // pred_fallthru
      _
    %p124 = scmp.lt.s32.totalorder %s9, 2
    // Predicated region
    $region21: #{net_forward.8} parent=5 // pred_check
      %p125 = pneg %p124
    $region22: #{net_forward.8} parent=5 // pred_check_branch
      %127 = sbr.rel (%p125) target = $region24
    $region23: #{net_forward.8} parent=5 // pred_region
      // Predicated region
      $region25: #{net_forward.8} parent=23 // pred_check
        %p128 = pneg %p29
      $region26: #{net_forward.8} parent=23 // pred_check_branch
        %130 = sbr.rel (%p128) target = $region28
      $region27: #{net_forward.8} parent=23 // pred_region
        %p131 = scmp.lt.s32.totalorder %s9, 1
        %s132 = scalar_select %p131, %s9, 1
        %s133 = smul.addr %s132, 54
        %s134 = smul.addr %s133, 8
        %s135 = scalar_lea.vmem %s0, %s134
      $region28: #{net_forward.8} parent=23 // pred_fallthru
        _
    $region24: #{net_forward.8} parent=5 // pred_fallthru
      _
    %p136 = scmp.le.s32.totalorder 1, %s9
    %p137 = scmp.lt.s32.totalorder %s9, 3
    %p138 = pnand %p136, %p137
    %p139 = pneg %p138
    // Predicated region
    $region29: #{net_forward.8} parent=5 // pred_check
      _
    $region30: #{net_forward.8} parent=5 // pred_check_branch
      %141 = sbr.rel (%p138) target = $region32
    $region31: #{net_forward.8} parent=5 // pred_region
      %s142 = ssub.s32 %s9, 1
      %p143 = scmp.lt.s32.totalorder %s14, 1
      %s144 = scalar_select %p143, %s14, 1
      %s145 = smul.addr %s144, 54
      %s146 = smul.addr %s145, 8
      %s147 = scalar_lea.vmem %s0, %s146
      %p148 = pneg %p35
      %p149 = pneg %p32
      %p150 = pneg %p56
      %p151 = pneg %p53
      %p152 = pneg %p77
      %p153 = pneg %p74
      %p154 = pneg %p103
      %p155 = pneg %p100
      %p156 = scmp.lt.s32.totalorder %s14, 1
      %s157 = scalar_select %p156, %s14, 1
      %s158 = smul.addr %s157, 32
      %s159 = smul.addr %s158, 8
      %s160 = scalar_lea.vmem %s3, %s159
      %p161 = scmp.lt.s32.totalorder %s14, 1
      %s162 = scalar_select %p161, %s14, 1
      %s163 = smul.addr %s162, 54
      %s164 = smul.addr %s163, 8
      %s165 = scalar_lea.vmem %s0, %s164
      %p166 = scmp.lt.s32.totalorder %s14, 1
      %s167 = scalar_select %p166, %s14, 1
      %s168 = smul.addr %s167, 32
      %s169 = smul.addr %s168, 8
      %s170 = scalar_lea.vmem %s3, %s169
      %v171 = vld [vmem:[%s165] sm:$0xff]
      %v172 = vld [vmem:[%s165 + $0x8] sm:$0xff]
      %v173 = vld [vmem:[%s165 + $0x10] sm:$0x3]
      %v174 = vld [vmem:[%s165 + $0x18] sm:$0xff]
      %v175 = vld [vmem:[%s165 + $0x20] sm:$0xff]
      %v176 = vld [vmem:[%s165 + $0x28] sm:$0x3]
      %v177 = vld [vmem:[%s165 + $0x30] sm:$0xff]
      %v178 = vld [vmem:[%s165 + $0x38] sm:$0xff]
      %v179 = vld [vmem:[%s165 + $0x40] sm:$0x3]
      %v180 = vld [vmem:[%s165 + $0x48] sm:$0xff]
      %v181 = vld [vmem:[%s165 + $0x50] sm:$0xff]
      %v182 = vld [vmem:[%s165 + $0x58] sm:$0x3]
      %v183 = vld [vmem:[%s165 + $0x60] sm:$0xff]
      %v184 = vld [vmem:[%s165 + $0x68] sm:$0xff]
      %v185 = vld [vmem:[%s165 + $0x70] sm:$0x3]
      %v186 = vld [vmem:[%s165 + $0x78] sm:$0xff]
      %v187 = vld [vmem:[%s165 + $0x80] sm:$0xff]
      %v188 = vld [vmem:[%s165 + $0x88] sm:$0x3]
      %v189 = vld [vmem:[%s165 + $0x90] sm:$0xff]
      %v190 = vld [vmem:[%s165 + $0x98] sm:$0xff]
      %v191 = vld [vmem:[%s165 + $0xa0] sm:$0x3]
      %v192 = vld [vmem:[%s165 + $0xa8] sm:$0xff]
      %v193 = vld [vmem:[%s165 + $0xb0] sm:$0xff]
      %v194 = vld [vmem:[%s165 + $0xb8] sm:$0x3]
      %v195 = vld [vmem:[%s165 + $0xc0] sm:$0xff]
      %v196 = vld [vmem:[%s165 + $0xc8] sm:$0xff]
      %v197 = vld [vmem:[%s165 + $0xd0] sm:$0x3]
      %v198 = vld [vmem:[%s165 + $0xd8] sm:$0xff]
      %v199 = vld [vmem:[%s165 + $0xe0] sm:$0xff]
      %v200 = vld [vmem:[%s165 + $0xe8] sm:$0x3]
      %v201 = vld [vmem:[%s165 + $0xf0] sm:$0xff]
      %v202 = vld [vmem:[%s165 + $0xf8] sm:$0xff]
      %v203 = vld [vmem:[%s165 + $0x100] sm:$0x3]
      %v204 = vld [vmem:[%s165 + $0x108] sm:$0xff]
      %v205 = vld [vmem:[%s165 + $0x110] sm:$0xff]
      %v206 = vld [vmem:[%s165 + $0x118] sm:$0x3]
      %v207 = vld [vmem:[%s165 + $0x120] sm:$0xff]
      %v208 = vld [vmem:[%s165 + $0x128] sm:$0xff]
      %v209 = vld [vmem:[%s165 + $0x130] sm:$0x3]
      %v210 = vld [vmem:[%s165 + $0x138] sm:$0xff]
      %v211 = vld [vmem:[%s165 + $0x140] sm:$0xff]
      %v212 = vld [vmem:[%s165 + $0x148] sm:$0x3]
      %v213 = vld [vmem:[%s165 + $0x150] sm:$0xff]
      %v214 = vld [vmem:[%s165 + $0x158] sm:$0xff]
      %v215 = vld [vmem:[%s165 + $0x160] sm:$0x3]
      %v216 = vld [vmem:[%s165 + $0x168] sm:$0xff]
      %v217 = vld [vmem:[%s165 + $0x170] sm:$0xff]
      %v218 = vld [vmem:[%s165 + $0x178] sm:$0x3]
      %v219 = vld [vmem:[%s1] sm:$0xff]
      %v220 = vld [vmem:[%s1 + $0x8] sm:$0xff]
      %v221 = vld [vmem:[%s1 + $0x10] sm:$0xff]
      %v222 = vld [vmem:[%s1 + $0x18] sm:$0xff]
      %v223 = vld [vmem:[%s1 + $0x20] sm:$0xff]
      %v224 = vld [vmem:[%s1 + $0x28] sm:$0xff]
      %v225 = vld [vmem:[%s1 + $0x30] sm:$0xff]
      %v226 = vld [vmem:[%s1 + $0x38] sm:$0xff]
      %v227 = vld [vmem:[%s1 + $0x40] sm:$0xff]
      %v228 = vld [vmem:[%s1 + $0x48] sm:$0xff]
      %v229 = vld [vmem:[%s1 + $0x50] sm:$0xff]
      %v230 = vld [vmem:[%s1 + $0x58] sm:$0xff]
      %v231 = vld [vmem:[%s1 + $0x60] sm:$0xff]
      %v232 = vld [vmem:[%s1 + $0x68] sm:$0xff]
      %v233 = vld [vmem:[%s1 + $0x70] sm:$0xff]
      %v234 = vld [vmem:[%s1 + $0x78] sm:$0xff]
      %vm283 = vcmask 1046528
      %v284 = vrot.slane %v171, 1
      %v285 = vrot.slane %v172, 1
      %v286 = vsel %vm283, %v284, %v285
      %v287 = vrot.slane %v173, 1
      %v288 = vsel %vm283, %v285, %v287
      %v289 = vrot.slane %v174, 1
      %v290 = vrot.slane %v175, 1
      %v291 = vsel %vm283, %v289, %v290
      %v292 = vrot.slane %v176, 1
      %v293 = vsel %vm283, %v290, %v292
      %v294 = vrot.slane %v177, 1
      %v295 = vrot.slane %v178, 1
      %v296 = vsel %vm283, %v294, %v295
      %v297 = vrot.slane %v179, 1
      %v298 = vsel %vm283, %v295, %v297
      %v299 = vrot.slane %v180, 1
      %v300 = vrot.slane %v181, 1
      %v301 = vsel %vm283, %v299, %v300
      %v302 = vrot.slane %v182, 1
      %v303 = vsel %vm283, %v300, %v302
      %v304 = vrot.slane %v183, 1
      %v305 = vrot.slane %v184, 1
      %v306 = vsel %vm283, %v304, %v305
      %v307 = vrot.slane %v185, 1
      %v308 = vsel %vm283, %v305, %v307
      %v309 = vrot.slane %v186, 1
      %v310 = vrot.slane %v187, 1
      %v311 = vsel %vm283, %v309, %v310
      %v312 = vrot.slane %v188, 1
      %v313 = vsel %vm283, %v310, %v312
      %v314 = vrot.slane %v189, 1
      %v315 = vrot.slane %v190, 1
      %v316 = vsel %vm283, %v314, %v315
      %v317 = vrot.slane %v191, 1
      %v318 = vsel %vm283, %v315, %v317
      %v319 = vrot.slane %v192, 1
      %v320 = vrot.slane %v193, 1
      %v321 = vsel %vm283, %v319, %v320
      %v322 = vrot.slane %v194, 1
      %v323 = vsel %vm283, %v320, %v322
      %v324 = vrot.slane %v195, 1
      %v325 = vrot.slane %v196, 1
      %v326 = vsel %vm283, %v324, %v325
      %v327 = vrot.slane %v197, 1
      %v328 = vsel %vm283, %v325, %v327
      %v329 = vrot.slane %v198, 1
      %v330 = vrot.slane %v199, 1
      %v331 = vsel %vm283, %v329, %v330
      %v332 = vrot.slane %v200, 1
      %v333 = vsel %vm283, %v330, %v332
      %v334 = vrot.slane %v201, 1
      %v335 = vrot.slane %v202, 1
      %v336 = vsel %vm283, %v334, %v335
      %v337 = vrot.slane %v203, 1
      %v338 = vsel %vm283, %v335, %v337
      %v339 = vrot.slane %v204, 1
      %v340 = vrot.slane %v205, 1
      %v341 = vsel %vm283, %v339, %v340
      %v342 = vrot.slane %v206, 1
      %v343 = vsel %vm283, %v340, %v342
      %v344 = vrot.slane %v207, 1
      %v345 = vrot.slane %v208, 1
      %v346 = vsel %vm283, %v344, %v345
      %v347 = vrot.slane %v209, 1
      %v348 = vsel %vm283, %v345, %v347
      %v349 = vrot.slane %v210, 1
      %v350 = vrot.slane %v211, 1
      %v351 = vsel %vm283, %v349, %v350
      %v352 = vrot.slane %v212, 1
      %v353 = vsel %vm283, %v350, %v352
      %v354 = vrot.slane %v213, 1
      %v355 = vrot.slane %v214, 1
      %v356 = vsel %vm283, %v354, %v355
      %v357 = vrot.slane %v215, 1
      %v358 = vsel %vm283, %v355, %v357
      %v359 = vrot.slane %v216, 1
      %v360 = vrot.slane %v217, 1
      %v361 = vsel %vm283, %v359, %v360
      %v362 = vrot.slane %v218, 1
      %v363 = vsel %vm283, %v360, %v362
      %s396 = scalar_lea.vmem %s1, 128
      %v397 = vld [vmem:[%s396] sm:$0xff]
      %v398 = vld [vmem:[%s396 + $0x8] sm:$0xff]
      %v399 = vld [vmem:[%s396 + $0x10] sm:$0xff]
      %v400 = vld [vmem:[%s396 + $0x18] sm:$0xff]
      %v401 = vld [vmem:[%s396 + $0x20] sm:$0xff]
      %v402 = vld [vmem:[%s396 + $0x28] sm:$0xff]
      %v403 = vld [vmem:[%s396 + $0x30] sm:$0xff]
      %v404 = vld [vmem:[%s396 + $0x38] sm:$0xff]
      %v405 = vld [vmem:[%s396 + $0x40] sm:$0xff]
      %v406 = vld [vmem:[%s396 + $0x48] sm:$0xff]
      %v407 = vld [vmem:[%s396 + $0x50] sm:$0xff]
      %v408 = vld [vmem:[%s396 + $0x58] sm:$0xff]
      %v409 = vld [vmem:[%s396 + $0x60] sm:$0xff]
      %v410 = vld [vmem:[%s396 + $0x68] sm:$0xff]
      %v411 = vld [vmem:[%s396 + $0x70] sm:$0xff]
      %v412 = vld [vmem:[%s396 + $0x78] sm:$0xff]
      %413 = vmatprep.subr.mxu0 0.0
      %414 = vmatpush1.msra.mxu0 %v412
      %415 = vmatprep.subr.mxu0 0.0
      %416 = vmatpush1.msra.mxu0 %v411
      %417 = vmatprep.subr.mxu0 0.0
      %418 = vmatpush1.msra.mxu0 %v410
      %419 = vmatprep.subr.mxu0 0.0
      %420 = vmatpush1.msra.mxu0 %v409
      %421 = vmatprep.subr.mxu0 0.0
      %422 = vmatpush1.msra.mxu0 %v408
      %423 = vmatprep.subr.mxu0 0.0
      %424 = vmatpush1.msra.mxu0 %v407
      %425 = vmatprep.subr.mxu0 0.0
      %426 = vmatpush1.msra.mxu0 %v406
      %427 = vmatprep.subr.mxu0 0.0
      %428 = vmatpush1.msra.mxu0 %v405
      %429 = vmatprep.subr.mxu0 0.0
      %430 = vmatpush1.msra.mxu0 %v404
      %431 = vmatprep.subr.mxu0 0.0
      %432 = vmatpush1.msra.mxu0 %v403
      %433 = vmatprep.subr.mxu0 0.0
      %434 = vmatpush1.msra.mxu0 %v402
      %435 = vmatprep.subr.mxu0 0.0
      %436 = vmatpush1.msra.mxu0 %v401
      %437 = vmatprep.subr.mxu0 0.0
      %438 = vmatpush1.msra.mxu0 %v400
      %439 = vmatprep.subr.mxu0 0.0
      %440 = vmatpush1.msra.mxu0 %v399
      %441 = vmatprep.subr.mxu0 0.0
      %442 = vmatpush1.msra.mxu0 %v398
      %443 = vmatprep.subr.mxu0 0.0
      %444 = vmatpush1.msra.mxu0 %v397
      %445 = vmatprep.subr.mxu0 0.0
      %446 = vmatpush2.msra.mxu0 0.0
      %447 = vmatprep.subr.mxu0 0.0
      %448 = vmatpush2.msra.mxu0 0.0
      %449 = vmatprep.subr.mxu0 0.0
      %450 = vmatpush2.msra.mxu0 0.0
      %451 = vmatprep.subr.mxu0 0.0
      %452 = vmatpush2.msra.mxu0 0.0
      %453 = vmatprep.subr.mxu0 0.0
      %454 = vmatpush2.msra.mxu0 0.0
      %455 = vmatprep.subr.mxu0 0.0
      %456 = vmatpush2.msra.mxu0 0.0
      %457 = vmatprep.subr.mxu0 0.0
      %458 = vmatpush2.msra.mxu0 0.0
      %459 = vmatprep.subr.mxu0 0.0
      %460 = vmatpush2.msra.mxu0 0.0
      %461 = vmatprep.subr.mxu0 0.0
      %462 = vmatpush2.msra.mxu0 0.0
      %463 = vmatprep.subr.mxu0 0.0
      %464 = vmatpush2.msra.mxu0 0.0
      %465 = vmatprep.subr.mxu0 0.0
      %466 = vmatpush2.msra.mxu0 0.0
      %467 = vmatprep.subr.mxu0 0.0
      %468 = vmatpush2.msra.mxu0 0.0
      %469 = vmatprep.subr.mxu0 0.0
      %470 = vmatpush2.msra.mxu0 0.0
      %471 = vmatprep.subr.mxu0 0.0
      %472 = vmatpush2.msra.mxu0 0.0
      %473 = vmatprep.subr.mxu0 0.0
      %474 = vmatpush2.msra.mxu0 0.0
      %475 = vmatprep.subr.mxu0 0.0
      %476 = vmatpush2.msra.mxu0 0.0
      %477 = vmatprep.mubr.f32.mxu0 0.0
      %478 = vmatmul.mubr.f32.gmra.mxu0 %v286
      %v479 = vpop.f32.mrf.mxu0
      %v480 = vadd.f32 0.0, %v479
      %v481 = vpop.f32.mrf.mxu0
      %482 = vmatprep.mubr.f32.mxu0 0.0
      %483 = vmatmul.mubr.f32.gmra.mxu0 %v288
      %v484 = vpop.f32.mrf.mxu0
      %v485 = vadd.f32 0.0, %v484
      %v486 = vpop.f32.mrf.mxu0
      %487 = vmatprep.mubr.f32.mxu0 0.0
      %488 = vmatmul.mubr.f32.gmra.mxu0 %v291
      %v489 = vpop.f32.mrf.mxu0
      %v490 = vadd.f32 0.0, %v489
      %v491 = vpop.f32.mrf.mxu0
      %492 = vmatprep.mubr.f32.mxu0 0.0
      %493 = vmatmul.mubr.f32.gmra.mxu0 %v293
      %v494 = vpop.f32.mrf.mxu0
      %v495 = vadd.f32 0.0, %v494
      %v496 = vpop.f32.mrf.mxu0
      %497 = vmatprep.mubr.f32.mxu0 0.0
      %498 = vmatmul.mubr.f32.gmra.mxu0 %v296
      %v499 = vpop.f32.mrf.mxu0
      %v500 = vadd.f32 0.0, %v499
      %v501 = vpop.f32.mrf.mxu0
      %502 = vmatprep.mubr.f32.mxu0 0.0
      %503 = vmatmul.mubr.f32.gmra.mxu0 %v298
      %v504 = vpop.f32.mrf.mxu0
      %v505 = vadd.f32 0.0, %v504
      %v506 = vpop.f32.mrf.mxu0
      %507 = vmatprep.mubr.f32.mxu0 0.0
      %508 = vmatmul.mubr.f32.gmra.mxu0 %v301
      %v509 = vpop.f32.mrf.mxu0
      %v510 = vadd.f32 0.0, %v509
      %v511 = vpop.f32.mrf.mxu0
      %512 = vmatprep.mubr.f32.mxu0 0.0
      %513 = vmatmul.mubr.f32.gmra.mxu0 %v303
      %v514 = vpop.f32.mrf.mxu0
      %v515 = vadd.f32 0.0, %v514
      %v516 = vpop.f32.mrf.mxu0
      %517 = vmatprep.mubr.f32.mxu0 0.0
      %518 = vmatmul.mubr.f32.gmra.mxu0 %v306
      %v519 = vpop.f32.mrf.mxu0
      %v520 = vadd.f32 0.0, %v519
      %v521 = vpop.f32.mrf.mxu0
      %522 = vmatprep.mubr.f32.mxu0 0.0
      %523 = vmatmul.mubr.f32.gmra.mxu0 %v308
      %v524 = vpop.f32.mrf.mxu0
      %v525 = vadd.f32 0.0, %v524
      %v526 = vpop.f32.mrf.mxu0
      %527 = vmatprep.mubr.f32.mxu0 0.0
      %528 = vmatmul.mubr.f32.gmra.mxu0 %v311
      %v529 = vpop.f32.mrf.mxu0
      %v530 = vadd.f32 0.0, %v529
      %v531 = vpop.f32.mrf.mxu0
      %532 = vmatprep.mubr.f32.mxu0 0.0
      %533 = vmatmul.mubr.f32.gmra.mxu0 %v313
      %v534 = vpop.f32.mrf.mxu0
      %v535 = vadd.f32 0.0, %v534
      %v536 = vpop.f32.mrf.mxu0
      %537 = vmatprep.mubr.f32.mxu0 0.0
      %538 = vmatmul.mubr.f32.gmra.mxu0 %v316
      %v539 = vpop.f32.mrf.mxu0
      %v540 = vadd.f32 0.0, %v539
      %v541 = vpop.f32.mrf.mxu0
      %542 = vmatprep.mubr.f32.mxu0 0.0
      %543 = vmatmul.mubr.f32.gmra.mxu0 %v318
      %v544 = vpop.f32.mrf.mxu0
      %v545 = vadd.f32 0.0, %v544
      %v546 = vpop.f32.mrf.mxu0
      %547 = vmatprep.mubr.f32.mxu0 0.0
      %548 = vmatmul.mubr.f32.gmra.mxu0 %v321
      %v549 = vpop.f32.mrf.mxu0
      %v550 = vadd.f32 0.0, %v549
      %v551 = vpop.f32.mrf.mxu0
      %552 = vmatprep.mubr.f32.mxu0 0.0
      %553 = vmatmul.mubr.f32.gmra.mxu0 %v323
      %v554 = vpop.f32.mrf.mxu0
      %v555 = vadd.f32 0.0, %v554
      %v556 = vpop.f32.mrf.mxu0
      %557 = vmatprep.mubr.f32.mxu0 0.0
      %558 = vmatmul.mubr.f32.gmra.mxu0 %v326
      %v559 = vpop.f32.mrf.mxu0
      %v560 = vadd.f32 0.0, %v559
      %v561 = vpop.f32.mrf.mxu0
      %562 = vmatprep.mubr.f32.mxu0 0.0
      %563 = vmatmul.mubr.f32.gmra.mxu0 %v328
      %v564 = vpop.f32.mrf.mxu0
      %v565 = vadd.f32 0.0, %v564
      %v566 = vpop.f32.mrf.mxu0
      %567 = vmatprep.mubr.f32.mxu0 0.0
      %568 = vmatmul.mubr.f32.gmra.mxu0 %v331
      %v569 = vpop.f32.mrf.mxu0
      %v570 = vadd.f32 0.0, %v569
      %v571 = vpop.f32.mrf.mxu0
      %572 = vmatprep.mubr.f32.mxu0 0.0
      %573 = vmatmul.mubr.f32.gmra.mxu0 %v333
      %v574 = vpop.f32.mrf.mxu0
      %v575 = vadd.f32 0.0, %v574
      %v576 = vpop.f32.mrf.mxu0
      %577 = vmatprep.mubr.f32.mxu0 0.0
      %578 = vmatmul.mubr.f32.gmra.mxu0 %v336
      %v579 = vpop.f32.mrf.mxu0
      %v580 = vadd.f32 0.0, %v579
      %v581 = vpop.f32.mrf.mxu0
      %582 = vmatprep.mubr.f32.mxu0 0.0
      %583 = vmatmul.mubr.f32.gmra.mxu0 %v338
      %v584 = vpop.f32.mrf.mxu0
      %v585 = vadd.f32 0.0, %v584
      %v586 = vpop.f32.mrf.mxu0
      %587 = vmatprep.mubr.f32.mxu0 0.0
      %588 = vmatmul.mubr.f32.gmra.mxu0 %v341
      %v589 = vpop.f32.mrf.mxu0
      %v590 = vadd.f32 0.0, %v589
      %v591 = vpop.f32.mrf.mxu0
      %592 = vmatprep.mubr.f32.mxu0 0.0
      %593 = vmatmul.mubr.f32.gmra.mxu0 %v343
      %v594 = vpop.f32.mrf.mxu0
      %v595 = vadd.f32 0.0, %v594
      %v596 = vpop.f32.mrf.mxu0
      %597 = vmatprep.mubr.f32.mxu0 0.0
      %598 = vmatmul.mubr.f32.gmra.mxu0 %v346
      %v599 = vpop.f32.mrf.mxu0
      %v600 = vadd.f32 0.0, %v599
      %v601 = vpop.f32.mrf.mxu0
      %602 = vmatprep.mubr.f32.mxu0 0.0
      %603 = vmatmul.mubr.f32.gmra.mxu0 %v348
      %v604 = vpop.f32.mrf.mxu0
      %v605 = vadd.f32 0.0, %v604
      %v606 = vpop.f32.mrf.mxu0
      %607 = vmatprep.mubr.f32.mxu0 0.0
      %608 = vmatmul.mubr.f32.gmra.mxu0 %v351
      %v609 = vpop.f32.mrf.mxu0
      %v610 = vadd.f32 0.0, %v609
      %v611 = vpop.f32.mrf.mxu0
      %612 = vmatprep.mubr.f32.mxu0 0.0
      %613 = vmatmul.mubr.f32.gmra.mxu0 %v353
      %v614 = vpop.f32.mrf.mxu0
      %v615 = vadd.f32 0.0, %v614
      %v616 = vpop.f32.mrf.mxu0
      %617 = vmatprep.mubr.f32.mxu0 0.0
      %618 = vmatmul.mubr.f32.gmra.mxu0 %v356
      %v619 = vpop.f32.mrf.mxu0
      %v620 = vadd.f32 0.0, %v619
      %v621 = vpop.f32.mrf.mxu0
      %622 = vmatprep.mubr.f32.mxu0 0.0
      %623 = vmatmul.mubr.f32.gmra.mxu0 %v358
      %v624 = vpop.f32.mrf.mxu0
      %v625 = vadd.f32 0.0, %v624
      %v626 = vpop.f32.mrf.mxu0
      %627 = vmatprep.mubr.f32.mxu0 0.0
      %628 = vmatmul.mubr.f32.gmra.mxu0 %v361
      %v629 = vpop.f32.mrf.mxu0
      %v630 = vadd.f32 0.0, %v629
      %v631 = vpop.f32.mrf.mxu0
      %632 = vmatprep.mubr.f32.mxu0 0.0
      %633 = vmatmul.mubr.f32.gmra.mxu0 %v363
      %v634 = vpop.f32.mrf.mxu0
      %v635 = vadd.f32 0.0, %v634
      %v636 = vpop.f32.mrf.mxu0
      %637 = vdwg.mxu0
      %638 = vmatprep.subr.mxu0 0.0
      %639 = vmatpush1.msra.mxu0 %v234
      %640 = vmatprep.subr.mxu0 0.0
      %641 = vmatpush1.msra.mxu0 %v233
      %642 = vmatprep.subr.mxu0 0.0
      %643 = vmatpush1.msra.mxu0 %v232
      %644 = vmatprep.subr.mxu0 0.0
      %645 = vmatpush1.msra.mxu0 %v231
      %646 = vmatprep.subr.mxu0 0.0
      %647 = vmatpush1.msra.mxu0 %v230
      %648 = vmatprep.subr.mxu0 0.0
      %649 = vmatpush1.msra.mxu0 %v229
      %650 = vmatprep.subr.mxu0 0.0
      %651 = vmatpush1.msra.mxu0 %v228
      %652 = vmatprep.subr.mxu0 0.0
      %653 = vmatpush1.msra.mxu0 %v227
      %654 = vmatprep.subr.mxu0 0.0
      %655 = vmatpush1.msra.mxu0 %v226
      %656 = vmatprep.subr.mxu0 0.0
      %657 = vmatpush1.msra.mxu0 %v225
      %658 = vmatprep.subr.mxu0 0.0
      %659 = vmatpush1.msra.mxu0 %v224
      %660 = vmatprep.subr.mxu0 0.0
      %661 = vmatpush1.msra.mxu0 %v223
      %662 = vmatprep.subr.mxu0 0.0
      %663 = vmatpush1.msra.mxu0 %v222
      %664 = vmatprep.subr.mxu0 0.0
      %665 = vmatpush1.msra.mxu0 %v221
      %666 = vmatprep.subr.mxu0 0.0
      %667 = vmatpush1.msra.mxu0 %v220
      %668 = vmatprep.subr.mxu0 0.0
      %669 = vmatpush1.msra.mxu0 %v219
      %670 = vmatprep.subr.mxu0 0.0
      %671 = vmatpush2.msra.mxu0 0.0
      %672 = vmatprep.subr.mxu0 0.0
      %673 = vmatpush2.msra.mxu0 0.0
      %674 = vmatprep.subr.mxu0 0.0
      %675 = vmatpush2.msra.mxu0 0.0
      %676 = vmatprep.subr.mxu0 0.0
      %677 = vmatpush2.msra.mxu0 0.0
      %678 = vmatprep.subr.mxu0 0.0
      %679 = vmatpush2.msra.mxu0 0.0
      %680 = vmatprep.subr.mxu0 0.0
      %681 = vmatpush2.msra.mxu0 0.0
      %682 = vmatprep.subr.mxu0 0.0
      %683 = vmatpush2.msra.mxu0 0.0
      %684 = vmatprep.subr.mxu0 0.0
      %685 = vmatpush2.msra.mxu0 0.0
      %686 = vmatprep.subr.mxu0 0.0
      %687 = vmatpush2.msra.mxu0 0.0
      %688 = vmatprep.subr.mxu0 0.0
      %689 = vmatpush2.msra.mxu0 0.0
      %690 = vmatprep.subr.mxu0 0.0
      %691 = vmatpush2.msra.mxu0 0.0
      %692 = vmatprep.subr.mxu0 0.0
      %693 = vmatpush2.msra.mxu0 0.0
      %694 = vmatprep.subr.mxu0 0.0
      %695 = vmatpush2.msra.mxu0 0.0
      %696 = vmatprep.subr.mxu0 0.0
      %697 = vmatpush2.msra.mxu0 0.0
      %698 = vmatprep.subr.mxu0 0.0
      %699 = vmatpush2.msra.mxu0 0.0
      %700 = vmatprep.subr.mxu0 0.0
      %701 = vmatpush2.msra.mxu0 0.0
      %702 = vmatprep.mubr.f32.mxu0 0.0
      %703 = vmatmul.mubr.f32.gmra.mxu0 %v171
      %v704 = vpop.f32.mrf.mxu0
      %v705 = vadd.f32 %v480, %v704
      %v706 = vpop.f32.mrf.mxu0
      %707 = vmatprep.mubr.f32.mxu0 0.0
      %708 = vmatmul.mubr.f32.gmra.mxu0 %v172
      %v709 = vpop.f32.mrf.mxu0
      %v710 = vadd.f32 %v485, %v709
      %v711 = vpop.f32.mrf.mxu0
      %712 = vmatprep.mubr.f32.mxu0 0.0
      %713 = vmatmul.mubr.f32.gmra.mxu0 %v174
      %v714 = vpop.f32.mrf.mxu0
      %v715 = vadd.f32 %v490, %v714
      %v716 = vpop.f32.mrf.mxu0
      %717 = vmatprep.mubr.f32.mxu0 0.0
      %718 = vmatmul.mubr.f32.gmra.mxu0 %v175
      %v719 = vpop.f32.mrf.mxu0
      %v720 = vadd.f32 %v495, %v719
      %v721 = vpop.f32.mrf.mxu0
      %722 = vmatprep.mubr.f32.mxu0 0.0
      %723 = vmatmul.mubr.f32.gmra.mxu0 %v177
      %v724 = vpop.f32.mrf.mxu0
      %v725 = vadd.f32 %v500, %v724
      %v726 = vpop.f32.mrf.mxu0
      %727 = vmatprep.mubr.f32.mxu0 0.0
      %728 = vmatmul.mubr.f32.gmra.mxu0 %v178
      %v729 = vpop.f32.mrf.mxu0
      %v730 = vadd.f32 %v505, %v729
      %v731 = vpop.f32.mrf.mxu0
      %732 = vmatprep.mubr.f32.mxu0 0.0
      %733 = vmatmul.mubr.f32.gmra.mxu0 %v180
      %v734 = vpop.f32.mrf.mxu0
      %v735 = vadd.f32 %v510, %v734
      %v736 = vpop.f32.mrf.mxu0
      %737 = vmatprep.mubr.f32.mxu0 0.0
      %738 = vmatmul.mubr.f32.gmra.mxu0 %v181
      %v739 = vpop.f32.mrf.mxu0
      %v740 = vadd.f32 %v515, %v739
      %v741 = vpop.f32.mrf.mxu0
      %742 = vmatprep.mubr.f32.mxu0 0.0
      %743 = vmatmul.mubr.f32.gmra.mxu0 %v183
      %v744 = vpop.f32.mrf.mxu0
      %v745 = vadd.f32 %v520, %v744
      %v746 = vpop.f32.mrf.mxu0
      %747 = vmatprep.mubr.f32.mxu0 0.0
      %748 = vmatmul.mubr.f32.gmra.mxu0 %v184
      %v749 = vpop.f32.mrf.mxu0
      %v750 = vadd.f32 %v525, %v749
      %v751 = vpop.f32.mrf.mxu0
      %752 = vmatprep.mubr.f32.mxu0 0.0
      %753 = vmatmul.mubr.f32.gmra.mxu0 %v186
      %v754 = vpop.f32.mrf.mxu0
      %v755 = vadd.f32 %v530, %v754
      %v756 = vpop.f32.mrf.mxu0
      %757 = vmatprep.mubr.f32.mxu0 0.0
      %758 = vmatmul.mubr.f32.gmra.mxu0 %v187
      %v759 = vpop.f32.mrf.mxu0
      %v760 = vadd.f32 %v535, %v759
      %v761 = vpop.f32.mrf.mxu0
      %762 = vmatprep.mubr.f32.mxu0 0.0
      %763 = vmatmul.mubr.f32.gmra.mxu0 %v189
      %v764 = vpop.f32.mrf.mxu0
      %v765 = vadd.f32 %v540, %v764
      %v766 = vpop.f32.mrf.mxu0
      %767 = vmatprep.mubr.f32.mxu0 0.0
      %768 = vmatmul.mubr.f32.gmra.mxu0 %v190
      %v769 = vpop.f32.mrf.mxu0
      %v770 = vadd.f32 %v545, %v769
      %v771 = vpop.f32.mrf.mxu0
      %772 = vmatprep.mubr.f32.mxu0 0.0
      %773 = vmatmul.mubr.f32.gmra.mxu0 %v192
      %v774 = vpop.f32.mrf.mxu0
      %v775 = vadd.f32 %v550, %v774
      %v776 = vpop.f32.mrf.mxu0
      %777 = vmatprep.mubr.f32.mxu0 0.0
      %778 = vmatmul.mubr.f32.gmra.mxu0 %v193
      %v779 = vpop.f32.mrf.mxu0
      %v780 = vadd.f32 %v555, %v779
      %v781 = vpop.f32.mrf.mxu0
      %782 = vmatprep.mubr.f32.mxu0 0.0
      %783 = vmatmul.mubr.f32.gmra.mxu0 %v195
      %v784 = vpop.f32.mrf.mxu0
      %v785 = vadd.f32 %v560, %v784
      %v786 = vpop.f32.mrf.mxu0
      %787 = vmatprep.mubr.f32.mxu0 0.0
      %788 = vmatmul.mubr.f32.gmra.mxu0 %v196
      %v789 = vpop.f32.mrf.mxu0
      %v790 = vadd.f32 %v565, %v789
      %v791 = vpop.f32.mrf.mxu0
      %792 = vmatprep.mubr.f32.mxu0 0.0
      %793 = vmatmul.mubr.f32.gmra.mxu0 %v198
      %v794 = vpop.f32.mrf.mxu0
      %v795 = vadd.f32 %v570, %v794
      %v796 = vpop.f32.mrf.mxu0
      %797 = vmatprep.mubr.f32.mxu0 0.0
      %798 = vmatmul.mubr.f32.gmra.mxu0 %v199
      %v799 = vpop.f32.mrf.mxu0
      %v800 = vadd.f32 %v575, %v799
      %v801 = vpop.f32.mrf.mxu0
      %802 = vmatprep.mubr.f32.mxu0 0.0
      %803 = vmatmul.mubr.f32.gmra.mxu0 %v201
      %v804 = vpop.f32.mrf.mxu0
      %v805 = vadd.f32 %v580, %v804
      %v806 = vpop.f32.mrf.mxu0
      %807 = vmatprep.mubr.f32.mxu0 0.0
      %808 = vmatmul.mubr.f32.gmra.mxu0 %v202
      %v809 = vpop.f32.mrf.mxu0
      %v810 = vadd.f32 %v585, %v809
      %v811 = vpop.f32.mrf.mxu0
      %812 = vmatprep.mubr.f32.mxu0 0.0
      %813 = vmatmul.mubr.f32.gmra.mxu0 %v204
      %v814 = vpop.f32.mrf.mxu0
      %v815 = vadd.f32 %v590, %v814
      %v816 = vpop.f32.mrf.mxu0
      %817 = vmatprep.mubr.f32.mxu0 0.0
      %818 = vmatmul.mubr.f32.gmra.mxu0 %v205
      %v819 = vpop.f32.mrf.mxu0
      %v820 = vadd.f32 %v595, %v819
      %v821 = vpop.f32.mrf.mxu0
      %822 = vmatprep.mubr.f32.mxu0 0.0
      %823 = vmatmul.mubr.f32.gmra.mxu0 %v207
      %v824 = vpop.f32.mrf.mxu0
      %v825 = vadd.f32 %v600, %v824
      %v826 = vpop.f32.mrf.mxu0
      %827 = vmatprep.mubr.f32.mxu0 0.0
      %828 = vmatmul.mubr.f32.gmra.mxu0 %v208
      %v829 = vpop.f32.mrf.mxu0
      %v830 = vadd.f32 %v605, %v829
      %v831 = vpop.f32.mrf.mxu0
      %832 = vmatprep.mubr.f32.mxu0 0.0
      %833 = vmatmul.mubr.f32.gmra.mxu0 %v210
      %v834 = vpop.f32.mrf.mxu0
      %v835 = vadd.f32 %v610, %v834
      %v836 = vpop.f32.mrf.mxu0
      %837 = vmatprep.mubr.f32.mxu0 0.0
      %838 = vmatmul.mubr.f32.gmra.mxu0 %v211
      %v839 = vpop.f32.mrf.mxu0
      %v840 = vadd.f32 %v615, %v839
      %v841 = vpop.f32.mrf.mxu0
      %842 = vmatprep.mubr.f32.mxu0 0.0
      %843 = vmatmul.mubr.f32.gmra.mxu0 %v213
      %v844 = vpop.f32.mrf.mxu0
      %v845 = vadd.f32 %v620, %v844
      %v846 = vpop.f32.mrf.mxu0
      %847 = vmatprep.mubr.f32.mxu0 0.0
      %848 = vmatmul.mubr.f32.gmra.mxu0 %v214
      %v849 = vpop.f32.mrf.mxu0
      %v850 = vadd.f32 %v625, %v849
      %v851 = vpop.f32.mrf.mxu0
      %852 = vmatprep.mubr.f32.mxu0 0.0
      %853 = vmatmul.mubr.f32.gmra.mxu0 %v216
      %v854 = vpop.f32.mrf.mxu0
      %v855 = vadd.f32 %v630, %v854
      %v856 = vpop.f32.mrf.mxu0
      %857 = vmatprep.mubr.f32.mxu0 0.0
      %858 = vmatmul.mubr.f32.gmra.mxu0 %v217
      %v859 = vpop.f32.mrf.mxu0
      %v860 = vadd.f32 %v635, %v859
      %v861 = vpop.f32.mrf.mxu0
      %862 = vdwg.mxu0
      %vm863 = vcmask 1045504
      %v864 = vrot.slane %v171, 2
      %v865 = vrot.slane %v172, 2
      %v866 = vsel %vm863, %v864, %v865
      %v867 = vrot.slane %v173, 2
      %v868 = vsel %vm863, %v865, %v867
      %v869 = vrot.slane %v174, 2
      %v870 = vrot.slane %v175, 2
      %v871 = vsel %vm863, %v869, %v870
      %v872 = vrot.slane %v176, 2
      %v873 = vsel %vm863, %v870, %v872
      %v874 = vrot.slane %v177, 2
      %v875 = vrot.slane %v178, 2
      %v876 = vsel %vm863, %v874, %v875
      %v877 = vrot.slane %v179, 2
      %v878 = vsel %vm863, %v875, %v877
      %v879 = vrot.slane %v180, 2
      %v880 = vrot.slane %v181, 2
      %v881 = vsel %vm863, %v879, %v880
      %v882 = vrot.slane %v182, 2
      %v883 = vsel %vm863, %v880, %v882
      %v884 = vrot.slane %v183, 2
      %v885 = vrot.slane %v184, 2
      %v886 = vsel %vm863, %v884, %v885
      %v887 = vrot.slane %v185, 2
      %v888 = vsel %vm863, %v885, %v887
      %v889 = vrot.slane %v186, 2
      %v890 = vrot.slane %v187, 2
      %v891 = vsel %vm863, %v889, %v890
      %v892 = vrot.slane %v188, 2
      %v893 = vsel %vm863, %v890, %v892
      %v894 = vrot.slane %v189, 2
      %v895 = vrot.slane %v190, 2
      %v896 = vsel %vm863, %v894, %v895
      %v897 = vrot.slane %v191, 2
      %v898 = vsel %vm863, %v895, %v897
      %v899 = vrot.slane %v192, 2
      %v900 = vrot.slane %v193, 2
      %v901 = vsel %vm863, %v899, %v900
      %v902 = vrot.slane %v194, 2
      %v903 = vsel %vm863, %v900, %v902
      %v904 = vrot.slane %v195, 2
      %v905 = vrot.slane %v196, 2
      %v906 = vsel %vm863, %v904, %v905
      %v907 = vrot.slane %v197, 2
      %v908 = vsel %vm863, %v905, %v907
      %v909 = vrot.slane %v198, 2
      %v910 = vrot.slane %v199, 2
      %v911 = vsel %vm863, %v909, %v910
      %v912 = vrot.slane %v200, 2
      %v913 = vsel %vm863, %v910, %v912
      %v914 = vrot.slane %v201, 2
      %v915 = vrot.slane %v202, 2
      %v916 = vsel %vm863, %v914, %v915
      %v917 = vrot.slane %v203, 2
      %v918 = vsel %vm863, %v915, %v917
      %v919 = vrot.slane %v204, 2
      %v920 = vrot.slane %v205, 2
      %v921 = vsel %vm863, %v919, %v920
      %v922 = vrot.slane %v206, 2
      %v923 = vsel %vm863, %v920, %v922
      %v924 = vrot.slane %v207, 2
      %v925 = vrot.slane %v208, 2
      %v926 = vsel %vm863, %v924, %v925
      %v927 = vrot.slane %v209, 2
      %v928 = vsel %vm863, %v925, %v927
      %v929 = vrot.slane %v210, 2
      %v930 = vrot.slane %v211, 2
      %v931 = vsel %vm863, %v929, %v930
      %v932 = vrot.slane %v212, 2
      %v933 = vsel %vm863, %v930, %v932
      %v934 = vrot.slane %v213, 2
      %v935 = vrot.slane %v214, 2
      %v936 = vsel %vm863, %v934, %v935
      %v937 = vrot.slane %v215, 2
      %v938 = vsel %vm863, %v935, %v937
      %v939 = vrot.slane %v216, 2
      %v940 = vrot.slane %v217, 2
      %v941 = vsel %vm863, %v939, %v940
      %v942 = vrot.slane %v218, 2
      %v943 = vsel %vm863, %v940, %v942
      %s976 = scalar_lea.vmem %s1, 256
      %v977 = vld [vmem:[%s976] sm:$0xff]
      %v978 = vld [vmem:[%s976 + $0x8] sm:$0xff]
      %v979 = vld [vmem:[%s976 + $0x10] sm:$0xff]
      %v980 = vld [vmem:[%s976 + $0x18] sm:$0xff]
      %v981 = vld [vmem:[%s976 + $0x20] sm:$0xff]
      %v982 = vld [vmem:[%s976 + $0x28] sm:$0xff]
      %v983 = vld [vmem:[%s976 + $0x30] sm:$0xff]
      %v984 = vld [vmem:[%s976 + $0x38] sm:$0xff]
      %v985 = vld [vmem:[%s976 + $0x40] sm:$0xff]
      %v986 = vld [vmem:[%s976 + $0x48] sm:$0xff]
      %v987 = vld [vmem:[%s976 + $0x50] sm:$0xff]
      %v988 = vld [vmem:[%s976 + $0x58] sm:$0xff]
      %v989 = vld [vmem:[%s976 + $0x60] sm:$0xff]
      %v990 = vld [vmem:[%s976 + $0x68] sm:$0xff]
      %v991 = vld [vmem:[%s976 + $0x70] sm:$0xff]
      %v992 = vld [vmem:[%s976 + $0x78] sm:$0xff]
      %993 = vmatprep.subr.mxu0 0.0
      %994 = vmatpush1.msra.mxu0 %v992
      %995 = vmatprep.subr.mxu0 0.0
      %996 = vmatpush1.msra.mxu0 %v991
      %997 = vmatprep.subr.mxu0 0.0
      %998 = vmatpush1.msra.mxu0 %v990
      %999 = vmatprep.subr.mxu0 0.0
      %1000 = vmatpush1.msra.mxu0 %v989
      %1001 = vmatprep.subr.mxu0 0.0
      %1002 = vmatpush1.msra.mxu0 %v988
      %1003 = vmatprep.subr.mxu0 0.0
      %1004 = vmatpush1.msra.mxu0 %v987
      %1005 = vmatprep.subr.mxu0 0.0
      %1006 = vmatpush1.msra.mxu0 %v986
      %1007 = vmatprep.subr.mxu0 0.0
      %1008 = vmatpush1.msra.mxu0 %v985
      %1009 = vmatprep.subr.mxu0 0.0
      %1010 = vmatpush1.msra.mxu0 %v984
      %1011 = vmatprep.subr.mxu0 0.0
      %1012 = vmatpush1.msra.mxu0 %v983
      %1013 = vmatprep.subr.mxu0 0.0
      %1014 = vmatpush1.msra.mxu0 %v982
      %1015 = vmatprep.subr.mxu0 0.0
      %1016 = vmatpush1.msra.mxu0 %v981
      %1017 = vmatprep.subr.mxu0 0.0
      %1018 = vmatpush1.msra.mxu0 %v980
      %1019 = vmatprep.subr.mxu0 0.0
      %1020 = vmatpush1.msra.mxu0 %v979
      %1021 = vmatprep.subr.mxu0 0.0
      %1022 = vmatpush1.msra.mxu0 %v978
      %1023 = vmatprep.subr.mxu0 0.0
      %1024 = vmatpush1.msra.mxu0 %v977
      %1025 = vmatprep.subr.mxu0 0.0
      %1026 = vmatpush2.msra.mxu0 0.0
      %1027 = vmatprep.subr.mxu0 0.0
      %1028 = vmatpush2.msra.mxu0 0.0
      %1029 = vmatprep.subr.mxu0 0.0
      %1030 = vmatpush2.msra.mxu0 0.0
      %1031 = vmatprep.subr.mxu0 0.0
      %1032 = vmatpush2.msra.mxu0 0.0
      %1033 = vmatprep.subr.mxu0 0.0
      %1034 = vmatpush2.msra.mxu0 0.0
      %1035 = vmatprep.subr.mxu0 0.0
      %1036 = vmatpush2.msra.mxu0 0.0
      %1037 = vmatprep.subr.mxu0 0.0
      %1038 = vmatpush2.msra.mxu0 0.0
      %1039 = vmatprep.subr.mxu0 0.0
      %1040 = vmatpush2.msra.mxu0 0.0
      %1041 = vmatprep.subr.mxu0 0.0
      %1042 = vmatpush2.msra.mxu0 0.0
      %1043 = vmatprep.subr.mxu0 0.0
      %1044 = vmatpush2.msra.mxu0 0.0
      %1045 = vmatprep.subr.mxu0 0.0
      %1046 = vmatpush2.msra.mxu0 0.0
      %1047 = vmatprep.subr.mxu0 0.0
      %1048 = vmatpush2.msra.mxu0 0.0
      %1049 = vmatprep.subr.mxu0 0.0
      %1050 = vmatpush2.msra.mxu0 0.0
      %1051 = vmatprep.subr.mxu0 0.0
      %1052 = vmatpush2.msra.mxu0 0.0
      %1053 = vmatprep.subr.mxu0 0.0
      %1054 = vmatpush2.msra.mxu0 0.0
      %1055 = vmatprep.subr.mxu0 0.0
      %1056 = vmatpush2.msra.mxu0 0.0
      %1057 = vmatprep.mubr.f32.mxu0 0.0
      %1058 = vmatmul.mubr.f32.gmra.mxu0 %v866
      %v1059 = vpop.f32.mrf.mxu0
      %v1060 = vadd.f32 0.0, %v1059
      %v1061 = vpop.f32.mrf.mxu0
      %1062 = vmatprep.mubr.f32.mxu0 0.0
      %1063 = vmatmul.mubr.f32.gmra.mxu0 %v868
      %v1064 = vpop.f32.mrf.mxu0
      %v1065 = vadd.f32 0.0, %v1064
      %v1066 = vpop.f32.mrf.mxu0
      %1067 = vmatprep.mubr.f32.mxu0 0.0
      %1068 = vmatmul.mubr.f32.gmra.mxu0 %v871
      %v1069 = vpop.f32.mrf.mxu0
      %v1070 = vadd.f32 0.0, %v1069
      %v1071 = vpop.f32.mrf.mxu0
      %1072 = vmatprep.mubr.f32.mxu0 0.0
      %1073 = vmatmul.mubr.f32.gmra.mxu0 %v873
      %v1074 = vpop.f32.mrf.mxu0
      %v1075 = vadd.f32 0.0, %v1074
      %v1076 = vpop.f32.mrf.mxu0
      %1077 = vmatprep.mubr.f32.mxu0 0.0
      %1078 = vmatmul.mubr.f32.gmra.mxu0 %v876
      %v1079 = vpop.f32.mrf.mxu0
      %v1080 = vadd.f32 0.0, %v1079
      %v1081 = vpop.f32.mrf.mxu0
      %1082 = vmatprep.mubr.f32.mxu0 0.0
      %1083 = vmatmul.mubr.f32.gmra.mxu0 %v878
      %v1084 = vpop.f32.mrf.mxu0
      %v1085 = vadd.f32 0.0, %v1084
      %v1086 = vpop.f32.mrf.mxu0
      %1087 = vmatprep.mubr.f32.mxu0 0.0
      %1088 = vmatmul.mubr.f32.gmra.mxu0 %v881
      %v1089 = vpop.f32.mrf.mxu0
      %v1090 = vadd.f32 0.0, %v1089
      %v1091 = vpop.f32.mrf.mxu0
      %1092 = vmatprep.mubr.f32.mxu0 0.0
      %1093 = vmatmul.mubr.f32.gmra.mxu0 %v883
      %v1094 = vpop.f32.mrf.mxu0
      %v1095 = vadd.f32 0.0, %v1094
      %v1096 = vpop.f32.mrf.mxu0
      %1097 = vmatprep.mubr.f32.mxu0 0.0
      %1098 = vmatmul.mubr.f32.gmra.mxu0 %v886
      %v1099 = vpop.f32.mrf.mxu0
      %v1100 = vadd.f32 0.0, %v1099
      %v1101 = vpop.f32.mrf.mxu0
      %1102 = vmatprep.mubr.f32.mxu0 0.0
      %1103 = vmatmul.mubr.f32.gmra.mxu0 %v888
      %v1104 = vpop.f32.mrf.mxu0
      %v1105 = vadd.f32 0.0, %v1104
      %v1106 = vpop.f32.mrf.mxu0
      %1107 = vmatprep.mubr.f32.mxu0 0.0
      %1108 = vmatmul.mubr.f32.gmra.mxu0 %v891
      %v1109 = vpop.f32.mrf.mxu0
      %v1110 = vadd.f32 0.0, %v1109
      %v1111 = vpop.f32.mrf.mxu0
      %1112 = vmatprep.mubr.f32.mxu0 0.0
      %1113 = vmatmul.mubr.f32.gmra.mxu0 %v893
      %v1114 = vpop.f32.mrf.mxu0
      %v1115 = vadd.f32 0.0, %v1114
      %v1116 = vpop.f32.mrf.mxu0
      %1117 = vmatprep.mubr.f32.mxu0 0.0
      %1118 = vmatmul.mubr.f32.gmra.mxu0 %v896
      %v1119 = vpop.f32.mrf.mxu0
      %v1120 = vadd.f32 0.0, %v1119
      %v1121 = vpop.f32.mrf.mxu0
      %1122 = vmatprep.mubr.f32.mxu0 0.0
      %1123 = vmatmul.mubr.f32.gmra.mxu0 %v898
      %v1124 = vpop.f32.mrf.mxu0
      %v1125 = vadd.f32 0.0, %v1124
      %v1126 = vpop.f32.mrf.mxu0
      %1127 = vmatprep.mubr.f32.mxu0 0.0
      %1128 = vmatmul.mubr.f32.gmra.mxu0 %v901
      %v1129 = vpop.f32.mrf.mxu0
      %v1130 = vadd.f32 0.0, %v1129
      %v1131 = vpop.f32.mrf.mxu0
      %1132 = vmatprep.mubr.f32.mxu0 0.0
      %1133 = vmatmul.mubr.f32.gmra.mxu0 %v903
      %v1134 = vpop.f32.mrf.mxu0
      %v1135 = vadd.f32 0.0, %v1134
      %v1136 = vpop.f32.mrf.mxu0
      %1137 = vmatprep.mubr.f32.mxu0 0.0
      %1138 = vmatmul.mubr.f32.gmra.mxu0 %v906
      %v1139 = vpop.f32.mrf.mxu0
      %v1140 = vadd.f32 0.0, %v1139
      %v1141 = vpop.f32.mrf.mxu0
      %1142 = vmatprep.mubr.f32.mxu0 0.0
      %1143 = vmatmul.mubr.f32.gmra.mxu0 %v908
      %v1144 = vpop.f32.mrf.mxu0
      %v1145 = vadd.f32 0.0, %v1144
      %v1146 = vpop.f32.mrf.mxu0
      %1147 = vmatprep.mubr.f32.mxu0 0.0
      %1148 = vmatmul.mubr.f32.gmra.mxu0 %v911
      %v1149 = vpop.f32.mrf.mxu0
      %v1150 = vadd.f32 0.0, %v1149
      %v1151 = vpop.f32.mrf.mxu0
      %1152 = vmatprep.mubr.f32.mxu0 0.0
      %1153 = vmatmul.mubr.f32.gmra.mxu0 %v913
      %v1154 = vpop.f32.mrf.mxu0
      %v1155 = vadd.f32 0.0, %v1154
      %v1156 = vpop.f32.mrf.mxu0
      %1157 = vmatprep.mubr.f32.mxu0 0.0
      %1158 = vmatmul.mubr.f32.gmra.mxu0 %v916
      %v1159 = vpop.f32.mrf.mxu0
      %v1160 = vadd.f32 0.0, %v1159
      %v1161 = vpop.f32.mrf.mxu0
      %1162 = vmatprep.mubr.f32.mxu0 0.0
      %1163 = vmatmul.mubr.f32.gmra.mxu0 %v918
      %v1164 = vpop.f32.mrf.mxu0
      %v1165 = vadd.f32 0.0, %v1164
      %v1166 = vpop.f32.mrf.mxu0
      %1167 = vmatprep.mubr.f32.mxu0 0.0
      %1168 = vmatmul.mubr.f32.gmra.mxu0 %v921
      %v1169 = vpop.f32.mrf.mxu0
      %v1170 = vadd.f32 0.0, %v1169
      %v1171 = vpop.f32.mrf.mxu0
      %1172 = vmatprep.mubr.f32.mxu0 0.0
      %1173 = vmatmul.mubr.f32.gmra.mxu0 %v923
      %v1174 = vpop.f32.mrf.mxu0
      %v1175 = vadd.f32 0.0, %v1174
      %v1176 = vpop.f32.mrf.mxu0
      %1177 = vmatprep.mubr.f32.mxu0 0.0
      %1178 = vmatmul.mubr.f32.gmra.mxu0 %v926
      %v1179 = vpop.f32.mrf.mxu0
      %v1180 = vadd.f32 0.0, %v1179
      %v1181 = vpop.f32.mrf.mxu0
      %1182 = vmatprep.mubr.f32.mxu0 0.0
      %1183 = vmatmul.mubr.f32.gmra.mxu0 %v928
      %v1184 = vpop.f32.mrf.mxu0
      %v1185 = vadd.f32 0.0, %v1184
      %v1186 = vpop.f32.mrf.mxu0
      %1187 = vmatprep.mubr.f32.mxu0 0.0
      %1188 = vmatmul.mubr.f32.gmra.mxu0 %v931
      %v1189 = vpop.f32.mrf.mxu0
      %v1190 = vadd.f32 0.0, %v1189
      %v1191 = vpop.f32.mrf.mxu0
      %1192 = vmatprep.mubr.f32.mxu0 0.0
      %1193 = vmatmul.mubr.f32.gmra.mxu0 %v933
      %v1194 = vpop.f32.mrf.mxu0
      %v1195 = vadd.f32 0.0, %v1194
      %v1196 = vpop.f32.mrf.mxu0
      %1197 = vmatprep.mubr.f32.mxu0 0.0
      %1198 = vmatmul.mubr.f32.gmra.mxu0 %v936
      %v1199 = vpop.f32.mrf.mxu0
      %v1200 = vadd.f32 0.0, %v1199
      %v1201 = vpop.f32.mrf.mxu0
      %1202 = vmatprep.mubr.f32.mxu0 0.0
      %1203 = vmatmul.mubr.f32.gmra.mxu0 %v938
      %v1204 = vpop.f32.mrf.mxu0
      %v1205 = vadd.f32 0.0, %v1204
      %v1206 = vpop.f32.mrf.mxu0
      %1207 = vmatprep.mubr.f32.mxu0 0.0
      %1208 = vmatmul.mubr.f32.gmra.mxu0 %v941
      %v1209 = vpop.f32.mrf.mxu0
      %v1210 = vadd.f32 0.0, %v1209
      %v1211 = vpop.f32.mrf.mxu0
      %1212 = vmatprep.mubr.f32.mxu0 0.0
      %1213 = vmatmul.mubr.f32.gmra.mxu0 %v943
      %v1214 = vpop.f32.mrf.mxu0
      %v1215 = vadd.f32 0.0, %v1214
      %v1216 = vpop.f32.mrf.mxu0
      %1217 = vdwg.mxu0
      %v1218 = vadd.f32 %v705, %v1060
      %v1219 = vadd.f32 %v710, %v1065
      %v1220 = vadd.f32 %v715, %v1070
      %v1221 = vadd.f32 %v720, %v1075
      %v1222 = vadd.f32 %v725, %v1080
      %v1223 = vadd.f32 %v730, %v1085
      %v1224 = vadd.f32 %v735, %v1090
      %v1225 = vadd.f32 %v740, %v1095
      %v1226 = vadd.f32 %v745, %v1100
      %v1227 = vadd.f32 %v750, %v1105
      %v1228 = vadd.f32 %v755, %v1110
      %v1229 = vadd.f32 %v760, %v1115
      %v1230 = vadd.f32 %v765, %v1120
      %v1231 = vadd.f32 %v770, %v1125
      %v1232 = vadd.f32 %v775, %v1130
      %v1233 = vadd.f32 %v780, %v1135
      %v1234 = vadd.f32 %v785, %v1140
      %v1235 = vadd.f32 %v790, %v1145
      %v1236 = vadd.f32 %v795, %v1150
      %v1237 = vadd.f32 %v800, %v1155
      %v1238 = vadd.f32 %v805, %v1160
      %v1239 = vadd.f32 %v810, %v1165
      %v1240 = vadd.f32 %v815, %v1170
      %v1241 = vadd.f32 %v820, %v1175
      %v1242 = vadd.f32 %v825, %v1180
      %v1243 = vadd.f32 %v830, %v1185
      %v1244 = vadd.f32 %v835, %v1190
      %v1245 = vadd.f32 %v840, %v1195
      %v1246 = vadd.f32 %v845, %v1200
      %v1247 = vadd.f32 %v850, %v1205
      %v1248 = vadd.f32 %v855, %v1210
      %v1249 = vadd.f32 %v860, %v1215
      %s1250 = scalar_lea.vmem %s165, 24
      %v1251 = vld [vmem:[%s1250] sm:$0xff]
      %v1252 = vld [vmem:[%s1250 + $0x8] sm:$0xff]
      %v1253 = vld [vmem:[%s1250 + $0x10] sm:$0x3]
      %v1254 = vld [vmem:[%s1250 + $0x18] sm:$0xff]
      %v1255 = vld [vmem:[%s1250 + $0x20] sm:$0xff]
      %v1256 = vld [vmem:[%s1250 + $0x28] sm:$0x3]
      %v1257 = vld [vmem:[%s1250 + $0x30] sm:$0xff]
      %v1258 = vld [vmem:[%s1250 + $0x38] sm:$0xff]
      %v1259 = vld [vmem:[%s1250 + $0x40] sm:$0x3]
      %v1260 = vld [vmem:[%s1250 + $0x48] sm:$0xff]
      %v1261 = vld [vmem:[%s1250 + $0x50] sm:$0xff]
      %v1262 = vld [vmem:[%s1250 + $0x58] sm:$0x3]
      %v1263 = vld [vmem:[%s1250 + $0x60] sm:$0xff]
      %v1264 = vld [vmem:[%s1250 + $0x68] sm:$0xff]
      %v1265 = vld [vmem:[%s1250 + $0x70] sm:$0x3]
      %v1266 = vld [vmem:[%s1250 + $0x78] sm:$0xff]
      %v1267 = vld [vmem:[%s1250 + $0x80] sm:$0xff]
      %v1268 = vld [vmem:[%s1250 + $0x88] sm:$0x3]
      %v1269 = vld [vmem:[%s1250 + $0x90] sm:$0xff]
      %v1270 = vld [vmem:[%s1250 + $0x98] sm:$0xff]
      %v1271 = vld [vmem:[%s1250 + $0xa0] sm:$0x3]
      %v1272 = vld [vmem:[%s1250 + $0xa8] sm:$0xff]
      %v1273 = vld [vmem:[%s1250 + $0xb0] sm:$0xff]
      %v1274 = vld [vmem:[%s1250 + $0xb8] sm:$0x3]
      %v1275 = vld [vmem:[%s1250 + $0xc0] sm:$0xff]
      %v1276 = vld [vmem:[%s1250 + $0xc8] sm:$0xff]
      %v1277 = vld [vmem:[%s1250 + $0xd0] sm:$0x3]
      %v1278 = vld [vmem:[%s1250 + $0xd8] sm:$0xff]
      %v1279 = vld [vmem:[%s1250 + $0xe0] sm:$0xff]
      %v1280 = vld [vmem:[%s1250 + $0xe8] sm:$0x3]
      %v1281 = vld [vmem:[%s1250 + $0xf0] sm:$0xff]
      %v1282 = vld [vmem:[%s1250 + $0xf8] sm:$0xff]
      %v1283 = vld [vmem:[%s1250 + $0x100] sm:$0x3]
      %v1284 = vld [vmem:[%s1250 + $0x108] sm:$0xff]
      %v1285 = vld [vmem:[%s1250 + $0x110] sm:$0xff]
      %v1286 = vld [vmem:[%s1250 + $0x118] sm:$0x3]
      %v1287 = vld [vmem:[%s1250 + $0x120] sm:$0xff]
      %v1288 = vld [vmem:[%s1250 + $0x128] sm:$0xff]
      %v1289 = vld [vmem:[%s1250 + $0x130] sm:$0x3]
      %v1290 = vld [vmem:[%s1250 + $0x138] sm:$0xff]
      %v1291 = vld [vmem:[%s1250 + $0x140] sm:$0xff]
      %v1292 = vld [vmem:[%s1250 + $0x148] sm:$0x3]
      %v1293 = vld [vmem:[%s1250 + $0x150] sm:$0xff]
      %v1294 = vld [vmem:[%s1250 + $0x158] sm:$0xff]
      %v1295 = vld [vmem:[%s1250 + $0x160] sm:$0x3]
      %v1296 = vld [vmem:[%s1250 + $0x168] sm:$0xff]
      %v1297 = vld [vmem:[%s1250 + $0x170] sm:$0xff]
      %v1298 = vld [vmem:[%s1250 + $0x178] sm:$0x3]
      %s1299 = scalar_lea.vmem %s1, 384
      %v1300 = vld [vmem:[%s1299] sm:$0xff]
      %v1301 = vld [vmem:[%s1299 + $0x8] sm:$0xff]
      %v1302 = vld [vmem:[%s1299 + $0x10] sm:$0xff]
      %v1303 = vld [vmem:[%s1299 + $0x18] sm:$0xff]
      %v1304 = vld [vmem:[%s1299 + $0x20] sm:$0xff]
      %v1305 = vld [vmem:[%s1299 + $0x28] sm:$0xff]
      %v1306 = vld [vmem:[%s1299 + $0x30] sm:$0xff]
      %v1307 = vld [vmem:[%s1299 + $0x38] sm:$0xff]
      %v1308 = vld [vmem:[%s1299 + $0x40] sm:$0xff]
      %v1309 = vld [vmem:[%s1299 + $0x48] sm:$0xff]
      %v1310 = vld [vmem:[%s1299 + $0x50] sm:$0xff]
      %v1311 = vld [vmem:[%s1299 + $0x58] sm:$0xff]
      %v1312 = vld [vmem:[%s1299 + $0x60] sm:$0xff]
      %v1313 = vld [vmem:[%s1299 + $0x68] sm:$0xff]
      %v1314 = vld [vmem:[%s1299 + $0x70] sm:$0xff]
      %v1315 = vld [vmem:[%s1299 + $0x78] sm:$0xff]
      %1316 = vmatprep.subr.mxu0 0.0
      %1317 = vmatpush1.msra.mxu0 %v1315
      %1318 = vmatprep.subr.mxu0 0.0
      %1319 = vmatpush1.msra.mxu0 %v1314
      %1320 = vmatprep.subr.mxu0 0.0
      %1321 = vmatpush1.msra.mxu0 %v1313
      %1322 = vmatprep.subr.mxu0 0.0
      %1323 = vmatpush1.msra.mxu0 %v1312
      %1324 = vmatprep.subr.mxu0 0.0
      %1325 = vmatpush1.msra.mxu0 %v1311
      %1326 = vmatprep.subr.mxu0 0.0
      %1327 = vmatpush1.msra.mxu0 %v1310
      %1328 = vmatprep.subr.mxu0 0.0
      %1329 = vmatpush1.msra.mxu0 %v1309
      %1330 = vmatprep.subr.mxu0 0.0
      %1331 = vmatpush1.msra.mxu0 %v1308
      %1332 = vmatprep.subr.mxu0 0.0
      %1333 = vmatpush1.msra.mxu0 %v1307
      %1334 = vmatprep.subr.mxu0 0.0
      %1335 = vmatpush1.msra.mxu0 %v1306
      %1336 = vmatprep.subr.mxu0 0.0
      %1337 = vmatpush1.msra.mxu0 %v1305
      %1338 = vmatprep.subr.mxu0 0.0
      %1339 = vmatpush1.msra.mxu0 %v1304
      %1340 = vmatprep.subr.mxu0 0.0
      %1341 = vmatpush1.msra.mxu0 %v1303
      %1342 = vmatprep.subr.mxu0 0.0
      %1343 = vmatpush1.msra.mxu0 %v1302
      %1344 = vmatprep.subr.mxu0 0.0
      %1345 = vmatpush1.msra.mxu0 %v1301
      %1346 = vmatprep.subr.mxu0 0.0
      %1347 = vmatpush1.msra.mxu0 %v1300
      %1348 = vmatprep.subr.mxu0 0.0
      %1349 = vmatpush2.msra.mxu0 0.0
      %1350 = vmatprep.subr.mxu0 0.0
      %1351 = vmatpush2.msra.mxu0 0.0
      %1352 = vmatprep.subr.mxu0 0.0
      %1353 = vmatpush2.msra.mxu0 0.0
      %1354 = vmatprep.subr.mxu0 0.0
      %1355 = vmatpush2.msra.mxu0 0.0
      %1356 = vmatprep.subr.mxu0 0.0
      %1357 = vmatpush2.msra.mxu0 0.0
      %1358 = vmatprep.subr.mxu0 0.0
      %1359 = vmatpush2.msra.mxu0 0.0
      %1360 = vmatprep.subr.mxu0 0.0
      %1361 = vmatpush2.msra.mxu0 0.0
      %1362 = vmatprep.subr.mxu0 0.0
      %1363 = vmatpush2.msra.mxu0 0.0
      %1364 = vmatprep.subr.mxu0 0.0
      %1365 = vmatpush2.msra.mxu0 0.0
      %1366 = vmatprep.subr.mxu0 0.0
      %1367 = vmatpush2.msra.mxu0 0.0
      %1368 = vmatprep.subr.mxu0 0.0
      %1369 = vmatpush2.msra.mxu0 0.0
      %1370 = vmatprep.subr.mxu0 0.0
      %1371 = vmatpush2.msra.mxu0 0.0
      %1372 = vmatprep.subr.mxu0 0.0
      %1373 = vmatpush2.msra.mxu0 0.0
      %1374 = vmatprep.subr.mxu0 0.0
      %1375 = vmatpush2.msra.mxu0 0.0
      %1376 = vmatprep.subr.mxu0 0.0
      %1377 = vmatpush2.msra.mxu0 0.0
      %1378 = vmatprep.subr.mxu0 0.0
      %1379 = vmatpush2.msra.mxu0 0.0
      %1380 = vmatprep.mubr.f32.mxu0 0.0
      %1381 = vmatmul.mubr.f32.gmra.mxu0 %v1251
      %v1382 = vpop.f32.mrf.mxu0
      %v1383 = vadd.f32 0.0, %v1382
      %v1384 = vpop.f32.mrf.mxu0
      %1385 = vmatprep.mubr.f32.mxu0 0.0
      %1386 = vmatmul.mubr.f32.gmra.mxu0 %v1252
      %v1387 = vpop.f32.mrf.mxu0
      %v1388 = vadd.f32 0.0, %v1387
      %v1389 = vpop.f32.mrf.mxu0
      %1390 = vmatprep.mubr.f32.mxu0 0.0
      %1391 = vmatmul.mubr.f32.gmra.mxu0 %v1254
      %v1392 = vpop.f32.mrf.mxu0
      %v1393 = vadd.f32 0.0, %v1392
      %v1394 = vpop.f32.mrf.mxu0
      %1395 = vmatprep.mubr.f32.mxu0 0.0
      %1396 = vmatmul.mubr.f32.gmra.mxu0 %v1255
      %v1397 = vpop.f32.mrf.mxu0
      %v1398 = vadd.f32 0.0, %v1397
      %v1399 = vpop.f32.mrf.mxu0
      %1400 = vmatprep.mubr.f32.mxu0 0.0
      %1401 = vmatmul.mubr.f32.gmra.mxu0 %v1257
      %v1402 = vpop.f32.mrf.mxu0
      %v1403 = vadd.f32 0.0, %v1402
      %v1404 = vpop.f32.mrf.mxu0
      %1405 = vmatprep.mubr.f32.mxu0 0.0
      %1406 = vmatmul.mubr.f32.gmra.mxu0 %v1258
      %v1407 = vpop.f32.mrf.mxu0
      %v1408 = vadd.f32 0.0, %v1407
      %v1409 = vpop.f32.mrf.mxu0
      %1410 = vmatprep.mubr.f32.mxu0 0.0
      %1411 = vmatmul.mubr.f32.gmra.mxu0 %v1260
      %v1412 = vpop.f32.mrf.mxu0
      %v1413 = vadd.f32 0.0, %v1412
      %v1414 = vpop.f32.mrf.mxu0
      %1415 = vmatprep.mubr.f32.mxu0 0.0
      %1416 = vmatmul.mubr.f32.gmra.mxu0 %v1261
      %v1417 = vpop.f32.mrf.mxu0
      %v1418 = vadd.f32 0.0, %v1417
      %v1419 = vpop.f32.mrf.mxu0
      %1420 = vmatprep.mubr.f32.mxu0 0.0
      %1421 = vmatmul.mubr.f32.gmra.mxu0 %v1263
      %v1422 = vpop.f32.mrf.mxu0
      %v1423 = vadd.f32 0.0, %v1422
      %v1424 = vpop.f32.mrf.mxu0
      %1425 = vmatprep.mubr.f32.mxu0 0.0
      %1426 = vmatmul.mubr.f32.gmra.mxu0 %v1264
      %v1427 = vpop.f32.mrf.mxu0
      %v1428 = vadd.f32 0.0, %v1427
      %v1429 = vpop.f32.mrf.mxu0
      %1430 = vmatprep.mubr.f32.mxu0 0.0
      %1431 = vmatmul.mubr.f32.gmra.mxu0 %v1266
      %v1432 = vpop.f32.mrf.mxu0
      %v1433 = vadd.f32 0.0, %v1432
      %v1434 = vpop.f32.mrf.mxu0
      %1435 = vmatprep.mubr.f32.mxu0 0.0
      %1436 = vmatmul.mubr.f32.gmra.mxu0 %v1267
      %v1437 = vpop.f32.mrf.mxu0
      %v1438 = vadd.f32 0.0, %v1437
      %v1439 = vpop.f32.mrf.mxu0
      %1440 = vmatprep.mubr.f32.mxu0 0.0
      %1441 = vmatmul.mubr.f32.gmra.mxu0 %v1269
      %v1442 = vpop.f32.mrf.mxu0
      %v1443 = vadd.f32 0.0, %v1442
      %v1444 = vpop.f32.mrf.mxu0
      %1445 = vmatprep.mubr.f32.mxu0 0.0
      %1446 = vmatmul.mubr.f32.gmra.mxu0 %v1270
      %v1447 = vpop.f32.mrf.mxu0
      %v1448 = vadd.f32 0.0, %v1447
      %v1449 = vpop.f32.mrf.mxu0
      %1450 = vmatprep.mubr.f32.mxu0 0.0
      %1451 = vmatmul.mubr.f32.gmra.mxu0 %v1272
      %v1452 = vpop.f32.mrf.mxu0
      %v1453 = vadd.f32 0.0, %v1452
      %v1454 = vpop.f32.mrf.mxu0
      %1455 = vmatprep.mubr.f32.mxu0 0.0
      %1456 = vmatmul.mubr.f32.gmra.mxu0 %v1273
      %v1457 = vpop.f32.mrf.mxu0
      %v1458 = vadd.f32 0.0, %v1457
      %v1459 = vpop.f32.mrf.mxu0
      %1460 = vmatprep.mubr.f32.mxu0 0.0
      %1461 = vmatmul.mubr.f32.gmra.mxu0 %v1275
      %v1462 = vpop.f32.mrf.mxu0
      %v1463 = vadd.f32 0.0, %v1462
      %v1464 = vpop.f32.mrf.mxu0
      %1465 = vmatprep.mubr.f32.mxu0 0.0
      %1466 = vmatmul.mubr.f32.gmra.mxu0 %v1276
      %v1467 = vpop.f32.mrf.mxu0
      %v1468 = vadd.f32 0.0, %v1467
      %v1469 = vpop.f32.mrf.mxu0
      %1470 = vmatprep.mubr.f32.mxu0 0.0
      %1471 = vmatmul.mubr.f32.gmra.mxu0 %v1278
      %v1472 = vpop.f32.mrf.mxu0
      %v1473 = vadd.f32 0.0, %v1472
      %v1474 = vpop.f32.mrf.mxu0
      %1475 = vmatprep.mubr.f32.mxu0 0.0
      %1476 = vmatmul.mubr.f32.gmra.mxu0 %v1279
      %v1477 = vpop.f32.mrf.mxu0
      %v1478 = vadd.f32 0.0, %v1477
      %v1479 = vpop.f32.mrf.mxu0
      %1480 = vmatprep.mubr.f32.mxu0 0.0
      %1481 = vmatmul.mubr.f32.gmra.mxu0 %v1281
      %v1482 = vpop.f32.mrf.mxu0
      %v1483 = vadd.f32 0.0, %v1482
      %v1484 = vpop.f32.mrf.mxu0
      %1485 = vmatprep.mubr.f32.mxu0 0.0
      %1486 = vmatmul.mubr.f32.gmra.mxu0 %v1282
      %v1487 = vpop.f32.mrf.mxu0
      %v1488 = vadd.f32 0.0, %v1487
      %v1489 = vpop.f32.mrf.mxu0
      %1490 = vmatprep.mubr.f32.mxu0 0.0
      %1491 = vmatmul.mubr.f32.gmra.mxu0 %v1284
      %v1492 = vpop.f32.mrf.mxu0
      %v1493 = vadd.f32 0.0, %v1492
      %v1494 = vpop.f32.mrf.mxu0
      %1495 = vmatprep.mubr.f32.mxu0 0.0
      %1496 = vmatmul.mubr.f32.gmra.mxu0 %v1285
      %v1497 = vpop.f32.mrf.mxu0
      %v1498 = vadd.f32 0.0, %v1497
      %v1499 = vpop.f32.mrf.mxu0
      %1500 = vmatprep.mubr.f32.mxu0 0.0
      %1501 = vmatmul.mubr.f32.gmra.mxu0 %v1287
      %v1502 = vpop.f32.mrf.mxu0
      %v1503 = vadd.f32 0.0, %v1502
      %v1504 = vpop.f32.mrf.mxu0
      %1505 = vmatprep.mubr.f32.mxu0 0.0
      %1506 = vmatmul.mubr.f32.gmra.mxu0 %v1288
      %v1507 = vpop.f32.mrf.mxu0
      %v1508 = vadd.f32 0.0, %v1507
      %v1509 = vpop.f32.mrf.mxu0
      %1510 = vmatprep.mubr.f32.mxu0 0.0
      %1511 = vmatmul.mubr.f32.gmra.mxu0 %v1290
      %v1512 = vpop.f32.mrf.mxu0
      %v1513 = vadd.f32 0.0, %v1512
      %v1514 = vpop.f32.mrf.mxu0
      %1515 = vmatprep.mubr.f32.mxu0 0.0
      %1516 = vmatmul.mubr.f32.gmra.mxu0 %v1291
      %v1517 = vpop.f32.mrf.mxu0
      %v1518 = vadd.f32 0.0, %v1517
      %v1519 = vpop.f32.mrf.mxu0
      %1520 = vmatprep.mubr.f32.mxu0 0.0
      %1521 = vmatmul.mubr.f32.gmra.mxu0 %v1293
      %v1522 = vpop.f32.mrf.mxu0
      %v1523 = vadd.f32 0.0, %v1522
      %v1524 = vpop.f32.mrf.mxu0
      %1525 = vmatprep.mubr.f32.mxu0 0.0
      %1526 = vmatmul.mubr.f32.gmra.mxu0 %v1294
      %v1527 = vpop.f32.mrf.mxu0
      %v1528 = vadd.f32 0.0, %v1527
      %v1529 = vpop.f32.mrf.mxu0
      %1530 = vmatprep.mubr.f32.mxu0 0.0
      %1531 = vmatmul.mubr.f32.gmra.mxu0 %v1296
      %v1532 = vpop.f32.mrf.mxu0
      %v1533 = vadd.f32 0.0, %v1532
      %v1534 = vpop.f32.mrf.mxu0
      %1535 = vmatprep.mubr.f32.mxu0 0.0
      %1536 = vmatmul.mubr.f32.gmra.mxu0 %v1297
      %v1537 = vpop.f32.mrf.mxu0
      %v1538 = vadd.f32 0.0, %v1537
      %v1539 = vpop.f32.mrf.mxu0
      %1540 = vdwg.mxu0
      %v1541 = vadd.f32 %v1218, %v1383
      %v1542 = vadd.f32 %v1219, %v1388
      %v1543 = vadd.f32 %v1220, %v1393
      %v1544 = vadd.f32 %v1221, %v1398
      %v1545 = vadd.f32 %v1222, %v1403
      %v1546 = vadd.f32 %v1223, %v1408
      %v1547 = vadd.f32 %v1224, %v1413
      %v1548 = vadd.f32 %v1225, %v1418
      %v1549 = vadd.f32 %v1226, %v1423
      %v1550 = vadd.f32 %v1227, %v1428
      %v1551 = vadd.f32 %v1228, %v1433
      %v1552 = vadd.f32 %v1229, %v1438
      %v1553 = vadd.f32 %v1230, %v1443
      %v1554 = vadd.f32 %v1231, %v1448
      %v1555 = vadd.f32 %v1232, %v1453
      %v1556 = vadd.f32 %v1233, %v1458
      %v1557 = vadd.f32 %v1234, %v1463
      %v1558 = vadd.f32 %v1235, %v1468
      %v1559 = vadd.f32 %v1236, %v1473
      %v1560 = vadd.f32 %v1237, %v1478
      %v1561 = vadd.f32 %v1238, %v1483
      %v1562 = vadd.f32 %v1239, %v1488
      %v1563 = vadd.f32 %v1240, %v1493
      %v1564 = vadd.f32 %v1241, %v1498
      %v1565 = vadd.f32 %v1242, %v1503
      %v1566 = vadd.f32 %v1243, %v1508
      %v1567 = vadd.f32 %v1244, %v1513
      %v1568 = vadd.f32 %v1245, %v1518
      %v1569 = vadd.f32 %v1246, %v1523
      %v1570 = vadd.f32 %v1247, %v1528
      %v1571 = vadd.f32 %v1248, %v1533
      %v1572 = vadd.f32 %v1249, %v1538
      %v1621 = vrot.slane %v1251, 1
      %v1622 = vrot.slane %v1252, 1
      %v1623 = vsel %vm283, %v1621, %v1622
      %v1624 = vrot.slane %v1253, 1
      %v1625 = vsel %vm283, %v1622, %v1624
      %v1626 = vrot.slane %v1254, 1
      %v1627 = vrot.slane %v1255, 1
      %v1628 = vsel %vm283, %v1626, %v1627
      %v1629 = vrot.slane %v1256, 1
      %v1630 = vsel %vm283, %v1627, %v1629
      %v1631 = vrot.slane %v1257, 1
      %v1632 = vrot.slane %v1258, 1
      %v1633 = vsel %vm283, %v1631, %v1632
      %v1634 = vrot.slane %v1259, 1
      %v1635 = vsel %vm283, %v1632, %v1634
      %v1636 = vrot.slane %v1260, 1
      %v1637 = vrot.slane %v1261, 1
      %v1638 = vsel %vm283, %v1636, %v1637
      %v1639 = vrot.slane %v1262, 1
      %v1640 = vsel %vm283, %v1637, %v1639
      %v1641 = vrot.slane %v1263, 1
      %v1642 = vrot.slane %v1264, 1
      %v1643 = vsel %vm283, %v1641, %v1642
      %v1644 = vrot.slane %v1265, 1
      %v1645 = vsel %vm283, %v1642, %v1644
      %v1646 = vrot.slane %v1266, 1
      %v1647 = vrot.slane %v1267, 1
      %v1648 = vsel %vm283, %v1646, %v1647
      %v1649 = vrot.slane %v1268, 1
      %v1650 = vsel %vm283, %v1647, %v1649
      %v1651 = vrot.slane %v1269, 1
      %v1652 = vrot.slane %v1270, 1
      %v1653 = vsel %vm283, %v1651, %v1652
      %v1654 = vrot.slane %v1271, 1
      %v1655 = vsel %vm283, %v1652, %v1654
      %v1656 = vrot.slane %v1272, 1
      %v1657 = vrot.slane %v1273, 1
      %v1658 = vsel %vm283, %v1656, %v1657
      %v1659 = vrot.slane %v1274, 1
      %v1660 = vsel %vm283, %v1657, %v1659
      %v1661 = vrot.slane %v1275, 1
      %v1662 = vrot.slane %v1276, 1
      %v1663 = vsel %vm283, %v1661, %v1662
      %v1664 = vrot.slane %v1277, 1
      %v1665 = vsel %vm283, %v1662, %v1664
      %v1666 = vrot.slane %v1278, 1
      %v1667 = vrot.slane %v1279, 1
      %v1668 = vsel %vm283, %v1666, %v1667
      %v1669 = vrot.slane %v1280, 1
      %v1670 = vsel %vm283, %v1667, %v1669
      %v1671 = vrot.slane %v1281, 1
      %v1672 = vrot.slane %v1282, 1
      %v1673 = vsel %vm283, %v1671, %v1672
      %v1674 = vrot.slane %v1283, 1
      %v1675 = vsel %vm283, %v1672, %v1674
      %v1676 = vrot.slane %v1284, 1
      %v1677 = vrot.slane %v1285, 1
      %v1678 = vsel %vm283, %v1676, %v1677
      %v1679 = vrot.slane %v1286, 1
      %v1680 = vsel %vm283, %v1677, %v1679
      %v1681 = vrot.slane %v1287, 1
      %v1682 = vrot.slane %v1288, 1
      %v1683 = vsel %vm283, %v1681, %v1682
      %v1684 = vrot.slane %v1289, 1
      %v1685 = vsel %vm283, %v1682, %v1684
      %v1686 = vrot.slane %v1290, 1
      %v1687 = vrot.slane %v1291, 1
      %v1688 = vsel %vm283, %v1686, %v1687
      %v1689 = vrot.slane %v1292, 1
      %v1690 = vsel %vm283, %v1687, %v1689
      %v1691 = vrot.slane %v1293, 1
      %v1692 = vrot.slane %v1294, 1
      %v1693 = vsel %vm283, %v1691, %v1692
      %v1694 = vrot.slane %v1295, 1
      %v1695 = vsel %vm283, %v1692, %v1694
      %v1696 = vrot.slane %v1296, 1
      %v1697 = vrot.slane %v1297, 1
      %v1698 = vsel %vm283, %v1696, %v1697
      %v1699 = vrot.slane %v1298, 1
      %v1700 = vsel %vm283, %v1697, %v1699
      %s1733 = scalar_lea.vmem %s1, 512
      %v1734 = vld [vmem:[%s1733] sm:$0xff]
      %v1735 = vld [vmem:[%s1733 + $0x8] sm:$0xff]
      %v1736 = vld [vmem:[%s1733 + $0x10] sm:$0xff]
      %v1737 = vld [vmem:[%s1733 + $0x18] sm:$0xff]
      %v1738 = vld [vmem:[%s1733 + $0x20] sm:$0xff]
      %v1739 = vld [vmem:[%s1733 + $0x28] sm:$0xff]
      %v1740 = vld [vmem:[%s1733 + $0x30] sm:$0xff]
      %v1741 = vld [vmem:[%s1733 + $0x38] sm:$0xff]
      %v1742 = vld [vmem:[%s1733 + $0x40] sm:$0xff]
      %v1743 = vld [vmem:[%s1733 + $0x48] sm:$0xff]
      %v1744 = vld [vmem:[%s1733 + $0x50] sm:$0xff]
      %v1745 = vld [vmem:[%s1733 + $0x58] sm:$0xff]
      %v1746 = vld [vmem:[%s1733 + $0x60] sm:$0xff]
      %v1747 = vld [vmem:[%s1733 + $0x68] sm:$0xff]
      %v1748 = vld [vmem:[%s1733 + $0x70] sm:$0xff]
      %v1749 = vld [vmem:[%s1733 + $0x78] sm:$0xff]
      %1750 = vmatprep.subr.mxu0 0.0
      %1751 = vmatpush1.msra.mxu0 %v1749
      %1752 = vmatprep.subr.mxu0 0.0
      %1753 = vmatpush1.msra.mxu0 %v1748
      %1754 = vmatprep.subr.mxu0 0.0
      %1755 = vmatpush1.msra.mxu0 %v1747
      %1756 = vmatprep.subr.mxu0 0.0
      %1757 = vmatpush1.msra.mxu0 %v1746
      %1758 = vmatprep.subr.mxu0 0.0
      %1759 = vmatpush1.msra.mxu0 %v1745
      %1760 = vmatprep.subr.mxu0 0.0
      %1761 = vmatpush1.msra.mxu0 %v1744
      %1762 = vmatprep.subr.mxu0 0.0
      %1763 = vmatpush1.msra.mxu0 %v1743
      %1764 = vmatprep.subr.mxu0 0.0
      %1765 = vmatpush1.msra.mxu0 %v1742
      %1766 = vmatprep.subr.mxu0 0.0
      %1767 = vmatpush1.msra.mxu0 %v1741
      %1768 = vmatprep.subr.mxu0 0.0
      %1769 = vmatpush1.msra.mxu0 %v1740
      %1770 = vmatprep.subr.mxu0 0.0
      %1771 = vmatpush1.msra.mxu0 %v1739
      %1772 = vmatprep.subr.mxu0 0.0
      %1773 = vmatpush1.msra.mxu0 %v1738
      %1774 = vmatprep.subr.mxu0 0.0
      %1775 = vmatpush1.msra.mxu0 %v1737
      %1776 = vmatprep.subr.mxu0 0.0
      %1777 = vmatpush1.msra.mxu0 %v1736
      %1778 = vmatprep.subr.mxu0 0.0
      %1779 = vmatpush1.msra.mxu0 %v1735
      %1780 = vmatprep.subr.mxu0 0.0
      %1781 = vmatpush1.msra.mxu0 %v1734
      %1782 = vmatprep.subr.mxu0 0.0
      %1783 = vmatpush2.msra.mxu0 0.0
      %1784 = vmatprep.subr.mxu0 0.0
      %1785 = vmatpush2.msra.mxu0 0.0
      %1786 = vmatprep.subr.mxu0 0.0
      %1787 = vmatpush2.msra.mxu0 0.0
      %1788 = vmatprep.subr.mxu0 0.0
      %1789 = vmatpush2.msra.mxu0 0.0
      %1790 = vmatprep.subr.mxu0 0.0
      %1791 = vmatpush2.msra.mxu0 0.0
      %1792 = vmatprep.subr.mxu0 0.0
      %1793 = vmatpush2.msra.mxu0 0.0
      %1794 = vmatprep.subr.mxu0 0.0
      %1795 = vmatpush2.msra.mxu0 0.0
      %1796 = vmatprep.subr.mxu0 0.0
      %1797 = vmatpush2.msra.mxu0 0.0
      %1798 = vmatprep.subr.mxu0 0.0
      %1799 = vmatpush2.msra.mxu0 0.0
      %1800 = vmatprep.subr.mxu0 0.0
      %1801 = vmatpush2.msra.mxu0 0.0
      %1802 = vmatprep.subr.mxu0 0.0
      %1803 = vmatpush2.msra.mxu0 0.0
      %1804 = vmatprep.subr.mxu0 0.0
      %1805 = vmatpush2.msra.mxu0 0.0
      %1806 = vmatprep.subr.mxu0 0.0
      %1807 = vmatpush2.msra.mxu0 0.0
      %1808 = vmatprep.subr.mxu0 0.0
      %1809 = vmatpush2.msra.mxu0 0.0
      %1810 = vmatprep.subr.mxu0 0.0
      %1811 = vmatpush2.msra.mxu0 0.0
      %1812 = vmatprep.subr.mxu0 0.0
      %1813 = vmatpush2.msra.mxu0 0.0
      %1814 = vmatprep.mubr.f32.mxu0 0.0
      %1815 = vmatmul.mubr.f32.gmra.mxu0 %v1623
      %v1816 = vpop.f32.mrf.mxu0
      %v1817 = vadd.f32 0.0, %v1816
      %v1818 = vpop.f32.mrf.mxu0
      %1819 = vmatprep.mubr.f32.mxu0 0.0
      %1820 = vmatmul.mubr.f32.gmra.mxu0 %v1625
      %v1821 = vpop.f32.mrf.mxu0
      %v1822 = vadd.f32 0.0, %v1821
      %v1823 = vpop.f32.mrf.mxu0
      %1824 = vmatprep.mubr.f32.mxu0 0.0
      %1825 = vmatmul.mubr.f32.gmra.mxu0 %v1628
      %v1826 = vpop.f32.mrf.mxu0
      %v1827 = vadd.f32 0.0, %v1826
      %v1828 = vpop.f32.mrf.mxu0
      %1829 = vmatprep.mubr.f32.mxu0 0.0
      %1830 = vmatmul.mubr.f32.gmra.mxu0 %v1630
      %v1831 = vpop.f32.mrf.mxu0
      %v1832 = vadd.f32 0.0, %v1831
      %v1833 = vpop.f32.mrf.mxu0
      %1834 = vmatprep.mubr.f32.mxu0 0.0
      %1835 = vmatmul.mubr.f32.gmra.mxu0 %v1633
      %v1836 = vpop.f32.mrf.mxu0
      %v1837 = vadd.f32 0.0, %v1836
      %v1838 = vpop.f32.mrf.mxu0
      %1839 = vmatprep.mubr.f32.mxu0 0.0
      %1840 = vmatmul.mubr.f32.gmra.mxu0 %v1635
      %v1841 = vpop.f32.mrf.mxu0
      %v1842 = vadd.f32 0.0, %v1841
      %v1843 = vpop.f32.mrf.mxu0
      %1844 = vmatprep.mubr.f32.mxu0 0.0
      %1845 = vmatmul.mubr.f32.gmra.mxu0 %v1638
      %v1846 = vpop.f32.mrf.mxu0
      %v1847 = vadd.f32 0.0, %v1846
      %v1848 = vpop.f32.mrf.mxu0
      %1849 = vmatprep.mubr.f32.mxu0 0.0
      %1850 = vmatmul.mubr.f32.gmra.mxu0 %v1640
      %v1851 = vpop.f32.mrf.mxu0
      %v1852 = vadd.f32 0.0, %v1851
      %v1853 = vpop.f32.mrf.mxu0
      %1854 = vmatprep.mubr.f32.mxu0 0.0
      %1855 = vmatmul.mubr.f32.gmra.mxu0 %v1643
      %v1856 = vpop.f32.mrf.mxu0
      %v1857 = vadd.f32 0.0, %v1856
      %v1858 = vpop.f32.mrf.mxu0
      %1859 = vmatprep.mubr.f32.mxu0 0.0
      %1860 = vmatmul.mubr.f32.gmra.mxu0 %v1645
      %v1861 = vpop.f32.mrf.mxu0
      %v1862 = vadd.f32 0.0, %v1861
      %v1863 = vpop.f32.mrf.mxu0
      %1864 = vmatprep.mubr.f32.mxu0 0.0
      %1865 = vmatmul.mubr.f32.gmra.mxu0 %v1648
      %v1866 = vpop.f32.mrf.mxu0
      %v1867 = vadd.f32 0.0, %v1866
      %v1868 = vpop.f32.mrf.mxu0
      %1869 = vmatprep.mubr.f32.mxu0 0.0
      %1870 = vmatmul.mubr.f32.gmra.mxu0 %v1650
      %v1871 = vpop.f32.mrf.mxu0
      %v1872 = vadd.f32 0.0, %v1871
      %v1873 = vpop.f32.mrf.mxu0
      %1874 = vmatprep.mubr.f32.mxu0 0.0
      %1875 = vmatmul.mubr.f32.gmra.mxu0 %v1653
      %v1876 = vpop.f32.mrf.mxu0
      %v1877 = vadd.f32 0.0, %v1876
      %v1878 = vpop.f32.mrf.mxu0
      %1879 = vmatprep.mubr.f32.mxu0 0.0
      %1880 = vmatmul.mubr.f32.gmra.mxu0 %v1655
      %v1881 = vpop.f32.mrf.mxu0
      %v1882 = vadd.f32 0.0, %v1881
      %v1883 = vpop.f32.mrf.mxu0
      %1884 = vmatprep.mubr.f32.mxu0 0.0
      %1885 = vmatmul.mubr.f32.gmra.mxu0 %v1658
      %v1886 = vpop.f32.mrf.mxu0
      %v1887 = vadd.f32 0.0, %v1886
      %v1888 = vpop.f32.mrf.mxu0
      %1889 = vmatprep.mubr.f32.mxu0 0.0
      %1890 = vmatmul.mubr.f32.gmra.mxu0 %v1660
      %v1891 = vpop.f32.mrf.mxu0
      %v1892 = vadd.f32 0.0, %v1891
      %v1893 = vpop.f32.mrf.mxu0
      %1894 = vmatprep.mubr.f32.mxu0 0.0
      %1895 = vmatmul.mubr.f32.gmra.mxu0 %v1663
      %v1896 = vpop.f32.mrf.mxu0
      %v1897 = vadd.f32 0.0, %v1896
      %v1898 = vpop.f32.mrf.mxu0
      %1899 = vmatprep.mubr.f32.mxu0 0.0
      %1900 = vmatmul.mubr.f32.gmra.mxu0 %v1665
      %v1901 = vpop.f32.mrf.mxu0
      %v1902 = vadd.f32 0.0, %v1901
      %v1903 = vpop.f32.mrf.mxu0
      %1904 = vmatprep.mubr.f32.mxu0 0.0
      %1905 = vmatmul.mubr.f32.gmra.mxu0 %v1668
      %v1906 = vpop.f32.mrf.mxu0
      %v1907 = vadd.f32 0.0, %v1906
      %v1908 = vpop.f32.mrf.mxu0
      %1909 = vmatprep.mubr.f32.mxu0 0.0
      %1910 = vmatmul.mubr.f32.gmra.mxu0 %v1670
      %v1911 = vpop.f32.mrf.mxu0
      %v1912 = vadd.f32 0.0, %v1911
      %v1913 = vpop.f32.mrf.mxu0
      %1914 = vmatprep.mubr.f32.mxu0 0.0
      %1915 = vmatmul.mubr.f32.gmra.mxu0 %v1673
      %v1916 = vpop.f32.mrf.mxu0
      %v1917 = vadd.f32 0.0, %v1916
      %v1918 = vpop.f32.mrf.mxu0
      %1919 = vmatprep.mubr.f32.mxu0 0.0
      %1920 = vmatmul.mubr.f32.gmra.mxu0 %v1675
      %v1921 = vpop.f32.mrf.mxu0
      %v1922 = vadd.f32 0.0, %v1921
      %v1923 = vpop.f32.mrf.mxu0
      %1924 = vmatprep.mubr.f32.mxu0 0.0
      %1925 = vmatmul.mubr.f32.gmra.mxu0 %v1678
      %v1926 = vpop.f32.mrf.mxu0
      %v1927 = vadd.f32 0.0, %v1926
      %v1928 = vpop.f32.mrf.mxu0
      %1929 = vmatprep.mubr.f32.mxu0 0.0
      %1930 = vmatmul.mubr.f32.gmra.mxu0 %v1680
      %v1931 = vpop.f32.mrf.mxu0
      %v1932 = vadd.f32 0.0, %v1931
      %v1933 = vpop.f32.mrf.mxu0
      %1934 = vmatprep.mubr.f32.mxu0 0.0
      %1935 = vmatmul.mubr.f32.gmra.mxu0 %v1683
      %v1936 = vpop.f32.mrf.mxu0
      %v1937 = vadd.f32 0.0, %v1936
      %v1938 = vpop.f32.mrf.mxu0
      %1939 = vmatprep.mubr.f32.mxu0 0.0
      %1940 = vmatmul.mubr.f32.gmra.mxu0 %v1685
      %v1941 = vpop.f32.mrf.mxu0
      %v1942 = vadd.f32 0.0, %v1941
      %v1943 = vpop.f32.mrf.mxu0
      %1944 = vmatprep.mubr.f32.mxu0 0.0
      %1945 = vmatmul.mubr.f32.gmra.mxu0 %v1688
      %v1946 = vpop.f32.mrf.mxu0
      %v1947 = vadd.f32 0.0, %v1946
      %v1948 = vpop.f32.mrf.mxu0
      %1949 = vmatprep.mubr.f32.mxu0 0.0
      %1950 = vmatmul.mubr.f32.gmra.mxu0 %v1690
      %v1951 = vpop.f32.mrf.mxu0
      %v1952 = vadd.f32 0.0, %v1951
      %v1953 = vpop.f32.mrf.mxu0
      %1954 = vmatprep.mubr.f32.mxu0 0.0
      %1955 = vmatmul.mubr.f32.gmra.mxu0 %v1693
      %v1956 = vpop.f32.mrf.mxu0
      %v1957 = vadd.f32 0.0, %v1956
      %v1958 = vpop.f32.mrf.mxu0
      %1959 = vmatprep.mubr.f32.mxu0 0.0
      %1960 = vmatmul.mubr.f32.gmra.mxu0 %v1695
      %v1961 = vpop.f32.mrf.mxu0
      %v1962 = vadd.f32 0.0, %v1961
      %v1963 = vpop.f32.mrf.mxu0
      %1964 = vmatprep.mubr.f32.mxu0 0.0
      %1965 = vmatmul.mubr.f32.gmra.mxu0 %v1698
      %v1966 = vpop.f32.mrf.mxu0
      %v1967 = vadd.f32 0.0, %v1966
      %v1968 = vpop.f32.mrf.mxu0
      %1969 = vmatprep.mubr.f32.mxu0 0.0
      %1970 = vmatmul.mubr.f32.gmra.mxu0 %v1700
      %v1971 = vpop.f32.mrf.mxu0
      %v1972 = vadd.f32 0.0, %v1971
      %v1973 = vpop.f32.mrf.mxu0
      %1974 = vdwg.mxu0
      %v1975 = vadd.f32 %v1541, %v1817
      %v1976 = vadd.f32 %v1542, %v1822
      %v1977 = vadd.f32 %v1543, %v1827
      %v1978 = vadd.f32 %v1544, %v1832
      %v1979 = vadd.f32 %v1545, %v1837
      %v1980 = vadd.f32 %v1546, %v1842
      %v1981 = vadd.f32 %v1547, %v1847
      %v1982 = vadd.f32 %v1548, %v1852
      %v1983 = vadd.f32 %v1549, %v1857
      %v1984 = vadd.f32 %v1550, %v1862
      %v1985 = vadd.f32 %v1551, %v1867
      %v1986 = vadd.f32 %v1552, %v1872
      %v1987 = vadd.f32 %v1553, %v1877
      %v1988 = vadd.f32 %v1554, %v1882
      %v1989 = vadd.f32 %v1555, %v1887
      %v1990 = vadd.f32 %v1556, %v1892
      %v1991 = vadd.f32 %v1557, %v1897
      %v1992 = vadd.f32 %v1558, %v1902
      %v1993 = vadd.f32 %v1559, %v1907
      %v1994 = vadd.f32 %v1560, %v1912
      %v1995 = vadd.f32 %v1561, %v1917
      %v1996 = vadd.f32 %v1562, %v1922
      %v1997 = vadd.f32 %v1563, %v1927
      %v1998 = vadd.f32 %v1564, %v1932
      %v1999 = vadd.f32 %v1565, %v1937
      %v2000 = vadd.f32 %v1566, %v1942
      %v2001 = vadd.f32 %v1567, %v1947
      %v2002 = vadd.f32 %v1568, %v1952
      %v2003 = vadd.f32 %v1569, %v1957
      %v2004 = vadd.f32 %v1570, %v1962
      %v2005 = vadd.f32 %v1571, %v1967
      %v2006 = vadd.f32 %v1572, %v1972
      %v2007 = vrot.slane %v1251, 2
      %v2008 = vrot.slane %v1252, 2
      %v2009 = vsel %vm863, %v2007, %v2008
      %v2010 = vrot.slane %v1253, 2
      %v2011 = vsel %vm863, %v2008, %v2010
      %v2012 = vrot.slane %v1254, 2
      %v2013 = vrot.slane %v1255, 2
      %v2014 = vsel %vm863, %v2012, %v2013
      %v2015 = vrot.slane %v1256, 2
      %v2016 = vsel %vm863, %v2013, %v2015
      %v2017 = vrot.slane %v1257, 2
      %v2018 = vrot.slane %v1258, 2
      %v2019 = vsel %vm863, %v2017, %v2018
      %v2020 = vrot.slane %v1259, 2
      %v2021 = vsel %vm863, %v2018, %v2020
      %v2022 = vrot.slane %v1260, 2
      %v2023 = vrot.slane %v1261, 2
      %v2024 = vsel %vm863, %v2022, %v2023
      %v2025 = vrot.slane %v1262, 2
      %v2026 = vsel %vm863, %v2023, %v2025
      %v2027 = vrot.slane %v1263, 2
      %v2028 = vrot.slane %v1264, 2
      %v2029 = vsel %vm863, %v2027, %v2028
      %v2030 = vrot.slane %v1265, 2
      %v2031 = vsel %vm863, %v2028, %v2030
      %v2032 = vrot.slane %v1266, 2
      %v2033 = vrot.slane %v1267, 2
      %v2034 = vsel %vm863, %v2032, %v2033
      %v2035 = vrot.slane %v1268, 2
      %v2036 = vsel %vm863, %v2033, %v2035
      %v2037 = vrot.slane %v1269, 2
      %v2038 = vrot.slane %v1270, 2
      %v2039 = vsel %vm863, %v2037, %v2038
      %v2040 = vrot.slane %v1271, 2
      %v2041 = vsel %vm863, %v2038, %v2040
      %v2042 = vrot.slane %v1272, 2
      %v2043 = vrot.slane %v1273, 2
      %v2044 = vsel %vm863, %v2042, %v2043
      %v2045 = vrot.slane %v1274, 2
      %v2046 = vsel %vm863, %v2043, %v2045
      %v2047 = vrot.slane %v1275, 2
      %v2048 = vrot.slane %v1276, 2
      %v2049 = vsel %vm863, %v2047, %v2048
      %v2050 = vrot.slane %v1277, 2
      %v2051 = vsel %vm863, %v2048, %v2050
      %v2052 = vrot.slane %v1278, 2
      %v2053 = vrot.slane %v1279, 2
      %v2054 = vsel %vm863, %v2052, %v2053
      %v2055 = vrot.slane %v1280, 2
      %v2056 = vsel %vm863, %v2053, %v2055
      %v2057 = vrot.slane %v1281, 2
      %v2058 = vrot.slane %v1282, 2
      %v2059 = vsel %vm863, %v2057, %v2058
      %v2060 = vrot.slane %v1283, 2
      %v2061 = vsel %vm863, %v2058, %v2060
      %v2062 = vrot.slane %v1284, 2
      %v2063 = vrot.slane %v1285, 2
      %v2064 = vsel %vm863, %v2062, %v2063
      %v2065 = vrot.slane %v1286, 2
      %v2066 = vsel %vm863, %v2063, %v2065
      %v2067 = vrot.slane %v1287, 2
      %v2068 = vrot.slane %v1288, 2
      %v2069 = vsel %vm863, %v2067, %v2068
      %v2070 = vrot.slane %v1289, 2
      %v2071 = vsel %vm863, %v2068, %v2070
      %v2072 = vrot.slane %v1290, 2
      %v2073 = vrot.slane %v1291, 2
      %v2074 = vsel %vm863, %v2072, %v2073
      %v2075 = vrot.slane %v1292, 2
      %v2076 = vsel %vm863, %v2073, %v2075
      %v2077 = vrot.slane %v1293, 2
      %v2078 = vrot.slane %v1294, 2
      %v2079 = vsel %vm863, %v2077, %v2078
      %v2080 = vrot.slane %v1295, 2
      %v2081 = vsel %vm863, %v2078, %v2080
      %v2082 = vrot.slane %v1296, 2
      %v2083 = vrot.slane %v1297, 2
      %v2084 = vsel %vm863, %v2082, %v2083
      %v2085 = vrot.slane %v1298, 2
      %v2086 = vsel %vm863, %v2083, %v2085
      %s2119 = scalar_lea.vmem %s1, 640
      %v2120 = vld [vmem:[%s2119] sm:$0xff]
      %v2121 = vld [vmem:[%s2119 + $0x8] sm:$0xff]
      %v2122 = vld [vmem:[%s2119 + $0x10] sm:$0xff]
      %v2123 = vld [vmem:[%s2119 + $0x18] sm:$0xff]
      %v2124 = vld [vmem:[%s2119 + $0x20] sm:$0xff]
      %v2125 = vld [vmem:[%s2119 + $0x28] sm:$0xff]
      %v2126 = vld [vmem:[%s2119 + $0x30] sm:$0xff]
      %v2127 = vld [vmem:[%s2119 + $0x38] sm:$0xff]
      %v2128 = vld [vmem:[%s2119 + $0x40] sm:$0xff]
      %v2129 = vld [vmem:[%s2119 + $0x48] sm:$0xff]
      %v2130 = vld [vmem:[%s2119 + $0x50] sm:$0xff]
      %v2131 = vld [vmem:[%s2119 + $0x58] sm:$0xff]
      %v2132 = vld [vmem:[%s2119 + $0x60] sm:$0xff]
      %v2133 = vld [vmem:[%s2119 + $0x68] sm:$0xff]
      %v2134 = vld [vmem:[%s2119 + $0x70] sm:$0xff]
      %v2135 = vld [vmem:[%s2119 + $0x78] sm:$0xff]
      %2136 = vmatprep.subr.mxu0 0.0
      %2137 = vmatpush1.msra.mxu0 %v2135
      %2138 = vmatprep.subr.mxu0 0.0
      %2139 = vmatpush1.msra.mxu0 %v2134
      %2140 = vmatprep.subr.mxu0 0.0
      %2141 = vmatpush1.msra.mxu0 %v2133
      %2142 = vmatprep.subr.mxu0 0.0
      %2143 = vmatpush1.msra.mxu0 %v2132
      %2144 = vmatprep.subr.mxu0 0.0
      %2145 = vmatpush1.msra.mxu0 %v2131
      %2146 = vmatprep.subr.mxu0 0.0
      %2147 = vmatpush1.msra.mxu0 %v2130
      %2148 = vmatprep.subr.mxu0 0.0
      %2149 = vmatpush1.msra.mxu0 %v2129
      %2150 = vmatprep.subr.mxu0 0.0
      %2151 = vmatpush1.msra.mxu0 %v2128
      %2152 = vmatprep.subr.mxu0 0.0
      %2153 = vmatpush1.msra.mxu0 %v2127
      %2154 = vmatprep.subr.mxu0 0.0
      %2155 = vmatpush1.msra.mxu0 %v2126
      %2156 = vmatprep.subr.mxu0 0.0
      %2157 = vmatpush1.msra.mxu0 %v2125
      %2158 = vmatprep.subr.mxu0 0.0
      %2159 = vmatpush1.msra.mxu0 %v2124
      %2160 = vmatprep.subr.mxu0 0.0
      %2161 = vmatpush1.msra.mxu0 %v2123
      %2162 = vmatprep.subr.mxu0 0.0
      %2163 = vmatpush1.msra.mxu0 %v2122
      %2164 = vmatprep.subr.mxu0 0.0
      %2165 = vmatpush1.msra.mxu0 %v2121
      %2166 = vmatprep.subr.mxu0 0.0
      %2167 = vmatpush1.msra.mxu0 %v2120
      %2168 = vmatprep.subr.mxu0 0.0
      %2169 = vmatpush2.msra.mxu0 0.0
      %2170 = vmatprep.subr.mxu0 0.0
      %2171 = vmatpush2.msra.mxu0 0.0
      %2172 = vmatprep.subr.mxu0 0.0
      %2173 = vmatpush2.msra.mxu0 0.0
      %2174 = vmatprep.subr.mxu0 0.0
      %2175 = vmatpush2.msra.mxu0 0.0
      %2176 = vmatprep.subr.mxu0 0.0
      %2177 = vmatpush2.msra.mxu0 0.0
      %2178 = vmatprep.subr.mxu0 0.0
      %2179 = vmatpush2.msra.mxu0 0.0
      %2180 = vmatprep.subr.mxu0 0.0
      %2181 = vmatpush2.msra.mxu0 0.0
      %2182 = vmatprep.subr.mxu0 0.0
      %2183 = vmatpush2.msra.mxu0 0.0
      %2184 = vmatprep.subr.mxu0 0.0
      %2185 = vmatpush2.msra.mxu0 0.0
      %2186 = vmatprep.subr.mxu0 0.0
      %2187 = vmatpush2.msra.mxu0 0.0
      %2188 = vmatprep.subr.mxu0 0.0
      %2189 = vmatpush2.msra.mxu0 0.0
      %2190 = vmatprep.subr.mxu0 0.0
      %2191 = vmatpush2.msra.mxu0 0.0
      %2192 = vmatprep.subr.mxu0 0.0
      %2193 = vmatpush2.msra.mxu0 0.0
      %2194 = vmatprep.subr.mxu0 0.0
      %2195 = vmatpush2.msra.mxu0 0.0
      %2196 = vmatprep.subr.mxu0 0.0
      %2197 = vmatpush2.msra.mxu0 0.0
      %2198 = vmatprep.subr.mxu0 0.0
      %2199 = vmatpush2.msra.mxu0 0.0
      %2200 = vmatprep.mubr.f32.mxu0 0.0
      %2201 = vmatmul.mubr.f32.gmra.mxu0 %v2009
      %v2202 = vpop.f32.mrf.mxu0
      %v2203 = vadd.f32 0.0, %v2202
      %v2204 = vpop.f32.mrf.mxu0
      %2205 = vmatprep.mubr.f32.mxu0 0.0
      %2206 = vmatmul.mubr.f32.gmra.mxu0 %v2011
      %v2207 = vpop.f32.mrf.mxu0
      %v2208 = vadd.f32 0.0, %v2207
      %v2209 = vpop.f32.mrf.mxu0
      %2210 = vmatprep.mubr.f32.mxu0 0.0
      %2211 = vmatmul.mubr.f32.gmra.mxu0 %v2014
      %v2212 = vpop.f32.mrf.mxu0
      %v2213 = vadd.f32 0.0, %v2212
      %v2214 = vpop.f32.mrf.mxu0
      %2215 = vmatprep.mubr.f32.mxu0 0.0
      %2216 = vmatmul.mubr.f32.gmra.mxu0 %v2016
      %v2217 = vpop.f32.mrf.mxu0
      %v2218 = vadd.f32 0.0, %v2217
      %v2219 = vpop.f32.mrf.mxu0
      %2220 = vmatprep.mubr.f32.mxu0 0.0
      %2221 = vmatmul.mubr.f32.gmra.mxu0 %v2019
      %v2222 = vpop.f32.mrf.mxu0
      %v2223 = vadd.f32 0.0, %v2222
      %v2224 = vpop.f32.mrf.mxu0
      %2225 = vmatprep.mubr.f32.mxu0 0.0
      %2226 = vmatmul.mubr.f32.gmra.mxu0 %v2021
      %v2227 = vpop.f32.mrf.mxu0
      %v2228 = vadd.f32 0.0, %v2227
      %v2229 = vpop.f32.mrf.mxu0
      %2230 = vmatprep.mubr.f32.mxu0 0.0
      %2231 = vmatmul.mubr.f32.gmra.mxu0 %v2024
      %v2232 = vpop.f32.mrf.mxu0
      %v2233 = vadd.f32 0.0, %v2232
      %v2234 = vpop.f32.mrf.mxu0
      %2235 = vmatprep.mubr.f32.mxu0 0.0
      %2236 = vmatmul.mubr.f32.gmra.mxu0 %v2026
      %v2237 = vpop.f32.mrf.mxu0
      %v2238 = vadd.f32 0.0, %v2237
      %v2239 = vpop.f32.mrf.mxu0
      %2240 = vmatprep.mubr.f32.mxu0 0.0
      %2241 = vmatmul.mubr.f32.gmra.mxu0 %v2029
      %v2242 = vpop.f32.mrf.mxu0
      %v2243 = vadd.f32 0.0, %v2242
      %v2244 = vpop.f32.mrf.mxu0
      %2245 = vmatprep.mubr.f32.mxu0 0.0
      %2246 = vmatmul.mubr.f32.gmra.mxu0 %v2031
      %v2247 = vpop.f32.mrf.mxu0
      %v2248 = vadd.f32 0.0, %v2247
      %v2249 = vpop.f32.mrf.mxu0
      %2250 = vmatprep.mubr.f32.mxu0 0.0
      %2251 = vmatmul.mubr.f32.gmra.mxu0 %v2034
      %v2252 = vpop.f32.mrf.mxu0
      %v2253 = vadd.f32 0.0, %v2252
      %v2254 = vpop.f32.mrf.mxu0
      %2255 = vmatprep.mubr.f32.mxu0 0.0
      %2256 = vmatmul.mubr.f32.gmra.mxu0 %v2036
      %v2257 = vpop.f32.mrf.mxu0
      %v2258 = vadd.f32 0.0, %v2257
      %v2259 = vpop.f32.mrf.mxu0
      %2260 = vmatprep.mubr.f32.mxu0 0.0
      %2261 = vmatmul.mubr.f32.gmra.mxu0 %v2039
      %v2262 = vpop.f32.mrf.mxu0
      %v2263 = vadd.f32 0.0, %v2262
      %v2264 = vpop.f32.mrf.mxu0
      %2265 = vmatprep.mubr.f32.mxu0 0.0
      %2266 = vmatmul.mubr.f32.gmra.mxu0 %v2041
      %v2267 = vpop.f32.mrf.mxu0
      %v2268 = vadd.f32 0.0, %v2267
      %v2269 = vpop.f32.mrf.mxu0
      %2270 = vmatprep.mubr.f32.mxu0 0.0
      %2271 = vmatmul.mubr.f32.gmra.mxu0 %v2044
      %v2272 = vpop.f32.mrf.mxu0
      %v2273 = vadd.f32 0.0, %v2272
      %v2274 = vpop.f32.mrf.mxu0
      %2275 = vmatprep.mubr.f32.mxu0 0.0
      %2276 = vmatmul.mubr.f32.gmra.mxu0 %v2046
      %v2277 = vpop.f32.mrf.mxu0
      %v2278 = vadd.f32 0.0, %v2277
      %v2279 = vpop.f32.mrf.mxu0
      %2280 = vmatprep.mubr.f32.mxu0 0.0
      %2281 = vmatmul.mubr.f32.gmra.mxu0 %v2049
      %v2282 = vpop.f32.mrf.mxu0
      %v2283 = vadd.f32 0.0, %v2282
      %v2284 = vpop.f32.mrf.mxu0
      %2285 = vmatprep.mubr.f32.mxu0 0.0
      %2286 = vmatmul.mubr.f32.gmra.mxu0 %v2051
      %v2287 = vpop.f32.mrf.mxu0
      %v2288 = vadd.f32 0.0, %v2287
      %v2289 = vpop.f32.mrf.mxu0
      %2290 = vmatprep.mubr.f32.mxu0 0.0
      %2291 = vmatmul.mubr.f32.gmra.mxu0 %v2054
      %v2292 = vpop.f32.mrf.mxu0
      %v2293 = vadd.f32 0.0, %v2292
      %v2294 = vpop.f32.mrf.mxu0
      %2295 = vmatprep.mubr.f32.mxu0 0.0
      %2296 = vmatmul.mubr.f32.gmra.mxu0 %v2056
      %v2297 = vpop.f32.mrf.mxu0
      %v2298 = vadd.f32 0.0, %v2297
      %v2299 = vpop.f32.mrf.mxu0
      %2300 = vmatprep.mubr.f32.mxu0 0.0
      %2301 = vmatmul.mubr.f32.gmra.mxu0 %v2059
      %v2302 = vpop.f32.mrf.mxu0
      %v2303 = vadd.f32 0.0, %v2302
      %v2304 = vpop.f32.mrf.mxu0
      %2305 = vmatprep.mubr.f32.mxu0 0.0
      %2306 = vmatmul.mubr.f32.gmra.mxu0 %v2061
      %v2307 = vpop.f32.mrf.mxu0
      %v2308 = vadd.f32 0.0, %v2307
      %v2309 = vpop.f32.mrf.mxu0
      %2310 = vmatprep.mubr.f32.mxu0 0.0
      %2311 = vmatmul.mubr.f32.gmra.mxu0 %v2064
      %v2312 = vpop.f32.mrf.mxu0
      %v2313 = vadd.f32 0.0, %v2312
      %v2314 = vpop.f32.mrf.mxu0
      %2315 = vmatprep.mubr.f32.mxu0 0.0
      %2316 = vmatmul.mubr.f32.gmra.mxu0 %v2066
      %v2317 = vpop.f32.mrf.mxu0
      %v2318 = vadd.f32 0.0, %v2317
      %v2319 = vpop.f32.mrf.mxu0
      %2320 = vmatprep.mubr.f32.mxu0 0.0
      %2321 = vmatmul.mubr.f32.gmra.mxu0 %v2069
      %v2322 = vpop.f32.mrf.mxu0
      %v2323 = vadd.f32 0.0, %v2322
      %v2324 = vpop.f32.mrf.mxu0
      %2325 = vmatprep.mubr.f32.mxu0 0.0
      %2326 = vmatmul.mubr.f32.gmra.mxu0 %v2071
      %v2327 = vpop.f32.mrf.mxu0
      %v2328 = vadd.f32 0.0, %v2327
      %v2329 = vpop.f32.mrf.mxu0
      %2330 = vmatprep.mubr.f32.mxu0 0.0
      %2331 = vmatmul.mubr.f32.gmra.mxu0 %v2074
      %v2332 = vpop.f32.mrf.mxu0
      %v2333 = vadd.f32 0.0, %v2332
      %v2334 = vpop.f32.mrf.mxu0
      %2335 = vmatprep.mubr.f32.mxu0 0.0
      %2336 = vmatmul.mubr.f32.gmra.mxu0 %v2076
      %v2337 = vpop.f32.mrf.mxu0
      %v2338 = vadd.f32 0.0, %v2337
      %v2339 = vpop.f32.mrf.mxu0
      %2340 = vmatprep.mubr.f32.mxu0 0.0
      %2341 = vmatmul.mubr.f32.gmra.mxu0 %v2079
      %v2342 = vpop.f32.mrf.mxu0
      %v2343 = vadd.f32 0.0, %v2342
      %v2344 = vpop.f32.mrf.mxu0
      %2345 = vmatprep.mubr.f32.mxu0 0.0
      %2346 = vmatmul.mubr.f32.gmra.mxu0 %v2081
      %v2347 = vpop.f32.mrf.mxu0
      %v2348 = vadd.f32 0.0, %v2347
      %v2349 = vpop.f32.mrf.mxu0
      %2350 = vmatprep.mubr.f32.mxu0 0.0
      %2351 = vmatmul.mubr.f32.gmra.mxu0 %v2084
      %v2352 = vpop.f32.mrf.mxu0
      %v2353 = vadd.f32 0.0, %v2352
      %v2354 = vpop.f32.mrf.mxu0
      %2355 = vmatprep.mubr.f32.mxu0 0.0
      %2356 = vmatmul.mubr.f32.gmra.mxu0 %v2086
      %v2357 = vpop.f32.mrf.mxu0
      %v2358 = vadd.f32 0.0, %v2357
      %v2359 = vpop.f32.mrf.mxu0
      %2360 = vdwg.mxu0
      %v2361 = vadd.f32 %v1975, %v2203
      %v2362 = vadd.f32 %v1976, %v2208
      %v2363 = vadd.f32 %v1977, %v2213
      %v2364 = vadd.f32 %v1978, %v2218
      %v2365 = vadd.f32 %v1979, %v2223
      %v2366 = vadd.f32 %v1980, %v2228
      %v2367 = vadd.f32 %v1981, %v2233
      %v2368 = vadd.f32 %v1982, %v2238
      %v2369 = vadd.f32 %v1983, %v2243
      %v2370 = vadd.f32 %v1984, %v2248
      %v2371 = vadd.f32 %v1985, %v2253
      %v2372 = vadd.f32 %v1986, %v2258
      %v2373 = vadd.f32 %v1987, %v2263
      %v2374 = vadd.f32 %v1988, %v2268
      %v2375 = vadd.f32 %v1989, %v2273
      %v2376 = vadd.f32 %v1990, %v2278
      %v2377 = vadd.f32 %v1991, %v2283
      %v2378 = vadd.f32 %v1992, %v2288
      %v2379 = vadd.f32 %v1993, %v2293
      %v2380 = vadd.f32 %v1994, %v2298
      %v2381 = vadd.f32 %v1995, %v2303
      %v2382 = vadd.f32 %v1996, %v2308
      %v2383 = vadd.f32 %v1997, %v2313
      %v2384 = vadd.f32 %v1998, %v2318
      %v2385 = vadd.f32 %v1999, %v2323
      %v2386 = vadd.f32 %v2000, %v2328
      %v2387 = vadd.f32 %v2001, %v2333
      %v2388 = vadd.f32 %v2002, %v2338
      %v2389 = vadd.f32 %v2003, %v2343
      %v2390 = vadd.f32 %v2004, %v2348
      %v2391 = vadd.f32 %v2005, %v2353
      %v2392 = vadd.f32 %v2006, %v2358
      %s2393 = scalar_lea.vmem %s165, 48
      %v2394 = vld [vmem:[%s2393] sm:$0xff]
      %v2395 = vld [vmem:[%s2393 + $0x8] sm:$0xff]
      %v2396 = vld [vmem:[%s2393 + $0x10] sm:$0x3]
      %v2397 = vld [vmem:[%s2393 + $0x18] sm:$0xff]
      %v2398 = vld [vmem:[%s2393 + $0x20] sm:$0xff]
      %v2399 = vld [vmem:[%s2393 + $0x28] sm:$0x3]
      %v2400 = vld [vmem:[%s2393 + $0x30] sm:$0xff]
      %v2401 = vld [vmem:[%s2393 + $0x38] sm:$0xff]
      %v2402 = vld [vmem:[%s2393 + $0x40] sm:$0x3]
      %v2403 = vld [vmem:[%s2393 + $0x48] sm:$0xff]
      %v2404 = vld [vmem:[%s2393 + $0x50] sm:$0xff]
      %v2405 = vld [vmem:[%s2393 + $0x58] sm:$0x3]
      %v2406 = vld [vmem:[%s2393 + $0x60] sm:$0xff]
      %v2407 = vld [vmem:[%s2393 + $0x68] sm:$0xff]
      %v2408 = vld [vmem:[%s2393 + $0x70] sm:$0x3]
      %v2409 = vld [vmem:[%s2393 + $0x78] sm:$0xff]
      %v2410 = vld [vmem:[%s2393 + $0x80] sm:$0xff]
      %v2411 = vld [vmem:[%s2393 + $0x88] sm:$0x3]
      %v2412 = vld [vmem:[%s2393 + $0x90] sm:$0xff]
      %v2413 = vld [vmem:[%s2393 + $0x98] sm:$0xff]
      %v2414 = vld [vmem:[%s2393 + $0xa0] sm:$0x3]
      %v2415 = vld [vmem:[%s2393 + $0xa8] sm:$0xff]
      %v2416 = vld [vmem:[%s2393 + $0xb0] sm:$0xff]
      %v2417 = vld [vmem:[%s2393 + $0xb8] sm:$0x3]
      %v2418 = vld [vmem:[%s2393 + $0xc0] sm:$0xff]
      %v2419 = vld [vmem:[%s2393 + $0xc8] sm:$0xff]
      %v2420 = vld [vmem:[%s2393 + $0xd0] sm:$0x3]
      %v2421 = vld [vmem:[%s2393 + $0xd8] sm:$0xff]
      %v2422 = vld [vmem:[%s2393 + $0xe0] sm:$0xff]
      %v2423 = vld [vmem:[%s2393 + $0xe8] sm:$0x3]
      %v2424 = vld [vmem:[%s2393 + $0xf0] sm:$0xff]
      %v2425 = vld [vmem:[%s2393 + $0xf8] sm:$0xff]
      %v2426 = vld [vmem:[%s2393 + $0x100] sm:$0x3]
      %v2427 = vld [vmem:[%s2393 + $0x108] sm:$0xff]
      %v2428 = vld [vmem:[%s2393 + $0x110] sm:$0xff]
      %v2429 = vld [vmem:[%s2393 + $0x118] sm:$0x3]
      %v2430 = vld [vmem:[%s2393 + $0x120] sm:$0xff]
      %v2431 = vld [vmem:[%s2393 + $0x128] sm:$0xff]
      %v2432 = vld [vmem:[%s2393 + $0x130] sm:$0x3]
      %v2433 = vld [vmem:[%s2393 + $0x138] sm:$0xff]
      %v2434 = vld [vmem:[%s2393 + $0x140] sm:$0xff]
      %v2435 = vld [vmem:[%s2393 + $0x148] sm:$0x3]
      %v2436 = vld [vmem:[%s2393 + $0x150] sm:$0xff]
      %v2437 = vld [vmem:[%s2393 + $0x158] sm:$0xff]
      %v2438 = vld [vmem:[%s2393 + $0x160] sm:$0x3]
      %v2439 = vld [vmem:[%s2393 + $0x168] sm:$0xff]
      %v2440 = vld [vmem:[%s2393 + $0x170] sm:$0xff]
      %v2441 = vld [vmem:[%s2393 + $0x178] sm:$0x3]
      %s2442 = scalar_lea.vmem %s1, 768
      %v2443 = vld [vmem:[%s2442] sm:$0xff]
      %v2444 = vld [vmem:[%s2442 + $0x8] sm:$0xff]
      %v2445 = vld [vmem:[%s2442 + $0x10] sm:$0xff]
      %v2446 = vld [vmem:[%s2442 + $0x18] sm:$0xff]
      %v2447 = vld [vmem:[%s2442 + $0x20] sm:$0xff]
      %v2448 = vld [vmem:[%s2442 + $0x28] sm:$0xff]
      %v2449 = vld [vmem:[%s2442 + $0x30] sm:$0xff]
      %v2450 = vld [vmem:[%s2442 + $0x38] sm:$0xff]
      %v2451 = vld [vmem:[%s2442 + $0x40] sm:$0xff]
      %v2452 = vld [vmem:[%s2442 + $0x48] sm:$0xff]
      %v2453 = vld [vmem:[%s2442 + $0x50] sm:$0xff]
      %v2454 = vld [vmem:[%s2442 + $0x58] sm:$0xff]
      %v2455 = vld [vmem:[%s2442 + $0x60] sm:$0xff]
      %v2456 = vld [vmem:[%s2442 + $0x68] sm:$0xff]
      %v2457 = vld [vmem:[%s2442 + $0x70] sm:$0xff]
      %v2458 = vld [vmem:[%s2442 + $0x78] sm:$0xff]
      %2459 = vmatprep.subr.mxu0 0.0
      %2460 = vmatpush1.msra.mxu0 %v2458
      %2461 = vmatprep.subr.mxu0 0.0
      %2462 = vmatpush1.msra.mxu0 %v2457
      %2463 = vmatprep.subr.mxu0 0.0
      %2464 = vmatpush1.msra.mxu0 %v2456
      %2465 = vmatprep.subr.mxu0 0.0
      %2466 = vmatpush1.msra.mxu0 %v2455
      %2467 = vmatprep.subr.mxu0 0.0
      %2468 = vmatpush1.msra.mxu0 %v2454
      %2469 = vmatprep.subr.mxu0 0.0
      %2470 = vmatpush1.msra.mxu0 %v2453
      %2471 = vmatprep.subr.mxu0 0.0
      %2472 = vmatpush1.msra.mxu0 %v2452
      %2473 = vmatprep.subr.mxu0 0.0
      %2474 = vmatpush1.msra.mxu0 %v2451
      %2475 = vmatprep.subr.mxu0 0.0
      %2476 = vmatpush1.msra.mxu0 %v2450
      %2477 = vmatprep.subr.mxu0 0.0
      %2478 = vmatpush1.msra.mxu0 %v2449
      %2479 = vmatprep.subr.mxu0 0.0
      %2480 = vmatpush1.msra.mxu0 %v2448
      %2481 = vmatprep.subr.mxu0 0.0
      %2482 = vmatpush1.msra.mxu0 %v2447
      %2483 = vmatprep.subr.mxu0 0.0
      %2484 = vmatpush1.msra.mxu0 %v2446
      %2485 = vmatprep.subr.mxu0 0.0
      %2486 = vmatpush1.msra.mxu0 %v2445
      %2487 = vmatprep.subr.mxu0 0.0
      %2488 = vmatpush1.msra.mxu0 %v2444
      %2489 = vmatprep.subr.mxu0 0.0
      %2490 = vmatpush1.msra.mxu0 %v2443
      %2491 = vmatprep.subr.mxu0 0.0
      %2492 = vmatpush2.msra.mxu0 0.0
      %2493 = vmatprep.subr.mxu0 0.0
      %2494 = vmatpush2.msra.mxu0 0.0
      %2495 = vmatprep.subr.mxu0 0.0
      %2496 = vmatpush2.msra.mxu0 0.0
      %2497 = vmatprep.subr.mxu0 0.0
      %2498 = vmatpush2.msra.mxu0 0.0
      %2499 = vmatprep.subr.mxu0 0.0
      %2500 = vmatpush2.msra.mxu0 0.0
      %2501 = vmatprep.subr.mxu0 0.0
      %2502 = vmatpush2.msra.mxu0 0.0
      %2503 = vmatprep.subr.mxu0 0.0
      %2504 = vmatpush2.msra.mxu0 0.0
      %2505 = vmatprep.subr.mxu0 0.0
      %2506 = vmatpush2.msra.mxu0 0.0
      %2507 = vmatprep.subr.mxu0 0.0
      %2508 = vmatpush2.msra.mxu0 0.0
      %2509 = vmatprep.subr.mxu0 0.0
      %2510 = vmatpush2.msra.mxu0 0.0
      %2511 = vmatprep.subr.mxu0 0.0
      %2512 = vmatpush2.msra.mxu0 0.0
      %2513 = vmatprep.subr.mxu0 0.0
      %2514 = vmatpush2.msra.mxu0 0.0
      %2515 = vmatprep.subr.mxu0 0.0
      %2516 = vmatpush2.msra.mxu0 0.0
      %2517 = vmatprep.subr.mxu0 0.0
      %2518 = vmatpush2.msra.mxu0 0.0
      %2519 = vmatprep.subr.mxu0 0.0
      %2520 = vmatpush2.msra.mxu0 0.0
      %2521 = vmatprep.subr.mxu0 0.0
      %2522 = vmatpush2.msra.mxu0 0.0
      %2523 = vmatprep.mubr.f32.mxu0 0.0
      %2524 = vmatmul.mubr.f32.gmra.mxu0 %v2394
      %v2525 = vpop.f32.mrf.mxu0
      %v2526 = vadd.f32 0.0, %v2525
      %v2527 = vpop.f32.mrf.mxu0
      %2528 = vmatprep.mubr.f32.mxu0 0.0
      %2529 = vmatmul.mubr.f32.gmra.mxu0 %v2395
      %v2530 = vpop.f32.mrf.mxu0
      %v2531 = vadd.f32 0.0, %v2530
      %v2532 = vpop.f32.mrf.mxu0
      %2533 = vmatprep.mubr.f32.mxu0 0.0
      %2534 = vmatmul.mubr.f32.gmra.mxu0 %v2397
      %v2535 = vpop.f32.mrf.mxu0
      %v2536 = vadd.f32 0.0, %v2535
      %v2537 = vpop.f32.mrf.mxu0
      %2538 = vmatprep.mubr.f32.mxu0 0.0
      %2539 = vmatmul.mubr.f32.gmra.mxu0 %v2398
      %v2540 = vpop.f32.mrf.mxu0
      %v2541 = vadd.f32 0.0, %v2540
      %v2542 = vpop.f32.mrf.mxu0
      %2543 = vmatprep.mubr.f32.mxu0 0.0
      %2544 = vmatmul.mubr.f32.gmra.mxu0 %v2400
      %v2545 = vpop.f32.mrf.mxu0
      %v2546 = vadd.f32 0.0, %v2545
      %v2547 = vpop.f32.mrf.mxu0
      %2548 = vmatprep.mubr.f32.mxu0 0.0
      %2549 = vmatmul.mubr.f32.gmra.mxu0 %v2401
      %v2550 = vpop.f32.mrf.mxu0
      %v2551 = vadd.f32 0.0, %v2550
      %v2552 = vpop.f32.mrf.mxu0
      %2553 = vmatprep.mubr.f32.mxu0 0.0
      %2554 = vmatmul.mubr.f32.gmra.mxu0 %v2403
      %v2555 = vpop.f32.mrf.mxu0
      %v2556 = vadd.f32 0.0, %v2555
      %v2557 = vpop.f32.mrf.mxu0
      %2558 = vmatprep.mubr.f32.mxu0 0.0
      %2559 = vmatmul.mubr.f32.gmra.mxu0 %v2404
      %v2560 = vpop.f32.mrf.mxu0
      %v2561 = vadd.f32 0.0, %v2560
      %v2562 = vpop.f32.mrf.mxu0
      %2563 = vmatprep.mubr.f32.mxu0 0.0
      %2564 = vmatmul.mubr.f32.gmra.mxu0 %v2406
      %v2565 = vpop.f32.mrf.mxu0
      %v2566 = vadd.f32 0.0, %v2565
      %v2567 = vpop.f32.mrf.mxu0
      %2568 = vmatprep.mubr.f32.mxu0 0.0
      %2569 = vmatmul.mubr.f32.gmra.mxu0 %v2407
      %v2570 = vpop.f32.mrf.mxu0
      %v2571 = vadd.f32 0.0, %v2570
      %v2572 = vpop.f32.mrf.mxu0
      %2573 = vmatprep.mubr.f32.mxu0 0.0
      %2574 = vmatmul.mubr.f32.gmra.mxu0 %v2409
      %v2575 = vpop.f32.mrf.mxu0
      %v2576 = vadd.f32 0.0, %v2575
      %v2577 = vpop.f32.mrf.mxu0
      %2578 = vmatprep.mubr.f32.mxu0 0.0
      %2579 = vmatmul.mubr.f32.gmra.mxu0 %v2410
      %v2580 = vpop.f32.mrf.mxu0
      %v2581 = vadd.f32 0.0, %v2580
      %v2582 = vpop.f32.mrf.mxu0
      %2583 = vmatprep.mubr.f32.mxu0 0.0
      %2584 = vmatmul.mubr.f32.gmra.mxu0 %v2412
      %v2585 = vpop.f32.mrf.mxu0
      %v2586 = vadd.f32 0.0, %v2585
      %v2587 = vpop.f32.mrf.mxu0
      %2588 = vmatprep.mubr.f32.mxu0 0.0
      %2589 = vmatmul.mubr.f32.gmra.mxu0 %v2413
      %v2590 = vpop.f32.mrf.mxu0
      %v2591 = vadd.f32 0.0, %v2590
      %v2592 = vpop.f32.mrf.mxu0
      %2593 = vmatprep.mubr.f32.mxu0 0.0
      %2594 = vmatmul.mubr.f32.gmra.mxu0 %v2415
      %v2595 = vpop.f32.mrf.mxu0
      %v2596 = vadd.f32 0.0, %v2595
      %v2597 = vpop.f32.mrf.mxu0
      %2598 = vmatprep.mubr.f32.mxu0 0.0
      %2599 = vmatmul.mubr.f32.gmra.mxu0 %v2416
      %v2600 = vpop.f32.mrf.mxu0
      %v2601 = vadd.f32 0.0, %v2600
      %v2602 = vpop.f32.mrf.mxu0
      %2603 = vmatprep.mubr.f32.mxu0 0.0
      %2604 = vmatmul.mubr.f32.gmra.mxu0 %v2418
      %v2605 = vpop.f32.mrf.mxu0
      %v2606 = vadd.f32 0.0, %v2605
      %v2607 = vpop.f32.mrf.mxu0
      %2608 = vmatprep.mubr.f32.mxu0 0.0
      %2609 = vmatmul.mubr.f32.gmra.mxu0 %v2419
      %v2610 = vpop.f32.mrf.mxu0
      %v2611 = vadd.f32 0.0, %v2610
      %v2612 = vpop.f32.mrf.mxu0
      %2613 = vmatprep.mubr.f32.mxu0 0.0
      %2614 = vmatmul.mubr.f32.gmra.mxu0 %v2421
      %v2615 = vpop.f32.mrf.mxu0
      %v2616 = vadd.f32 0.0, %v2615
      %v2617 = vpop.f32.mrf.mxu0
      %2618 = vmatprep.mubr.f32.mxu0 0.0
      %2619 = vmatmul.mubr.f32.gmra.mxu0 %v2422
      %v2620 = vpop.f32.mrf.mxu0
      %v2621 = vadd.f32 0.0, %v2620
      %v2622 = vpop.f32.mrf.mxu0
      %2623 = vmatprep.mubr.f32.mxu0 0.0
      %2624 = vmatmul.mubr.f32.gmra.mxu0 %v2424
      %v2625 = vpop.f32.mrf.mxu0
      %v2626 = vadd.f32 0.0, %v2625
      %v2627 = vpop.f32.mrf.mxu0
      %2628 = vmatprep.mubr.f32.mxu0 0.0
      %2629 = vmatmul.mubr.f32.gmra.mxu0 %v2425
      %v2630 = vpop.f32.mrf.mxu0
      %v2631 = vadd.f32 0.0, %v2630
      %v2632 = vpop.f32.mrf.mxu0
      %2633 = vmatprep.mubr.f32.mxu0 0.0
      %2634 = vmatmul.mubr.f32.gmra.mxu0 %v2427
      %v2635 = vpop.f32.mrf.mxu0
      %v2636 = vadd.f32 0.0, %v2635
      %v2637 = vpop.f32.mrf.mxu0
      %2638 = vmatprep.mubr.f32.mxu0 0.0
      %2639 = vmatmul.mubr.f32.gmra.mxu0 %v2428
      %v2640 = vpop.f32.mrf.mxu0
      %v2641 = vadd.f32 0.0, %v2640
      %v2642 = vpop.f32.mrf.mxu0
      %2643 = vmatprep.mubr.f32.mxu0 0.0
      %2644 = vmatmul.mubr.f32.gmra.mxu0 %v2430
      %v2645 = vpop.f32.mrf.mxu0
      %v2646 = vadd.f32 0.0, %v2645
      %v2647 = vpop.f32.mrf.mxu0
      %2648 = vmatprep.mubr.f32.mxu0 0.0
      %2649 = vmatmul.mubr.f32.gmra.mxu0 %v2431
      %v2650 = vpop.f32.mrf.mxu0
      %v2651 = vadd.f32 0.0, %v2650
      %v2652 = vpop.f32.mrf.mxu0
      %2653 = vmatprep.mubr.f32.mxu0 0.0
      %2654 = vmatmul.mubr.f32.gmra.mxu0 %v2433
      %v2655 = vpop.f32.mrf.mxu0
      %v2656 = vadd.f32 0.0, %v2655
      %v2657 = vpop.f32.mrf.mxu0
      %2658 = vmatprep.mubr.f32.mxu0 0.0
      %2659 = vmatmul.mubr.f32.gmra.mxu0 %v2434
      %v2660 = vpop.f32.mrf.mxu0
      %v2661 = vadd.f32 0.0, %v2660
      %v2662 = vpop.f32.mrf.mxu0
      %2663 = vmatprep.mubr.f32.mxu0 0.0
      %2664 = vmatmul.mubr.f32.gmra.mxu0 %v2436
      %v2665 = vpop.f32.mrf.mxu0
      %v2666 = vadd.f32 0.0, %v2665
      %v2667 = vpop.f32.mrf.mxu0
      %2668 = vmatprep.mubr.f32.mxu0 0.0
      %2669 = vmatmul.mubr.f32.gmra.mxu0 %v2437
      %v2670 = vpop.f32.mrf.mxu0
      %v2671 = vadd.f32 0.0, %v2670
      %v2672 = vpop.f32.mrf.mxu0
      %2673 = vmatprep.mubr.f32.mxu0 0.0
      %2674 = vmatmul.mubr.f32.gmra.mxu0 %v2439
      %v2675 = vpop.f32.mrf.mxu0
      %v2676 = vadd.f32 0.0, %v2675
      %v2677 = vpop.f32.mrf.mxu0
      %2678 = vmatprep.mubr.f32.mxu0 0.0
      %2679 = vmatmul.mubr.f32.gmra.mxu0 %v2440
      %v2680 = vpop.f32.mrf.mxu0
      %v2681 = vadd.f32 0.0, %v2680
      %v2682 = vpop.f32.mrf.mxu0
      %2683 = vdwg.mxu0
      %v2684 = vadd.f32 %v2361, %v2526
      %v2685 = vadd.f32 %v2362, %v2531
      %v2686 = vadd.f32 %v2363, %v2536
      %v2687 = vadd.f32 %v2364, %v2541
      %v2688 = vadd.f32 %v2365, %v2546
      %v2689 = vadd.f32 %v2366, %v2551
      %v2690 = vadd.f32 %v2367, %v2556
      %v2691 = vadd.f32 %v2368, %v2561
      %v2692 = vadd.f32 %v2369, %v2566
      %v2693 = vadd.f32 %v2370, %v2571
      %v2694 = vadd.f32 %v2371, %v2576
      %v2695 = vadd.f32 %v2372, %v2581
      %v2696 = vadd.f32 %v2373, %v2586
      %v2697 = vadd.f32 %v2374, %v2591
      %v2698 = vadd.f32 %v2375, %v2596
      %v2699 = vadd.f32 %v2376, %v2601
      %v2700 = vadd.f32 %v2377, %v2606
      %v2701 = vadd.f32 %v2378, %v2611
      %v2702 = vadd.f32 %v2379, %v2616
      %v2703 = vadd.f32 %v2380, %v2621
      %v2704 = vadd.f32 %v2381, %v2626
      %v2705 = vadd.f32 %v2382, %v2631
      %v2706 = vadd.f32 %v2383, %v2636
      %v2707 = vadd.f32 %v2384, %v2641
      %v2708 = vadd.f32 %v2385, %v2646
      %v2709 = vadd.f32 %v2386, %v2651
      %v2710 = vadd.f32 %v2387, %v2656
      %v2711 = vadd.f32 %v2388, %v2661
      %v2712 = vadd.f32 %v2389, %v2666
      %v2713 = vadd.f32 %v2390, %v2671
      %v2714 = vadd.f32 %v2391, %v2676
      %v2715 = vadd.f32 %v2392, %v2681
      %v2764 = vrot.slane %v2394, 1
      %v2765 = vrot.slane %v2395, 1
      %v2766 = vsel %vm283, %v2764, %v2765
      %v2767 = vrot.slane %v2396, 1
      %v2768 = vsel %vm283, %v2765, %v2767
      %v2769 = vrot.slane %v2397, 1
      %v2770 = vrot.slane %v2398, 1
      %v2771 = vsel %vm283, %v2769, %v2770
      %v2772 = vrot.slane %v2399, 1
      %v2773 = vsel %vm283, %v2770, %v2772
      %v2774 = vrot.slane %v2400, 1
      %v2775 = vrot.slane %v2401, 1
      %v2776 = vsel %vm283, %v2774, %v2775
      %v2777 = vrot.slane %v2402, 1
      %v2778 = vsel %vm283, %v2775, %v2777
      %v2779 = vrot.slane %v2403, 1
      %v2780 = vrot.slane %v2404, 1
      %v2781 = vsel %vm283, %v2779, %v2780
      %v2782 = vrot.slane %v2405, 1
      %v2783 = vsel %vm283, %v2780, %v2782
      %v2784 = vrot.slane %v2406, 1
      %v2785 = vrot.slane %v2407, 1
      %v2786 = vsel %vm283, %v2784, %v2785
      %v2787 = vrot.slane %v2408, 1
      %v2788 = vsel %vm283, %v2785, %v2787
      %v2789 = vrot.slane %v2409, 1
      %v2790 = vrot.slane %v2410, 1
      %v2791 = vsel %vm283, %v2789, %v2790
      %v2792 = vrot.slane %v2411, 1
      %v2793 = vsel %vm283, %v2790, %v2792
      %v2794 = vrot.slane %v2412, 1
      %v2795 = vrot.slane %v2413, 1
      %v2796 = vsel %vm283, %v2794, %v2795
      %v2797 = vrot.slane %v2414, 1
      %v2798 = vsel %vm283, %v2795, %v2797
      %v2799 = vrot.slane %v2415, 1
      %v2800 = vrot.slane %v2416, 1
      %v2801 = vsel %vm283, %v2799, %v2800
      %v2802 = vrot.slane %v2417, 1
      %v2803 = vsel %vm283, %v2800, %v2802
      %v2804 = vrot.slane %v2418, 1
      %v2805 = vrot.slane %v2419, 1
      %v2806 = vsel %vm283, %v2804, %v2805
      %v2807 = vrot.slane %v2420, 1
      %v2808 = vsel %vm283, %v2805, %v2807
      %v2809 = vrot.slane %v2421, 1
      %v2810 = vrot.slane %v2422, 1
      %v2811 = vsel %vm283, %v2809, %v2810
      %v2812 = vrot.slane %v2423, 1
      %v2813 = vsel %vm283, %v2810, %v2812
      %v2814 = vrot.slane %v2424, 1
      %v2815 = vrot.slane %v2425, 1
      %v2816 = vsel %vm283, %v2814, %v2815
      %v2817 = vrot.slane %v2426, 1
      %v2818 = vsel %vm283, %v2815, %v2817
      %v2819 = vrot.slane %v2427, 1
      %v2820 = vrot.slane %v2428, 1
      %v2821 = vsel %vm283, %v2819, %v2820
      %v2822 = vrot.slane %v2429, 1
      %v2823 = vsel %vm283, %v2820, %v2822
      %v2824 = vrot.slane %v2430, 1
      %v2825 = vrot.slane %v2431, 1
      %v2826 = vsel %vm283, %v2824, %v2825
      %v2827 = vrot.slane %v2432, 1
      %v2828 = vsel %vm283, %v2825, %v2827
      %v2829 = vrot.slane %v2433, 1
      %v2830 = vrot.slane %v2434, 1
      %v2831 = vsel %vm283, %v2829, %v2830
      %v2832 = vrot.slane %v2435, 1
      %v2833 = vsel %vm283, %v2830, %v2832
      %v2834 = vrot.slane %v2436, 1
      %v2835 = vrot.slane %v2437, 1
      %v2836 = vsel %vm283, %v2834, %v2835
      %v2837 = vrot.slane %v2438, 1
      %v2838 = vsel %vm283, %v2835, %v2837
      %v2839 = vrot.slane %v2439, 1
      %v2840 = vrot.slane %v2440, 1
      %v2841 = vsel %vm283, %v2839, %v2840
      %v2842 = vrot.slane %v2441, 1
      %v2843 = vsel %vm283, %v2840, %v2842
      %s2876 = scalar_lea.vmem %s1, 896
      %v2877 = vld [vmem:[%s2876] sm:$0xff]
      %v2878 = vld [vmem:[%s2876 + $0x8] sm:$0xff]
      %v2879 = vld [vmem:[%s2876 + $0x10] sm:$0xff]
      %v2880 = vld [vmem:[%s2876 + $0x18] sm:$0xff]
      %v2881 = vld [vmem:[%s2876 + $0x20] sm:$0xff]
      %v2882 = vld [vmem:[%s2876 + $0x28] sm:$0xff]
      %v2883 = vld [vmem:[%s2876 + $0x30] sm:$0xff]
      %v2884 = vld [vmem:[%s2876 + $0x38] sm:$0xff]
      %v2885 = vld [vmem:[%s2876 + $0x40] sm:$0xff]
      %v2886 = vld [vmem:[%s2876 + $0x48] sm:$0xff]
      %v2887 = vld [vmem:[%s2876 + $0x50] sm:$0xff]
      %v2888 = vld [vmem:[%s2876 + $0x58] sm:$0xff]
      %v2889 = vld [vmem:[%s2876 + $0x60] sm:$0xff]
      %v2890 = vld [vmem:[%s2876 + $0x68] sm:$0xff]
      %v2891 = vld [vmem:[%s2876 + $0x70] sm:$0xff]
      %v2892 = vld [vmem:[%s2876 + $0x78] sm:$0xff]
      %2893 = vmatprep.subr.mxu0 0.0
      %2894 = vmatpush1.msra.mxu0 %v2892
      %2895 = vmatprep.subr.mxu0 0.0
      %2896 = vmatpush1.msra.mxu0 %v2891
      %2897 = vmatprep.subr.mxu0 0.0
      %2898 = vmatpush1.msra.mxu0 %v2890
      %2899 = vmatprep.subr.mxu0 0.0
      %2900 = vmatpush1.msra.mxu0 %v2889
      %2901 = vmatprep.subr.mxu0 0.0
      %2902 = vmatpush1.msra.mxu0 %v2888
      %2903 = vmatprep.subr.mxu0 0.0
      %2904 = vmatpush1.msra.mxu0 %v2887
      %2905 = vmatprep.subr.mxu0 0.0
      %2906 = vmatpush1.msra.mxu0 %v2886
      %2907 = vmatprep.subr.mxu0 0.0
      %2908 = vmatpush1.msra.mxu0 %v2885
      %2909 = vmatprep.subr.mxu0 0.0
      %2910 = vmatpush1.msra.mxu0 %v2884
      %2911 = vmatprep.subr.mxu0 0.0
      %2912 = vmatpush1.msra.mxu0 %v2883
      %2913 = vmatprep.subr.mxu0 0.0
      %2914 = vmatpush1.msra.mxu0 %v2882
      %2915 = vmatprep.subr.mxu0 0.0
      %2916 = vmatpush1.msra.mxu0 %v2881
      %2917 = vmatprep.subr.mxu0 0.0
      %2918 = vmatpush1.msra.mxu0 %v2880
      %2919 = vmatprep.subr.mxu0 0.0
      %2920 = vmatpush1.msra.mxu0 %v2879
      %2921 = vmatprep.subr.mxu0 0.0
      %2922 = vmatpush1.msra.mxu0 %v2878
      %2923 = vmatprep.subr.mxu0 0.0
      %2924 = vmatpush1.msra.mxu0 %v2877
      %2925 = vmatprep.subr.mxu0 0.0
      %2926 = vmatpush2.msra.mxu0 0.0
      %2927 = vmatprep.subr.mxu0 0.0
      %2928 = vmatpush2.msra.mxu0 0.0
      %2929 = vmatprep.subr.mxu0 0.0
      %2930 = vmatpush2.msra.mxu0 0.0
      %2931 = vmatprep.subr.mxu0 0.0
      %2932 = vmatpush2.msra.mxu0 0.0
      %2933 = vmatprep.subr.mxu0 0.0
      %2934 = vmatpush2.msra.mxu0 0.0
      %2935 = vmatprep.subr.mxu0 0.0
      %2936 = vmatpush2.msra.mxu0 0.0
      %2937 = vmatprep.subr.mxu0 0.0
      %2938 = vmatpush2.msra.mxu0 0.0
      %2939 = vmatprep.subr.mxu0 0.0
      %2940 = vmatpush2.msra.mxu0 0.0
      %2941 = vmatprep.subr.mxu0 0.0
      %2942 = vmatpush2.msra.mxu0 0.0
      %2943 = vmatprep.subr.mxu0 0.0
      %2944 = vmatpush2.msra.mxu0 0.0
      %2945 = vmatprep.subr.mxu0 0.0
      %2946 = vmatpush2.msra.mxu0 0.0
      %2947 = vmatprep.subr.mxu0 0.0
      %2948 = vmatpush2.msra.mxu0 0.0
      %2949 = vmatprep.subr.mxu0 0.0
      %2950 = vmatpush2.msra.mxu0 0.0
      %2951 = vmatprep.subr.mxu0 0.0
      %2952 = vmatpush2.msra.mxu0 0.0
      %2953 = vmatprep.subr.mxu0 0.0
      %2954 = vmatpush2.msra.mxu0 0.0
      %2955 = vmatprep.subr.mxu0 0.0
      %2956 = vmatpush2.msra.mxu0 0.0
      %2957 = vmatprep.mubr.f32.mxu0 0.0
      %2958 = vmatmul.mubr.f32.gmra.mxu0 %v2766
      %v2959 = vpop.f32.mrf.mxu0
      %v2960 = vadd.f32 0.0, %v2959
      %v2961 = vpop.f32.mrf.mxu0
      %2962 = vmatprep.mubr.f32.mxu0 0.0
      %2963 = vmatmul.mubr.f32.gmra.mxu0 %v2768
      %v2964 = vpop.f32.mrf.mxu0
      %v2965 = vadd.f32 0.0, %v2964
      %v2966 = vpop.f32.mrf.mxu0
      %2967 = vmatprep.mubr.f32.mxu0 0.0
      %2968 = vmatmul.mubr.f32.gmra.mxu0 %v2771
      %v2969 = vpop.f32.mrf.mxu0
      %v2970 = vadd.f32 0.0, %v2969
      %v2971 = vpop.f32.mrf.mxu0
      %2972 = vmatprep.mubr.f32.mxu0 0.0
      %2973 = vmatmul.mubr.f32.gmra.mxu0 %v2773
      %v2974 = vpop.f32.mrf.mxu0
      %v2975 = vadd.f32 0.0, %v2974
      %v2976 = vpop.f32.mrf.mxu0
      %2977 = vmatprep.mubr.f32.mxu0 0.0
      %2978 = vmatmul.mubr.f32.gmra.mxu0 %v2776
      %v2979 = vpop.f32.mrf.mxu0
      %v2980 = vadd.f32 0.0, %v2979
      %v2981 = vpop.f32.mrf.mxu0
      %2982 = vmatprep.mubr.f32.mxu0 0.0
      %2983 = vmatmul.mubr.f32.gmra.mxu0 %v2778
      %v2984 = vpop.f32.mrf.mxu0
      %v2985 = vadd.f32 0.0, %v2984
      %v2986 = vpop.f32.mrf.mxu0
      %2987 = vmatprep.mubr.f32.mxu0 0.0
      %2988 = vmatmul.mubr.f32.gmra.mxu0 %v2781
      %v2989 = vpop.f32.mrf.mxu0
      %v2990 = vadd.f32 0.0, %v2989
      %v2991 = vpop.f32.mrf.mxu0
      %2992 = vmatprep.mubr.f32.mxu0 0.0
      %2993 = vmatmul.mubr.f32.gmra.mxu0 %v2783
      %v2994 = vpop.f32.mrf.mxu0
      %v2995 = vadd.f32 0.0, %v2994
      %v2996 = vpop.f32.mrf.mxu0
      %2997 = vmatprep.mubr.f32.mxu0 0.0
      %2998 = vmatmul.mubr.f32.gmra.mxu0 %v2786
      %v2999 = vpop.f32.mrf.mxu0
      %v3000 = vadd.f32 0.0, %v2999
      %v3001 = vpop.f32.mrf.mxu0
      %3002 = vmatprep.mubr.f32.mxu0 0.0
      %3003 = vmatmul.mubr.f32.gmra.mxu0 %v2788
      %v3004 = vpop.f32.mrf.mxu0
      %v3005 = vadd.f32 0.0, %v3004
      %v3006 = vpop.f32.mrf.mxu0
      %3007 = vmatprep.mubr.f32.mxu0 0.0
      %3008 = vmatmul.mubr.f32.gmra.mxu0 %v2791
      %v3009 = vpop.f32.mrf.mxu0
      %v3010 = vadd.f32 0.0, %v3009
      %v3011 = vpop.f32.mrf.mxu0
      %3012 = vmatprep.mubr.f32.mxu0 0.0
      %3013 = vmatmul.mubr.f32.gmra.mxu0 %v2793
      %v3014 = vpop.f32.mrf.mxu0
      %v3015 = vadd.f32 0.0, %v3014
      %v3016 = vpop.f32.mrf.mxu0
      %3017 = vmatprep.mubr.f32.mxu0 0.0
      %3018 = vmatmul.mubr.f32.gmra.mxu0 %v2796
      %v3019 = vpop.f32.mrf.mxu0
      %v3020 = vadd.f32 0.0, %v3019
      %v3021 = vpop.f32.mrf.mxu0
      %3022 = vmatprep.mubr.f32.mxu0 0.0
      %3023 = vmatmul.mubr.f32.gmra.mxu0 %v2798
      %v3024 = vpop.f32.mrf.mxu0
      %v3025 = vadd.f32 0.0, %v3024
      %v3026 = vpop.f32.mrf.mxu0
      %3027 = vmatprep.mubr.f32.mxu0 0.0
      %3028 = vmatmul.mubr.f32.gmra.mxu0 %v2801
      %v3029 = vpop.f32.mrf.mxu0
      %v3030 = vadd.f32 0.0, %v3029
      %v3031 = vpop.f32.mrf.mxu0
      %3032 = vmatprep.mubr.f32.mxu0 0.0
      %3033 = vmatmul.mubr.f32.gmra.mxu0 %v2803
      %v3034 = vpop.f32.mrf.mxu0
      %v3035 = vadd.f32 0.0, %v3034
      %v3036 = vpop.f32.mrf.mxu0
      %3037 = vmatprep.mubr.f32.mxu0 0.0
      %3038 = vmatmul.mubr.f32.gmra.mxu0 %v2806
      %v3039 = vpop.f32.mrf.mxu0
      %v3040 = vadd.f32 0.0, %v3039
      %v3041 = vpop.f32.mrf.mxu0
      %3042 = vmatprep.mubr.f32.mxu0 0.0
      %3043 = vmatmul.mubr.f32.gmra.mxu0 %v2808
      %v3044 = vpop.f32.mrf.mxu0
      %v3045 = vadd.f32 0.0, %v3044
      %v3046 = vpop.f32.mrf.mxu0
      %3047 = vmatprep.mubr.f32.mxu0 0.0
      %3048 = vmatmul.mubr.f32.gmra.mxu0 %v2811
      %v3049 = vpop.f32.mrf.mxu0
      %v3050 = vadd.f32 0.0, %v3049
      %v3051 = vpop.f32.mrf.mxu0
      %3052 = vmatprep.mubr.f32.mxu0 0.0
      %3053 = vmatmul.mubr.f32.gmra.mxu0 %v2813
      %v3054 = vpop.f32.mrf.mxu0
      %v3055 = vadd.f32 0.0, %v3054
      %v3056 = vpop.f32.mrf.mxu0
      %3057 = vmatprep.mubr.f32.mxu0 0.0
      %3058 = vmatmul.mubr.f32.gmra.mxu0 %v2816
      %v3059 = vpop.f32.mrf.mxu0
      %v3060 = vadd.f32 0.0, %v3059
      %v3061 = vpop.f32.mrf.mxu0
      %3062 = vmatprep.mubr.f32.mxu0 0.0
      %3063 = vmatmul.mubr.f32.gmra.mxu0 %v2818
      %v3064 = vpop.f32.mrf.mxu0
      %v3065 = vadd.f32 0.0, %v3064
      %v3066 = vpop.f32.mrf.mxu0
      %3067 = vmatprep.mubr.f32.mxu0 0.0
      %3068 = vmatmul.mubr.f32.gmra.mxu0 %v2821
      %v3069 = vpop.f32.mrf.mxu0
      %v3070 = vadd.f32 0.0, %v3069
      %v3071 = vpop.f32.mrf.mxu0
      %3072 = vmatprep.mubr.f32.mxu0 0.0
      %3073 = vmatmul.mubr.f32.gmra.mxu0 %v2823
      %v3074 = vpop.f32.mrf.mxu0
      %v3075 = vadd.f32 0.0, %v3074
      %v3076 = vpop.f32.mrf.mxu0
      %3077 = vmatprep.mubr.f32.mxu0 0.0
      %3078 = vmatmul.mubr.f32.gmra.mxu0 %v2826
      %v3079 = vpop.f32.mrf.mxu0
      %v3080 = vadd.f32 0.0, %v3079
      %v3081 = vpop.f32.mrf.mxu0
      %3082 = vmatprep.mubr.f32.mxu0 0.0
      %3083 = vmatmul.mubr.f32.gmra.mxu0 %v2828
      %v3084 = vpop.f32.mrf.mxu0
      %v3085 = vadd.f32 0.0, %v3084
      %v3086 = vpop.f32.mrf.mxu0
      %3087 = vmatprep.mubr.f32.mxu0 0.0
      %3088 = vmatmul.mubr.f32.gmra.mxu0 %v2831
      %v3089 = vpop.f32.mrf.mxu0
      %v3090 = vadd.f32 0.0, %v3089
      %v3091 = vpop.f32.mrf.mxu0
      %3092 = vmatprep.mubr.f32.mxu0 0.0
      %3093 = vmatmul.mubr.f32.gmra.mxu0 %v2833
      %v3094 = vpop.f32.mrf.mxu0
      %v3095 = vadd.f32 0.0, %v3094
      %v3096 = vpop.f32.mrf.mxu0
      %3097 = vmatprep.mubr.f32.mxu0 0.0
      %3098 = vmatmul.mubr.f32.gmra.mxu0 %v2836
      %v3099 = vpop.f32.mrf.mxu0
      %v3100 = vadd.f32 0.0, %v3099
      %v3101 = vpop.f32.mrf.mxu0
      %3102 = vmatprep.mubr.f32.mxu0 0.0
      %3103 = vmatmul.mubr.f32.gmra.mxu0 %v2838
      %v3104 = vpop.f32.mrf.mxu0
      %v3105 = vadd.f32 0.0, %v3104
      %v3106 = vpop.f32.mrf.mxu0
      %3107 = vmatprep.mubr.f32.mxu0 0.0
      %3108 = vmatmul.mubr.f32.gmra.mxu0 %v2841
      %v3109 = vpop.f32.mrf.mxu0
      %v3110 = vadd.f32 0.0, %v3109
      %v3111 = vpop.f32.mrf.mxu0
      %3112 = vmatprep.mubr.f32.mxu0 0.0
      %3113 = vmatmul.mubr.f32.gmra.mxu0 %v2843
      %v3114 = vpop.f32.mrf.mxu0
      %v3115 = vadd.f32 0.0, %v3114
      %v3116 = vpop.f32.mrf.mxu0
      %3117 = vdwg.mxu0
      %v3118 = vadd.f32 %v2684, %v2960
      %v3119 = vadd.f32 %v2685, %v2965
      %v3120 = vadd.f32 %v2686, %v2970
      %v3121 = vadd.f32 %v2687, %v2975
      %v3122 = vadd.f32 %v2688, %v2980
      %v3123 = vadd.f32 %v2689, %v2985
      %v3124 = vadd.f32 %v2690, %v2990
      %v3125 = vadd.f32 %v2691, %v2995
      %v3126 = vadd.f32 %v2692, %v3000
      %v3127 = vadd.f32 %v2693, %v3005
      %v3128 = vadd.f32 %v2694, %v3010
      %v3129 = vadd.f32 %v2695, %v3015
      %v3130 = vadd.f32 %v2696, %v3020
      %v3131 = vadd.f32 %v2697, %v3025
      %v3132 = vadd.f32 %v2698, %v3030
      %v3133 = vadd.f32 %v2699, %v3035
      %v3134 = vadd.f32 %v2700, %v3040
      %v3135 = vadd.f32 %v2701, %v3045
      %v3136 = vadd.f32 %v2702, %v3050
      %v3137 = vadd.f32 %v2703, %v3055
      %v3138 = vadd.f32 %v2704, %v3060
      %v3139 = vadd.f32 %v2705, %v3065
      %v3140 = vadd.f32 %v2706, %v3070
      %v3141 = vadd.f32 %v2707, %v3075
      %v3142 = vadd.f32 %v2708, %v3080
      %v3143 = vadd.f32 %v2709, %v3085
      %v3144 = vadd.f32 %v2710, %v3090
      %v3145 = vadd.f32 %v2711, %v3095
      %v3146 = vadd.f32 %v2712, %v3100
      %v3147 = vadd.f32 %v2713, %v3105
      %v3148 = vadd.f32 %v2714, %v3110
      %v3149 = vadd.f32 %v2715, %v3115
      %v3150 = vrot.slane %v2394, 2
      %v3151 = vrot.slane %v2395, 2
      %v3152 = vsel %vm863, %v3150, %v3151
      %v3153 = vrot.slane %v2396, 2
      %v3154 = vsel %vm863, %v3151, %v3153
      %v3155 = vrot.slane %v2397, 2
      %v3156 = vrot.slane %v2398, 2
      %v3157 = vsel %vm863, %v3155, %v3156
      %v3158 = vrot.slane %v2399, 2
      %v3159 = vsel %vm863, %v3156, %v3158
      %v3160 = vrot.slane %v2400, 2
      %v3161 = vrot.slane %v2401, 2
      %v3162 = vsel %vm863, %v3160, %v3161
      %v3163 = vrot.slane %v2402, 2
      %v3164 = vsel %vm863, %v3161, %v3163
      %v3165 = vrot.slane %v2403, 2
      %v3166 = vrot.slane %v2404, 2
      %v3167 = vsel %vm863, %v3165, %v3166
      %v3168 = vrot.slane %v2405, 2
      %v3169 = vsel %vm863, %v3166, %v3168
      %v3170 = vrot.slane %v2406, 2
      %v3171 = vrot.slane %v2407, 2
      %v3172 = vsel %vm863, %v3170, %v3171
      %v3173 = vrot.slane %v2408, 2
      %v3174 = vsel %vm863, %v3171, %v3173
      %v3175 = vrot.slane %v2409, 2
      %v3176 = vrot.slane %v2410, 2
      %v3177 = vsel %vm863, %v3175, %v3176
      %v3178 = vrot.slane %v2411, 2
      %v3179 = vsel %vm863, %v3176, %v3178
      %v3180 = vrot.slane %v2412, 2
      %v3181 = vrot.slane %v2413, 2
      %v3182 = vsel %vm863, %v3180, %v3181
      %v3183 = vrot.slane %v2414, 2
      %v3184 = vsel %vm863, %v3181, %v3183
      %v3185 = vrot.slane %v2415, 2
      %v3186 = vrot.slane %v2416, 2
      %v3187 = vsel %vm863, %v3185, %v3186
      %v3188 = vrot.slane %v2417, 2
      %v3189 = vsel %vm863, %v3186, %v3188
      %v3190 = vrot.slane %v2418, 2
      %v3191 = vrot.slane %v2419, 2
      %v3192 = vsel %vm863, %v3190, %v3191
      %v3193 = vrot.slane %v2420, 2
      %v3194 = vsel %vm863, %v3191, %v3193
      %v3195 = vrot.slane %v2421, 2
      %v3196 = vrot.slane %v2422, 2
      %v3197 = vsel %vm863, %v3195, %v3196
      %v3198 = vrot.slane %v2423, 2
      %v3199 = vsel %vm863, %v3196, %v3198
      %v3200 = vrot.slane %v2424, 2
      %v3201 = vrot.slane %v2425, 2
      %v3202 = vsel %vm863, %v3200, %v3201
      %v3203 = vrot.slane %v2426, 2
      %v3204 = vsel %vm863, %v3201, %v3203
      %v3205 = vrot.slane %v2427, 2
      %v3206 = vrot.slane %v2428, 2
      %v3207 = vsel %vm863, %v3205, %v3206
      %v3208 = vrot.slane %v2429, 2
      %v3209 = vsel %vm863, %v3206, %v3208
      %v3210 = vrot.slane %v2430, 2
      %v3211 = vrot.slane %v2431, 2
      %v3212 = vsel %vm863, %v3210, %v3211
      %v3213 = vrot.slane %v2432, 2
      %v3214 = vsel %vm863, %v3211, %v3213
      %v3215 = vrot.slane %v2433, 2
      %v3216 = vrot.slane %v2434, 2
      %v3217 = vsel %vm863, %v3215, %v3216
      %v3218 = vrot.slane %v2435, 2
      %v3219 = vsel %vm863, %v3216, %v3218
      %v3220 = vrot.slane %v2436, 2
      %v3221 = vrot.slane %v2437, 2
      %v3222 = vsel %vm863, %v3220, %v3221
      %v3223 = vrot.slane %v2438, 2
      %v3224 = vsel %vm863, %v3221, %v3223
      %v3225 = vrot.slane %v2439, 2
      %v3226 = vrot.slane %v2440, 2
      %v3227 = vsel %vm863, %v3225, %v3226
      %v3228 = vrot.slane %v2441, 2
      %v3229 = vsel %vm863, %v3226, %v3228
      %s3262 = scalar_lea.vmem %s1, 1024
      %v3263 = vld [vmem:[%s3262] sm:$0xff]
      %v3264 = vld [vmem:[%s3262 + $0x8] sm:$0xff]
      %v3265 = vld [vmem:[%s3262 + $0x10] sm:$0xff]
      %v3266 = vld [vmem:[%s3262 + $0x18] sm:$0xff]
      %v3267 = vld [vmem:[%s3262 + $0x20] sm:$0xff]
      %v3268 = vld [vmem:[%s3262 + $0x28] sm:$0xff]
      %v3269 = vld [vmem:[%s3262 + $0x30] sm:$0xff]
      %v3270 = vld [vmem:[%s3262 + $0x38] sm:$0xff]
      %v3271 = vld [vmem:[%s3262 + $0x40] sm:$0xff]
      %v3272 = vld [vmem:[%s3262 + $0x48] sm:$0xff]
      %v3273 = vld [vmem:[%s3262 + $0x50] sm:$0xff]
      %v3274 = vld [vmem:[%s3262 + $0x58] sm:$0xff]
      %v3275 = vld [vmem:[%s3262 + $0x60] sm:$0xff]
      %v3276 = vld [vmem:[%s3262 + $0x68] sm:$0xff]
      %v3277 = vld [vmem:[%s3262 + $0x70] sm:$0xff]
      %v3278 = vld [vmem:[%s3262 + $0x78] sm:$0xff]
      %3279 = vmatprep.subr.mxu0 0.0
      %3280 = vmatpush1.msra.mxu0 %v3278
      %3281 = vmatprep.subr.mxu0 0.0
      %3282 = vmatpush1.msra.mxu0 %v3277
      %3283 = vmatprep.subr.mxu0 0.0
      %3284 = vmatpush1.msra.mxu0 %v3276
      %3285 = vmatprep.subr.mxu0 0.0
      %3286 = vmatpush1.msra.mxu0 %v3275
      %3287 = vmatprep.subr.mxu0 0.0
      %3288 = vmatpush1.msra.mxu0 %v3274
      %3289 = vmatprep.subr.mxu0 0.0
      %3290 = vmatpush1.msra.mxu0 %v3273
      %3291 = vmatprep.subr.mxu0 0.0
      %3292 = vmatpush1.msra.mxu0 %v3272
      %3293 = vmatprep.subr.mxu0 0.0
      %3294 = vmatpush1.msra.mxu0 %v3271
      %3295 = vmatprep.subr.mxu0 0.0
      %3296 = vmatpush1.msra.mxu0 %v3270
      %3297 = vmatprep.subr.mxu0 0.0
      %3298 = vmatpush1.msra.mxu0 %v3269
      %3299 = vmatprep.subr.mxu0 0.0
      %3300 = vmatpush1.msra.mxu0 %v3268
      %3301 = vmatprep.subr.mxu0 0.0
      %3302 = vmatpush1.msra.mxu0 %v3267
      %3303 = vmatprep.subr.mxu0 0.0
      %3304 = vmatpush1.msra.mxu0 %v3266
      %3305 = vmatprep.subr.mxu0 0.0
      %3306 = vmatpush1.msra.mxu0 %v3265
      %3307 = vmatprep.subr.mxu0 0.0
      %3308 = vmatpush1.msra.mxu0 %v3264
      %3309 = vmatprep.subr.mxu0 0.0
      %3310 = vmatpush1.msra.mxu0 %v3263
      %3311 = vmatprep.subr.mxu0 0.0
      %3312 = vmatpush2.msra.mxu0 0.0
      %3313 = vmatprep.subr.mxu0 0.0
      %3314 = vmatpush2.msra.mxu0 0.0
      %3315 = vmatprep.subr.mxu0 0.0
      %3316 = vmatpush2.msra.mxu0 0.0
      %3317 = vmatprep.subr.mxu0 0.0
      %3318 = vmatpush2.msra.mxu0 0.0
      %3319 = vmatprep.subr.mxu0 0.0
      %3320 = vmatpush2.msra.mxu0 0.0
      %3321 = vmatprep.subr.mxu0 0.0
      %3322 = vmatpush2.msra.mxu0 0.0
      %3323 = vmatprep.subr.mxu0 0.0
      %3324 = vmatpush2.msra.mxu0 0.0
      %3325 = vmatprep.subr.mxu0 0.0
      %3326 = vmatpush2.msra.mxu0 0.0
      %3327 = vmatprep.subr.mxu0 0.0
      %3328 = vmatpush2.msra.mxu0 0.0
      %3329 = vmatprep.subr.mxu0 0.0
      %3330 = vmatpush2.msra.mxu0 0.0
      %3331 = vmatprep.subr.mxu0 0.0
      %3332 = vmatpush2.msra.mxu0 0.0
      %3333 = vmatprep.subr.mxu0 0.0
      %3334 = vmatpush2.msra.mxu0 0.0
      %3335 = vmatprep.subr.mxu0 0.0
      %3336 = vmatpush2.msra.mxu0 0.0
      %3337 = vmatprep.subr.mxu0 0.0
      %3338 = vmatpush2.msra.mxu0 0.0
      %3339 = vmatprep.subr.mxu0 0.0
      %3340 = vmatpush2.msra.mxu0 0.0
      %3341 = vmatprep.subr.mxu0 0.0
      %3342 = vmatpush2.msra.mxu0 0.0
      %3343 = vmatprep.mubr.f32.mxu0 0.0
      %3344 = vmatmul.mubr.f32.gmra.mxu0 %v3152
      %v3345 = vpop.f32.mrf.mxu0
      %v3346 = vadd.f32 0.0, %v3345
      %v3347 = vpop.f32.mrf.mxu0
      %3348 = vmatprep.mubr.f32.mxu0 0.0
      %3349 = vmatmul.mubr.f32.gmra.mxu0 %v3154
      %v3350 = vpop.f32.mrf.mxu0
      %v3351 = vadd.f32 0.0, %v3350
      %v3352 = vpop.f32.mrf.mxu0
      %3353 = vmatprep.mubr.f32.mxu0 0.0
      %3354 = vmatmul.mubr.f32.gmra.mxu0 %v3157
      %v3355 = vpop.f32.mrf.mxu0
      %v3356 = vadd.f32 0.0, %v3355
      %v3357 = vpop.f32.mrf.mxu0
      %3358 = vmatprep.mubr.f32.mxu0 0.0
      %3359 = vmatmul.mubr.f32.gmra.mxu0 %v3159
      %v3360 = vpop.f32.mrf.mxu0
      %v3361 = vadd.f32 0.0, %v3360
      %v3362 = vpop.f32.mrf.mxu0
      %3363 = vmatprep.mubr.f32.mxu0 0.0
      %3364 = vmatmul.mubr.f32.gmra.mxu0 %v3162
      %v3365 = vpop.f32.mrf.mxu0
      %v3366 = vadd.f32 0.0, %v3365
      %v3367 = vpop.f32.mrf.mxu0
      %3368 = vmatprep.mubr.f32.mxu0 0.0
      %3369 = vmatmul.mubr.f32.gmra.mxu0 %v3164
      %v3370 = vpop.f32.mrf.mxu0
      %v3371 = vadd.f32 0.0, %v3370
      %v3372 = vpop.f32.mrf.mxu0
      %3373 = vmatprep.mubr.f32.mxu0 0.0
      %3374 = vmatmul.mubr.f32.gmra.mxu0 %v3167
      %v3375 = vpop.f32.mrf.mxu0
      %v3376 = vadd.f32 0.0, %v3375
      %v3377 = vpop.f32.mrf.mxu0
      %3378 = vmatprep.mubr.f32.mxu0 0.0
      %3379 = vmatmul.mubr.f32.gmra.mxu0 %v3169
      %v3380 = vpop.f32.mrf.mxu0
      %v3381 = vadd.f32 0.0, %v3380
      %v3382 = vpop.f32.mrf.mxu0
      %3383 = vmatprep.mubr.f32.mxu0 0.0
      %3384 = vmatmul.mubr.f32.gmra.mxu0 %v3172
      %v3385 = vpop.f32.mrf.mxu0
      %v3386 = vadd.f32 0.0, %v3385
      %v3387 = vpop.f32.mrf.mxu0
      %3388 = vmatprep.mubr.f32.mxu0 0.0
      %3389 = vmatmul.mubr.f32.gmra.mxu0 %v3174
      %v3390 = vpop.f32.mrf.mxu0
      %v3391 = vadd.f32 0.0, %v3390
      %v3392 = vpop.f32.mrf.mxu0
      %3393 = vmatprep.mubr.f32.mxu0 0.0
      %3394 = vmatmul.mubr.f32.gmra.mxu0 %v3177
      %v3395 = vpop.f32.mrf.mxu0
      %v3396 = vadd.f32 0.0, %v3395
      %v3397 = vpop.f32.mrf.mxu0
      %3398 = vmatprep.mubr.f32.mxu0 0.0
      %3399 = vmatmul.mubr.f32.gmra.mxu0 %v3179
      %v3400 = vpop.f32.mrf.mxu0
      %v3401 = vadd.f32 0.0, %v3400
      %v3402 = vpop.f32.mrf.mxu0
      %3403 = vmatprep.mubr.f32.mxu0 0.0
      %3404 = vmatmul.mubr.f32.gmra.mxu0 %v3182
      %v3405 = vpop.f32.mrf.mxu0
      %v3406 = vadd.f32 0.0, %v3405
      %v3407 = vpop.f32.mrf.mxu0
      %3408 = vmatprep.mubr.f32.mxu0 0.0
      %3409 = vmatmul.mubr.f32.gmra.mxu0 %v3184
      %v3410 = vpop.f32.mrf.mxu0
      %v3411 = vadd.f32 0.0, %v3410
      %v3412 = vpop.f32.mrf.mxu0
      %3413 = vmatprep.mubr.f32.mxu0 0.0
      %3414 = vmatmul.mubr.f32.gmra.mxu0 %v3187
      %v3415 = vpop.f32.mrf.mxu0
      %v3416 = vadd.f32 0.0, %v3415
      %v3417 = vpop.f32.mrf.mxu0
      %3418 = vmatprep.mubr.f32.mxu0 0.0
      %3419 = vmatmul.mubr.f32.gmra.mxu0 %v3189
      %v3420 = vpop.f32.mrf.mxu0
      %v3421 = vadd.f32 0.0, %v3420
      %v3422 = vpop.f32.mrf.mxu0
      %3423 = vmatprep.mubr.f32.mxu0 0.0
      %3424 = vmatmul.mubr.f32.gmra.mxu0 %v3192
      %v3425 = vpop.f32.mrf.mxu0
      %v3426 = vadd.f32 0.0, %v3425
      %v3427 = vpop.f32.mrf.mxu0
      %3428 = vmatprep.mubr.f32.mxu0 0.0
      %3429 = vmatmul.mubr.f32.gmra.mxu0 %v3194
      %v3430 = vpop.f32.mrf.mxu0
      %v3431 = vadd.f32 0.0, %v3430
      %v3432 = vpop.f32.mrf.mxu0
      %3433 = vmatprep.mubr.f32.mxu0 0.0
      %3434 = vmatmul.mubr.f32.gmra.mxu0 %v3197
      %v3435 = vpop.f32.mrf.mxu0
      %v3436 = vadd.f32 0.0, %v3435
      %v3437 = vpop.f32.mrf.mxu0
      %3438 = vmatprep.mubr.f32.mxu0 0.0
      %3439 = vmatmul.mubr.f32.gmra.mxu0 %v3199
      %v3440 = vpop.f32.mrf.mxu0
      %v3441 = vadd.f32 0.0, %v3440
      %v3442 = vpop.f32.mrf.mxu0
      %3443 = vmatprep.mubr.f32.mxu0 0.0
      %3444 = vmatmul.mubr.f32.gmra.mxu0 %v3202
      %v3445 = vpop.f32.mrf.mxu0
      %v3446 = vadd.f32 0.0, %v3445
      %v3447 = vpop.f32.mrf.mxu0
      %3448 = vmatprep.mubr.f32.mxu0 0.0
      %3449 = vmatmul.mubr.f32.gmra.mxu0 %v3204
      %v3450 = vpop.f32.mrf.mxu0
      %v3451 = vadd.f32 0.0, %v3450
      %v3452 = vpop.f32.mrf.mxu0
      %3453 = vmatprep.mubr.f32.mxu0 0.0
      %3454 = vmatmul.mubr.f32.gmra.mxu0 %v3207
      %v3455 = vpop.f32.mrf.mxu0
      %v3456 = vadd.f32 0.0, %v3455
      %v3457 = vpop.f32.mrf.mxu0
      %3458 = vmatprep.mubr.f32.mxu0 0.0
      %3459 = vmatmul.mubr.f32.gmra.mxu0 %v3209
      %v3460 = vpop.f32.mrf.mxu0
      %v3461 = vadd.f32 0.0, %v3460
      %v3462 = vpop.f32.mrf.mxu0
      %3463 = vmatprep.mubr.f32.mxu0 0.0
      %3464 = vmatmul.mubr.f32.gmra.mxu0 %v3212
      %v3465 = vpop.f32.mrf.mxu0
      %v3466 = vadd.f32 0.0, %v3465
      %v3467 = vpop.f32.mrf.mxu0
      %3468 = vmatprep.mubr.f32.mxu0 0.0
      %3469 = vmatmul.mubr.f32.gmra.mxu0 %v3214
      %v3470 = vpop.f32.mrf.mxu0
      %v3471 = vadd.f32 0.0, %v3470
      %v3472 = vpop.f32.mrf.mxu0
      %3473 = vmatprep.mubr.f32.mxu0 0.0
      %3474 = vmatmul.mubr.f32.gmra.mxu0 %v3217
      %v3475 = vpop.f32.mrf.mxu0
      %v3476 = vadd.f32 0.0, %v3475
      %v3477 = vpop.f32.mrf.mxu0
      %3478 = vmatprep.mubr.f32.mxu0 0.0
      %3479 = vmatmul.mubr.f32.gmra.mxu0 %v3219
      %v3480 = vpop.f32.mrf.mxu0
      %v3481 = vadd.f32 0.0, %v3480
      %v3482 = vpop.f32.mrf.mxu0
      %3483 = vmatprep.mubr.f32.mxu0 0.0
      %3484 = vmatmul.mubr.f32.gmra.mxu0 %v3222
      %v3485 = vpop.f32.mrf.mxu0
      %v3486 = vadd.f32 0.0, %v3485
      %v3487 = vpop.f32.mrf.mxu0
      %3488 = vmatprep.mubr.f32.mxu0 0.0
      %3489 = vmatmul.mubr.f32.gmra.mxu0 %v3224
      %v3490 = vpop.f32.mrf.mxu0
      %v3491 = vadd.f32 0.0, %v3490
      %v3492 = vpop.f32.mrf.mxu0
      %3493 = vmatprep.mubr.f32.mxu0 0.0
      %3494 = vmatmul.mubr.f32.gmra.mxu0 %v3227
      %v3495 = vpop.f32.mrf.mxu0
      %v3496 = vadd.f32 0.0, %v3495
      %v3497 = vpop.f32.mrf.mxu0
      %3498 = vmatprep.mubr.f32.mxu0 0.0
      %3499 = vmatmul.mubr.f32.gmra.mxu0 %v3229
      %v3500 = vpop.f32.mrf.mxu0
      %v3501 = vadd.f32 0.0, %v3500
      %v3502 = vpop.f32.mrf.mxu0
      %3503 = vdwg.mxu0
      %v3504 = vadd.f32 %v3118, %v3346
      %v3505 = vadd.f32 %v3119, %v3351
      %v3506 = vadd.f32 %v3120, %v3356
      %v3507 = vadd.f32 %v3121, %v3361
      %v3508 = vadd.f32 %v3122, %v3366
      %v3509 = vadd.f32 %v3123, %v3371
      %v3510 = vadd.f32 %v3124, %v3376
      %v3511 = vadd.f32 %v3125, %v3381
      %v3512 = vadd.f32 %v3126, %v3386
      %v3513 = vadd.f32 %v3127, %v3391
      %v3514 = vadd.f32 %v3128, %v3396
      %v3515 = vadd.f32 %v3129, %v3401
      %v3516 = vadd.f32 %v3130, %v3406
      %v3517 = vadd.f32 %v3131, %v3411
      %v3518 = vadd.f32 %v3132, %v3416
      %v3519 = vadd.f32 %v3133, %v3421
      %v3520 = vadd.f32 %v3134, %v3426
      %v3521 = vadd.f32 %v3135, %v3431
      %v3522 = vadd.f32 %v3136, %v3436
      %v3523 = vadd.f32 %v3137, %v3441
      %v3524 = vadd.f32 %v3138, %v3446
      %v3525 = vadd.f32 %v3139, %v3451
      %v3526 = vadd.f32 %v3140, %v3456
      %v3527 = vadd.f32 %v3141, %v3461
      %v3528 = vadd.f32 %v3142, %v3466
      %v3529 = vadd.f32 %v3143, %v3471
      %v3530 = vadd.f32 %v3144, %v3476
      %v3531 = vadd.f32 %v3145, %v3481
      %v3532 = vadd.f32 %v3146, %v3486
      %v3533 = vadd.f32 %v3147, %v3491
      %v3534 = vadd.f32 %v3148, %v3496
      %v3535 = vadd.f32 %v3149, %v3501
      %v3536 = vld [vmem:[%s2] sm:$0x1]
      %v3538 = vlaneseq
      %v3539 = vshrl.u32 %v3538, 7
      %v3540 = vsub.s32 0, %v3539
      %v3541 = vrot.slane %v3536, %v3540
      %v3543 = vadd.f32 %v3504, %v3541
      %v3544 = vadd.f32 %v3505, %v3541
      %v3545 = vadd.f32 %v3506, %v3541
      %v3546 = vadd.f32 %v3507, %v3541
      %v3547 = vadd.f32 %v3508, %v3541
      %v3548 = vadd.f32 %v3509, %v3541
      %v3549 = vadd.f32 %v3510, %v3541
      %v3550 = vadd.f32 %v3511, %v3541
      %v3551 = vadd.f32 %v3512, %v3541
      %v3552 = vadd.f32 %v3513, %v3541
      %v3553 = vadd.f32 %v3514, %v3541
      %v3554 = vadd.f32 %v3515, %v3541
      %v3555 = vadd.f32 %v3516, %v3541
      %v3556 = vadd.f32 %v3517, %v3541
      %v3557 = vadd.f32 %v3518, %v3541
      %v3558 = vadd.f32 %v3519, %v3541
      %v3559 = vadd.f32 %v3520, %v3541
      %v3560 = vadd.f32 %v3521, %v3541
      %v3561 = vadd.f32 %v3522, %v3541
      %v3562 = vadd.f32 %v3523, %v3541
      %v3563 = vadd.f32 %v3524, %v3541
      %v3564 = vadd.f32 %v3525, %v3541
      %v3565 = vadd.f32 %v3526, %v3541
      %v3566 = vadd.f32 %v3527, %v3541
      %v3567 = vadd.f32 %v3528, %v3541
      %v3568 = vadd.f32 %v3529, %v3541
      %v3569 = vadd.f32 %v3530, %v3541
      %v3570 = vadd.f32 %v3531, %v3541
      %v3571 = vadd.f32 %v3532, %v3541
      %v3572 = vadd.f32 %v3533, %v3541
      %v3573 = vadd.f32 %v3534, %v3541
      %v3574 = vadd.f32 %v3535, %v3541
      %v3575 = vmax.f32 %v3543, 0.0
      %v3576 = vmax.f32 %v3544, 0.0
      %v3577 = vmax.f32 %v3545, 0.0
      %v3578 = vmax.f32 %v3546, 0.0
      %v3579 = vmax.f32 %v3547, 0.0
      %v3580 = vmax.f32 %v3548, 0.0
      %v3581 = vmax.f32 %v3549, 0.0
      %v3582 = vmax.f32 %v3550, 0.0
      %v3583 = vmax.f32 %v3551, 0.0
      %v3584 = vmax.f32 %v3552, 0.0
      %v3585 = vmax.f32 %v3553, 0.0
      %v3586 = vmax.f32 %v3554, 0.0
      %v3587 = vmax.f32 %v3555, 0.0
      %v3588 = vmax.f32 %v3556, 0.0
      %v3589 = vmax.f32 %v3557, 0.0
      %v3590 = vmax.f32 %v3558, 0.0
      %v3591 = vmax.f32 %v3559, 0.0
      %v3592 = vmax.f32 %v3560, 0.0
      %v3593 = vmax.f32 %v3561, 0.0
      %v3594 = vmax.f32 %v3562, 0.0
      %v3595 = vmax.f32 %v3563, 0.0
      %v3596 = vmax.f32 %v3564, 0.0
      %v3597 = vmax.f32 %v3565, 0.0
      %v3598 = vmax.f32 %v3566, 0.0
      %v3599 = vmax.f32 %v3567, 0.0
      %v3600 = vmax.f32 %v3568, 0.0
      %v3601 = vmax.f32 %v3569, 0.0
      %v3602 = vmax.f32 %v3570, 0.0
      %v3603 = vmax.f32 %v3571, 0.0
      %v3604 = vmax.f32 %v3572, 0.0
      %v3605 = vmax.f32 %v3573, 0.0
      %v3606 = vmax.f32 %v3574, 0.0
      %3607 = vst [vmem:[%s170] sm:$0xff] %v3575
      %3608 = vst [vmem:[%s170 + $0x8] sm:$0xff] %v3576
      %3609 = vst [vmem:[%s170 + $0x10] sm:$0xff] %v3577
      %3610 = vst [vmem:[%s170 + $0x18] sm:$0xff] %v3578
      %3611 = vst [vmem:[%s170 + $0x20] sm:$0xff] %v3579
      %3612 = vst [vmem:[%s170 + $0x28] sm:$0xff] %v3580
      %3613 = vst [vmem:[%s170 + $0x30] sm:$0xff] %v3581
      %3614 = vst [vmem:[%s170 + $0x38] sm:$0xff] %v3582
      %3615 = vst [vmem:[%s170 + $0x40] sm:$0xff] %v3583
      %3616 = vst [vmem:[%s170 + $0x48] sm:$0xff] %v3584
      %3617 = vst [vmem:[%s170 + $0x50] sm:$0xff] %v3585
      %3618 = vst [vmem:[%s170 + $0x58] sm:$0xff] %v3586
      %3619 = vst [vmem:[%s170 + $0x60] sm:$0xff] %v3587
      %3620 = vst [vmem:[%s170 + $0x68] sm:$0xff] %v3588
      %3621 = vst [vmem:[%s170 + $0x70] sm:$0xff] %v3589
      %3622 = vst [vmem:[%s170 + $0x78] sm:$0xff] %v3590
      %3623 = vst [vmem:[%s170 + $0x80] sm:$0xff] %v3591
      %3624 = vst [vmem:[%s170 + $0x88] sm:$0xff] %v3592
      %3625 = vst [vmem:[%s170 + $0x90] sm:$0xff] %v3593
      %3626 = vst [vmem:[%s170 + $0x98] sm:$0xff] %v3594
      %3627 = vst [vmem:[%s170 + $0xa0] sm:$0xff] %v3595
      %3628 = vst [vmem:[%s170 + $0xa8] sm:$0xff] %v3596
      %3629 = vst [vmem:[%s170 + $0xb0] sm:$0xff] %v3597
      %3630 = vst [vmem:[%s170 + $0xb8] sm:$0xff] %v3598
      %3631 = vst [vmem:[%s170 + $0xc0] sm:$0xff] %v3599
      %3632 = vst [vmem:[%s170 + $0xc8] sm:$0xff] %v3600
      %3633 = vst [vmem:[%s170 + $0xd0] sm:$0xff] %v3601
      %3634 = vst [vmem:[%s170 + $0xd8] sm:$0xff] %v3602
      %3635 = vst [vmem:[%s170 + $0xe0] sm:$0xff] %v3603
      %3636 = vst [vmem:[%s170 + $0xe8] sm:$0xff] %v3604
      %3637 = vst [vmem:[%s170 + $0xf0] sm:$0xff] %v3605
      %3638 = vst [vmem:[%s170 + $0xf8] sm:$0xff] %v3606
      %p3639 = scmp.lt.s32.totalorder %s14, 1
      %s3640 = scalar_select %p3639, %s14, 1
      %s3641 = smul.addr %s3640, 32
      %s3642 = smul.addr %s3641, 8
      %s3643 = scalar_lea.vmem %s3, %s3642
      // Predicated region
      $region33: #{net_forward.8} parent=31 // pred_check
        %p3644 = pneg %p100
      $region34: #{net_forward.8} parent=31 // pred_check_branch
        %3646 = sbr.rel (%p3644) target = $region36
      $region35: #{net_forward.8} parent=31 // pred_region
        _
      $region36: #{net_forward.8} parent=31 // pred_fallthru
        _
    $region32: #{net_forward.8} parent=5 // pred_fallthru
      _
    %p3647 = scmp.le.s32.totalorder 2, %s9
    // Predicated region
    $region37: #{net_forward.8} parent=5 // pred_check
      %p3648 = pneg %p3647
    $region38: #{net_forward.8} parent=5 // pred_check_branch
      %3650 = sbr.rel (%p3648) target = $region40
    $region39: #{net_forward.8} parent=5 // pred_region
      %s3651 = ssub.s32 %s9, 2
      // Predicated region
      $region41: #{net_forward.8} parent=39 // pred_check
        %p3652 = pneg %p106
      $region42: #{net_forward.8} parent=39 // pred_check_branch
        %3654 = sbr.rel (%p3652) target = $region44
      $region43: #{net_forward.8} parent=39 // pred_region
        %p3655 = scmp.lt.s32.totalorder %s15, 1
        %s3656 = scalar_select %p3655, %s15, 1
        %s3657 = smul.addr %s3656, 32
        %s3658 = smul.addr %s3657, 8
        %s3659 = scalar_lea.vmem %s3, %s3658
      $region44: #{net_forward.8} parent=39 // pred_fallthru
        _
    $region40: #{net_forward.8} parent=5 // pred_fallthru
      _
  $region6: #{net_forward.8} parent=0 // loop_footer
    %s13 = sadd.s32 1, %s9
  $region7: #{net_forward.8} parent=0 // loop_footer_branch
    %8 = sbr.rel target = $region3
  $region8: #{net_forward.8} parent=0 // loop_exit
    _

// kernel: net_forward.10
$region0: #{net_forward.10}
  #allocation0 [shape = 'u32[]', space=smem, size = 0x4, offset = 0x4, fixed_abs, tag = 'smem constant byte address 0x4 - core index']
  #allocation1 [shape = 'u32[144,128]{1,0:T(1,128)}', space=vmem, size = 0x12000, scoped, tag = 'internal scratch']
  %s0 = inlined_call_operand.vmem [shape: f32[2,10,10,128], index: 0, kind: input, shape index: {}]
  %s1 = inlined_call_operand.vmem [shape: f32[9,128,128], index: 1, kind: input, shape index: {}]
  %s2 = inlined_call_operand.vmem [shape: f32[1,128], index: 2, kind: input, shape index: {}]
  %s3 = inlined_call_operand.vmem [shape: f32[2,64,128], index: 3, kind: output, shape index: {}]
  %s4 = sld [smem:[#allocation0]]
  $region45: #{net_forward.10} parent=0
    _
  %s6 = ssub.s32 1, %s4
  %s7 = scalar_select 0, %s6, %s4
  loop: start=0, step=1, limit=4
  $region2: #{net_forward.10} parent=0 // loop_pre_header
    _
  $region3: #{net_forward.10} parent=0 // loop_header
    %s9 = sphi 0, %s13
    %p10 = scmp.ge.s32.totalorder %s9, 4
    %s19 = sphi 0, %s21
    %s22 = sphi 0, %s19
    %s23 = sphi 0, %s22
    %s39 = sphi 0, %s23
    %s43 = sphi 0, %s43
    %s45 = sphi 0, %s43
    %s46 = sphi 0, %s45
    %s60 = sphi 0, %s46
    %s64 = sphi 0, %s64
    %s66 = sphi 0, %s64
    %s67 = sphi 0, %s66
    %s81 = sphi 0, %s67
    %s87 = sphi 0, %s89
    %s90 = sphi 0, %s87
    %s91 = sphi 0, %s90
    %s107 = sphi 0, %s91
  $region4: #{net_forward.10} parent=0 // loop_header_branch
    %12 = sbr.rel (%p10) target = $region8
  $region5: #{net_forward.10} parent=0 // loop_body
    %s14 = ssub.s32 %s9, 1
    %s15 = ssub.s32 %s9, 2
    %s16 = sadd.s32 %s9, 1
    %s17 = ssub.s32 %s9, %s16
    %p18 = scmp.eq.s32.totalorder %s17, 0
    %s20 = sadd.s32 %s19, 1
    %s21 = scalar_select %p18, %s19, %s20
    %p24 = pneg %p18
    %p25 = scmp.eq.s32.totalorder %s9, 1
    %p26 = por %p24, %p25
    %p27 = scmp.ne.s32.totalorder %s19, %s22
    %p28 = scmp.eq.s32.totalorder %s9, 0
    %p29 = por %p27, %p28
    %p30 = scmp.ne.s32.totalorder %s19, %s22
    %p31 = scmp.eq.s32.totalorder %s14, 1
    %p32 = por %p30, %p31
    %p33 = scmp.ne.s32.totalorder %s22, %s23
    %p34 = scmp.eq.s32.totalorder %s14, 0
    %p35 = por %p33, %p34
    %p36 = scmp.ne.s32.totalorder %s22, %s23
    %p37 = scmp.eq.s32.totalorder %s15, 1
    %p38 = por %p36, %p37
    %p40 = scmp.ne.s32.totalorder %s23, %s39
    %p41 = scmp.eq.s32.totalorder %s15, 0
    %p42 = por %p40, %p41
    %s44 = sadd.s32 %s43, 1
    %p47 = scmp.eq.s32.totalorder %s9, 1
    %p48 = scmp.ne.s32.totalorder %s43, %s45
    %p49 = scmp.eq.s32.totalorder %s9, 0
    %p50 = por %p48, %p49
    %p51 = scmp.ne.s32.totalorder %s43, %s45
    %p52 = scmp.eq.s32.totalorder %s14, 1
    %p53 = por %p51, %p52
    %p54 = scmp.ne.s32.totalorder %s45, %s46
    %p55 = scmp.eq.s32.totalorder %s14, 0
    %p56 = por %p54, %p55
    %p57 = scmp.ne.s32.totalorder %s45, %s46
    %p58 = scmp.eq.s32.totalorder %s15, 1
    %p59 = por %p57, %p58
    %p61 = scmp.ne.s32.totalorder %s46, %s60
    %p62 = scmp.eq.s32.totalorder %s15, 0
    %p63 = por %p61, %p62
    %s65 = sadd.s32 %s64, 1
    %p68 = scmp.eq.s32.totalorder %s9, 1
    %p69 = scmp.ne.s32.totalorder %s64, %s66
    %p70 = scmp.eq.s32.totalorder %s9, 0
    %p71 = por %p69, %p70
    %p72 = scmp.ne.s32.totalorder %s64, %s66
    %p73 = scmp.eq.s32.totalorder %s14, 1
    %p74 = por %p72, %p73
    %p75 = scmp.ne.s32.totalorder %s66, %s67
    %p76 = scmp.eq.s32.totalorder %s14, 0
    %p77 = por %p75, %p76
    %p78 = scmp.ne.s32.totalorder %s66, %s67
    %p79 = scmp.eq.s32.totalorder %s15, 1
    %p80 = por %p78, %p79
    %p82 = scmp.ne.s32.totalorder %s67, %s81
    %p83 = scmp.eq.s32.totalorder %s15, 0
    %p84 = por %p82, %p83
    %s85 = ssub.s32 %s9, %s16
    %p86 = scmp.eq.s32.totalorder %s85, 0
    %s88 = sadd.s32 %s87, 1
    %s89 = scalar_select %p86, %s87, %s88
    %p92 = pneg %p86
    %p93 = scmp.eq.s32.totalorder %s9, 1
    %p94 = por %p92, %p93
    %p95 = scmp.ne.s32.totalorder %s87, %s90
    %p96 = scmp.eq.s32.totalorder %s9, 0
    %p97 = por %p95, %p96
    %p98 = scmp.ne.s32.totalorder %s87, %s90
    %p99 = scmp.eq.s32.totalorder %s14, 1
    %p100 = por %p98, %p99
    %p101 = scmp.ne.s32.totalorder %s90, %s91
    %p102 = scmp.eq.s32.totalorder %s14, 0
    %p103 = por %p101, %p102
    %p104 = scmp.ne.s32.totalorder %s90, %s91
    %p105 = scmp.eq.s32.totalorder %s15, 1
    %p106 = por %p104, %p105
    %p108 = scmp.ne.s32.totalorder %s91, %s107
    %p109 = scmp.eq.s32.totalorder %s15, 0
    %p110 = por %p108, %p109
    %p111 = scmp.le.s32.totalorder 1, %s9
    %p112 = scmp.lt.s32.totalorder %s9, 3
    %p113 = pnand %p111, %p112
    %p114 = pneg %p113
    // Predicated region
    $region9: #{net_forward.10} parent=5 // pred_check
      _
    $region10: #{net_forward.10} parent=5 // pred_check_branch
      %116 = sbr.rel (%p113) target = $region12
    $region11: #{net_forward.10} parent=5 // pred_region
      %s117 = ssub.s32 %s9, 1
      // Predicated region
      $region13: #{net_forward.10} parent=11 // pred_check
        %p118 = pneg %p56
      $region14: #{net_forward.10} parent=11 // pred_check_branch
        %120 = sbr.rel (%p118) target = $region16
      $region15: #{net_forward.10} parent=11 // pred_region
        _
      $region16: #{net_forward.10} parent=11 // pred_fallthru
        _
      // Predicated region
      $region17: #{net_forward.10} parent=11 // pred_check
        %p121 = pneg %p77
      $region18: #{net_forward.10} parent=11 // pred_check_branch
        %123 = sbr.rel (%p121) target = $region20
      $region19: #{net_forward.10} parent=11 // pred_region
        _
      $region20: #{net_forward.10} parent=11 // pred_fallthru
        _
    $region12: #{net_forward.10} parent=5 // pred_fallthru
      _
    %p124 = scmp.lt.s32.totalorder %s9, 2
    // Predicated region
    $region21: #{net_forward.10} parent=5 // pred_check
      %p125 = pneg %p124
    $region22: #{net_forward.10} parent=5 // pred_check_branch
      %127 = sbr.rel (%p125) target = $region24
    $region23: #{net_forward.10} parent=5 // pred_region
      // Predicated region
      $region25: #{net_forward.10} parent=23 // pred_check
        %p128 = pneg %p29
      $region26: #{net_forward.10} parent=23 // pred_check_branch
        %130 = sbr.rel (%p128) target = $region28
      $region27: #{net_forward.10} parent=23 // pred_region
        %p131 = scmp.lt.s32.totalorder %s9, 1
        %s132 = scalar_select %p131, %s9, 1
        %s133 = smul.addr %s132, 20
        %s134 = smul.addr %s133, 8
        %s135 = scalar_lea.vmem %s0, %s134
      $region28: #{net_forward.10} parent=23 // pred_fallthru
        _
    $region24: #{net_forward.10} parent=5 // pred_fallthru
      _
    %p136 = scmp.le.s32.totalorder 1, %s9
    %p137 = scmp.lt.s32.totalorder %s9, 3
    %p138 = pnand %p136, %p137
    %p139 = pneg %p138
    // Predicated region
    $region29: #{net_forward.10} parent=5 // pred_check
      _
    $region30: #{net_forward.10} parent=5 // pred_check_branch
      %141 = sbr.rel (%p138) target = $region32
    $region31: #{net_forward.10} parent=5 // pred_region
      %s142 = ssub.s32 %s9, 1
      %p143 = scmp.lt.s32.totalorder %s14, 1
      %s144 = scalar_select %p143, %s14, 1
      %s145 = smul.addr %s144, 20
      %s146 = smul.addr %s145, 8
      %s147 = scalar_lea.vmem %s0, %s146
      %p148 = pneg %p35
      %p149 = pneg %p32
      %p150 = pneg %p56
      %p151 = pneg %p53
      %p152 = pneg %p77
      %p153 = pneg %p74
      %p154 = pneg %p103
      %p155 = pneg %p100
      %p156 = scmp.lt.s32.totalorder %s14, 1
      %s157 = scalar_select %p156, %s14, 1
      %s158 = smul.addr %s157, 8
      %s159 = smul.addr %s158, 8
      %s160 = scalar_lea.vmem %s3, %s159
      %p161 = scmp.lt.s32.totalorder %s14, 1
      %s162 = scalar_select %p161, %s14, 1
      %s163 = smul.addr %s162, 20
      %s164 = smul.addr %s163, 8
      %s165 = scalar_lea.vmem %s0, %s164
      %p166 = scmp.lt.s32.totalorder %s14, 1
      %s167 = scalar_select %p166, %s14, 1
      %s168 = smul.addr %s167, 8
      %s169 = smul.addr %s168, 8
      %s170 = scalar_lea.vmem %s3, %s169
      %v171 = vld [vmem:[%s165] sm:$0xff]
      %v172 = vld [vmem:[%s165 + $0x8] sm:$0x3]
      %v173 = vld [vmem:[%s165 + $0x10] sm:$0xff]
      %v174 = vld [vmem:[%s165 + $0x18] sm:$0x3]
      %v175 = vld [vmem:[%s165 + $0x20] sm:$0xff]
      %v176 = vld [vmem:[%s165 + $0x28] sm:$0x3]
      %v177 = vld [vmem:[%s165 + $0x30] sm:$0xff]
      %v178 = vld [vmem:[%s165 + $0x38] sm:$0x3]
      %v179 = vld [vmem:[%s165 + $0x40] sm:$0xff]
      %v180 = vld [vmem:[%s165 + $0x48] sm:$0x3]
      %v181 = vld [vmem:[%s165 + $0x50] sm:$0xff]
      %v182 = vld [vmem:[%s165 + $0x58] sm:$0x3]
      %v183 = vld [vmem:[%s165 + $0x60] sm:$0xff]
      %v184 = vld [vmem:[%s165 + $0x68] sm:$0x3]
      %v185 = vld [vmem:[%s165 + $0x70] sm:$0xff]
      %v186 = vld [vmem:[%s165 + $0x78] sm:$0x3]
      %v187 = vld [vmem:[%s1] sm:$0xff]
      %v188 = vld [vmem:[%s1 + $0x8] sm:$0xff]
      %v189 = vld [vmem:[%s1 + $0x10] sm:$0xff]
      %v190 = vld [vmem:[%s1 + $0x18] sm:$0xff]
      %v191 = vld [vmem:[%s1 + $0x20] sm:$0xff]
      %v192 = vld [vmem:[%s1 + $0x28] sm:$0xff]
      %v193 = vld [vmem:[%s1 + $0x30] sm:$0xff]
      %v194 = vld [vmem:[%s1 + $0x38] sm:$0xff]
      %v195 = vld [vmem:[%s1 + $0x40] sm:$0xff]
      %v196 = vld [vmem:[%s1 + $0x48] sm:$0xff]
      %v197 = vld [vmem:[%s1 + $0x50] sm:$0xff]
      %v198 = vld [vmem:[%s1 + $0x58] sm:$0xff]
      %v199 = vld [vmem:[%s1 + $0x60] sm:$0xff]
      %v200 = vld [vmem:[%s1 + $0x68] sm:$0xff]
      %v201 = vld [vmem:[%s1 + $0x70] sm:$0xff]
      %v202 = vld [vmem:[%s1 + $0x78] sm:$0xff]
      %vm219 = vcmask 1046528
      %v220 = vrot.slane %v171, 1
      %v221 = vrot.slane %v172, 1
      %v222 = vsel %vm219, %v220, %v221
      %v223 = vrot.slane %v173, 1
      %v224 = vrot.slane %v174, 1
      %v225 = vsel %vm219, %v223, %v224
      %v226 = vrot.slane %v175, 1
      %v227 = vrot.slane %v176, 1
      %v228 = vsel %vm219, %v226, %v227
      %v229 = vrot.slane %v177, 1
      %v230 = vrot.slane %v178, 1
      %v231 = vsel %vm219, %v229, %v230
      %v232 = vrot.slane %v179, 1
      %v233 = vrot.slane %v180, 1
      %v234 = vsel %vm219, %v232, %v233
      %v235 = vrot.slane %v181, 1
      %v236 = vrot.slane %v182, 1
      %v237 = vsel %vm219, %v235, %v236
      %v238 = vrot.slane %v183, 1
      %v239 = vrot.slane %v184, 1
      %v240 = vsel %vm219, %v238, %v239
      %v241 = vrot.slane %v185, 1
      %v242 = vrot.slane %v186, 1
      %v243 = vsel %vm219, %v241, %v242
      %s252 = scalar_lea.vmem %s1, 128
      %v253 = vld [vmem:[%s252] sm:$0xff]
      %v254 = vld [vmem:[%s252 + $0x8] sm:$0xff]
      %v255 = vld [vmem:[%s252 + $0x10] sm:$0xff]
      %v256 = vld [vmem:[%s252 + $0x18] sm:$0xff]
      %v257 = vld [vmem:[%s252 + $0x20] sm:$0xff]
      %v258 = vld [vmem:[%s252 + $0x28] sm:$0xff]
      %v259 = vld [vmem:[%s252 + $0x30] sm:$0xff]
      %v260 = vld [vmem:[%s252 + $0x38] sm:$0xff]
      %v261 = vld [vmem:[%s252 + $0x40] sm:$0xff]
      %v262 = vld [vmem:[%s252 + $0x48] sm:$0xff]
      %v263 = vld [vmem:[%s252 + $0x50] sm:$0xff]
      %v264 = vld [vmem:[%s252 + $0x58] sm:$0xff]
      %v265 = vld [vmem:[%s252 + $0x60] sm:$0xff]
      %v266 = vld [vmem:[%s252 + $0x68] sm:$0xff]
      %v267 = vld [vmem:[%s252 + $0x70] sm:$0xff]
      %v268 = vld [vmem:[%s252 + $0x78] sm:$0xff]
      %269 = vmatprep.subr.mxu0 0.0
      %270 = vmatpush1.msra.mxu0 %v268
      %271 = vmatprep.subr.mxu0 0.0
      %272 = vmatpush1.msra.mxu0 %v267
      %273 = vmatprep.subr.mxu0 0.0
      %274 = vmatpush1.msra.mxu0 %v266
      %275 = vmatprep.subr.mxu0 0.0
      %276 = vmatpush1.msra.mxu0 %v265
      %277 = vmatprep.subr.mxu0 0.0
      %278 = vmatpush1.msra.mxu0 %v264
      %279 = vmatprep.subr.mxu0 0.0
      %280 = vmatpush1.msra.mxu0 %v263
      %281 = vmatprep.subr.mxu0 0.0
      %282 = vmatpush1.msra.mxu0 %v262
      %283 = vmatprep.subr.mxu0 0.0
      %284 = vmatpush1.msra.mxu0 %v261
      %285 = vmatprep.subr.mxu0 0.0
      %286 = vmatpush1.msra.mxu0 %v260
      %287 = vmatprep.subr.mxu0 0.0
      %288 = vmatpush1.msra.mxu0 %v259
      %289 = vmatprep.subr.mxu0 0.0
      %290 = vmatpush1.msra.mxu0 %v258
      %291 = vmatprep.subr.mxu0 0.0
      %292 = vmatpush1.msra.mxu0 %v257
      %293 = vmatprep.subr.mxu0 0.0
      %294 = vmatpush1.msra.mxu0 %v256
      %295 = vmatprep.subr.mxu0 0.0
      %296 = vmatpush1.msra.mxu0 %v255
      %297 = vmatprep.subr.mxu0 0.0
      %298 = vmatpush1.msra.mxu0 %v254
      %299 = vmatprep.subr.mxu0 0.0
      %300 = vmatpush1.msra.mxu0 %v253
      %301 = vmatprep.subr.mxu0 0.0
      %302 = vmatpush2.msra.mxu0 0.0
      %303 = vmatprep.subr.mxu0 0.0
      %304 = vmatpush2.msra.mxu0 0.0
      %305 = vmatprep.subr.mxu0 0.0
      %306 = vmatpush2.msra.mxu0 0.0
      %307 = vmatprep.subr.mxu0 0.0
      %308 = vmatpush2.msra.mxu0 0.0
      %309 = vmatprep.subr.mxu0 0.0
      %310 = vmatpush2.msra.mxu0 0.0
      %311 = vmatprep.subr.mxu0 0.0
      %312 = vmatpush2.msra.mxu0 0.0
      %313 = vmatprep.subr.mxu0 0.0
      %314 = vmatpush2.msra.mxu0 0.0
      %315 = vmatprep.subr.mxu0 0.0
      %316 = vmatpush2.msra.mxu0 0.0
      %317 = vmatprep.subr.mxu0 0.0
      %318 = vmatpush2.msra.mxu0 0.0
      %319 = vmatprep.subr.mxu0 0.0
      %320 = vmatpush2.msra.mxu0 0.0
      %321 = vmatprep.subr.mxu0 0.0
      %322 = vmatpush2.msra.mxu0 0.0
      %323 = vmatprep.subr.mxu0 0.0
      %324 = vmatpush2.msra.mxu0 0.0
      %325 = vmatprep.subr.mxu0 0.0
      %326 = vmatpush2.msra.mxu0 0.0
      %327 = vmatprep.subr.mxu0 0.0
      %328 = vmatpush2.msra.mxu0 0.0
      %329 = vmatprep.subr.mxu0 0.0
      %330 = vmatpush2.msra.mxu0 0.0
      %331 = vmatprep.subr.mxu0 0.0
      %332 = vmatpush2.msra.mxu0 0.0
      %333 = vmatprep.mubr.f32.mxu0 0.0
      %334 = vmatmul.mubr.f32.gmra.mxu0 %v222
      %v335 = vpop.f32.mrf.mxu0
      %v336 = vadd.f32 0.0, %v335
      %v337 = vpop.f32.mrf.mxu0
      %338 = vmatprep.mubr.f32.mxu0 0.0
      %339 = vmatmul.mubr.f32.gmra.mxu0 %v225
      %v340 = vpop.f32.mrf.mxu0
      %v341 = vadd.f32 0.0, %v340
      %v342 = vpop.f32.mrf.mxu0
      %343 = vmatprep.mubr.f32.mxu0 0.0
      %344 = vmatmul.mubr.f32.gmra.mxu0 %v228
      %v345 = vpop.f32.mrf.mxu0
      %v346 = vadd.f32 0.0, %v345
      %v347 = vpop.f32.mrf.mxu0
      %348 = vmatprep.mubr.f32.mxu0 0.0
      %349 = vmatmul.mubr.f32.gmra.mxu0 %v231
      %v350 = vpop.f32.mrf.mxu0
      %v351 = vadd.f32 0.0, %v350
      %v352 = vpop.f32.mrf.mxu0
      %353 = vmatprep.mubr.f32.mxu0 0.0
      %354 = vmatmul.mubr.f32.gmra.mxu0 %v234
      %v355 = vpop.f32.mrf.mxu0
      %v356 = vadd.f32 0.0, %v355
      %v357 = vpop.f32.mrf.mxu0
      %358 = vmatprep.mubr.f32.mxu0 0.0
      %359 = vmatmul.mubr.f32.gmra.mxu0 %v237
      %v360 = vpop.f32.mrf.mxu0
      %v361 = vadd.f32 0.0, %v360
      %v362 = vpop.f32.mrf.mxu0
      %363 = vmatprep.mubr.f32.mxu0 0.0
      %364 = vmatmul.mubr.f32.gmra.mxu0 %v240
      %v365 = vpop.f32.mrf.mxu0
      %v366 = vadd.f32 0.0, %v365
      %v367 = vpop.f32.mrf.mxu0
      %368 = vmatprep.mubr.f32.mxu0 0.0
      %369 = vmatmul.mubr.f32.gmra.mxu0 %v243
      %v370 = vpop.f32.mrf.mxu0
      %v371 = vadd.f32 0.0, %v370
      %v372 = vpop.f32.mrf.mxu0
      %373 = vdwg.mxu0
      %374 = vmatprep.subr.mxu0 0.0
      %375 = vmatpush1.msra.mxu0 %v202
      %376 = vmatprep.subr.mxu0 0.0
      %377 = vmatpush1.msra.mxu0 %v201
      %378 = vmatprep.subr.mxu0 0.0
      %379 = vmatpush1.msra.mxu0 %v200
      %380 = vmatprep.subr.mxu0 0.0
      %381 = vmatpush1.msra.mxu0 %v199
      %382 = vmatprep.subr.mxu0 0.0
      %383 = vmatpush1.msra.mxu0 %v198
      %384 = vmatprep.subr.mxu0 0.0
      %385 = vmatpush1.msra.mxu0 %v197
      %386 = vmatprep.subr.mxu0 0.0
      %387 = vmatpush1.msra.mxu0 %v196
      %388 = vmatprep.subr.mxu0 0.0
      %389 = vmatpush1.msra.mxu0 %v195
      %390 = vmatprep.subr.mxu0 0.0
      %391 = vmatpush1.msra.mxu0 %v194
      %392 = vmatprep.subr.mxu0 0.0
      %393 = vmatpush1.msra.mxu0 %v193
      %394 = vmatprep.subr.mxu0 0.0
      %395 = vmatpush1.msra.mxu0 %v192
      %396 = vmatprep.subr.mxu0 0.0
      %397 = vmatpush1.msra.mxu0 %v191
      %398 = vmatprep.subr.mxu0 0.0
      %399 = vmatpush1.msra.mxu0 %v190
      %400 = vmatprep.subr.mxu0 0.0
      %401 = vmatpush1.msra.mxu0 %v189
      %402 = vmatprep.subr.mxu0 0.0
      %403 = vmatpush1.msra.mxu0 %v188
      %404 = vmatprep.subr.mxu0 0.0
      %405 = vmatpush1.msra.mxu0 %v187
      %406 = vmatprep.subr.mxu0 0.0
      %407 = vmatpush2.msra.mxu0 0.0
      %408 = vmatprep.subr.mxu0 0.0
      %409 = vmatpush2.msra.mxu0 0.0
      %410 = vmatprep.subr.mxu0 0.0
      %411 = vmatpush2.msra.mxu0 0.0
      %412 = vmatprep.subr.mxu0 0.0
      %413 = vmatpush2.msra.mxu0 0.0
      %414 = vmatprep.subr.mxu0 0.0
      %415 = vmatpush2.msra.mxu0 0.0
      %416 = vmatprep.subr.mxu0 0.0
      %417 = vmatpush2.msra.mxu0 0.0
      %418 = vmatprep.subr.mxu0 0.0
      %419 = vmatpush2.msra.mxu0 0.0
      %420 = vmatprep.subr.mxu0 0.0
      %421 = vmatpush2.msra.mxu0 0.0
      %422 = vmatprep.subr.mxu0 0.0
      %423 = vmatpush2.msra.mxu0 0.0
      %424 = vmatprep.subr.mxu0 0.0
      %425 = vmatpush2.msra.mxu0 0.0
      %426 = vmatprep.subr.mxu0 0.0
      %427 = vmatpush2.msra.mxu0 0.0
      %428 = vmatprep.subr.mxu0 0.0
      %429 = vmatpush2.msra.mxu0 0.0
      %430 = vmatprep.subr.mxu0 0.0
      %431 = vmatpush2.msra.mxu0 0.0
      %432 = vmatprep.subr.mxu0 0.0
      %433 = vmatpush2.msra.mxu0 0.0
      %434 = vmatprep.subr.mxu0 0.0
      %435 = vmatpush2.msra.mxu0 0.0
      %436 = vmatprep.subr.mxu0 0.0
      %437 = vmatpush2.msra.mxu0 0.0
      %438 = vmatprep.mubr.f32.mxu0 0.0
      %439 = vmatmul.mubr.f32.gmra.mxu0 %v171
      %v440 = vpop.f32.mrf.mxu0
      %v441 = vadd.f32 %v336, %v440
      %v442 = vpop.f32.mrf.mxu0
      %443 = vmatprep.mubr.f32.mxu0 0.0
      %444 = vmatmul.mubr.f32.gmra.mxu0 %v173
      %v445 = vpop.f32.mrf.mxu0
      %v446 = vadd.f32 %v341, %v445
      %v447 = vpop.f32.mrf.mxu0
      %448 = vmatprep.mubr.f32.mxu0 0.0
      %449 = vmatmul.mubr.f32.gmra.mxu0 %v175
      %v450 = vpop.f32.mrf.mxu0
      %v451 = vadd.f32 %v346, %v450
      %v452 = vpop.f32.mrf.mxu0
      %453 = vmatprep.mubr.f32.mxu0 0.0
      %454 = vmatmul.mubr.f32.gmra.mxu0 %v177
      %v455 = vpop.f32.mrf.mxu0
      %v456 = vadd.f32 %v351, %v455
      %v457 = vpop.f32.mrf.mxu0
      %458 = vmatprep.mubr.f32.mxu0 0.0
      %459 = vmatmul.mubr.f32.gmra.mxu0 %v179
      %v460 = vpop.f32.mrf.mxu0
      %v461 = vadd.f32 %v356, %v460
      %v462 = vpop.f32.mrf.mxu0
      %463 = vmatprep.mubr.f32.mxu0 0.0
      %464 = vmatmul.mubr.f32.gmra.mxu0 %v181
      %v465 = vpop.f32.mrf.mxu0
      %v466 = vadd.f32 %v361, %v465
      %v467 = vpop.f32.mrf.mxu0
      %468 = vmatprep.mubr.f32.mxu0 0.0
      %469 = vmatmul.mubr.f32.gmra.mxu0 %v183
      %v470 = vpop.f32.mrf.mxu0
      %v471 = vadd.f32 %v366, %v470
      %v472 = vpop.f32.mrf.mxu0
      %473 = vmatprep.mubr.f32.mxu0 0.0
      %474 = vmatmul.mubr.f32.gmra.mxu0 %v185
      %v475 = vpop.f32.mrf.mxu0
      %v476 = vadd.f32 %v371, %v475
      %v477 = vpop.f32.mrf.mxu0
      %478 = vdwg.mxu0
      %vm479 = vcmask 1045504
      %v480 = vrot.slane %v171, 2
      %v481 = vrot.slane %v172, 2
      %v482 = vsel %vm479, %v480, %v481
      %v483 = vrot.slane %v173, 2
      %v484 = vrot.slane %v174, 2
      %v485 = vsel %vm479, %v483, %v484
      %v486 = vrot.slane %v175, 2
      %v487 = vrot.slane %v176, 2
      %v488 = vsel %vm479, %v486, %v487
      %v489 = vrot.slane %v177, 2
      %v490 = vrot.slane %v178, 2
      %v491 = vsel %vm479, %v489, %v490
      %v492 = vrot.slane %v179, 2
      %v493 = vrot.slane %v180, 2
      %v494 = vsel %vm479, %v492, %v493
      %v495 = vrot.slane %v181, 2
      %v496 = vrot.slane %v182, 2
      %v497 = vsel %vm479, %v495, %v496
      %v498 = vrot.slane %v183, 2
      %v499 = vrot.slane %v184, 2
      %v500 = vsel %vm479, %v498, %v499
      %v501 = vrot.slane %v185, 2
      %v502 = vrot.slane %v186, 2
      %v503 = vsel %vm479, %v501, %v502
      %s512 = scalar_lea.vmem %s1, 256
      %v513 = vld [vmem:[%s512] sm:$0xff]
      %v514 = vld [vmem:[%s512 + $0x8] sm:$0xff]
      %v515 = vld [vmem:[%s512 + $0x10] sm:$0xff]
      %v516 = vld [vmem:[%s512 + $0x18] sm:$0xff]
      %v517 = vld [vmem:[%s512 + $0x20] sm:$0xff]
      %v518 = vld [vmem:[%s512 + $0x28] sm:$0xff]
      %v519 = vld [vmem:[%s512 + $0x30] sm:$0xff]
      %v520 = vld [vmem:[%s512 + $0x38] sm:$0xff]
      %v521 = vld [vmem:[%s512 + $0x40] sm:$0xff]
      %v522 = vld [vmem:[%s512 + $0x48] sm:$0xff]
      %v523 = vld [vmem:[%s512 + $0x50] sm:$0xff]
      %v524 = vld [vmem:[%s512 + $0x58] sm:$0xff]
      %v525 = vld [vmem:[%s512 + $0x60] sm:$0xff]
      %v526 = vld [vmem:[%s512 + $0x68] sm:$0xff]
      %v527 = vld [vmem:[%s512 + $0x70] sm:$0xff]
      %v528 = vld [vmem:[%s512 + $0x78] sm:$0xff]
      %529 = vmatprep.subr.mxu0 0.0
      %530 = vmatpush1.msra.mxu0 %v528
      %531 = vmatprep.subr.mxu0 0.0
      %532 = vmatpush1.msra.mxu0 %v527
      %533 = vmatprep.subr.mxu0 0.0
      %534 = vmatpush1.msra.mxu0 %v526
      %535 = vmatprep.subr.mxu0 0.0
      %536 = vmatpush1.msra.mxu0 %v525
      %537 = vmatprep.subr.mxu0 0.0
      %538 = vmatpush1.msra.mxu0 %v524
      %539 = vmatprep.subr.mxu0 0.0
      %540 = vmatpush1.msra.mxu0 %v523
      %541 = vmatprep.subr.mxu0 0.0
      %542 = vmatpush1.msra.mxu0 %v522
      %543 = vmatprep.subr.mxu0 0.0
      %544 = vmatpush1.msra.mxu0 %v521
      %545 = vmatprep.subr.mxu0 0.0
      %546 = vmatpush1.msra.mxu0 %v520
      %547 = vmatprep.subr.mxu0 0.0
      %548 = vmatpush1.msra.mxu0 %v519
      %549 = vmatprep.subr.mxu0 0.0
      %550 = vmatpush1.msra.mxu0 %v518
      %551 = vmatprep.subr.mxu0 0.0
      %552 = vmatpush1.msra.mxu0 %v517
      %553 = vmatprep.subr.mxu0 0.0
      %554 = vmatpush1.msra.mxu0 %v516
      %555 = vmatprep.subr.mxu0 0.0
      %556 = vmatpush1.msra.mxu0 %v515
      %557 = vmatprep.subr.mxu0 0.0
      %558 = vmatpush1.msra.mxu0 %v514
      %559 = vmatprep.subr.mxu0 0.0
      %560 = vmatpush1.msra.mxu0 %v513
      %561 = vmatprep.subr.mxu0 0.0
      %562 = vmatpush2.msra.mxu0 0.0
      %563 = vmatprep.subr.mxu0 0.0
      %564 = vmatpush2.msra.mxu0 0.0
      %565 = vmatprep.subr.mxu0 0.0
      %566 = vmatpush2.msra.mxu0 0.0
      %567 = vmatprep.subr.mxu0 0.0
      %568 = vmatpush2.msra.mxu0 0.0
      %569 = vmatprep.subr.mxu0 0.0
      %570 = vmatpush2.msra.mxu0 0.0
      %571 = vmatprep.subr.mxu0 0.0
      %572 = vmatpush2.msra.mxu0 0.0
      %573 = vmatprep.subr.mxu0 0.0
      %574 = vmatpush2.msra.mxu0 0.0
      %575 = vmatprep.subr.mxu0 0.0
      %576 = vmatpush2.msra.mxu0 0.0
      %577 = vmatprep.subr.mxu0 0.0
      %578 = vmatpush2.msra.mxu0 0.0
      %579 = vmatprep.subr.mxu0 0.0
      %580 = vmatpush2.msra.mxu0 0.0
      %581 = vmatprep.subr.mxu0 0.0
      %582 = vmatpush2.msra.mxu0 0.0
      %583 = vmatprep.subr.mxu0 0.0
      %584 = vmatpush2.msra.mxu0 0.0
      %585 = vmatprep.subr.mxu0 0.0
      %586 = vmatpush2.msra.mxu0 0.0
      %587 = vmatprep.subr.mxu0 0.0
      %588 = vmatpush2.msra.mxu0 0.0
      %589 = vmatprep.subr.mxu0 0.0
      %590 = vmatpush2.msra.mxu0 0.0
      %591 = vmatprep.subr.mxu0 0.0
      %592 = vmatpush2.msra.mxu0 0.0
      %593 = vmatprep.mubr.f32.mxu0 0.0
      %594 = vmatmul.mubr.f32.gmra.mxu0 %v482
      %v595 = vpop.f32.mrf.mxu0
      %v596 = vadd.f32 0.0, %v595
      %v597 = vpop.f32.mrf.mxu0
      %598 = vmatprep.mubr.f32.mxu0 0.0
      %599 = vmatmul.mubr.f32.gmra.mxu0 %v485
      %v600 = vpop.f32.mrf.mxu0
      %v601 = vadd.f32 0.0, %v600
      %v602 = vpop.f32.mrf.mxu0
      %603 = vmatprep.mubr.f32.mxu0 0.0
      %604 = vmatmul.mubr.f32.gmra.mxu0 %v488
      %v605 = vpop.f32.mrf.mxu0
      %v606 = vadd.f32 0.0, %v605
      %v607 = vpop.f32.mrf.mxu0
      %608 = vmatprep.mubr.f32.mxu0 0.0
      %609 = vmatmul.mubr.f32.gmra.mxu0 %v491
      %v610 = vpop.f32.mrf.mxu0
      %v611 = vadd.f32 0.0, %v610
      %v612 = vpop.f32.mrf.mxu0
      %613 = vmatprep.mubr.f32.mxu0 0.0
      %614 = vmatmul.mubr.f32.gmra.mxu0 %v494
      %v615 = vpop.f32.mrf.mxu0
      %v616 = vadd.f32 0.0, %v615
      %v617 = vpop.f32.mrf.mxu0
      %618 = vmatprep.mubr.f32.mxu0 0.0
      %619 = vmatmul.mubr.f32.gmra.mxu0 %v497
      %v620 = vpop.f32.mrf.mxu0
      %v621 = vadd.f32 0.0, %v620
      %v622 = vpop.f32.mrf.mxu0
      %623 = vmatprep.mubr.f32.mxu0 0.0
      %624 = vmatmul.mubr.f32.gmra.mxu0 %v500
      %v625 = vpop.f32.mrf.mxu0
      %v626 = vadd.f32 0.0, %v625
      %v627 = vpop.f32.mrf.mxu0
      %628 = vmatprep.mubr.f32.mxu0 0.0
      %629 = vmatmul.mubr.f32.gmra.mxu0 %v503
      %v630 = vpop.f32.mrf.mxu0
      %v631 = vadd.f32 0.0, %v630
      %v632 = vpop.f32.mrf.mxu0
      %633 = vdwg.mxu0
      %v634 = vadd.f32 %v441, %v596
      %v635 = vadd.f32 %v446, %v601
      %v636 = vadd.f32 %v451, %v606
      %v637 = vadd.f32 %v456, %v611
      %v638 = vadd.f32 %v461, %v616
      %v639 = vadd.f32 %v466, %v621
      %v640 = vadd.f32 %v471, %v626
      %v641 = vadd.f32 %v476, %v631
      %s642 = scalar_lea.vmem %s165, 16
      %v643 = vld [vmem:[%s642] sm:$0xff]
      %v644 = vld [vmem:[%s642 + $0x8] sm:$0x3]
      %v645 = vld [vmem:[%s642 + $0x10] sm:$0xff]
      %v646 = vld [vmem:[%s642 + $0x18] sm:$0x3]
      %v647 = vld [vmem:[%s642 + $0x20] sm:$0xff]
      %v648 = vld [vmem:[%s642 + $0x28] sm:$0x3]
      %v649 = vld [vmem:[%s642 + $0x30] sm:$0xff]
      %v650 = vld [vmem:[%s642 + $0x38] sm:$0x3]
      %v651 = vld [vmem:[%s642 + $0x40] sm:$0xff]
      %v652 = vld [vmem:[%s642 + $0x48] sm:$0x3]
      %v653 = vld [vmem:[%s642 + $0x50] sm:$0xff]
      %v654 = vld [vmem:[%s642 + $0x58] sm:$0x3]
      %v655 = vld [vmem:[%s642 + $0x60] sm:$0xff]
      %v656 = vld [vmem:[%s642 + $0x68] sm:$0x3]
      %v657 = vld [vmem:[%s642 + $0x70] sm:$0xff]
      %v658 = vld [vmem:[%s642 + $0x78] sm:$0x3]
      %s659 = scalar_lea.vmem %s1, 384
      %v660 = vld [vmem:[%s659] sm:$0xff]
      %v661 = vld [vmem:[%s659 + $0x8] sm:$0xff]
      %v662 = vld [vmem:[%s659 + $0x10] sm:$0xff]
      %v663 = vld [vmem:[%s659 + $0x18] sm:$0xff]
      %v664 = vld [vmem:[%s659 + $0x20] sm:$0xff]
      %v665 = vld [vmem:[%s659 + $0x28] sm:$0xff]
      %v666 = vld [vmem:[%s659 + $0x30] sm:$0xff]
      %v667 = vld [vmem:[%s659 + $0x38] sm:$0xff]
      %v668 = vld [vmem:[%s659 + $0x40] sm:$0xff]
      %v669 = vld [vmem:[%s659 + $0x48] sm:$0xff]
      %v670 = vld [vmem:[%s659 + $0x50] sm:$0xff]
      %v671 = vld [vmem:[%s659 + $0x58] sm:$0xff]
      %v672 = vld [vmem:[%s659 + $0x60] sm:$0xff]
      %v673 = vld [vmem:[%s659 + $0x68] sm:$0xff]
      %v674 = vld [vmem:[%s659 + $0x70] sm:$0xff]
      %v675 = vld [vmem:[%s659 + $0x78] sm:$0xff]
      %676 = vmatprep.subr.mxu0 0.0
      %677 = vmatpush1.msra.mxu0 %v675
      %678 = vmatprep.subr.mxu0 0.0
      %679 = vmatpush1.msra.mxu0 %v674
      %680 = vmatprep.subr.mxu0 0.0
      %681 = vmatpush1.msra.mxu0 %v673
      %682 = vmatprep.subr.mxu0 0.0
      %683 = vmatpush1.msra.mxu0 %v672
      %684 = vmatprep.subr.mxu0 0.0
      %685 = vmatpush1.msra.mxu0 %v671
      %686 = vmatprep.subr.mxu0 0.0
      %687 = vmatpush1.msra.mxu0 %v670
      %688 = vmatprep.subr.mxu0 0.0
      %689 = vmatpush1.msra.mxu0 %v669
      %690 = vmatprep.subr.mxu0 0.0
      %691 = vmatpush1.msra.mxu0 %v668
      %692 = vmatprep.subr.mxu0 0.0
      %693 = vmatpush1.msra.mxu0 %v667
      %694 = vmatprep.subr.mxu0 0.0
      %695 = vmatpush1.msra.mxu0 %v666
      %696 = vmatprep.subr.mxu0 0.0
      %697 = vmatpush1.msra.mxu0 %v665
      %698 = vmatprep.subr.mxu0 0.0
      %699 = vmatpush1.msra.mxu0 %v664
      %700 = vmatprep.subr.mxu0 0.0
      %701 = vmatpush1.msra.mxu0 %v663
      %702 = vmatprep.subr.mxu0 0.0
      %703 = vmatpush1.msra.mxu0 %v662
      %704 = vmatprep.subr.mxu0 0.0
      %705 = vmatpush1.msra.mxu0 %v661
      %706 = vmatprep.subr.mxu0 0.0
      %707 = vmatpush1.msra.mxu0 %v660
      %708 = vmatprep.subr.mxu0 0.0
      %709 = vmatpush2.msra.mxu0 0.0
      %710 = vmatprep.subr.mxu0 0.0
      %711 = vmatpush2.msra.mxu0 0.0
      %712 = vmatprep.subr.mxu0 0.0
      %713 = vmatpush2.msra.mxu0 0.0
      %714 = vmatprep.subr.mxu0 0.0
      %715 = vmatpush2.msra.mxu0 0.0
      %716 = vmatprep.subr.mxu0 0.0
      %717 = vmatpush2.msra.mxu0 0.0
      %718 = vmatprep.subr.mxu0 0.0
      %719 = vmatpush2.msra.mxu0 0.0
      %720 = vmatprep.subr.mxu0 0.0
      %721 = vmatpush2.msra.mxu0 0.0
      %722 = vmatprep.subr.mxu0 0.0
      %723 = vmatpush2.msra.mxu0 0.0
      %724 = vmatprep.subr.mxu0 0.0
      %725 = vmatpush2.msra.mxu0 0.0
      %726 = vmatprep.subr.mxu0 0.0
      %727 = vmatpush2.msra.mxu0 0.0
      %728 = vmatprep.subr.mxu0 0.0
      %729 = vmatpush2.msra.mxu0 0.0
      %730 = vmatprep.subr.mxu0 0.0
      %731 = vmatpush2.msra.mxu0 0.0
      %732 = vmatprep.subr.mxu0 0.0
      %733 = vmatpush2.msra.mxu0 0.0
      %734 = vmatprep.subr.mxu0 0.0
      %735 = vmatpush2.msra.mxu0 0.0
      %736 = vmatprep.subr.mxu0 0.0
      %737 = vmatpush2.msra.mxu0 0.0
      %738 = vmatprep.subr.mxu0 0.0
      %739 = vmatpush2.msra.mxu0 0.0
      %740 = vmatprep.mubr.f32.mxu0 0.0
      %741 = vmatmul.mubr.f32.gmra.mxu0 %v643
      %v742 = vpop.f32.mrf.mxu0
      %v743 = vadd.f32 0.0, %v742
      %v744 = vpop.f32.mrf.mxu0
      %745 = vmatprep.mubr.f32.mxu0 0.0
      %746 = vmatmul.mubr.f32.gmra.mxu0 %v645
      %v747 = vpop.f32.mrf.mxu0
      %v748 = vadd.f32 0.0, %v747
      %v749 = vpop.f32.mrf.mxu0
      %750 = vmatprep.mubr.f32.mxu0 0.0
      %751 = vmatmul.mubr.f32.gmra.mxu0 %v647
      %v752 = vpop.f32.mrf.mxu0
      %v753 = vadd.f32 0.0, %v752
      %v754 = vpop.f32.mrf.mxu0
      %755 = vmatprep.mubr.f32.mxu0 0.0
      %756 = vmatmul.mubr.f32.gmra.mxu0 %v649
      %v757 = vpop.f32.mrf.mxu0
      %v758 = vadd.f32 0.0, %v757
      %v759 = vpop.f32.mrf.mxu0
      %760 = vmatprep.mubr.f32.mxu0 0.0
      %761 = vmatmul.mubr.f32.gmra.mxu0 %v651
      %v762 = vpop.f32.mrf.mxu0
      %v763 = vadd.f32 0.0, %v762
      %v764 = vpop.f32.mrf.mxu0
      %765 = vmatprep.mubr.f32.mxu0 0.0
      %766 = vmatmul.mubr.f32.gmra.mxu0 %v653
      %v767 = vpop.f32.mrf.mxu0
      %v768 = vadd.f32 0.0, %v767
      %v769 = vpop.f32.mrf.mxu0
      %770 = vmatprep.mubr.f32.mxu0 0.0
      %771 = vmatmul.mubr.f32.gmra.mxu0 %v655
      %v772 = vpop.f32.mrf.mxu0
      %v773 = vadd.f32 0.0, %v772
      %v774 = vpop.f32.mrf.mxu0
      %775 = vmatprep.mubr.f32.mxu0 0.0
      %776 = vmatmul.mubr.f32.gmra.mxu0 %v657
      %v777 = vpop.f32.mrf.mxu0
      %v778 = vadd.f32 0.0, %v777
      %v779 = vpop.f32.mrf.mxu0
      %780 = vdwg.mxu0
      %v781 = vadd.f32 %v634, %v743
      %v782 = vadd.f32 %v635, %v748
      %v783 = vadd.f32 %v636, %v753
      %v784 = vadd.f32 %v637, %v758
      %v785 = vadd.f32 %v638, %v763
      %v786 = vadd.f32 %v639, %v768
      %v787 = vadd.f32 %v640, %v773
      %v788 = vadd.f32 %v641, %v778
      %v805 = vrot.slane %v643, 1
      %v806 = vrot.slane %v644, 1
      %v807 = vsel %vm219, %v805, %v806
      %v808 = vrot.slane %v645, 1
      %v809 = vrot.slane %v646, 1
      %v810 = vsel %vm219, %v808, %v809
      %v811 = vrot.slane %v647, 1
      %v812 = vrot.slane %v648, 1
      %v813 = vsel %vm219, %v811, %v812
      %v814 = vrot.slane %v649, 1
      %v815 = vrot.slane %v650, 1
      %v816 = vsel %vm219, %v814, %v815
      %v817 = vrot.slane %v651, 1
      %v818 = vrot.slane %v652, 1
      %v819 = vsel %vm219, %v817, %v818
      %v820 = vrot.slane %v653, 1
      %v821 = vrot.slane %v654, 1
      %v822 = vsel %vm219, %v820, %v821
      %v823 = vrot.slane %v655, 1
      %v824 = vrot.slane %v656, 1
      %v825 = vsel %vm219, %v823, %v824
      %v826 = vrot.slane %v657, 1
      %v827 = vrot.slane %v658, 1
      %v828 = vsel %vm219, %v826, %v827
      %s837 = scalar_lea.vmem %s1, 512
      %v838 = vld [vmem:[%s837] sm:$0xff]
      %v839 = vld [vmem:[%s837 + $0x8] sm:$0xff]
      %v840 = vld [vmem:[%s837 + $0x10] sm:$0xff]
      %v841 = vld [vmem:[%s837 + $0x18] sm:$0xff]
      %v842 = vld [vmem:[%s837 + $0x20] sm:$0xff]
      %v843 = vld [vmem:[%s837 + $0x28] sm:$0xff]
      %v844 = vld [vmem:[%s837 + $0x30] sm:$0xff]
      %v845 = vld [vmem:[%s837 + $0x38] sm:$0xff]
      %v846 = vld [vmem:[%s837 + $0x40] sm:$0xff]
      %v847 = vld [vmem:[%s837 + $0x48] sm:$0xff]
      %v848 = vld [vmem:[%s837 + $0x50] sm:$0xff]
      %v849 = vld [vmem:[%s837 + $0x58] sm:$0xff]
      %v850 = vld [vmem:[%s837 + $0x60] sm:$0xff]
      %v851 = vld [vmem:[%s837 + $0x68] sm:$0xff]
      %v852 = vld [vmem:[%s837 + $0x70] sm:$0xff]
      %v853 = vld [vmem:[%s837 + $0x78] sm:$0xff]
      %854 = vmatprep.subr.mxu0 0.0
      %855 = vmatpush1.msra.mxu0 %v853
      %856 = vmatprep.subr.mxu0 0.0
      %857 = vmatpush1.msra.mxu0 %v852
      %858 = vmatprep.subr.mxu0 0.0
      %859 = vmatpush1.msra.mxu0 %v851
      %860 = vmatprep.subr.mxu0 0.0
      %861 = vmatpush1.msra.mxu0 %v850
      %862 = vmatprep.subr.mxu0 0.0
      %863 = vmatpush1.msra.mxu0 %v849
      %864 = vmatprep.subr.mxu0 0.0
      %865 = vmatpush1.msra.mxu0 %v848
      %866 = vmatprep.subr.mxu0 0.0
      %867 = vmatpush1.msra.mxu0 %v847
      %868 = vmatprep.subr.mxu0 0.0
      %869 = vmatpush1.msra.mxu0 %v846
      %870 = vmatprep.subr.mxu0 0.0
      %871 = vmatpush1.msra.mxu0 %v845
      %872 = vmatprep.subr.mxu0 0.0
      %873 = vmatpush1.msra.mxu0 %v844
      %874 = vmatprep.subr.mxu0 0.0
      %875 = vmatpush1.msra.mxu0 %v843
      %876 = vmatprep.subr.mxu0 0.0
      %877 = vmatpush1.msra.mxu0 %v842
      %878 = vmatprep.subr.mxu0 0.0
      %879 = vmatpush1.msra.mxu0 %v841
      %880 = vmatprep.subr.mxu0 0.0
      %881 = vmatpush1.msra.mxu0 %v840
      %882 = vmatprep.subr.mxu0 0.0
      %883 = vmatpush1.msra.mxu0 %v839
      %884 = vmatprep.subr.mxu0 0.0
      %885 = vmatpush1.msra.mxu0 %v838
      %886 = vmatprep.subr.mxu0 0.0
      %887 = vmatpush2.msra.mxu0 0.0
      %888 = vmatprep.subr.mxu0 0.0
      %889 = vmatpush2.msra.mxu0 0.0
      %890 = vmatprep.subr.mxu0 0.0
      %891 = vmatpush2.msra.mxu0 0.0
      %892 = vmatprep.subr.mxu0 0.0
      %893 = vmatpush2.msra.mxu0 0.0
      %894 = vmatprep.subr.mxu0 0.0
      %895 = vmatpush2.msra.mxu0 0.0
      %896 = vmatprep.subr.mxu0 0.0
      %897 = vmatpush2.msra.mxu0 0.0
      %898 = vmatprep.subr.mxu0 0.0
      %899 = vmatpush2.msra.mxu0 0.0
      %900 = vmatprep.subr.mxu0 0.0
      %901 = vmatpush2.msra.mxu0 0.0
      %902 = vmatprep.subr.mxu0 0.0
      %903 = vmatpush2.msra.mxu0 0.0
      %904 = vmatprep.subr.mxu0 0.0
      %905 = vmatpush2.msra.mxu0 0.0
      %906 = vmatprep.subr.mxu0 0.0
      %907 = vmatpush2.msra.mxu0 0.0
      %908 = vmatprep.subr.mxu0 0.0
      %909 = vmatpush2.msra.mxu0 0.0
      %910 = vmatprep.subr.mxu0 0.0
      %911 = vmatpush2.msra.mxu0 0.0
      %912 = vmatprep.subr.mxu0 0.0
      %913 = vmatpush2.msra.mxu0 0.0
      %914 = vmatprep.subr.mxu0 0.0
      %915 = vmatpush2.msra.mxu0 0.0
      %916 = vmatprep.subr.mxu0 0.0
      %917 = vmatpush2.msra.mxu0 0.0
      %918 = vmatprep.mubr.f32.mxu0 0.0
      %919 = vmatmul.mubr.f32.gmra.mxu0 %v807
      %v920 = vpop.f32.mrf.mxu0
      %v921 = vadd.f32 0.0, %v920
      %v922 = vpop.f32.mrf.mxu0
      %923 = vmatprep.mubr.f32.mxu0 0.0
      %924 = vmatmul.mubr.f32.gmra.mxu0 %v810
      %v925 = vpop.f32.mrf.mxu0
      %v926 = vadd.f32 0.0, %v925
      %v927 = vpop.f32.mrf.mxu0
      %928 = vmatprep.mubr.f32.mxu0 0.0
      %929 = vmatmul.mubr.f32.gmra.mxu0 %v813
      %v930 = vpop.f32.mrf.mxu0
      %v931 = vadd.f32 0.0, %v930
      %v932 = vpop.f32.mrf.mxu0
      %933 = vmatprep.mubr.f32.mxu0 0.0
      %934 = vmatmul.mubr.f32.gmra.mxu0 %v816
      %v935 = vpop.f32.mrf.mxu0
      %v936 = vadd.f32 0.0, %v935
      %v937 = vpop.f32.mrf.mxu0
      %938 = vmatprep.mubr.f32.mxu0 0.0
      %939 = vmatmul.mubr.f32.gmra.mxu0 %v819
      %v940 = vpop.f32.mrf.mxu0
      %v941 = vadd.f32 0.0, %v940
      %v942 = vpop.f32.mrf.mxu0
      %943 = vmatprep.mubr.f32.mxu0 0.0
      %944 = vmatmul.mubr.f32.gmra.mxu0 %v822
      %v945 = vpop.f32.mrf.mxu0
      %v946 = vadd.f32 0.0, %v945
      %v947 = vpop.f32.mrf.mxu0
      %948 = vmatprep.mubr.f32.mxu0 0.0
      %949 = vmatmul.mubr.f32.gmra.mxu0 %v825
      %v950 = vpop.f32.mrf.mxu0
      %v951 = vadd.f32 0.0, %v950
      %v952 = vpop.f32.mrf.mxu0
      %953 = vmatprep.mubr.f32.mxu0 0.0
      %954 = vmatmul.mubr.f32.gmra.mxu0 %v828
      %v955 = vpop.f32.mrf.mxu0
      %v956 = vadd.f32 0.0, %v955
      %v957 = vpop.f32.mrf.mxu0
      %958 = vdwg.mxu0
      %v959 = vadd.f32 %v781, %v921
      %v960 = vadd.f32 %v782, %v926
      %v961 = vadd.f32 %v783, %v931
      %v962 = vadd.f32 %v784, %v936
      %v963 = vadd.f32 %v785, %v941
      %v964 = vadd.f32 %v786, %v946
      %v965 = vadd.f32 %v787, %v951
      %v966 = vadd.f32 %v788, %v956
      %v967 = vrot.slane %v643, 2
      %v968 = vrot.slane %v644, 2
      %v969 = vsel %vm479, %v967, %v968
      %v970 = vrot.slane %v645, 2
      %v971 = vrot.slane %v646, 2
      %v972 = vsel %vm479, %v970, %v971
      %v973 = vrot.slane %v647, 2
      %v974 = vrot.slane %v648, 2
      %v975 = vsel %vm479, %v973, %v974
      %v976 = vrot.slane %v649, 2
      %v977 = vrot.slane %v650, 2
      %v978 = vsel %vm479, %v976, %v977
      %v979 = vrot.slane %v651, 2
      %v980 = vrot.slane %v652, 2
      %v981 = vsel %vm479, %v979, %v980
      %v982 = vrot.slane %v653, 2
      %v983 = vrot.slane %v654, 2
      %v984 = vsel %vm479, %v982, %v983
      %v985 = vrot.slane %v655, 2
      %v986 = vrot.slane %v656, 2
      %v987 = vsel %vm479, %v985, %v986
      %v988 = vrot.slane %v657, 2
      %v989 = vrot.slane %v658, 2
      %v990 = vsel %vm479, %v988, %v989
      %s999 = scalar_lea.vmem %s1, 640
      %v1000 = vld [vmem:[%s999] sm:$0xff]
      %v1001 = vld [vmem:[%s999 + $0x8] sm:$0xff]
      %v1002 = vld [vmem:[%s999 + $0x10] sm:$0xff]
      %v1003 = vld [vmem:[%s999 + $0x18] sm:$0xff]
      %v1004 = vld [vmem:[%s999 + $0x20] sm:$0xff]
      %v1005 = vld [vmem:[%s999 + $0x28] sm:$0xff]
      %v1006 = vld [vmem:[%s999 + $0x30] sm:$0xff]
      %v1007 = vld [vmem:[%s999 + $0x38] sm:$0xff]
      %v1008 = vld [vmem:[%s999 + $0x40] sm:$0xff]
      %v1009 = vld [vmem:[%s999 + $0x48] sm:$0xff]
      %v1010 = vld [vmem:[%s999 + $0x50] sm:$0xff]
      %v1011 = vld [vmem:[%s999 + $0x58] sm:$0xff]
      %v1012 = vld [vmem:[%s999 + $0x60] sm:$0xff]
      %v1013 = vld [vmem:[%s999 + $0x68] sm:$0xff]
      %v1014 = vld [vmem:[%s999 + $0x70] sm:$0xff]
      %v1015 = vld [vmem:[%s999 + $0x78] sm:$0xff]
      %1016 = vmatprep.subr.mxu0 0.0
      %1017 = vmatpush1.msra.mxu0 %v1015
      %1018 = vmatprep.subr.mxu0 0.0
      %1019 = vmatpush1.msra.mxu0 %v1014
      %1020 = vmatprep.subr.mxu0 0.0
      %1021 = vmatpush1.msra.mxu0 %v1013
      %1022 = vmatprep.subr.mxu0 0.0
      %1023 = vmatpush1.msra.mxu0 %v1012
      %1024 = vmatprep.subr.mxu0 0.0
      %1025 = vmatpush1.msra.mxu0 %v1011
      %1026 = vmatprep.subr.mxu0 0.0
      %1027 = vmatpush1.msra.mxu0 %v1010
      %1028 = vmatprep.subr.mxu0 0.0
      %1029 = vmatpush1.msra.mxu0 %v1009
      %1030 = vmatprep.subr.mxu0 0.0
      %1031 = vmatpush1.msra.mxu0 %v1008
      %1032 = vmatprep.subr.mxu0 0.0
      %1033 = vmatpush1.msra.mxu0 %v1007
      %1034 = vmatprep.subr.mxu0 0.0
      %1035 = vmatpush1.msra.mxu0 %v1006
      %1036 = vmatprep.subr.mxu0 0.0
      %1037 = vmatpush1.msra.mxu0 %v1005
      %1038 = vmatprep.subr.mxu0 0.0
      %1039 = vmatpush1.msra.mxu0 %v1004
      %1040 = vmatprep.subr.mxu0 0.0
      %1041 = vmatpush1.msra.mxu0 %v1003
      %1042 = vmatprep.subr.mxu0 0.0
      %1043 = vmatpush1.msra.mxu0 %v1002
      %1044 = vmatprep.subr.mxu0 0.0
      %1045 = vmatpush1.msra.mxu0 %v1001
      %1046 = vmatprep.subr.mxu0 0.0
      %1047 = vmatpush1.msra.mxu0 %v1000
      %1048 = vmatprep.subr.mxu0 0.0
      %1049 = vmatpush2.msra.mxu0 0.0
      %1050 = vmatprep.subr.mxu0 0.0
      %1051 = vmatpush2.msra.mxu0 0.0
      %1052 = vmatprep.subr.mxu0 0.0
      %1053 = vmatpush2.msra.mxu0 0.0
      %1054 = vmatprep.subr.mxu0 0.0
      %1055 = vmatpush2.msra.mxu0 0.0
      %1056 = vmatprep.subr.mxu0 0.0
      %1057 = vmatpush2.msra.mxu0 0.0
      %1058 = vmatprep.subr.mxu0 0.0
      %1059 = vmatpush2.msra.mxu0 0.0
      %1060 = vmatprep.subr.mxu0 0.0
      %1061 = vmatpush2.msra.mxu0 0.0
      %1062 = vmatprep.subr.mxu0 0.0
      %1063 = vmatpush2.msra.mxu0 0.0
      %1064 = vmatprep.subr.mxu0 0.0
      %1065 = vmatpush2.msra.mxu0 0.0
      %1066 = vmatprep.subr.mxu0 0.0
      %1067 = vmatpush2.msra.mxu0 0.0
      %1068 = vmatprep.subr.mxu0 0.0
      %1069 = vmatpush2.msra.mxu0 0.0
      %1070 = vmatprep.subr.mxu0 0.0
      %1071 = vmatpush2.msra.mxu0 0.0
      %1072 = vmatprep.subr.mxu0 0.0
      %1073 = vmatpush2.msra.mxu0 0.0
      %1074 = vmatprep.subr.mxu0 0.0
      %1075 = vmatpush2.msra.mxu0 0.0
      %1076 = vmatprep.subr.mxu0 0.0
      %1077 = vmatpush2.msra.mxu0 0.0
      %1078 = vmatprep.subr.mxu0 0.0
      %1079 = vmatpush2.msra.mxu0 0.0
      %1080 = vmatprep.mubr.f32.mxu0 0.0
      %1081 = vmatmul.mubr.f32.gmra.mxu0 %v969
      %v1082 = vpop.f32.mrf.mxu0
      %v1083 = vadd.f32 0.0, %v1082
      %v1084 = vpop.f32.mrf.mxu0
      %1085 = vmatprep.mubr.f32.mxu0 0.0
      %1086 = vmatmul.mubr.f32.gmra.mxu0 %v972
      %v1087 = vpop.f32.mrf.mxu0
      %v1088 = vadd.f32 0.0, %v1087
      %v1089 = vpop.f32.mrf.mxu0
      %1090 = vmatprep.mubr.f32.mxu0 0.0
      %1091 = vmatmul.mubr.f32.gmra.mxu0 %v975
      %v1092 = vpop.f32.mrf.mxu0
      %v1093 = vadd.f32 0.0, %v1092
      %v1094 = vpop.f32.mrf.mxu0
      %1095 = vmatprep.mubr.f32.mxu0 0.0
      %1096 = vmatmul.mubr.f32.gmra.mxu0 %v978
      %v1097 = vpop.f32.mrf.mxu0
      %v1098 = vadd.f32 0.0, %v1097
      %v1099 = vpop.f32.mrf.mxu0
      %1100 = vmatprep.mubr.f32.mxu0 0.0
      %1101 = vmatmul.mubr.f32.gmra.mxu0 %v981
      %v1102 = vpop.f32.mrf.mxu0
      %v1103 = vadd.f32 0.0, %v1102
      %v1104 = vpop.f32.mrf.mxu0
      %1105 = vmatprep.mubr.f32.mxu0 0.0
      %1106 = vmatmul.mubr.f32.gmra.mxu0 %v984
      %v1107 = vpop.f32.mrf.mxu0
      %v1108 = vadd.f32 0.0, %v1107
      %v1109 = vpop.f32.mrf.mxu0
      %1110 = vmatprep.mubr.f32.mxu0 0.0
      %1111 = vmatmul.mubr.f32.gmra.mxu0 %v987
      %v1112 = vpop.f32.mrf.mxu0
      %v1113 = vadd.f32 0.0, %v1112
      %v1114 = vpop.f32.mrf.mxu0
      %1115 = vmatprep.mubr.f32.mxu0 0.0
      %1116 = vmatmul.mubr.f32.gmra.mxu0 %v990
      %v1117 = vpop.f32.mrf.mxu0
      %v1118 = vadd.f32 0.0, %v1117
      %v1119 = vpop.f32.mrf.mxu0
      %1120 = vdwg.mxu0
      %v1121 = vadd.f32 %v959, %v1083
      %v1122 = vadd.f32 %v960, %v1088
      %v1123 = vadd.f32 %v961, %v1093
      %v1124 = vadd.f32 %v962, %v1098
      %v1125 = vadd.f32 %v963, %v1103
      %v1126 = vadd.f32 %v964, %v1108
      %v1127 = vadd.f32 %v965, %v1113
      %v1128 = vadd.f32 %v966, %v1118
      %s1129 = scalar_lea.vmem %s165, 32
      %v1130 = vld [vmem:[%s1129] sm:$0xff]
      %v1131 = vld [vmem:[%s1129 + $0x8] sm:$0x3]
      %v1132 = vld [vmem:[%s1129 + $0x10] sm:$0xff]
      %v1133 = vld [vmem:[%s1129 + $0x18] sm:$0x3]
      %v1134 = vld [vmem:[%s1129 + $0x20] sm:$0xff]
      %v1135 = vld [vmem:[%s1129 + $0x28] sm:$0x3]
      %v1136 = vld [vmem:[%s1129 + $0x30] sm:$0xff]
      %v1137 = vld [vmem:[%s1129 + $0x38] sm:$0x3]
      %v1138 = vld [vmem:[%s1129 + $0x40] sm:$0xff]
      %v1139 = vld [vmem:[%s1129 + $0x48] sm:$0x3]
      %v1140 = vld [vmem:[%s1129 + $0x50] sm:$0xff]
      %v1141 = vld [vmem:[%s1129 + $0x58] sm:$0x3]
      %v1142 = vld [vmem:[%s1129 + $0x60] sm:$0xff]
      %v1143 = vld [vmem:[%s1129 + $0x68] sm:$0x3]
      %v1144 = vld [vmem:[%s1129 + $0x70] sm:$0xff]
      %v1145 = vld [vmem:[%s1129 + $0x78] sm:$0x3]
      %s1146 = scalar_lea.vmem %s1, 768
      %v1147 = vld [vmem:[%s1146] sm:$0xff]
      %v1148 = vld [vmem:[%s1146 + $0x8] sm:$0xff]
      %v1149 = vld [vmem:[%s1146 + $0x10] sm:$0xff]
      %v1150 = vld [vmem:[%s1146 + $0x18] sm:$0xff]
      %v1151 = vld [vmem:[%s1146 + $0x20] sm:$0xff]
      %v1152 = vld [vmem:[%s1146 + $0x28] sm:$0xff]
      %v1153 = vld [vmem:[%s1146 + $0x30] sm:$0xff]
      %v1154 = vld [vmem:[%s1146 + $0x38] sm:$0xff]
      %v1155 = vld [vmem:[%s1146 + $0x40] sm:$0xff]
      %v1156 = vld [vmem:[%s1146 + $0x48] sm:$0xff]
      %v1157 = vld [vmem:[%s1146 + $0x50] sm:$0xff]
      %v1158 = vld [vmem:[%s1146 + $0x58] sm:$0xff]
      %v1159 = vld [vmem:[%s1146 + $0x60] sm:$0xff]
      %v1160 = vld [vmem:[%s1146 + $0x68] sm:$0xff]
      %v1161 = vld [vmem:[%s1146 + $0x70] sm:$0xff]
      %v1162 = vld [vmem:[%s1146 + $0x78] sm:$0xff]
      %1163 = vmatprep.subr.mxu0 0.0
      %1164 = vmatpush1.msra.mxu0 %v1162
      %1165 = vmatprep.subr.mxu0 0.0
      %1166 = vmatpush1.msra.mxu0 %v1161
      %1167 = vmatprep.subr.mxu0 0.0
      %1168 = vmatpush1.msra.mxu0 %v1160
      %1169 = vmatprep.subr.mxu0 0.0
      %1170 = vmatpush1.msra.mxu0 %v1159
      %1171 = vmatprep.subr.mxu0 0.0
      %1172 = vmatpush1.msra.mxu0 %v1158
      %1173 = vmatprep.subr.mxu0 0.0
      %1174 = vmatpush1.msra.mxu0 %v1157
      %1175 = vmatprep.subr.mxu0 0.0
      %1176 = vmatpush1.msra.mxu0 %v1156
      %1177 = vmatprep.subr.mxu0 0.0
      %1178 = vmatpush1.msra.mxu0 %v1155
      %1179 = vmatprep.subr.mxu0 0.0
      %1180 = vmatpush1.msra.mxu0 %v1154
      %1181 = vmatprep.subr.mxu0 0.0
      %1182 = vmatpush1.msra.mxu0 %v1153
      %1183 = vmatprep.subr.mxu0 0.0
      %1184 = vmatpush1.msra.mxu0 %v1152
      %1185 = vmatprep.subr.mxu0 0.0
      %1186 = vmatpush1.msra.mxu0 %v1151
      %1187 = vmatprep.subr.mxu0 0.0
      %1188 = vmatpush1.msra.mxu0 %v1150
      %1189 = vmatprep.subr.mxu0 0.0
      %1190 = vmatpush1.msra.mxu0 %v1149
      %1191 = vmatprep.subr.mxu0 0.0
      %1192 = vmatpush1.msra.mxu0 %v1148
      %1193 = vmatprep.subr.mxu0 0.0
      %1194 = vmatpush1.msra.mxu0 %v1147
      %1195 = vmatprep.subr.mxu0 0.0
      %1196 = vmatpush2.msra.mxu0 0.0
      %1197 = vmatprep.subr.mxu0 0.0
      %1198 = vmatpush2.msra.mxu0 0.0
      %1199 = vmatprep.subr.mxu0 0.0
      %1200 = vmatpush2.msra.mxu0 0.0
      %1201 = vmatprep.subr.mxu0 0.0
      %1202 = vmatpush2.msra.mxu0 0.0
      %1203 = vmatprep.subr.mxu0 0.0
      %1204 = vmatpush2.msra.mxu0 0.0
      %1205 = vmatprep.subr.mxu0 0.0
      %1206 = vmatpush2.msra.mxu0 0.0
      %1207 = vmatprep.subr.mxu0 0.0
      %1208 = vmatpush2.msra.mxu0 0.0
      %1209 = vmatprep.subr.mxu0 0.0
      %1210 = vmatpush2.msra.mxu0 0.0
      %1211 = vmatprep.subr.mxu0 0.0
      %1212 = vmatpush2.msra.mxu0 0.0
      %1213 = vmatprep.subr.mxu0 0.0
      %1214 = vmatpush2.msra.mxu0 0.0
      %1215 = vmatprep.subr.mxu0 0.0
      %1216 = vmatpush2.msra.mxu0 0.0
      %1217 = vmatprep.subr.mxu0 0.0
      %1218 = vmatpush2.msra.mxu0 0.0
      %1219 = vmatprep.subr.mxu0 0.0
      %1220 = vmatpush2.msra.mxu0 0.0
      %1221 = vmatprep.subr.mxu0 0.0
      %1222 = vmatpush2.msra.mxu0 0.0
      %1223 = vmatprep.subr.mxu0 0.0
      %1224 = vmatpush2.msra.mxu0 0.0
      %1225 = vmatprep.subr.mxu0 0.0
      %1226 = vmatpush2.msra.mxu0 0.0
      %1227 = vmatprep.mubr.f32.mxu0 0.0
      %1228 = vmatmul.mubr.f32.gmra.mxu0 %v1130
      %v1229 = vpop.f32.mrf.mxu0
      %v1230 = vadd.f32 0.0, %v1229
      %v1231 = vpop.f32.mrf.mxu0
      %1232 = vmatprep.mubr.f32.mxu0 0.0
      %1233 = vmatmul.mubr.f32.gmra.mxu0 %v1132
      %v1234 = vpop.f32.mrf.mxu0
      %v1235 = vadd.f32 0.0, %v1234
      %v1236 = vpop.f32.mrf.mxu0
      %1237 = vmatprep.mubr.f32.mxu0 0.0
      %1238 = vmatmul.mubr.f32.gmra.mxu0 %v1134
      %v1239 = vpop.f32.mrf.mxu0
      %v1240 = vadd.f32 0.0, %v1239
      %v1241 = vpop.f32.mrf.mxu0
      %1242 = vmatprep.mubr.f32.mxu0 0.0
      %1243 = vmatmul.mubr.f32.gmra.mxu0 %v1136
      %v1244 = vpop.f32.mrf.mxu0
      %v1245 = vadd.f32 0.0, %v1244
      %v1246 = vpop.f32.mrf.mxu0
      %1247 = vmatprep.mubr.f32.mxu0 0.0
      %1248 = vmatmul.mubr.f32.gmra.mxu0 %v1138
      %v1249 = vpop.f32.mrf.mxu0
      %v1250 = vadd.f32 0.0, %v1249
      %v1251 = vpop.f32.mrf.mxu0
      %1252 = vmatprep.mubr.f32.mxu0 0.0
      %1253 = vmatmul.mubr.f32.gmra.mxu0 %v1140
      %v1254 = vpop.f32.mrf.mxu0
      %v1255 = vadd.f32 0.0, %v1254
      %v1256 = vpop.f32.mrf.mxu0
      %1257 = vmatprep.mubr.f32.mxu0 0.0
      %1258 = vmatmul.mubr.f32.gmra.mxu0 %v1142
      %v1259 = vpop.f32.mrf.mxu0
      %v1260 = vadd.f32 0.0, %v1259
      %v1261 = vpop.f32.mrf.mxu0
      %1262 = vmatprep.mubr.f32.mxu0 0.0
      %1263 = vmatmul.mubr.f32.gmra.mxu0 %v1144
      %v1264 = vpop.f32.mrf.mxu0
      %v1265 = vadd.f32 0.0, %v1264
      %v1266 = vpop.f32.mrf.mxu0
      %1267 = vdwg.mxu0
      %v1268 = vadd.f32 %v1121, %v1230
      %v1269 = vadd.f32 %v1122, %v1235
      %v1270 = vadd.f32 %v1123, %v1240
      %v1271 = vadd.f32 %v1124, %v1245
      %v1272 = vadd.f32 %v1125, %v1250
      %v1273 = vadd.f32 %v1126, %v1255
      %v1274 = vadd.f32 %v1127, %v1260
      %v1275 = vadd.f32 %v1128, %v1265
      %v1292 = vrot.slane %v1130, 1
      %v1293 = vrot.slane %v1131, 1
      %v1294 = vsel %vm219, %v1292, %v1293
      %v1295 = vrot.slane %v1132, 1
      %v1296 = vrot.slane %v1133, 1
      %v1297 = vsel %vm219, %v1295, %v1296
      %v1298 = vrot.slane %v1134, 1
      %v1299 = vrot.slane %v1135, 1
      %v1300 = vsel %vm219, %v1298, %v1299
      %v1301 = vrot.slane %v1136, 1
      %v1302 = vrot.slane %v1137, 1
      %v1303 = vsel %vm219, %v1301, %v1302
      %v1304 = vrot.slane %v1138, 1
      %v1305 = vrot.slane %v1139, 1
      %v1306 = vsel %vm219, %v1304, %v1305
      %v1307 = vrot.slane %v1140, 1
      %v1308 = vrot.slane %v1141, 1
      %v1309 = vsel %vm219, %v1307, %v1308
      %v1310 = vrot.slane %v1142, 1
      %v1311 = vrot.slane %v1143, 1
      %v1312 = vsel %vm219, %v1310, %v1311
      %v1313 = vrot.slane %v1144, 1
      %v1314 = vrot.slane %v1145, 1
      %v1315 = vsel %vm219, %v1313, %v1314
      %s1324 = scalar_lea.vmem %s1, 896
      %v1325 = vld [vmem:[%s1324] sm:$0xff]
      %v1326 = vld [vmem:[%s1324 + $0x8] sm:$0xff]
      %v1327 = vld [vmem:[%s1324 + $0x10] sm:$0xff]
      %v1328 = vld [vmem:[%s1324 + $0x18] sm:$0xff]
      %v1329 = vld [vmem:[%s1324 + $0x20] sm:$0xff]
      %v1330 = vld [vmem:[%s1324 + $0x28] sm:$0xff]
      %v1331 = vld [vmem:[%s1324 + $0x30] sm:$0xff]
      %v1332 = vld [vmem:[%s1324 + $0x38] sm:$0xff]
      %v1333 = vld [vmem:[%s1324 + $0x40] sm:$0xff]
      %v1334 = vld [vmem:[%s1324 + $0x48] sm:$0xff]
      %v1335 = vld [vmem:[%s1324 + $0x50] sm:$0xff]
      %v1336 = vld [vmem:[%s1324 + $0x58] sm:$0xff]
      %v1337 = vld [vmem:[%s1324 + $0x60] sm:$0xff]
      %v1338 = vld [vmem:[%s1324 + $0x68] sm:$0xff]
      %v1339 = vld [vmem:[%s1324 + $0x70] sm:$0xff]
      %v1340 = vld [vmem:[%s1324 + $0x78] sm:$0xff]
      %1341 = vmatprep.subr.mxu0 0.0
      %1342 = vmatpush1.msra.mxu0 %v1340
      %1343 = vmatprep.subr.mxu0 0.0
      %1344 = vmatpush1.msra.mxu0 %v1339
      %1345 = vmatprep.subr.mxu0 0.0
      %1346 = vmatpush1.msra.mxu0 %v1338
      %1347 = vmatprep.subr.mxu0 0.0
      %1348 = vmatpush1.msra.mxu0 %v1337
      %1349 = vmatprep.subr.mxu0 0.0
      %1350 = vmatpush1.msra.mxu0 %v1336
      %1351 = vmatprep.subr.mxu0 0.0
      %1352 = vmatpush1.msra.mxu0 %v1335
      %1353 = vmatprep.subr.mxu0 0.0
      %1354 = vmatpush1.msra.mxu0 %v1334
      %1355 = vmatprep.subr.mxu0 0.0
      %1356 = vmatpush1.msra.mxu0 %v1333
      %1357 = vmatprep.subr.mxu0 0.0
      %1358 = vmatpush1.msra.mxu0 %v1332
      %1359 = vmatprep.subr.mxu0 0.0
      %1360 = vmatpush1.msra.mxu0 %v1331
      %1361 = vmatprep.subr.mxu0 0.0
      %1362 = vmatpush1.msra.mxu0 %v1330
      %1363 = vmatprep.subr.mxu0 0.0
      %1364 = vmatpush1.msra.mxu0 %v1329
      %1365 = vmatprep.subr.mxu0 0.0
      %1366 = vmatpush1.msra.mxu0 %v1328
      %1367 = vmatprep.subr.mxu0 0.0
      %1368 = vmatpush1.msra.mxu0 %v1327
      %1369 = vmatprep.subr.mxu0 0.0
      %1370 = vmatpush1.msra.mxu0 %v1326
      %1371 = vmatprep.subr.mxu0 0.0
      %1372 = vmatpush1.msra.mxu0 %v1325
      %1373 = vmatprep.subr.mxu0 0.0
      %1374 = vmatpush2.msra.mxu0 0.0
      %1375 = vmatprep.subr.mxu0 0.0
      %1376 = vmatpush2.msra.mxu0 0.0
      %1377 = vmatprep.subr.mxu0 0.0
      %1378 = vmatpush2.msra.mxu0 0.0
      %1379 = vmatprep.subr.mxu0 0.0
      %1380 = vmatpush2.msra.mxu0 0.0
      %1381 = vmatprep.subr.mxu0 0.0
      %1382 = vmatpush2.msra.mxu0 0.0
      %1383 = vmatprep.subr.mxu0 0.0
      %1384 = vmatpush2.msra.mxu0 0.0
      %1385 = vmatprep.subr.mxu0 0.0
      %1386 = vmatpush2.msra.mxu0 0.0
      %1387 = vmatprep.subr.mxu0 0.0
      %1388 = vmatpush2.msra.mxu0 0.0
      %1389 = vmatprep.subr.mxu0 0.0
      %1390 = vmatpush2.msra.mxu0 0.0
      %1391 = vmatprep.subr.mxu0 0.0
      %1392 = vmatpush2.msra.mxu0 0.0
      %1393 = vmatprep.subr.mxu0 0.0
      %1394 = vmatpush2.msra.mxu0 0.0
      %1395 = vmatprep.subr.mxu0 0.0
      %1396 = vmatpush2.msra.mxu0 0.0
      %1397 = vmatprep.subr.mxu0 0.0
      %1398 = vmatpush2.msra.mxu0 0.0
      %1399 = vmatprep.subr.mxu0 0.0
      %1400 = vmatpush2.msra.mxu0 0.0
      %1401 = vmatprep.subr.mxu0 0.0
      %1402 = vmatpush2.msra.mxu0 0.0
      %1403 = vmatprep.subr.mxu0 0.0
      %1404 = vmatpush2.msra.mxu0 0.0
      %1405 = vmatprep.mubr.f32.mxu0 0.0
      %1406 = vmatmul.mubr.f32.gmra.mxu0 %v1294
      %v1407 = vpop.f32.mrf.mxu0
      %v1408 = vadd.f32 0.0, %v1407
      %v1409 = vpop.f32.mrf.mxu0
      %1410 = vmatprep.mubr.f32.mxu0 0.0
      %1411 = vmatmul.mubr.f32.gmra.mxu0 %v1297
      %v1412 = vpop.f32.mrf.mxu0
      %v1413 = vadd.f32 0.0, %v1412
      %v1414 = vpop.f32.mrf.mxu0
      %1415 = vmatprep.mubr.f32.mxu0 0.0
      %1416 = vmatmul.mubr.f32.gmra.mxu0 %v1300
      %v1417 = vpop.f32.mrf.mxu0
      %v1418 = vadd.f32 0.0, %v1417
      %v1419 = vpop.f32.mrf.mxu0
      %1420 = vmatprep.mubr.f32.mxu0 0.0
      %1421 = vmatmul.mubr.f32.gmra.mxu0 %v1303
      %v1422 = vpop.f32.mrf.mxu0
      %v1423 = vadd.f32 0.0, %v1422
      %v1424 = vpop.f32.mrf.mxu0
      %1425 = vmatprep.mubr.f32.mxu0 0.0
      %1426 = vmatmul.mubr.f32.gmra.mxu0 %v1306
      %v1427 = vpop.f32.mrf.mxu0
      %v1428 = vadd.f32 0.0, %v1427
      %v1429 = vpop.f32.mrf.mxu0
      %1430 = vmatprep.mubr.f32.mxu0 0.0
      %1431 = vmatmul.mubr.f32.gmra.mxu0 %v1309
      %v1432 = vpop.f32.mrf.mxu0
      %v1433 = vadd.f32 0.0, %v1432
      %v1434 = vpop.f32.mrf.mxu0
      %1435 = vmatprep.mubr.f32.mxu0 0.0
      %1436 = vmatmul.mubr.f32.gmra.mxu0 %v1312
      %v1437 = vpop.f32.mrf.mxu0
      %v1438 = vadd.f32 0.0, %v1437
      %v1439 = vpop.f32.mrf.mxu0
      %1440 = vmatprep.mubr.f32.mxu0 0.0
      %1441 = vmatmul.mubr.f32.gmra.mxu0 %v1315
      %v1442 = vpop.f32.mrf.mxu0
      %v1443 = vadd.f32 0.0, %v1442
      %v1444 = vpop.f32.mrf.mxu0
      %1445 = vdwg.mxu0
      %v1446 = vadd.f32 %v1268, %v1408
      %v1447 = vadd.f32 %v1269, %v1413
      %v1448 = vadd.f32 %v1270, %v1418
      %v1449 = vadd.f32 %v1271, %v1423
      %v1450 = vadd.f32 %v1272, %v1428
      %v1451 = vadd.f32 %v1273, %v1433
      %v1452 = vadd.f32 %v1274, %v1438
      %v1453 = vadd.f32 %v1275, %v1443
      %v1454 = vrot.slane %v1130, 2
      %v1455 = vrot.slane %v1131, 2
      %v1456 = vsel %vm479, %v1454, %v1455
      %v1457 = vrot.slane %v1132, 2
      %v1458 = vrot.slane %v1133, 2
      %v1459 = vsel %vm479, %v1457, %v1458
      %v1460 = vrot.slane %v1134, 2
      %v1461 = vrot.slane %v1135, 2
      %v1462 = vsel %vm479, %v1460, %v1461
      %v1463 = vrot.slane %v1136, 2
      %v1464 = vrot.slane %v1137, 2
      %v1465 = vsel %vm479, %v1463, %v1464
      %v1466 = vrot.slane %v1138, 2
      %v1467 = vrot.slane %v1139, 2
      %v1468 = vsel %vm479, %v1466, %v1467
      %v1469 = vrot.slane %v1140, 2
      %v1470 = vrot.slane %v1141, 2
      %v1471 = vsel %vm479, %v1469, %v1470
      %v1472 = vrot.slane %v1142, 2
      %v1473 = vrot.slane %v1143, 2
      %v1474 = vsel %vm479, %v1472, %v1473
      %v1475 = vrot.slane %v1144, 2
      %v1476 = vrot.slane %v1145, 2
      %v1477 = vsel %vm479, %v1475, %v1476
      %s1486 = scalar_lea.vmem %s1, 1024
      %v1487 = vld [vmem:[%s1486] sm:$0xff]
      %v1488 = vld [vmem:[%s1486 + $0x8] sm:$0xff]
      %v1489 = vld [vmem:[%s1486 + $0x10] sm:$0xff]
      %v1490 = vld [vmem:[%s1486 + $0x18] sm:$0xff]
      %v1491 = vld [vmem:[%s1486 + $0x20] sm:$0xff]
      %v1492 = vld [vmem:[%s1486 + $0x28] sm:$0xff]
      %v1493 = vld [vmem:[%s1486 + $0x30] sm:$0xff]
      %v1494 = vld [vmem:[%s1486 + $0x38] sm:$0xff]
      %v1495 = vld [vmem:[%s1486 + $0x40] sm:$0xff]
      %v1496 = vld [vmem:[%s1486 + $0x48] sm:$0xff]
      %v1497 = vld [vmem:[%s1486 + $0x50] sm:$0xff]
      %v1498 = vld [vmem:[%s1486 + $0x58] sm:$0xff]
      %v1499 = vld [vmem:[%s1486 + $0x60] sm:$0xff]
      %v1500 = vld [vmem:[%s1486 + $0x68] sm:$0xff]
      %v1501 = vld [vmem:[%s1486 + $0x70] sm:$0xff]
      %v1502 = vld [vmem:[%s1486 + $0x78] sm:$0xff]
      %1503 = vmatprep.subr.mxu0 0.0
      %1504 = vmatpush1.msra.mxu0 %v1502
      %1505 = vmatprep.subr.mxu0 0.0
      %1506 = vmatpush1.msra.mxu0 %v1501
      %1507 = vmatprep.subr.mxu0 0.0
      %1508 = vmatpush1.msra.mxu0 %v1500
      %1509 = vmatprep.subr.mxu0 0.0
      %1510 = vmatpush1.msra.mxu0 %v1499
      %1511 = vmatprep.subr.mxu0 0.0
      %1512 = vmatpush1.msra.mxu0 %v1498
      %1513 = vmatprep.subr.mxu0 0.0
      %1514 = vmatpush1.msra.mxu0 %v1497
      %1515 = vmatprep.subr.mxu0 0.0
      %1516 = vmatpush1.msra.mxu0 %v1496
      %1517 = vmatprep.subr.mxu0 0.0
      %1518 = vmatpush1.msra.mxu0 %v1495
      %1519 = vmatprep.subr.mxu0 0.0
      %1520 = vmatpush1.msra.mxu0 %v1494
      %1521 = vmatprep.subr.mxu0 0.0
      %1522 = vmatpush1.msra.mxu0 %v1493
      %1523 = vmatprep.subr.mxu0 0.0
      %1524 = vmatpush1.msra.mxu0 %v1492
      %1525 = vmatprep.subr.mxu0 0.0
      %1526 = vmatpush1.msra.mxu0 %v1491
      %1527 = vmatprep.subr.mxu0 0.0
      %1528 = vmatpush1.msra.mxu0 %v1490
      %1529 = vmatprep.subr.mxu0 0.0
      %1530 = vmatpush1.msra.mxu0 %v1489
      %1531 = vmatprep.subr.mxu0 0.0
      %1532 = vmatpush1.msra.mxu0 %v1488
      %1533 = vmatprep.subr.mxu0 0.0
      %1534 = vmatpush1.msra.mxu0 %v1487
      %1535 = vmatprep.subr.mxu0 0.0
      %1536 = vmatpush2.msra.mxu0 0.0
      %1537 = vmatprep.subr.mxu0 0.0
      %1538 = vmatpush2.msra.mxu0 0.0
      %1539 = vmatprep.subr.mxu0 0.0
      %1540 = vmatpush2.msra.mxu0 0.0
      %1541 = vmatprep.subr.mxu0 0.0
      %1542 = vmatpush2.msra.mxu0 0.0
      %1543 = vmatprep.subr.mxu0 0.0
      %1544 = vmatpush2.msra.mxu0 0.0
      %1545 = vmatprep.subr.mxu0 0.0
      %1546 = vmatpush2.msra.mxu0 0.0
      %1547 = vmatprep.subr.mxu0 0.0
      %1548 = vmatpush2.msra.mxu0 0.0
      %1549 = vmatprep.subr.mxu0 0.0
      %1550 = vmatpush2.msra.mxu0 0.0
      %1551 = vmatprep.subr.mxu0 0.0
      %1552 = vmatpush2.msra.mxu0 0.0
      %1553 = vmatprep.subr.mxu0 0.0
      %1554 = vmatpush2.msra.mxu0 0.0
      %1555 = vmatprep.subr.mxu0 0.0
      %1556 = vmatpush2.msra.mxu0 0.0
      %1557 = vmatprep.subr.mxu0 0.0
      %1558 = vmatpush2.msra.mxu0 0.0
      %1559 = vmatprep.subr.mxu0 0.0
      %1560 = vmatpush2.msra.mxu0 0.0
      %1561 = vmatprep.subr.mxu0 0.0
      %1562 = vmatpush2.msra.mxu0 0.0
      %1563 = vmatprep.subr.mxu0 0.0
      %1564 = vmatpush2.msra.mxu0 0.0
      %1565 = vmatprep.subr.mxu0 0.0
      %1566 = vmatpush2.msra.mxu0 0.0
      %1567 = vmatprep.mubr.f32.mxu0 0.0
      %1568 = vmatmul.mubr.f32.gmra.mxu0 %v1456
      %v1569 = vpop.f32.mrf.mxu0
      %v1570 = vadd.f32 0.0, %v1569
      %v1571 = vpop.f32.mrf.mxu0
      %1572 = vmatprep.mubr.f32.mxu0 0.0
      %1573 = vmatmul.mubr.f32.gmra.mxu0 %v1459
      %v1574 = vpop.f32.mrf.mxu0
      %v1575 = vadd.f32 0.0, %v1574
      %v1576 = vpop.f32.mrf.mxu0
      %1577 = vmatprep.mubr.f32.mxu0 0.0
      %1578 = vmatmul.mubr.f32.gmra.mxu0 %v1462
      %v1579 = vpop.f32.mrf.mxu0
      %v1580 = vadd.f32 0.0, %v1579
      %v1581 = vpop.f32.mrf.mxu0
      %1582 = vmatprep.mubr.f32.mxu0 0.0
      %1583 = vmatmul.mubr.f32.gmra.mxu0 %v1465
      %v1584 = vpop.f32.mrf.mxu0
      %v1585 = vadd.f32 0.0, %v1584
      %v1586 = vpop.f32.mrf.mxu0
      %1587 = vmatprep.mubr.f32.mxu0 0.0
      %1588 = vmatmul.mubr.f32.gmra.mxu0 %v1468
      %v1589 = vpop.f32.mrf.mxu0
      %v1590 = vadd.f32 0.0, %v1589
      %v1591 = vpop.f32.mrf.mxu0
      %1592 = vmatprep.mubr.f32.mxu0 0.0
      %1593 = vmatmul.mubr.f32.gmra.mxu0 %v1471
      %v1594 = vpop.f32.mrf.mxu0
      %v1595 = vadd.f32 0.0, %v1594
      %v1596 = vpop.f32.mrf.mxu0
      %1597 = vmatprep.mubr.f32.mxu0 0.0
      %1598 = vmatmul.mubr.f32.gmra.mxu0 %v1474
      %v1599 = vpop.f32.mrf.mxu0
      %v1600 = vadd.f32 0.0, %v1599
      %v1601 = vpop.f32.mrf.mxu0
      %1602 = vmatprep.mubr.f32.mxu0 0.0
      %1603 = vmatmul.mubr.f32.gmra.mxu0 %v1477
      %v1604 = vpop.f32.mrf.mxu0
      %v1605 = vadd.f32 0.0, %v1604
      %v1606 = vpop.f32.mrf.mxu0
      %1607 = vdwg.mxu0
      %v1608 = vadd.f32 %v1446, %v1570
      %v1609 = vadd.f32 %v1447, %v1575
      %v1610 = vadd.f32 %v1448, %v1580
      %v1611 = vadd.f32 %v1449, %v1585
      %v1612 = vadd.f32 %v1450, %v1590
      %v1613 = vadd.f32 %v1451, %v1595
      %v1614 = vadd.f32 %v1452, %v1600
      %v1615 = vadd.f32 %v1453, %v1605
      %v1616 = vld [vmem:[%s2] sm:$0x1]
      %v1618 = vlaneseq
      %v1619 = vshrl.u32 %v1618, 7
      %v1620 = vsub.s32 0, %v1619
      %v1621 = vrot.slane %v1616, %v1620
      %v1623 = vadd.f32 %v1608, %v1621
      %v1624 = vadd.f32 %v1609, %v1621
      %v1625 = vadd.f32 %v1610, %v1621
      %v1626 = vadd.f32 %v1611, %v1621
      %v1627 = vadd.f32 %v1612, %v1621
      %v1628 = vadd.f32 %v1613, %v1621
      %v1629 = vadd.f32 %v1614, %v1621
      %v1630 = vadd.f32 %v1615, %v1621
      %v1631 = vmax.f32 %v1623, 0.0
      %v1632 = vmax.f32 %v1624, 0.0
      %v1633 = vmax.f32 %v1625, 0.0
      %v1634 = vmax.f32 %v1626, 0.0
      %v1635 = vmax.f32 %v1627, 0.0
      %v1636 = vmax.f32 %v1628, 0.0
      %v1637 = vmax.f32 %v1629, 0.0
      %v1638 = vmax.f32 %v1630, 0.0
      %1639 = vst [vmem:[%s170] sm:$0xff] %v1631
      %1640 = vst [vmem:[%s170 + $0x8] sm:$0xff] %v1632
      %1641 = vst [vmem:[%s170 + $0x10] sm:$0xff] %v1633
      %1642 = vst [vmem:[%s170 + $0x18] sm:$0xff] %v1634
      %1643 = vst [vmem:[%s170 + $0x20] sm:$0xff] %v1635
      %1644 = vst [vmem:[%s170 + $0x28] sm:$0xff] %v1636
      %1645 = vst [vmem:[%s170 + $0x30] sm:$0xff] %v1637
      %1646 = vst [vmem:[%s170 + $0x38] sm:$0xff] %v1638
      %p1647 = scmp.lt.s32.totalorder %s14, 1
      %s1648 = scalar_select %p1647, %s14, 1
      %s1649 = smul.addr %s1648, 8
      %s1650 = smul.addr %s1649, 8
      %s1651 = scalar_lea.vmem %s3, %s1650
      // Predicated region
      $region33: #{net_forward.10} parent=31 // pred_check
        %p1652 = pneg %p100
      $region34: #{net_forward.10} parent=31 // pred_check_branch
        %1654 = sbr.rel (%p1652) target = $region36
      $region35: #{net_forward.10} parent=31 // pred_region
        _
      $region36: #{net_forward.10} parent=31 // pred_fallthru
        _
    $region32: #{net_forward.10} parent=5 // pred_fallthru
      _
    %p1655 = scmp.le.s32.totalorder 2, %s9
    // Predicated region
    $region37: #{net_forward.10} parent=5 // pred_check
      %p1656 = pneg %p1655
    $region38: #{net_forward.10} parent=5 // pred_check_branch
      %1658 = sbr.rel (%p1656) target = $region40
    $region39: #{net_forward.10} parent=5 // pred_region
      %s1659 = ssub.s32 %s9, 2
      // Predicated region
      $region41: #{net_forward.10} parent=39 // pred_check
        %p1660 = pneg %p106
      $region42: #{net_forward.10} parent=39 // pred_check_branch
        %1662 = sbr.rel (%p1660) target = $region44
      $region43: #{net_forward.10} parent=39 // pred_region
        %p1663 = scmp.lt.s32.totalorder %s15, 1
        %s1664 = scalar_select %p1663, %s15, 1
        %s1665 = smul.addr %s1664, 8
        %s1666 = smul.addr %s1665, 8
        %s1667 = scalar_lea.vmem %s3, %s1666
      $region44: #{net_forward.10} parent=39 // pred_fallthru
        _
    $region40: #{net_forward.10} parent=5 // pred_fallthru
      _
  $region6: #{net_forward.10} parent=0 // loop_footer
    %s13 = sadd.s32 1, %s9
  $region7: #{net_forward.10} parent=0 // loop_footer_branch
    %8 = sbr.rel target = $region3
  $region8: #{net_forward.10} parent=0 // loop_exit
    _

// kernel: net_forward.7
$region0: #{net_forward.7}
  #allocation0 [shape = 'u32[]', space=smem, size = 0x4, offset = 0x4, fixed_abs, tag = 'smem constant byte address 0x4 - core index']
  #allocation1 [shape = 'u32[144,128]{1,0:T(1,128)}', space=vmem, size = 0x12000, scoped, tag = 'internal scratch']
  %s0 = inlined_call_operand.vmem [shape: f32[2,18,18,3], index: 0, kind: input, shape index: {}]
  %s1 = inlined_call_operand.vmem [shape: f32[9,3,128], index: 1, kind: input, shape index: {}]
  %s2 = inlined_call_operand.vmem [shape: f32[1,128], index: 2, kind: input, shape index: {}]
  %s3 = inlined_call_operand.vmem [shape: f32[2,256,128], index: 3, kind: output, shape index: {}]
  %s4 = sld [smem:[#allocation0]]
  $region45: #{net_forward.7} parent=0
    _
  %s6 = ssub.s32 1, %s4
  %s7 = scalar_select 0, %s6, %s4
  loop: start=0, step=1, limit=4
  $region2: #{net_forward.7} parent=0 // loop_pre_header
    _
  $region3: #{net_forward.7} parent=0 // loop_header
    %s9 = sphi 0, %s13
    %p10 = scmp.ge.s32.totalorder %s9, 4
    %s19 = sphi 0, %s21
    %s22 = sphi 0, %s19
    %s23 = sphi 0, %s22
    %s39 = sphi 0, %s23
    %s43 = sphi 0, %s43
    %s45 = sphi 0, %s43
    %s46 = sphi 0, %s45
    %s60 = sphi 0, %s46
    %s64 = sphi 0, %s64
    %s66 = sphi 0, %s64
    %s67 = sphi 0, %s66
    %s81 = sphi 0, %s67
    %s87 = sphi 0, %s89
    %s90 = sphi 0, %s87
    %s91 = sphi 0, %s90
    %s107 = sphi 0, %s91
  $region4: #{net_forward.7} parent=0 // loop_header_branch
    %12 = sbr.rel (%p10) target = $region8
  $region5: #{net_forward.7} parent=0 // loop_body
    %s14 = ssub.s32 %s9, 1
    %s15 = ssub.s32 %s9, 2
    %s16 = sadd.s32 %s9, 1
    %s17 = ssub.s32 %s9, %s16
    %p18 = scmp.eq.s32.totalorder %s17, 0
    %s20 = sadd.s32 %s19, 1
    %s21 = scalar_select %p18, %s19, %s20
    %p24 = pneg %p18
    %p25 = scmp.eq.s32.totalorder %s9, 1
    %p26 = por %p24, %p25
    %p27 = scmp.ne.s32.totalorder %s19, %s22
    %p28 = scmp.eq.s32.totalorder %s9, 0
    %p29 = por %p27, %p28
    %p30 = scmp.ne.s32.totalorder %s19, %s22
    %p31 = scmp.eq.s32.totalorder %s14, 1
    %p32 = por %p30, %p31
    %p33 = scmp.ne.s32.totalorder %s22, %s23
    %p34 = scmp.eq.s32.totalorder %s14, 0
    %p35 = por %p33, %p34
    %p36 = scmp.ne.s32.totalorder %s22, %s23
    %p37 = scmp.eq.s32.totalorder %s15, 1
    %p38 = por %p36, %p37
    %p40 = scmp.ne.s32.totalorder %s23, %s39
    %p41 = scmp.eq.s32.totalorder %s15, 0
    %p42 = por %p40, %p41
    %s44 = sadd.s32 %s43, 1
    %p47 = scmp.eq.s32.totalorder %s9, 1
    %p48 = scmp.ne.s32.totalorder %s43, %s45
    %p49 = scmp.eq.s32.totalorder %s9, 0
    %p50 = por %p48, %p49
    %p51 = scmp.ne.s32.totalorder %s43, %s45
    %p52 = scmp.eq.s32.totalorder %s14, 1
    %p53 = por %p51, %p52
    %p54 = scmp.ne.s32.totalorder %s45, %s46
    %p55 = scmp.eq.s32.totalorder %s14, 0
    %p56 = por %p54, %p55
    %p57 = scmp.ne.s32.totalorder %s45, %s46
    %p58 = scmp.eq.s32.totalorder %s15, 1
    %p59 = por %p57, %p58
    %p61 = scmp.ne.s32.totalorder %s46, %s60
    %p62 = scmp.eq.s32.totalorder %s15, 0
    %p63 = por %p61, %p62
    %s65 = sadd.s32 %s64, 1
    %p68 = scmp.eq.s32.totalorder %s9, 1
    %p69 = scmp.ne.s32.totalorder %s64, %s66
    %p70 = scmp.eq.s32.totalorder %s9, 0
    %p71 = por %p69, %p70
    %p72 = scmp.ne.s32.totalorder %s64, %s66
    %p73 = scmp.eq.s32.totalorder %s14, 1
    %p74 = por %p72, %p73
    %p75 = scmp.ne.s32.totalorder %s66, %s67
    %p76 = scmp.eq.s32.totalorder %s14, 0
    %p77 = por %p75, %p76
    %p78 = scmp.ne.s32.totalorder %s66, %s67
    %p79 = scmp.eq.s32.totalorder %s15, 1
    %p80 = por %p78, %p79
    %p82 = scmp.ne.s32.totalorder %s67, %s81
    %p83 = scmp.eq.s32.totalorder %s15, 0
    %p84 = por %p82, %p83
    %s85 = ssub.s32 %s9, %s16
    %p86 = scmp.eq.s32.totalorder %s85, 0
    %s88 = sadd.s32 %s87, 1
    %s89 = scalar_select %p86, %s87, %s88
    %p92 = pneg %p86
    %p93 = scmp.eq.s32.totalorder %s9, 1
    %p94 = por %p92, %p93
    %p95 = scmp.ne.s32.totalorder %s87, %s90
    %p96 = scmp.eq.s32.totalorder %s9, 0
    %p97 = por %p95, %p96
    %p98 = scmp.ne.s32.totalorder %s87, %s90
    %p99 = scmp.eq.s32.totalorder %s14, 1
    %p100 = por %p98, %p99
    %p101 = scmp.ne.s32.totalorder %s90, %s91
    %p102 = scmp.eq.s32.totalorder %s14, 0
    %p103 = por %p101, %p102
    %p104 = scmp.ne.s32.totalorder %s90, %s91
    %p105 = scmp.eq.s32.totalorder %s15, 1
    %p106 = por %p104, %p105
    %p108 = scmp.ne.s32.totalorder %s91, %s107
    %p109 = scmp.eq.s32.totalorder %s15, 0
    %p110 = por %p108, %p109
    %p111 = scmp.le.s32.totalorder 1, %s9
    %p112 = scmp.lt.s32.totalorder %s9, 3
    %p113 = pnand %p111, %p112
    %p114 = pneg %p113
    // Predicated region
    $region9: #{net_forward.7} parent=5 // pred_check
      _
    $region10: #{net_forward.7} parent=5 // pred_check_branch
      %116 = sbr.rel (%p113) target = $region12
    $region11: #{net_forward.7} parent=5 // pred_region
      %s117 = ssub.s32 %s9, 1
      // Predicated region
      $region13: #{net_forward.7} parent=11 // pred_check
        %p118 = pneg %p56
      $region14: #{net_forward.7} parent=11 // pred_check_branch
        %120 = sbr.rel (%p118) target = $region16
      $region15: #{net_forward.7} parent=11 // pred_region
        _
      $region16: #{net_forward.7} parent=11 // pred_fallthru
        _
      // Predicated region
      $region17: #{net_forward.7} parent=11 // pred_check
        %p121 = pneg %p77
      $region18: #{net_forward.7} parent=11 // pred_check_branch
        %123 = sbr.rel (%p121) target = $region20
      $region19: #{net_forward.7} parent=11 // pred_region
        _
      $region20: #{net_forward.7} parent=11 // pred_fallthru
        _
    $region12: #{net_forward.7} parent=5 // pred_fallthru
      _
    %p124 = scmp.lt.s32.totalorder %s9, 2
    // Predicated region
    $region21: #{net_forward.7} parent=5 // pred_check
      %p125 = pneg %p124
    $region22: #{net_forward.7} parent=5 // pred_check_branch
      %127 = sbr.rel (%p125) target = $region24
    $region23: #{net_forward.7} parent=5 // pred_region
      // Predicated region
      $region25: #{net_forward.7} parent=23 // pred_check
        %p128 = pneg %p29
      $region26: #{net_forward.7} parent=23 // pred_check_branch
        %130 = sbr.rel (%p128) target = $region28
      $region27: #{net_forward.7} parent=23 // pred_region
        %p131 = scmp.lt.s32.totalorder %s9, 1
        %s132 = scalar_select %p131, %s9, 1
        %s133 = smul.addr %s132, 54
        %s134 = smul.addr %s133, 8
        %s135 = scalar_lea.vmem %s0, %s134
      $region28: #{net_forward.7} parent=23 // pred_fallthru
        _
    $region24: #{net_forward.7} parent=5 // pred_fallthru
      _
    %p136 = scmp.le.s32.totalorder 1, %s9
    %p137 = scmp.lt.s32.totalorder %s9, 3
    %p138 = pnand %p136, %p137
    %p139 = pneg %p138
    // Predicated region
    $region29: #{net_forward.7} parent=5 // pred_check
      _
    $region30: #{net_forward.7} parent=5 // pred_check_branch
      %141 = sbr.rel (%p138) target = $region32
    $region31: #{net_forward.7} parent=5 // pred_region
      %s142 = ssub.s32 %s9, 1
      %p143 = scmp.lt.s32.totalorder %s14, 1
      %s144 = scalar_select %p143, %s14, 1
      %s145 = smul.addr %s144, 54
      %s146 = smul.addr %s145, 8
      %s147 = scalar_lea.vmem %s0, %s146
      %p148 = pneg %p35
      %p149 = pneg %p32
      %p150 = pneg %p56
      %p151 = pneg %p53
      %p152 = pneg %p77
      %p153 = pneg %p74
      %p154 = pneg %p103
      %p155 = pneg %p100
      %p156 = scmp.lt.s32.totalorder %s14, 1
      %s157 = scalar_select %p156, %s14, 1
      %s158 = smul.addr %s157, 32
      %s159 = smul.addr %s158, 8
      %s160 = scalar_lea.vmem %s3, %s159
      %p161 = scmp.lt.s32.totalorder %s14, 1
      %s162 = scalar_select %p161, %s14, 1
      %s163 = smul.addr %s162, 54
      %s164 = smul.addr %s163, 8
      %s165 = scalar_lea.vmem %s0, %s164
      %p166 = scmp.lt.s32.totalorder %s14, 1
      %s167 = scalar_select %p166, %s14, 1
      %s168 = smul.addr %s167, 32
      %s169 = smul.addr %s168, 8
      %s170 = scalar_lea.vmem %s3, %s169
      %v171 = vld [vmem:[%s165] sm:$0xff]
      %v172 = vld [vmem:[%s165 + $0x8] sm:$0xff]
      %v173 = vld [vmem:[%s165 + $0x10] sm:$0x3]
      %v174 = vld [vmem:[%s165 + $0x18] sm:$0xff]
      %v175 = vld [vmem:[%s165 + $0x20] sm:$0xff]
      %v176 = vld [vmem:[%s165 + $0x28] sm:$0x3]
      %v177 = vld [vmem:[%s165 + $0x30] sm:$0xff]
      %v178 = vld [vmem:[%s165 + $0x38] sm:$0xff]
      %v179 = vld [vmem:[%s165 + $0x40] sm:$0x3]
      %v180 = vld [vmem:[%s165 + $0x48] sm:$0xff]
      %v181 = vld [vmem:[%s165 + $0x50] sm:$0xff]
      %v182 = vld [vmem:[%s165 + $0x58] sm:$0x3]
      %v183 = vld [vmem:[%s165 + $0x60] sm:$0xff]
      %v184 = vld [vmem:[%s165 + $0x68] sm:$0xff]
      %v185 = vld [vmem:[%s165 + $0x70] sm:$0x3]
      %v186 = vld [vmem:[%s165 + $0x78] sm:$0xff]
      %v187 = vld [vmem:[%s165 + $0x80] sm:$0xff]
      %v188 = vld [vmem:[%s165 + $0x88] sm:$0x3]
      %v189 = vld [vmem:[%s165 + $0x90] sm:$0xff]
      %v190 = vld [vmem:[%s165 + $0x98] sm:$0xff]
      %v191 = vld [vmem:[%s165 + $0xa0] sm:$0x3]
      %v192 = vld [vmem:[%s165 + $0xa8] sm:$0xff]
      %v193 = vld [vmem:[%s165 + $0xb0] sm:$0xff]
      %v194 = vld [vmem:[%s165 + $0xb8] sm:$0x3]
      %v195 = vld [vmem:[%s165 + $0xc0] sm:$0xff]
      %v196 = vld [vmem:[%s165 + $0xc8] sm:$0xff]
      %v197 = vld [vmem:[%s165 + $0xd0] sm:$0x3]
      %v198 = vld [vmem:[%s165 + $0xd8] sm:$0xff]
      %v199 = vld [vmem:[%s165 + $0xe0] sm:$0xff]
      %v200 = vld [vmem:[%s165 + $0xe8] sm:$0x3]
      %v201 = vld [vmem:[%s165 + $0xf0] sm:$0xff]
      %v202 = vld [vmem:[%s165 + $0xf8] sm:$0xff]
      %v203 = vld [vmem:[%s165 + $0x100] sm:$0x3]
      %v204 = vld [vmem:[%s165 + $0x108] sm:$0xff]
      %v205 = vld [vmem:[%s165 + $0x110] sm:$0xff]
      %v206 = vld [vmem:[%s165 + $0x118] sm:$0x3]
      %v207 = vld [vmem:[%s165 + $0x120] sm:$0xff]
      %v208 = vld [vmem:[%s165 + $0x128] sm:$0xff]
      %v209 = vld [vmem:[%s165 + $0x130] sm:$0x3]
      %v210 = vld [vmem:[%s165 + $0x138] sm:$0xff]
      %v211 = vld [vmem:[%s165 + $0x140] sm:$0xff]
      %v212 = vld [vmem:[%s165 + $0x148] sm:$0x3]
      %v213 = vld [vmem:[%s165 + $0x150] sm:$0xff]
      %v214 = vld [vmem:[%s165 + $0x158] sm:$0xff]
      %v215 = vld [vmem:[%s165 + $0x160] sm:$0x3]
      %v216 = vld [vmem:[%s165 + $0x168] sm:$0xff]
      %v217 = vld [vmem:[%s165 + $0x170] sm:$0xff]
      %v218 = vld [vmem:[%s165 + $0x178] sm:$0x3]
      %v219 = vld [vmem:[%s1] sm:$0x7]
      %vm268 = vcmask 1046528
      %v269 = vrot.slane %v171, 1
      %v270 = vrot.slane %v172, 1
      %v271 = vsel %vm268, %v269, %v270
      %v272 = vrot.slane %v173, 1
      %v273 = vsel %vm268, %v270, %v272
      %v274 = vrot.slane %v174, 1
      %v275 = vrot.slane %v175, 1
      %v276 = vsel %vm268, %v274, %v275
      %v277 = vrot.slane %v176, 1
      %v278 = vsel %vm268, %v275, %v277
      %v279 = vrot.slane %v177, 1
      %v280 = vrot.slane %v178, 1
      %v281 = vsel %vm268, %v279, %v280
      %v282 = vrot.slane %v179, 1
      %v283 = vsel %vm268, %v280, %v282
      %v284 = vrot.slane %v180, 1
      %v285 = vrot.slane %v181, 1
      %v286 = vsel %vm268, %v284, %v285
      %v287 = vrot.slane %v182, 1
      %v288 = vsel %vm268, %v285, %v287
      %v289 = vrot.slane %v183, 1
      %v290 = vrot.slane %v184, 1
      %v291 = vsel %vm268, %v289, %v290
      %v292 = vrot.slane %v185, 1
      %v293 = vsel %vm268, %v290, %v292
      %v294 = vrot.slane %v186, 1
      %v295 = vrot.slane %v187, 1
      %v296 = vsel %vm268, %v294, %v295
      %v297 = vrot.slane %v188, 1
      %v298 = vsel %vm268, %v295, %v297
      %v299 = vrot.slane %v189, 1
      %v300 = vrot.slane %v190, 1
      %v301 = vsel %vm268, %v299, %v300
      %v302 = vrot.slane %v191, 1
      %v303 = vsel %vm268, %v300, %v302
      %v304 = vrot.slane %v192, 1
      %v305 = vrot.slane %v193, 1
      %v306 = vsel %vm268, %v304, %v305
      %v307 = vrot.slane %v194, 1
      %v308 = vsel %vm268, %v305, %v307
      %v309 = vrot.slane %v195, 1
      %v310 = vrot.slane %v196, 1
      %v311 = vsel %vm268, %v309, %v310
      %v312 = vrot.slane %v197, 1
      %v313 = vsel %vm268, %v310, %v312
      %v314 = vrot.slane %v198, 1
      %v315 = vrot.slane %v199, 1
      %v316 = vsel %vm268, %v314, %v315
      %v317 = vrot.slane %v200, 1
      %v318 = vsel %vm268, %v315, %v317
      %v319 = vrot.slane %v201, 1
      %v320 = vrot.slane %v202, 1
      %v321 = vsel %vm268, %v319, %v320
      %v322 = vrot.slane %v203, 1
      %v323 = vsel %vm268, %v320, %v322
      %v324 = vrot.slane %v204, 1
      %v325 = vrot.slane %v205, 1
      %v326 = vsel %vm268, %v324, %v325
      %v327 = vrot.slane %v206, 1
      %v328 = vsel %vm268, %v325, %v327
      %v329 = vrot.slane %v207, 1
      %v330 = vrot.slane %v208, 1
      %v331 = vsel %vm268, %v329, %v330
      %v332 = vrot.slane %v209, 1
      %v333 = vsel %vm268, %v330, %v332
      %v334 = vrot.slane %v210, 1
      %v335 = vrot.slane %v211, 1
      %v336 = vsel %vm268, %v334, %v335
      %v337 = vrot.slane %v212, 1
      %v338 = vsel %vm268, %v335, %v337
      %v339 = vrot.slane %v213, 1
      %v340 = vrot.slane %v214, 1
      %v341 = vsel %vm268, %v339, %v340
      %v342 = vrot.slane %v215, 1
      %v343 = vsel %vm268, %v340, %v342
      %v344 = vrot.slane %v216, 1
      %v345 = vrot.slane %v217, 1
      %v346 = vsel %vm268, %v344, %v345
      %v347 = vrot.slane %v218, 1
      %v348 = vsel %vm268, %v345, %v347
      %s349 = scalar_lea.vmem %s1, 4
      %v350 = vld [vmem:[%s349] sm:$0x7]
      %vm351 = vcmask 23552
      %v352 = vsel %vm351, %v271, 0
      %v354 = vsel %vm351, %v273, 0
      %v356 = vsel %vm351, %v276, 0
      %v358 = vsel %vm351, %v278, 0
      %v360 = vsel %vm351, %v281, 0
      %v362 = vsel %vm351, %v283, 0
      %v364 = vsel %vm351, %v286, 0
      %v366 = vsel %vm351, %v288, 0
      %v368 = vsel %vm351, %v291, 0
      %v370 = vsel %vm351, %v293, 0
      %v372 = vsel %vm351, %v296, 0
      %v374 = vsel %vm351, %v298, 0
      %v376 = vsel %vm351, %v301, 0
      %v378 = vsel %vm351, %v303, 0
      %v380 = vsel %vm351, %v306, 0
      %v382 = vsel %vm351, %v308, 0
      %v384 = vsel %vm351, %v311, 0
      %v386 = vsel %vm351, %v313, 0
      %v388 = vsel %vm351, %v316, 0
      %v390 = vsel %vm351, %v318, 0
      %v392 = vsel %vm351, %v321, 0
      %v394 = vsel %vm351, %v323, 0
      %v396 = vsel %vm351, %v326, 0
      %v398 = vsel %vm351, %v328, 0
      %v400 = vsel %vm351, %v331, 0
      %v402 = vsel %vm351, %v333, 0
      %v404 = vsel %vm351, %v336, 0
      %v406 = vsel %vm351, %v338, 0
      %v408 = vsel %vm351, %v341, 0
      %v410 = vsel %vm351, %v343, 0
      %v412 = vsel %vm351, %v346, 0
      %v414 = vsel %vm351, %v348, 0
      %vm416 = vcmask 1042432
      %v418 = vsel %vm416, %v350, 0
      %420 = vmatprep.subr.mxu0 0.0
      %421 = vmatpush1.msra.mxu0 0.0
      %422 = vmatprep.subr.mxu0 0.0
      %423 = vmatpush1.msra.mxu0 0.0
      %424 = vmatprep.subr.mxu0 0.0
      %425 = vmatpush1.msra.mxu0 0.0
      %426 = vmatprep.subr.mxu0 0.0
      %427 = vmatpush1.msra.mxu0 0.0
      %428 = vmatprep.subr.mxu0 0.0
      %429 = vmatpush1.msra.mxu0 0.0
      %430 = vmatprep.subr.mxu0 0.0
      %431 = vmatpush1.msra.mxu0 0.0
      %432 = vmatprep.subr.mxu0 0.0
      %433 = vmatpush1.msra.mxu0 0.0
      %434 = vmatprep.subr.mxu0 0.0
      %435 = vmatpush1.msra.mxu0 0.0
      %436 = vmatprep.subr.mxu0 0.0
      %437 = vmatpush1.msra.mxu0 0.0
      %438 = vmatprep.subr.mxu0 0.0
      %439 = vmatpush1.msra.mxu0 0.0
      %440 = vmatprep.subr.mxu0 0.0
      %441 = vmatpush1.msra.mxu0 0.0
      %442 = vmatprep.subr.mxu0 0.0
      %443 = vmatpush1.msra.mxu0 0.0
      %444 = vmatprep.subr.mxu0 0.0
      %445 = vmatpush1.msra.mxu0 0.0
      %446 = vmatprep.subr.mxu0 0.0
      %447 = vmatpush1.msra.mxu0 0.0
      %448 = vmatprep.subr.mxu0 0.0
      %449 = vmatpush1.msra.mxu0 0.0
      %450 = vmatprep.subr.mxu0 0.0
      %451 = vmatpush1.msra.mxu0 %v418
      %452 = vmatprep.subr.mxu0 0.0
      %453 = vmatpush2.msra.mxu0 0.0
      %454 = vmatprep.subr.mxu0 0.0
      %455 = vmatpush2.msra.mxu0 0.0
      %456 = vmatprep.subr.mxu0 0.0
      %457 = vmatpush2.msra.mxu0 0.0
      %458 = vmatprep.subr.mxu0 0.0
      %459 = vmatpush2.msra.mxu0 0.0
      %460 = vmatprep.subr.mxu0 0.0
      %461 = vmatpush2.msra.mxu0 0.0
      %462 = vmatprep.subr.mxu0 0.0
      %463 = vmatpush2.msra.mxu0 0.0
      %464 = vmatprep.subr.mxu0 0.0
      %465 = vmatpush2.msra.mxu0 0.0
      %466 = vmatprep.subr.mxu0 0.0
      %467 = vmatpush2.msra.mxu0 0.0
      %468 = vmatprep.subr.mxu0 0.0
      %469 = vmatpush2.msra.mxu0 0.0
      %470 = vmatprep.subr.mxu0 0.0
      %471 = vmatpush2.msra.mxu0 0.0
      %472 = vmatprep.subr.mxu0 0.0
      %473 = vmatpush2.msra.mxu0 0.0
      %474 = vmatprep.subr.mxu0 0.0
      %475 = vmatpush2.msra.mxu0 0.0
      %476 = vmatprep.subr.mxu0 0.0
      %477 = vmatpush2.msra.mxu0 0.0
      %478 = vmatprep.subr.mxu0 0.0
      %479 = vmatpush2.msra.mxu0 0.0
      %480 = vmatprep.subr.mxu0 0.0
      %481 = vmatpush2.msra.mxu0 0.0
      %482 = vmatprep.subr.mxu0 0.0
      %483 = vmatpush2.msra.mxu0 0.0
      %484 = vmatprep.mubr.f32.mxu0 0.0
      %485 = vmatmul.mubr.f32.gmra.mxu0 %v352
      %v486 = vpop.f32.mrf.mxu0
      %v487 = vadd.f32 0.0, %v486
      %v488 = vpop.f32.mrf.mxu0
      %489 = vmatprep.mubr.f32.mxu0 0.0
      %490 = vmatmul.mubr.f32.gmra.mxu0 %v354
      %v491 = vpop.f32.mrf.mxu0
      %v492 = vadd.f32 0.0, %v491
      %v493 = vpop.f32.mrf.mxu0
      %494 = vmatprep.mubr.f32.mxu0 0.0
      %495 = vmatmul.mubr.f32.gmra.mxu0 %v356
      %v496 = vpop.f32.mrf.mxu0
      %v497 = vadd.f32 0.0, %v496
      %v498 = vpop.f32.mrf.mxu0
      %499 = vmatprep.mubr.f32.mxu0 0.0
      %500 = vmatmul.mubr.f32.gmra.mxu0 %v358
      %v501 = vpop.f32.mrf.mxu0
      %v502 = vadd.f32 0.0, %v501
      %v503 = vpop.f32.mrf.mxu0
      %504 = vmatprep.mubr.f32.mxu0 0.0
      %505 = vmatmul.mubr.f32.gmra.mxu0 %v360
      %v506 = vpop.f32.mrf.mxu0
      %v507 = vadd.f32 0.0, %v506
      %v508 = vpop.f32.mrf.mxu0
      %509 = vmatprep.mubr.f32.mxu0 0.0
      %510 = vmatmul.mubr.f32.gmra.mxu0 %v362
      %v511 = vpop.f32.mrf.mxu0
      %v512 = vadd.f32 0.0, %v511
      %v513 = vpop.f32.mrf.mxu0
      %514 = vmatprep.mubr.f32.mxu0 0.0
      %515 = vmatmul.mubr.f32.gmra.mxu0 %v364
      %v516 = vpop.f32.mrf.mxu0
      %v517 = vadd.f32 0.0, %v516
      %v518 = vpop.f32.mrf.mxu0
      %519 = vmatprep.mubr.f32.mxu0 0.0
      %520 = vmatmul.mubr.f32.gmra.mxu0 %v366
      %v521 = vpop.f32.mrf.mxu0
      %v522 = vadd.f32 0.0, %v521
      %v523 = vpop.f32.mrf.mxu0
      %524 = vmatprep.mubr.f32.mxu0 0.0
      %525 = vmatmul.mubr.f32.gmra.mxu0 %v368
      %v526 = vpop.f32.mrf.mxu0
      %v527 = vadd.f32 0.0, %v526
      %v528 = vpop.f32.mrf.mxu0
      %529 = vmatprep.mubr.f32.mxu0 0.0
      %530 = vmatmul.mubr.f32.gmra.mxu0 %v370
      %v531 = vpop.f32.mrf.mxu0
      %v532 = vadd.f32 0.0, %v531
      %v533 = vpop.f32.mrf.mxu0
      %534 = vmatprep.mubr.f32.mxu0 0.0
      %535 = vmatmul.mubr.f32.gmra.mxu0 %v372
      %v536 = vpop.f32.mrf.mxu0
      %v537 = vadd.f32 0.0, %v536
      %v538 = vpop.f32.mrf.mxu0
      %539 = vmatprep.mubr.f32.mxu0 0.0
      %540 = vmatmul.mubr.f32.gmra.mxu0 %v374
      %v541 = vpop.f32.mrf.mxu0
      %v542 = vadd.f32 0.0, %v541
      %v543 = vpop.f32.mrf.mxu0
      %544 = vmatprep.mubr.f32.mxu0 0.0
      %545 = vmatmul.mubr.f32.gmra.mxu0 %v376
      %v546 = vpop.f32.mrf.mxu0
      %v547 = vadd.f32 0.0, %v546
      %v548 = vpop.f32.mrf.mxu0
      %549 = vmatprep.mubr.f32.mxu0 0.0
      %550 = vmatmul.mubr.f32.gmra.mxu0 %v378
      %v551 = vpop.f32.mrf.mxu0
      %v552 = vadd.f32 0.0, %v551
      %v553 = vpop.f32.mrf.mxu0
      %554 = vmatprep.mubr.f32.mxu0 0.0
      %555 = vmatmul.mubr.f32.gmra.mxu0 %v380
      %v556 = vpop.f32.mrf.mxu0
      %v557 = vadd.f32 0.0, %v556
      %v558 = vpop.f32.mrf.mxu0
      %559 = vmatprep.mubr.f32.mxu0 0.0
      %560 = vmatmul.mubr.f32.gmra.mxu0 %v382
      %v561 = vpop.f32.mrf.mxu0
      %v562 = vadd.f32 0.0, %v561
      %v563 = vpop.f32.mrf.mxu0
      %564 = vmatprep.mubr.f32.mxu0 0.0
      %565 = vmatmul.mubr.f32.gmra.mxu0 %v384
      %v566 = vpop.f32.mrf.mxu0
      %v567 = vadd.f32 0.0, %v566
      %v568 = vpop.f32.mrf.mxu0
      %569 = vmatprep.mubr.f32.mxu0 0.0
      %570 = vmatmul.mubr.f32.gmra.mxu0 %v386
      %v571 = vpop.f32.mrf.mxu0
      %v572 = vadd.f32 0.0, %v571
      %v573 = vpop.f32.mrf.mxu0
      %574 = vmatprep.mubr.f32.mxu0 0.0
      %575 = vmatmul.mubr.f32.gmra.mxu0 %v388
      %v576 = vpop.f32.mrf.mxu0
      %v577 = vadd.f32 0.0, %v576
      %v578 = vpop.f32.mrf.mxu0
      %579 = vmatprep.mubr.f32.mxu0 0.0
      %580 = vmatmul.mubr.f32.gmra.mxu0 %v390
      %v581 = vpop.f32.mrf.mxu0
      %v582 = vadd.f32 0.0, %v581
      %v583 = vpop.f32.mrf.mxu0
      %584 = vmatprep.mubr.f32.mxu0 0.0
      %585 = vmatmul.mubr.f32.gmra.mxu0 %v392
      %v586 = vpop.f32.mrf.mxu0
      %v587 = vadd.f32 0.0, %v586
      %v588 = vpop.f32.mrf.mxu0
      %589 = vmatprep.mubr.f32.mxu0 0.0
      %590 = vmatmul.mubr.f32.gmra.mxu0 %v394
      %v591 = vpop.f32.mrf.mxu0
      %v592 = vadd.f32 0.0, %v591
      %v593 = vpop.f32.mrf.mxu0
      %594 = vmatprep.mubr.f32.mxu0 0.0
      %595 = vmatmul.mubr.f32.gmra.mxu0 %v396
      %v596 = vpop.f32.mrf.mxu0
      %v597 = vadd.f32 0.0, %v596
      %v598 = vpop.f32.mrf.mxu0
      %599 = vmatprep.mubr.f32.mxu0 0.0
      %600 = vmatmul.mubr.f32.gmra.mxu0 %v398
      %v601 = vpop.f32.mrf.mxu0
      %v602 = vadd.f32 0.0, %v601
      %v603 = vpop.f32.mrf.mxu0
      %604 = vmatprep.mubr.f32.mxu0 0.0
      %605 = vmatmul.mubr.f32.gmra.mxu0 %v400
      %v606 = vpop.f32.mrf.mxu0
      %v607 = vadd.f32 0.0, %v606
      %v608 = vpop.f32.mrf.mxu0
      %609 = vmatprep.mubr.f32.mxu0 0.0
      %610 = vmatmul.mubr.f32.gmra.mxu0 %v402
      %v611 = vpop.f32.mrf.mxu0
      %v612 = vadd.f32 0.0, %v611
      %v613 = vpop.f32.mrf.mxu0
      %614 = vmatprep.mubr.f32.mxu0 0.0
      %615 = vmatmul.mubr.f32.gmra.mxu0 %v404
      %v616 = vpop.f32.mrf.mxu0
      %v617 = vadd.f32 0.0, %v616
      %v618 = vpop.f32.mrf.mxu0
      %619 = vmatprep.mubr.f32.mxu0 0.0
      %620 = vmatmul.mubr.f32.gmra.mxu0 %v406
      %v621 = vpop.f32.mrf.mxu0
      %v622 = vadd.f32 0.0, %v621
      %v623 = vpop.f32.mrf.mxu0
      %624 = vmatprep.mubr.f32.mxu0 0.0
      %625 = vmatmul.mubr.f32.gmra.mxu0 %v408
      %v626 = vpop.f32.mrf.mxu0
      %v627 = vadd.f32 0.0, %v626
      %v628 = vpop.f32.mrf.mxu0
      %629 = vmatprep.mubr.f32.mxu0 0.0
      %630 = vmatmul.mubr.f32.gmra.mxu0 %v410
      %v631 = vpop.f32.mrf.mxu0
      %v632 = vadd.f32 0.0, %v631
      %v633 = vpop.f32.mrf.mxu0
      %634 = vmatprep.mubr.f32.mxu0 0.0
      %635 = vmatmul.mubr.f32.gmra.mxu0 %v412
      %v636 = vpop.f32.mrf.mxu0
      %v637 = vadd.f32 0.0, %v636
      %v638 = vpop.f32.mrf.mxu0
      %639 = vmatprep.mubr.f32.mxu0 0.0
      %640 = vmatmul.mubr.f32.gmra.mxu0 %v414
      %v641 = vpop.f32.mrf.mxu0
      %v642 = vadd.f32 0.0, %v641
      %v643 = vpop.f32.mrf.mxu0
      %644 = vdwg.mxu0
      %v645 = vsel %vm351, %v171, 0
      %v647 = vsel %vm351, %v172, 0
      %v649 = vsel %vm351, %v174, 0
      %v651 = vsel %vm351, %v175, 0
      %v653 = vsel %vm351, %v177, 0
      %v655 = vsel %vm351, %v178, 0
      %v657 = vsel %vm351, %v180, 0
      %v659 = vsel %vm351, %v181, 0
      %v661 = vsel %vm351, %v183, 0
      %v663 = vsel %vm351, %v184, 0
      %v665 = vsel %vm351, %v186, 0
      %v667 = vsel %vm351, %v187, 0
      %v669 = vsel %vm351, %v189, 0
      %v671 = vsel %vm351, %v190, 0
      %v673 = vsel %vm351, %v192, 0
      %v675 = vsel %vm351, %v193, 0
      %v677 = vsel %vm351, %v195, 0
      %v679 = vsel %vm351, %v196, 0
      %v681 = vsel %vm351, %v198, 0
      %v683 = vsel %vm351, %v199, 0
      %v685 = vsel %vm351, %v201, 0
      %v687 = vsel %vm351, %v202, 0
      %v689 = vsel %vm351, %v204, 0
      %v691 = vsel %vm351, %v205, 0
      %v693 = vsel %vm351, %v207, 0
      %v695 = vsel %vm351, %v208, 0
      %v697 = vsel %vm351, %v210, 0
      %v699 = vsel %vm351, %v211, 0
      %v701 = vsel %vm351, %v213, 0
      %v703 = vsel %vm351, %v214, 0
      %v705 = vsel %vm351, %v216, 0
      %v707 = vsel %vm351, %v217, 0
      %v710 = vsel %vm416, %v219, 0
      %712 = vmatprep.subr.mxu0 0.0
      %713 = vmatpush1.msra.mxu0 0.0
      %714 = vmatprep.subr.mxu0 0.0
      %715 = vmatpush1.msra.mxu0 0.0
      %716 = vmatprep.subr.mxu0 0.0
      %717 = vmatpush1.msra.mxu0 0.0
      %718 = vmatprep.subr.mxu0 0.0
      %719 = vmatpush1.msra.mxu0 0.0
      %720 = vmatprep.subr.mxu0 0.0
      %721 = vmatpush1.msra.mxu0 0.0
      %722 = vmatprep.subr.mxu0 0.0
      %723 = vmatpush1.msra.mxu0 0.0
      %724 = vmatprep.subr.mxu0 0.0
      %725 = vmatpush1.msra.mxu0 0.0
      %726 = vmatprep.subr.mxu0 0.0
      %727 = vmatpush1.msra.mxu0 0.0
      %728 = vmatprep.subr.mxu0 0.0
      %729 = vmatpush1.msra.mxu0 0.0
      %730 = vmatprep.subr.mxu0 0.0
      %731 = vmatpush1.msra.mxu0 0.0
      %732 = vmatprep.subr.mxu0 0.0
      %733 = vmatpush1.msra.mxu0 0.0
      %734 = vmatprep.subr.mxu0 0.0
      %735 = vmatpush1.msra.mxu0 0.0
      %736 = vmatprep.subr.mxu0 0.0
      %737 = vmatpush1.msra.mxu0 0.0
      %738 = vmatprep.subr.mxu0 0.0
      %739 = vmatpush1.msra.mxu0 0.0
      %740 = vmatprep.subr.mxu0 0.0
      %741 = vmatpush1.msra.mxu0 0.0
      %742 = vmatprep.subr.mxu0 0.0
      %743 = vmatpush1.msra.mxu0 %v710
      %744 = vmatprep.subr.mxu0 0.0
      %745 = vmatpush2.msra.mxu0 0.0
      %746 = vmatprep.subr.mxu0 0.0
      %747 = vmatpush2.msra.mxu0 0.0
      %748 = vmatprep.subr.mxu0 0.0
      %749 = vmatpush2.msra.mxu0 0.0
      %750 = vmatprep.subr.mxu0 0.0
      %751 = vmatpush2.msra.mxu0 0.0
      %752 = vmatprep.subr.mxu0 0.0
      %753 = vmatpush2.msra.mxu0 0.0
      %754 = vmatprep.subr.mxu0 0.0
      %755 = vmatpush2.msra.mxu0 0.0
      %756 = vmatprep.subr.mxu0 0.0
      %757 = vmatpush2.msra.mxu0 0.0
      %758 = vmatprep.subr.mxu0 0.0
      %759 = vmatpush2.msra.mxu0 0.0
      %760 = vmatprep.subr.mxu0 0.0
      %761 = vmatpush2.msra.mxu0 0.0
      %762 = vmatprep.subr.mxu0 0.0
      %763 = vmatpush2.msra.mxu0 0.0
      %764 = vmatprep.subr.mxu0 0.0
      %765 = vmatpush2.msra.mxu0 0.0
      %766 = vmatprep.subr.mxu0 0.0
      %767 = vmatpush2.msra.mxu0 0.0
      %768 = vmatprep.subr.mxu0 0.0
      %769 = vmatpush2.msra.mxu0 0.0
      %770 = vmatprep.subr.mxu0 0.0
      %771 = vmatpush2.msra.mxu0 0.0
      %772 = vmatprep.subr.mxu0 0.0
      %773 = vmatpush2.msra.mxu0 0.0
      %774 = vmatprep.subr.mxu0 0.0
      %775 = vmatpush2.msra.mxu0 0.0
      %776 = vmatprep.mubr.f32.mxu0 0.0
      %777 = vmatmul.mubr.f32.gmra.mxu0 %v645
      %v778 = vpop.f32.mrf.mxu0
      %v779 = vadd.f32 %v487, %v778
      %v780 = vpop.f32.mrf.mxu0
      %781 = vmatprep.mubr.f32.mxu0 0.0
      %782 = vmatmul.mubr.f32.gmra.mxu0 %v647
      %v783 = vpop.f32.mrf.mxu0
      %v784 = vadd.f32 %v492, %v783
      %v785 = vpop.f32.mrf.mxu0
      %786 = vmatprep.mubr.f32.mxu0 0.0
      %787 = vmatmul.mubr.f32.gmra.mxu0 %v649
      %v788 = vpop.f32.mrf.mxu0
      %v789 = vadd.f32 %v497, %v788
      %v790 = vpop.f32.mrf.mxu0
      %791 = vmatprep.mubr.f32.mxu0 0.0
      %792 = vmatmul.mubr.f32.gmra.mxu0 %v651
      %v793 = vpop.f32.mrf.mxu0
      %v794 = vadd.f32 %v502, %v793
      %v795 = vpop.f32.mrf.mxu0
      %796 = vmatprep.mubr.f32.mxu0 0.0
      %797 = vmatmul.mubr.f32.gmra.mxu0 %v653
      %v798 = vpop.f32.mrf.mxu0
      %v799 = vadd.f32 %v507, %v798
      %v800 = vpop.f32.mrf.mxu0
      %801 = vmatprep.mubr.f32.mxu0 0.0
      %802 = vmatmul.mubr.f32.gmra.mxu0 %v655
      %v803 = vpop.f32.mrf.mxu0
      %v804 = vadd.f32 %v512, %v803
      %v805 = vpop.f32.mrf.mxu0
      %806 = vmatprep.mubr.f32.mxu0 0.0
      %807 = vmatmul.mubr.f32.gmra.mxu0 %v657
      %v808 = vpop.f32.mrf.mxu0
      %v809 = vadd.f32 %v517, %v808
      %v810 = vpop.f32.mrf.mxu0
      %811 = vmatprep.mubr.f32.mxu0 0.0
      %812 = vmatmul.mubr.f32.gmra.mxu0 %v659
      %v813 = vpop.f32.mrf.mxu0
      %v814 = vadd.f32 %v522, %v813
      %v815 = vpop.f32.mrf.mxu0
      %816 = vmatprep.mubr.f32.mxu0 0.0
      %817 = vmatmul.mubr.f32.gmra.mxu0 %v661
      %v818 = vpop.f32.mrf.mxu0
      %v819 = vadd.f32 %v527, %v818
      %v820 = vpop.f32.mrf.mxu0
      %821 = vmatprep.mubr.f32.mxu0 0.0
      %822 = vmatmul.mubr.f32.gmra.mxu0 %v663
      %v823 = vpop.f32.mrf.mxu0
      %v824 = vadd.f32 %v532, %v823
      %v825 = vpop.f32.mrf.mxu0
      %826 = vmatprep.mubr.f32.mxu0 0.0
      %827 = vmatmul.mubr.f32.gmra.mxu0 %v665
      %v828 = vpop.f32.mrf.mxu0
      %v829 = vadd.f32 %v537, %v828
      %v830 = vpop.f32.mrf.mxu0
      %831 = vmatprep.mubr.f32.mxu0 0.0
      %832 = vmatmul.mubr.f32.gmra.mxu0 %v667
      %v833 = vpop.f32.mrf.mxu0
      %v834 = vadd.f32 %v542, %v833
      %v835 = vpop.f32.mrf.mxu0
      %836 = vmatprep.mubr.f32.mxu0 0.0
      %837 = vmatmul.mubr.f32.gmra.mxu0 %v669
      %v838 = vpop.f32.mrf.mxu0
      %v839 = vadd.f32 %v547, %v838
      %v840 = vpop.f32.mrf.mxu0
      %841 = vmatprep.mubr.f32.mxu0 0.0
      %842 = vmatmul.mubr.f32.gmra.mxu0 %v671
      %v843 = vpop.f32.mrf.mxu0
      %v844 = vadd.f32 %v552, %v843
      %v845 = vpop.f32.mrf.mxu0
      %846 = vmatprep.mubr.f32.mxu0 0.0
      %847 = vmatmul.mubr.f32.gmra.mxu0 %v673
      %v848 = vpop.f32.mrf.mxu0
      %v849 = vadd.f32 %v557, %v848
      %v850 = vpop.f32.mrf.mxu0
      %851 = vmatprep.mubr.f32.mxu0 0.0
      %852 = vmatmul.mubr.f32.gmra.mxu0 %v675
      %v853 = vpop.f32.mrf.mxu0
      %v854 = vadd.f32 %v562, %v853
      %v855 = vpop.f32.mrf.mxu0
      %856 = vmatprep.mubr.f32.mxu0 0.0
      %857 = vmatmul.mubr.f32.gmra.mxu0 %v677
      %v858 = vpop.f32.mrf.mxu0
      %v859 = vadd.f32 %v567, %v858
      %v860 = vpop.f32.mrf.mxu0
      %861 = vmatprep.mubr.f32.mxu0 0.0
      %862 = vmatmul.mubr.f32.gmra.mxu0 %v679
      %v863 = vpop.f32.mrf.mxu0
      %v864 = vadd.f32 %v572, %v863
      %v865 = vpop.f32.mrf.mxu0
      %866 = vmatprep.mubr.f32.mxu0 0.0
      %867 = vmatmul.mubr.f32.gmra.mxu0 %v681
      %v868 = vpop.f32.mrf.mxu0
      %v869 = vadd.f32 %v577, %v868
      %v870 = vpop.f32.mrf.mxu0
      %871 = vmatprep.mubr.f32.mxu0 0.0
      %872 = vmatmul.mubr.f32.gmra.mxu0 %v683
      %v873 = vpop.f32.mrf.mxu0
      %v874 = vadd.f32 %v582, %v873
      %v875 = vpop.f32.mrf.mxu0
      %876 = vmatprep.mubr.f32.mxu0 0.0
      %877 = vmatmul.mubr.f32.gmra.mxu0 %v685
      %v878 = vpop.f32.mrf.mxu0
      %v879 = vadd.f32 %v587, %v878
      %v880 = vpop.f32.mrf.mxu0
      %881 = vmatprep.mubr.f32.mxu0 0.0
      %882 = vmatmul.mubr.f32.gmra.mxu0 %v687
      %v883 = vpop.f32.mrf.mxu0
      %v884 = vadd.f32 %v592, %v883
      %v885 = vpop.f32.mrf.mxu0
      %886 = vmatprep.mubr.f32.mxu0 0.0
      %887 = vmatmul.mubr.f32.gmra.mxu0 %v689
      %v888 = vpop.f32.mrf.mxu0
      %v889 = vadd.f32 %v597, %v888
      %v890 = vpop.f32.mrf.mxu0
      %891 = vmatprep.mubr.f32.mxu0 0.0
      %892 = vmatmul.mubr.f32.gmra.mxu0 %v691
      %v893 = vpop.f32.mrf.mxu0
      %v894 = vadd.f32 %v602, %v893
      %v895 = vpop.f32.mrf.mxu0
      %896 = vmatprep.mubr.f32.mxu0 0.0
      %897 = vmatmul.mubr.f32.gmra.mxu0 %v693
      %v898 = vpop.f32.mrf.mxu0
      %v899 = vadd.f32 %v607, %v898
      %v900 = vpop.f32.mrf.mxu0
      %901 = vmatprep.mubr.f32.mxu0 0.0
      %902 = vmatmul.mubr.f32.gmra.mxu0 %v695
      %v903 = vpop.f32.mrf.mxu0
      %v904 = vadd.f32 %v612, %v903
      %v905 = vpop.f32.mrf.mxu0
      %906 = vmatprep.mubr.f32.mxu0 0.0
      %907 = vmatmul.mubr.f32.gmra.mxu0 %v697
      %v908 = vpop.f32.mrf.mxu0
      %v909 = vadd.f32 %v617, %v908
      %v910 = vpop.f32.mrf.mxu0
      %911 = vmatprep.mubr.f32.mxu0 0.0
      %912 = vmatmul.mubr.f32.gmra.mxu0 %v699
      %v913 = vpop.f32.mrf.mxu0
      %v914 = vadd.f32 %v622, %v913
      %v915 = vpop.f32.mrf.mxu0
      %916 = vmatprep.mubr.f32.mxu0 0.0
      %917 = vmatmul.mubr.f32.gmra.mxu0 %v701
      %v918 = vpop.f32.mrf.mxu0
      %v919 = vadd.f32 %v627, %v918
      %v920 = vpop.f32.mrf.mxu0
      %921 = vmatprep.mubr.f32.mxu0 0.0
      %922 = vmatmul.mubr.f32.gmra.mxu0 %v703
      %v923 = vpop.f32.mrf.mxu0
      %v924 = vadd.f32 %v632, %v923
      %v925 = vpop.f32.mrf.mxu0
      %926 = vmatprep.mubr.f32.mxu0 0.0
      %927 = vmatmul.mubr.f32.gmra.mxu0 %v705
      %v928 = vpop.f32.mrf.mxu0
      %v929 = vadd.f32 %v637, %v928
      %v930 = vpop.f32.mrf.mxu0
      %931 = vmatprep.mubr.f32.mxu0 0.0
      %932 = vmatmul.mubr.f32.gmra.mxu0 %v707
      %v933 = vpop.f32.mrf.mxu0
      %v934 = vadd.f32 %v642, %v933
      %v935 = vpop.f32.mrf.mxu0
      %936 = vdwg.mxu0
      %vm937 = vcmask 1045504
      %v938 = vrot.slane %v171, 2
      %v939 = vrot.slane %v172, 2
      %v940 = vsel %vm937, %v938, %v939
      %v941 = vrot.slane %v173, 2
      %v942 = vsel %vm937, %v939, %v941
      %v943 = vrot.slane %v174, 2
      %v944 = vrot.slane %v175, 2
      %v945 = vsel %vm937, %v943, %v944
      %v946 = vrot.slane %v176, 2
      %v947 = vsel %vm937, %v944, %v946
      %v948 = vrot.slane %v177, 2
      %v949 = vrot.slane %v178, 2
      %v950 = vsel %vm937, %v948, %v949
      %v951 = vrot.slane %v179, 2
      %v952 = vsel %vm937, %v949, %v951
      %v953 = vrot.slane %v180, 2
      %v954 = vrot.slane %v181, 2
      %v955 = vsel %vm937, %v953, %v954
      %v956 = vrot.slane %v182, 2
      %v957 = vsel %vm937, %v954, %v956
      %v958 = vrot.slane %v183, 2
      %v959 = vrot.slane %v184, 2
      %v960 = vsel %vm937, %v958, %v959
      %v961 = vrot.slane %v185, 2
      %v962 = vsel %vm937, %v959, %v961
      %v963 = vrot.slane %v186, 2
      %v964 = vrot.slane %v187, 2
      %v965 = vsel %vm937, %v963, %v964
      %v966 = vrot.slane %v188, 2
      %v967 = vsel %vm937, %v964, %v966
      %v968 = vrot.slane %v189, 2
      %v969 = vrot.slane %v190, 2
      %v970 = vsel %vm937, %v968, %v969
      %v971 = vrot.slane %v191, 2
      %v972 = vsel %vm937, %v969, %v971
      %v973 = vrot.slane %v192, 2
      %v974 = vrot.slane %v193, 2
      %v975 = vsel %vm937, %v973, %v974
      %v976 = vrot.slane %v194, 2
      %v977 = vsel %vm937, %v974, %v976
      %v978 = vrot.slane %v195, 2
      %v979 = vrot.slane %v196, 2
      %v980 = vsel %vm937, %v978, %v979
      %v981 = vrot.slane %v197, 2
      %v982 = vsel %vm937, %v979, %v981
      %v983 = vrot.slane %v198, 2
      %v984 = vrot.slane %v199, 2
      %v985 = vsel %vm937, %v983, %v984
      %v986 = vrot.slane %v200, 2
      %v987 = vsel %vm937, %v984, %v986
      %v988 = vrot.slane %v201, 2
      %v989 = vrot.slane %v202, 2
      %v990 = vsel %vm937, %v988, %v989
      %v991 = vrot.slane %v203, 2
      %v992 = vsel %vm937, %v989, %v991
      %v993 = vrot.slane %v204, 2
      %v994 = vrot.slane %v205, 2
      %v995 = vsel %vm937, %v993, %v994
      %v996 = vrot.slane %v206, 2
      %v997 = vsel %vm937, %v994, %v996
      %v998 = vrot.slane %v207, 2
      %v999 = vrot.slane %v208, 2
      %v1000 = vsel %vm937, %v998, %v999
      %v1001 = vrot.slane %v209, 2
      %v1002 = vsel %vm937, %v999, %v1001
      %v1003 = vrot.slane %v210, 2
      %v1004 = vrot.slane %v211, 2
      %v1005 = vsel %vm937, %v1003, %v1004
      %v1006 = vrot.slane %v212, 2
      %v1007 = vsel %vm937, %v1004, %v1006
      %v1008 = vrot.slane %v213, 2
      %v1009 = vrot.slane %v214, 2
      %v1010 = vsel %vm937, %v1008, %v1009
      %v1011 = vrot.slane %v215, 2
      %v1012 = vsel %vm937, %v1009, %v1011
      %v1013 = vrot.slane %v216, 2
      %v1014 = vrot.slane %v217, 2
      %v1015 = vsel %vm937, %v1013, %v1014
      %v1016 = vrot.slane %v218, 2
      %v1017 = vsel %vm937, %v1014, %v1016
      %s1018 = scalar_lea.vmem %s1, 8
      %v1019 = vld [vmem:[%s1018] sm:$0x7]
      %v1020 = vsel %vm351, %v940, 0
      %v1022 = vsel %vm351, %v942, 0
      %v1024 = vsel %vm351, %v945, 0
      %v1026 = vsel %vm351, %v947, 0
      %v1028 = vsel %vm351, %v950, 0
      %v1030 = vsel %vm351, %v952, 0
      %v1032 = vsel %vm351, %v955, 0
      %v1034 = vsel %vm351, %v957, 0
      %v1036 = vsel %vm351, %v960, 0
      %v1038 = vsel %vm351, %v962, 0
      %v1040 = vsel %vm351, %v965, 0
      %v1042 = vsel %vm351, %v967, 0
      %v1044 = vsel %vm351, %v970, 0
      %v1046 = vsel %vm351, %v972, 0
      %v1048 = vsel %vm351, %v975, 0
      %v1050 = vsel %vm351, %v977, 0
      %v1052 = vsel %vm351, %v980, 0
      %v1054 = vsel %vm351, %v982, 0
      %v1056 = vsel %vm351, %v985, 0
      %v1058 = vsel %vm351, %v987, 0
      %v1060 = vsel %vm351, %v990, 0
      %v1062 = vsel %vm351, %v992, 0
      %v1064 = vsel %vm351, %v995, 0
      %v1066 = vsel %vm351, %v997, 0
      %v1068 = vsel %vm351, %v1000, 0
      %v1070 = vsel %vm351, %v1002, 0
      %v1072 = vsel %vm351, %v1005, 0
      %v1074 = vsel %vm351, %v1007, 0
      %v1076 = vsel %vm351, %v1010, 0
      %v1078 = vsel %vm351, %v1012, 0
      %v1080 = vsel %vm351, %v1015, 0
      %v1082 = vsel %vm351, %v1017, 0
      %v1085 = vsel %vm416, %v1019, 0
      %1087 = vmatprep.subr.mxu0 0.0
      %1088 = vmatpush1.msra.mxu0 0.0
      %1089 = vmatprep.subr.mxu0 0.0
      %1090 = vmatpush1.msra.mxu0 0.0
      %1091 = vmatprep.subr.mxu0 0.0
      %1092 = vmatpush1.msra.mxu0 0.0
      %1093 = vmatprep.subr.mxu0 0.0
      %1094 = vmatpush1.msra.mxu0 0.0
      %1095 = vmatprep.subr.mxu0 0.0
      %1096 = vmatpush1.msra.mxu0 0.0
      %1097 = vmatprep.subr.mxu0 0.0
      %1098 = vmatpush1.msra.mxu0 0.0
      %1099 = vmatprep.subr.mxu0 0.0
      %1100 = vmatpush1.msra.mxu0 0.0
      %1101 = vmatprep.subr.mxu0 0.0
      %1102 = vmatpush1.msra.mxu0 0.0
      %1103 = vmatprep.subr.mxu0 0.0
      %1104 = vmatpush1.msra.mxu0 0.0
      %1105 = vmatprep.subr.mxu0 0.0
      %1106 = vmatpush1.msra.mxu0 0.0
      %1107 = vmatprep.subr.mxu0 0.0
      %1108 = vmatpush1.msra.mxu0 0.0
      %1109 = vmatprep.subr.mxu0 0.0
      %1110 = vmatpush1.msra.mxu0 0.0
      %1111 = vmatprep.subr.mxu0 0.0
      %1112 = vmatpush1.msra.mxu0 0.0
      %1113 = vmatprep.subr.mxu0 0.0
      %1114 = vmatpush1.msra.mxu0 0.0
      %1115 = vmatprep.subr.mxu0 0.0
      %1116 = vmatpush1.msra.mxu0 0.0
      %1117 = vmatprep.subr.mxu0 0.0
      %1118 = vmatpush1.msra.mxu0 %v1085
      %1119 = vmatprep.subr.mxu0 0.0
      %1120 = vmatpush2.msra.mxu0 0.0
      %1121 = vmatprep.subr.mxu0 0.0
      %1122 = vmatpush2.msra.mxu0 0.0
      %1123 = vmatprep.subr.mxu0 0.0
      %1124 = vmatpush2.msra.mxu0 0.0
      %1125 = vmatprep.subr.mxu0 0.0
      %1126 = vmatpush2.msra.mxu0 0.0
      %1127 = vmatprep.subr.mxu0 0.0
      %1128 = vmatpush2.msra.mxu0 0.0
      %1129 = vmatprep.subr.mxu0 0.0
      %1130 = vmatpush2.msra.mxu0 0.0
      %1131 = vmatprep.subr.mxu0 0.0
      %1132 = vmatpush2.msra.mxu0 0.0
      %1133 = vmatprep.subr.mxu0 0.0
      %1134 = vmatpush2.msra.mxu0 0.0
      %1135 = vmatprep.subr.mxu0 0.0
      %1136 = vmatpush2.msra.mxu0 0.0
      %1137 = vmatprep.subr.mxu0 0.0
      %1138 = vmatpush2.msra.mxu0 0.0
      %1139 = vmatprep.subr.mxu0 0.0
      %1140 = vmatpush2.msra.mxu0 0.0
      %1141 = vmatprep.subr.mxu0 0.0
      %1142 = vmatpush2.msra.mxu0 0.0
      %1143 = vmatprep.subr.mxu0 0.0
      %1144 = vmatpush2.msra.mxu0 0.0
      %1145 = vmatprep.subr.mxu0 0.0
      %1146 = vmatpush2.msra.mxu0 0.0
      %1147 = vmatprep.subr.mxu0 0.0
      %1148 = vmatpush2.msra.mxu0 0.0
      %1149 = vmatprep.subr.mxu0 0.0
      %1150 = vmatpush2.msra.mxu0 0.0
      %1151 = vmatprep.mubr.f32.mxu0 0.0
      %1152 = vmatmul.mubr.f32.gmra.mxu0 %v1020
      %v1153 = vpop.f32.mrf.mxu0
      %v1154 = vadd.f32 0.0, %v1153
      %v1155 = vpop.f32.mrf.mxu0
      %1156 = vmatprep.mubr.f32.mxu0 0.0
      %1157 = vmatmul.mubr.f32.gmra.mxu0 %v1022
      %v1158 = vpop.f32.mrf.mxu0
      %v1159 = vadd.f32 0.0, %v1158
      %v1160 = vpop.f32.mrf.mxu0
      %1161 = vmatprep.mubr.f32.mxu0 0.0
      %1162 = vmatmul.mubr.f32.gmra.mxu0 %v1024
      %v1163 = vpop.f32.mrf.mxu0
      %v1164 = vadd.f32 0.0, %v1163
      %v1165 = vpop.f32.mrf.mxu0
      %1166 = vmatprep.mubr.f32.mxu0 0.0
      %1167 = vmatmul.mubr.f32.gmra.mxu0 %v1026
      %v1168 = vpop.f32.mrf.mxu0
      %v1169 = vadd.f32 0.0, %v1168
      %v1170 = vpop.f32.mrf.mxu0
      %1171 = vmatprep.mubr.f32.mxu0 0.0
      %1172 = vmatmul.mubr.f32.gmra.mxu0 %v1028
      %v1173 = vpop.f32.mrf.mxu0
      %v1174 = vadd.f32 0.0, %v1173
      %v1175 = vpop.f32.mrf.mxu0
      %1176 = vmatprep.mubr.f32.mxu0 0.0
      %1177 = vmatmul.mubr.f32.gmra.mxu0 %v1030
      %v1178 = vpop.f32.mrf.mxu0
      %v1179 = vadd.f32 0.0, %v1178
      %v1180 = vpop.f32.mrf.mxu0
      %1181 = vmatprep.mubr.f32.mxu0 0.0
      %1182 = vmatmul.mubr.f32.gmra.mxu0 %v1032
      %v1183 = vpop.f32.mrf.mxu0
      %v1184 = vadd.f32 0.0, %v1183
      %v1185 = vpop.f32.mrf.mxu0
      %1186 = vmatprep.mubr.f32.mxu0 0.0
      %1187 = vmatmul.mubr.f32.gmra.mxu0 %v1034
      %v1188 = vpop.f32.mrf.mxu0
      %v1189 = vadd.f32 0.0, %v1188
      %v1190 = vpop.f32.mrf.mxu0
      %1191 = vmatprep.mubr.f32.mxu0 0.0
      %1192 = vmatmul.mubr.f32.gmra.mxu0 %v1036
      %v1193 = vpop.f32.mrf.mxu0
      %v1194 = vadd.f32 0.0, %v1193
      %v1195 = vpop.f32.mrf.mxu0
      %1196 = vmatprep.mubr.f32.mxu0 0.0
      %1197 = vmatmul.mubr.f32.gmra.mxu0 %v1038
      %v1198 = vpop.f32.mrf.mxu0
      %v1199 = vadd.f32 0.0, %v1198
      %v1200 = vpop.f32.mrf.mxu0
      %1201 = vmatprep.mubr.f32.mxu0 0.0
      %1202 = vmatmul.mubr.f32.gmra.mxu0 %v1040
      %v1203 = vpop.f32.mrf.mxu0
      %v1204 = vadd.f32 0.0, %v1203
      %v1205 = vpop.f32.mrf.mxu0
      %1206 = vmatprep.mubr.f32.mxu0 0.0
      %1207 = vmatmul.mubr.f32.gmra.mxu0 %v1042
      %v1208 = vpop.f32.mrf.mxu0
      %v1209 = vadd.f32 0.0, %v1208
      %v1210 = vpop.f32.mrf.mxu0
      %1211 = vmatprep.mubr.f32.mxu0 0.0
      %1212 = vmatmul.mubr.f32.gmra.mxu0 %v1044
      %v1213 = vpop.f32.mrf.mxu0
      %v1214 = vadd.f32 0.0, %v1213
      %v1215 = vpop.f32.mrf.mxu0
      %1216 = vmatprep.mubr.f32.mxu0 0.0
      %1217 = vmatmul.mubr.f32.gmra.mxu0 %v1046
      %v1218 = vpop.f32.mrf.mxu0
      %v1219 = vadd.f32 0.0, %v1218
      %v1220 = vpop.f32.mrf.mxu0
      %1221 = vmatprep.mubr.f32.mxu0 0.0
      %1222 = vmatmul.mubr.f32.gmra.mxu0 %v1048
      %v1223 = vpop.f32.mrf.mxu0
      %v1224 = vadd.f32 0.0, %v1223
      %v1225 = vpop.f32.mrf.mxu0
      %1226 = vmatprep.mubr.f32.mxu0 0.0
      %1227 = vmatmul.mubr.f32.gmra.mxu0 %v1050
      %v1228 = vpop.f32.mrf.mxu0
      %v1229 = vadd.f32 0.0, %v1228
      %v1230 = vpop.f32.mrf.mxu0
      %1231 = vmatprep.mubr.f32.mxu0 0.0
      %1232 = vmatmul.mubr.f32.gmra.mxu0 %v1052
      %v1233 = vpop.f32.mrf.mxu0
      %v1234 = vadd.f32 0.0, %v1233
      %v1235 = vpop.f32.mrf.mxu0
      %1236 = vmatprep.mubr.f32.mxu0 0.0
      %1237 = vmatmul.mubr.f32.gmra.mxu0 %v1054
      %v1238 = vpop.f32.mrf.mxu0
      %v1239 = vadd.f32 0.0, %v1238
      %v1240 = vpop.f32.mrf.mxu0
      %1241 = vmatprep.mubr.f32.mxu0 0.0
      %1242 = vmatmul.mubr.f32.gmra.mxu0 %v1056
      %v1243 = vpop.f32.mrf.mxu0
      %v1244 = vadd.f32 0.0, %v1243
      %v1245 = vpop.f32.mrf.mxu0
      %1246 = vmatprep.mubr.f32.mxu0 0.0
      %1247 = vmatmul.mubr.f32.gmra.mxu0 %v1058
      %v1248 = vpop.f32.mrf.mxu0
      %v1249 = vadd.f32 0.0, %v1248
      %v1250 = vpop.f32.mrf.mxu0
      %1251 = vmatprep.mubr.f32.mxu0 0.0
      %1252 = vmatmul.mubr.f32.gmra.mxu0 %v1060
      %v1253 = vpop.f32.mrf.mxu0
      %v1254 = vadd.f32 0.0, %v1253
      %v1255 = vpop.f32.mrf.mxu0
      %1256 = vmatprep.mubr.f32.mxu0 0.0
      %1257 = vmatmul.mubr.f32.gmra.mxu0 %v1062
      %v1258 = vpop.f32.mrf.mxu0
      %v1259 = vadd.f32 0.0, %v1258
      %v1260 = vpop.f32.mrf.mxu0
      %1261 = vmatprep.mubr.f32.mxu0 0.0
      %1262 = vmatmul.mubr.f32.gmra.mxu0 %v1064
      %v1263 = vpop.f32.mrf.mxu0
      %v1264 = vadd.f32 0.0, %v1263
      %v1265 = vpop.f32.mrf.mxu0
      %1266 = vmatprep.mubr.f32.mxu0 0.0
      %1267 = vmatmul.mubr.f32.gmra.mxu0 %v1066
      %v1268 = vpop.f32.mrf.mxu0
      %v1269 = vadd.f32 0.0, %v1268
      %v1270 = vpop.f32.mrf.mxu0
      %1271 = vmatprep.mubr.f32.mxu0 0.0
      %1272 = vmatmul.mubr.f32.gmra.mxu0 %v1068
      %v1273 = vpop.f32.mrf.mxu0
      %v1274 = vadd.f32 0.0, %v1273
      %v1275 = vpop.f32.mrf.mxu0
      %1276 = vmatprep.mubr.f32.mxu0 0.0
      %1277 = vmatmul.mubr.f32.gmra.mxu0 %v1070
      %v1278 = vpop.f32.mrf.mxu0
      %v1279 = vadd.f32 0.0, %v1278
      %v1280 = vpop.f32.mrf.mxu0
      %1281 = vmatprep.mubr.f32.mxu0 0.0
      %1282 = vmatmul.mubr.f32.gmra.mxu0 %v1072
      %v1283 = vpop.f32.mrf.mxu0
      %v1284 = vadd.f32 0.0, %v1283
      %v1285 = vpop.f32.mrf.mxu0
      %1286 = vmatprep.mubr.f32.mxu0 0.0
      %1287 = vmatmul.mubr.f32.gmra.mxu0 %v1074
      %v1288 = vpop.f32.mrf.mxu0
      %v1289 = vadd.f32 0.0, %v1288
      %v1290 = vpop.f32.mrf.mxu0
      %1291 = vmatprep.mubr.f32.mxu0 0.0
      %1292 = vmatmul.mubr.f32.gmra.mxu0 %v1076
      %v1293 = vpop.f32.mrf.mxu0
      %v1294 = vadd.f32 0.0, %v1293
      %v1295 = vpop.f32.mrf.mxu0
      %1296 = vmatprep.mubr.f32.mxu0 0.0
      %1297 = vmatmul.mubr.f32.gmra.mxu0 %v1078
      %v1298 = vpop.f32.mrf.mxu0
      %v1299 = vadd.f32 0.0, %v1298
      %v1300 = vpop.f32.mrf.mxu0
      %1301 = vmatprep.mubr.f32.mxu0 0.0
      %1302 = vmatmul.mubr.f32.gmra.mxu0 %v1080
      %v1303 = vpop.f32.mrf.mxu0
      %v1304 = vadd.f32 0.0, %v1303
      %v1305 = vpop.f32.mrf.mxu0
      %1306 = vmatprep.mubr.f32.mxu0 0.0
      %1307 = vmatmul.mubr.f32.gmra.mxu0 %v1082
      %v1308 = vpop.f32.mrf.mxu0
      %v1309 = vadd.f32 0.0, %v1308
      %v1310 = vpop.f32.mrf.mxu0
      %1311 = vdwg.mxu0
      %v1312 = vadd.f32 %v779, %v1154
      %v1313 = vadd.f32 %v784, %v1159
      %v1314 = vadd.f32 %v789, %v1164
      %v1315 = vadd.f32 %v794, %v1169
      %v1316 = vadd.f32 %v799, %v1174
      %v1317 = vadd.f32 %v804, %v1179
      %v1318 = vadd.f32 %v809, %v1184
      %v1319 = vadd.f32 %v814, %v1189
      %v1320 = vadd.f32 %v819, %v1194
      %v1321 = vadd.f32 %v824, %v1199
      %v1322 = vadd.f32 %v829, %v1204
      %v1323 = vadd.f32 %v834, %v1209
      %v1324 = vadd.f32 %v839, %v1214
      %v1325 = vadd.f32 %v844, %v1219
      %v1326 = vadd.f32 %v849, %v1224
      %v1327 = vadd.f32 %v854, %v1229
      %v1328 = vadd.f32 %v859, %v1234
      %v1329 = vadd.f32 %v864, %v1239
      %v1330 = vadd.f32 %v869, %v1244
      %v1331 = vadd.f32 %v874, %v1249
      %v1332 = vadd.f32 %v879, %v1254
      %v1333 = vadd.f32 %v884, %v1259
      %v1334 = vadd.f32 %v889, %v1264
      %v1335 = vadd.f32 %v894, %v1269
      %v1336 = vadd.f32 %v899, %v1274
      %v1337 = vadd.f32 %v904, %v1279
      %v1338 = vadd.f32 %v909, %v1284
      %v1339 = vadd.f32 %v914, %v1289
      %v1340 = vadd.f32 %v919, %v1294
      %v1341 = vadd.f32 %v924, %v1299
      %v1342 = vadd.f32 %v929, %v1304
      %v1343 = vadd.f32 %v934, %v1309
      %s1344 = scalar_lea.vmem %s165, 24
      %v1345 = vld [vmem:[%s1344] sm:$0xff]
      %v1346 = vld [vmem:[%s1344 + $0x8] sm:$0xff]
      %v1347 = vld [vmem:[%s1344 + $0x10] sm:$0x3]
      %v1348 = vld [vmem:[%s1344 + $0x18] sm:$0xff]
      %v1349 = vld [vmem:[%s1344 + $0x20] sm:$0xff]
      %v1350 = vld [vmem:[%s1344 + $0x28] sm:$0x3]
      %v1351 = vld [vmem:[%s1344 + $0x30] sm:$0xff]
      %v1352 = vld [vmem:[%s1344 + $0x38] sm:$0xff]
      %v1353 = vld [vmem:[%s1344 + $0x40] sm:$0x3]
      %v1354 = vld [vmem:[%s1344 + $0x48] sm:$0xff]
      %v1355 = vld [vmem:[%s1344 + $0x50] sm:$0xff]
      %v1356 = vld [vmem:[%s1344 + $0x58] sm:$0x3]
      %v1357 = vld [vmem:[%s1344 + $0x60] sm:$0xff]
      %v1358 = vld [vmem:[%s1344 + $0x68] sm:$0xff]
      %v1359 = vld [vmem:[%s1344 + $0x70] sm:$0x3]
      %v1360 = vld [vmem:[%s1344 + $0x78] sm:$0xff]
      %v1361 = vld [vmem:[%s1344 + $0x80] sm:$0xff]
      %v1362 = vld [vmem:[%s1344 + $0x88] sm:$0x3]
      %v1363 = vld [vmem:[%s1344 + $0x90] sm:$0xff]
      %v1364 = vld [vmem:[%s1344 + $0x98] sm:$0xff]
      %v1365 = vld [vmem:[%s1344 + $0xa0] sm:$0x3]
      %v1366 = vld [vmem:[%s1344 + $0xa8] sm:$0xff]
      %v1367 = vld [vmem:[%s1344 + $0xb0] sm:$0xff]
      %v1368 = vld [vmem:[%s1344 + $0xb8] sm:$0x3]
      %v1369 = vld [vmem:[%s1344 + $0xc0] sm:$0xff]
      %v1370 = vld [vmem:[%s1344 + $0xc8] sm:$0xff]
      %v1371 = vld [vmem:[%s1344 + $0xd0] sm:$0x3]
      %v1372 = vld [vmem:[%s1344 + $0xd8] sm:$0xff]
      %v1373 = vld [vmem:[%s1344 + $0xe0] sm:$0xff]
      %v1374 = vld [vmem:[%s1344 + $0xe8] sm:$0x3]
      %v1375 = vld [vmem:[%s1344 + $0xf0] sm:$0xff]
      %v1376 = vld [vmem:[%s1344 + $0xf8] sm:$0xff]
      %v1377 = vld [vmem:[%s1344 + $0x100] sm:$0x3]
      %v1378 = vld [vmem:[%s1344 + $0x108] sm:$0xff]
      %v1379 = vld [vmem:[%s1344 + $0x110] sm:$0xff]
      %v1380 = vld [vmem:[%s1344 + $0x118] sm:$0x3]
      %v1381 = vld [vmem:[%s1344 + $0x120] sm:$0xff]
      %v1382 = vld [vmem:[%s1344 + $0x128] sm:$0xff]
      %v1383 = vld [vmem:[%s1344 + $0x130] sm:$0x3]
      %v1384 = vld [vmem:[%s1344 + $0x138] sm:$0xff]
      %v1385 = vld [vmem:[%s1344 + $0x140] sm:$0xff]
      %v1386 = vld [vmem:[%s1344 + $0x148] sm:$0x3]
      %v1387 = vld [vmem:[%s1344 + $0x150] sm:$0xff]
      %v1388 = vld [vmem:[%s1344 + $0x158] sm:$0xff]
      %v1389 = vld [vmem:[%s1344 + $0x160] sm:$0x3]
      %v1390 = vld [vmem:[%s1344 + $0x168] sm:$0xff]
      %v1391 = vld [vmem:[%s1344 + $0x170] sm:$0xff]
      %v1392 = vld [vmem:[%s1344 + $0x178] sm:$0x3]
      %s1393 = scalar_lea.vmem %s1, 12
      %v1394 = vld [vmem:[%s1393] sm:$0x7]
      %v1396 = vsel %vm351, %v1345, 0
      %v1399 = vsel %vm351, %v1346, 0
      %v1402 = vsel %vm351, %v1348, 0
      %v1405 = vsel %vm351, %v1349, 0
      %v1408 = vsel %vm351, %v1351, 0
      %v1411 = vsel %vm351, %v1352, 0
      %v1414 = vsel %vm351, %v1354, 0
      %v1417 = vsel %vm351, %v1355, 0
      %v1420 = vsel %vm351, %v1357, 0
      %v1423 = vsel %vm351, %v1358, 0
      %v1426 = vsel %vm351, %v1360, 0
      %v1429 = vsel %vm351, %v1361, 0
      %v1432 = vsel %vm351, %v1363, 0
      %v1435 = vsel %vm351, %v1364, 0
      %v1438 = vsel %vm351, %v1366, 0
      %v1441 = vsel %vm351, %v1367, 0
      %v1444 = vsel %vm351, %v1369, 0
      %v1447 = vsel %vm351, %v1370, 0
      %v1450 = vsel %vm351, %v1372, 0
      %v1453 = vsel %vm351, %v1373, 0
      %v1456 = vsel %vm351, %v1375, 0
      %v1459 = vsel %vm351, %v1376, 0
      %v1462 = vsel %vm351, %v1378, 0
      %v1465 = vsel %vm351, %v1379, 0
      %v1468 = vsel %vm351, %v1381, 0
      %v1471 = vsel %vm351, %v1382, 0
      %v1474 = vsel %vm351, %v1384, 0
      %v1477 = vsel %vm351, %v1385, 0
      %v1480 = vsel %vm351, %v1387, 0
      %v1483 = vsel %vm351, %v1388, 0
      %v1486 = vsel %vm351, %v1390, 0
      %v1489 = vsel %vm351, %v1391, 0
      %v1492 = vsel %vm416, %v1394, 0
      %1494 = vmatprep.subr.mxu0 0.0
      %1495 = vmatpush1.msra.mxu0 0.0
      %1496 = vmatprep.subr.mxu0 0.0
      %1497 = vmatpush1.msra.mxu0 0.0
      %1498 = vmatprep.subr.mxu0 0.0
      %1499 = vmatpush1.msra.mxu0 0.0
      %1500 = vmatprep.subr.mxu0 0.0
      %1501 = vmatpush1.msra.mxu0 0.0
      %1502 = vmatprep.subr.mxu0 0.0
      %1503 = vmatpush1.msra.mxu0 0.0
      %1504 = vmatprep.subr.mxu0 0.0
      %1505 = vmatpush1.msra.mxu0 0.0
      %1506 = vmatprep.subr.mxu0 0.0
      %1507 = vmatpush1.msra.mxu0 0.0
      %1508 = vmatprep.subr.mxu0 0.0
      %1509 = vmatpush1.msra.mxu0 0.0
      %1510 = vmatprep.subr.mxu0 0.0
      %1511 = vmatpush1.msra.mxu0 0.0
      %1512 = vmatprep.subr.mxu0 0.0
      %1513 = vmatpush1.msra.mxu0 0.0
      %1514 = vmatprep.subr.mxu0 0.0
      %1515 = vmatpush1.msra.mxu0 0.0
      %1516 = vmatprep.subr.mxu0 0.0
      %1517 = vmatpush1.msra.mxu0 0.0
      %1518 = vmatprep.subr.mxu0 0.0
      %1519 = vmatpush1.msra.mxu0 0.0
      %1520 = vmatprep.subr.mxu0 0.0
      %1521 = vmatpush1.msra.mxu0 0.0
      %1522 = vmatprep.subr.mxu0 0.0
      %1523 = vmatpush1.msra.mxu0 0.0
      %1524 = vmatprep.subr.mxu0 0.0
      %1525 = vmatpush1.msra.mxu0 %v1492
      %1526 = vmatprep.subr.mxu0 0.0
      %1527 = vmatpush2.msra.mxu0 0.0
      %1528 = vmatprep.subr.mxu0 0.0
      %1529 = vmatpush2.msra.mxu0 0.0
      %1530 = vmatprep.subr.mxu0 0.0
      %1531 = vmatpush2.msra.mxu0 0.0
      %1532 = vmatprep.subr.mxu0 0.0
      %1533 = vmatpush2.msra.mxu0 0.0
      %1534 = vmatprep.subr.mxu0 0.0
      %1535 = vmatpush2.msra.mxu0 0.0
      %1536 = vmatprep.subr.mxu0 0.0
      %1537 = vmatpush2.msra.mxu0 0.0
      %1538 = vmatprep.subr.mxu0 0.0
      %1539 = vmatpush2.msra.mxu0 0.0
      %1540 = vmatprep.subr.mxu0 0.0
      %1541 = vmatpush2.msra.mxu0 0.0
      %1542 = vmatprep.subr.mxu0 0.0
      %1543 = vmatpush2.msra.mxu0 0.0
      %1544 = vmatprep.subr.mxu0 0.0
      %1545 = vmatpush2.msra.mxu0 0.0
      %1546 = vmatprep.subr.mxu0 0.0
      %1547 = vmatpush2.msra.mxu0 0.0
      %1548 = vmatprep.subr.mxu0 0.0
      %1549 = vmatpush2.msra.mxu0 0.0
      %1550 = vmatprep.subr.mxu0 0.0
      %1551 = vmatpush2.msra.mxu0 0.0
      %1552 = vmatprep.subr.mxu0 0.0
      %1553 = vmatpush2.msra.mxu0 0.0
      %1554 = vmatprep.subr.mxu0 0.0
      %1555 = vmatpush2.msra.mxu0 0.0
      %1556 = vmatprep.subr.mxu0 0.0
      %1557 = vmatpush2.msra.mxu0 0.0
      %1558 = vmatprep.mubr.f32.mxu0 0.0
      %1559 = vmatmul.mubr.f32.gmra.mxu0 %v1396
      %v1560 = vpop.f32.mrf.mxu0
      %v1561 = vadd.f32 0.0, %v1560
      %v1562 = vpop.f32.mrf.mxu0
      %1563 = vmatprep.mubr.f32.mxu0 0.0
      %1564 = vmatmul.mubr.f32.gmra.mxu0 %v1399
      %v1565 = vpop.f32.mrf.mxu0
      %v1566 = vadd.f32 0.0, %v1565
      %v1567 = vpop.f32.mrf.mxu0
      %1568 = vmatprep.mubr.f32.mxu0 0.0
      %1569 = vmatmul.mubr.f32.gmra.mxu0 %v1402
      %v1570 = vpop.f32.mrf.mxu0
      %v1571 = vadd.f32 0.0, %v1570
      %v1572 = vpop.f32.mrf.mxu0
      %1573 = vmatprep.mubr.f32.mxu0 0.0
      %1574 = vmatmul.mubr.f32.gmra.mxu0 %v1405
      %v1575 = vpop.f32.mrf.mxu0
      %v1576 = vadd.f32 0.0, %v1575
      %v1577 = vpop.f32.mrf.mxu0
      %1578 = vmatprep.mubr.f32.mxu0 0.0
      %1579 = vmatmul.mubr.f32.gmra.mxu0 %v1408
      %v1580 = vpop.f32.mrf.mxu0
      %v1581 = vadd.f32 0.0, %v1580
      %v1582 = vpop.f32.mrf.mxu0
      %1583 = vmatprep.mubr.f32.mxu0 0.0
      %1584 = vmatmul.mubr.f32.gmra.mxu0 %v1411
      %v1585 = vpop.f32.mrf.mxu0
      %v1586 = vadd.f32 0.0, %v1585
      %v1587 = vpop.f32.mrf.mxu0
      %1588 = vmatprep.mubr.f32.mxu0 0.0
      %1589 = vmatmul.mubr.f32.gmra.mxu0 %v1414
      %v1590 = vpop.f32.mrf.mxu0
      %v1591 = vadd.f32 0.0, %v1590
      %v1592 = vpop.f32.mrf.mxu0
      %1593 = vmatprep.mubr.f32.mxu0 0.0
      %1594 = vmatmul.mubr.f32.gmra.mxu0 %v1417
      %v1595 = vpop.f32.mrf.mxu0
      %v1596 = vadd.f32 0.0, %v1595
      %v1597 = vpop.f32.mrf.mxu0
      %1598 = vmatprep.mubr.f32.mxu0 0.0
      %1599 = vmatmul.mubr.f32.gmra.mxu0 %v1420
      %v1600 = vpop.f32.mrf.mxu0
      %v1601 = vadd.f32 0.0, %v1600
      %v1602 = vpop.f32.mrf.mxu0
      %1603 = vmatprep.mubr.f32.mxu0 0.0
      %1604 = vmatmul.mubr.f32.gmra.mxu0 %v1423
      %v1605 = vpop.f32.mrf.mxu0
      %v1606 = vadd.f32 0.0, %v1605
      %v1607 = vpop.f32.mrf.mxu0
      %1608 = vmatprep.mubr.f32.mxu0 0.0
      %1609 = vmatmul.mubr.f32.gmra.mxu0 %v1426
      %v1610 = vpop.f32.mrf.mxu0
      %v1611 = vadd.f32 0.0, %v1610
      %v1612 = vpop.f32.mrf.mxu0
      %1613 = vmatprep.mubr.f32.mxu0 0.0
      %1614 = vmatmul.mubr.f32.gmra.mxu0 %v1429
      %v1615 = vpop.f32.mrf.mxu0
      %v1616 = vadd.f32 0.0, %v1615
      %v1617 = vpop.f32.mrf.mxu0
      %1618 = vmatprep.mubr.f32.mxu0 0.0
      %1619 = vmatmul.mubr.f32.gmra.mxu0 %v1432
      %v1620 = vpop.f32.mrf.mxu0
      %v1621 = vadd.f32 0.0, %v1620
      %v1622 = vpop.f32.mrf.mxu0
      %1623 = vmatprep.mubr.f32.mxu0 0.0
      %1624 = vmatmul.mubr.f32.gmra.mxu0 %v1435
      %v1625 = vpop.f32.mrf.mxu0
      %v1626 = vadd.f32 0.0, %v1625
      %v1627 = vpop.f32.mrf.mxu0
      %1628 = vmatprep.mubr.f32.mxu0 0.0
      %1629 = vmatmul.mubr.f32.gmra.mxu0 %v1438
      %v1630 = vpop.f32.mrf.mxu0
      %v1631 = vadd.f32 0.0, %v1630
      %v1632 = vpop.f32.mrf.mxu0
      %1633 = vmatprep.mubr.f32.mxu0 0.0
      %1634 = vmatmul.mubr.f32.gmra.mxu0 %v1441
      %v1635 = vpop.f32.mrf.mxu0
      %v1636 = vadd.f32 0.0, %v1635
      %v1637 = vpop.f32.mrf.mxu0
      %1638 = vmatprep.mubr.f32.mxu0 0.0
      %1639 = vmatmul.mubr.f32.gmra.mxu0 %v1444
      %v1640 = vpop.f32.mrf.mxu0
      %v1641 = vadd.f32 0.0, %v1640
      %v1642 = vpop.f32.mrf.mxu0
      %1643 = vmatprep.mubr.f32.mxu0 0.0
      %1644 = vmatmul.mubr.f32.gmra.mxu0 %v1447
      %v1645 = vpop.f32.mrf.mxu0
      %v1646 = vadd.f32 0.0, %v1645
      %v1647 = vpop.f32.mrf.mxu0
      %1648 = vmatprep.mubr.f32.mxu0 0.0
      %1649 = vmatmul.mubr.f32.gmra.mxu0 %v1450
      %v1650 = vpop.f32.mrf.mxu0
      %v1651 = vadd.f32 0.0, %v1650
      %v1652 = vpop.f32.mrf.mxu0
      %1653 = vmatprep.mubr.f32.mxu0 0.0
      %1654 = vmatmul.mubr.f32.gmra.mxu0 %v1453
      %v1655 = vpop.f32.mrf.mxu0
      %v1656 = vadd.f32 0.0, %v1655
      %v1657 = vpop.f32.mrf.mxu0
      %1658 = vmatprep.mubr.f32.mxu0 0.0
      %1659 = vmatmul.mubr.f32.gmra.mxu0 %v1456
      %v1660 = vpop.f32.mrf.mxu0
      %v1661 = vadd.f32 0.0, %v1660
      %v1662 = vpop.f32.mrf.mxu0
      %1663 = vmatprep.mubr.f32.mxu0 0.0
      %1664 = vmatmul.mubr.f32.gmra.mxu0 %v1459
      %v1665 = vpop.f32.mrf.mxu0
      %v1666 = vadd.f32 0.0, %v1665
      %v1667 = vpop.f32.mrf.mxu0
      %1668 = vmatprep.mubr.f32.mxu0 0.0
      %1669 = vmatmul.mubr.f32.gmra.mxu0 %v1462
      %v1670 = vpop.f32.mrf.mxu0
      %v1671 = vadd.f32 0.0, %v1670
      %v1672 = vpop.f32.mrf.mxu0
      %1673 = vmatprep.mubr.f32.mxu0 0.0
      %1674 = vmatmul.mubr.f32.gmra.mxu0 %v1465
      %v1675 = vpop.f32.mrf.mxu0
      %v1676 = vadd.f32 0.0, %v1675
      %v1677 = vpop.f32.mrf.mxu0
      %1678 = vmatprep.mubr.f32.mxu0 0.0
      %1679 = vmatmul.mubr.f32.gmra.mxu0 %v1468
      %v1680 = vpop.f32.mrf.mxu0
      %v1681 = vadd.f32 0.0, %v1680
      %v1682 = vpop.f32.mrf.mxu0
      %1683 = vmatprep.mubr.f32.mxu0 0.0
      %1684 = vmatmul.mubr.f32.gmra.mxu0 %v1471
      %v1685 = vpop.f32.mrf.mxu0
      %v1686 = vadd.f32 0.0, %v1685
      %v1687 = vpop.f32.mrf.mxu0
      %1688 = vmatprep.mubr.f32.mxu0 0.0
      %1689 = vmatmul.mubr.f32.gmra.mxu0 %v1474
      %v1690 = vpop.f32.mrf.mxu0
      %v1691 = vadd.f32 0.0, %v1690
      %v1692 = vpop.f32.mrf.mxu0
      %1693 = vmatprep.mubr.f32.mxu0 0.0
      %1694 = vmatmul.mubr.f32.gmra.mxu0 %v1477
      %v1695 = vpop.f32.mrf.mxu0
      %v1696 = vadd.f32 0.0, %v1695
      %v1697 = vpop.f32.mrf.mxu0
      %1698 = vmatprep.mubr.f32.mxu0 0.0
      %1699 = vmatmul.mubr.f32.gmra.mxu0 %v1480
      %v1700 = vpop.f32.mrf.mxu0
      %v1701 = vadd.f32 0.0, %v1700
      %v1702 = vpop.f32.mrf.mxu0
      %1703 = vmatprep.mubr.f32.mxu0 0.0
      %1704 = vmatmul.mubr.f32.gmra.mxu0 %v1483
      %v1705 = vpop.f32.mrf.mxu0
      %v1706 = vadd.f32 0.0, %v1705
      %v1707 = vpop.f32.mrf.mxu0
      %1708 = vmatprep.mubr.f32.mxu0 0.0
      %1709 = vmatmul.mubr.f32.gmra.mxu0 %v1486
      %v1710 = vpop.f32.mrf.mxu0
      %v1711 = vadd.f32 0.0, %v1710
      %v1712 = vpop.f32.mrf.mxu0
      %1713 = vmatprep.mubr.f32.mxu0 0.0
      %1714 = vmatmul.mubr.f32.gmra.mxu0 %v1489
      %v1715 = vpop.f32.mrf.mxu0
      %v1716 = vadd.f32 0.0, %v1715
      %v1717 = vpop.f32.mrf.mxu0
      %1718 = vdwg.mxu0
      %v1719 = vadd.f32 %v1312, %v1561
      %v1720 = vadd.f32 %v1313, %v1566
      %v1721 = vadd.f32 %v1314, %v1571
      %v1722 = vadd.f32 %v1315, %v1576
      %v1723 = vadd.f32 %v1316, %v1581
      %v1724 = vadd.f32 %v1317, %v1586
      %v1725 = vadd.f32 %v1318, %v1591
      %v1726 = vadd.f32 %v1319, %v1596
      %v1727 = vadd.f32 %v1320, %v1601
      %v1728 = vadd.f32 %v1321, %v1606
      %v1729 = vadd.f32 %v1322, %v1611
      %v1730 = vadd.f32 %v1323, %v1616
      %v1731 = vadd.f32 %v1324, %v1621
      %v1732 = vadd.f32 %v1325, %v1626
      %v1733 = vadd.f32 %v1326, %v1631
      %v1734 = vadd.f32 %v1327, %v1636
      %v1735 = vadd.f32 %v1328, %v1641
      %v1736 = vadd.f32 %v1329, %v1646
      %v1737 = vadd.f32 %v1330, %v1651
      %v1738 = vadd.f32 %v1331, %v1656
      %v1739 = vadd.f32 %v1332, %v1661
      %v1740 = vadd.f32 %v1333, %v1666
      %v1741 = vadd.f32 %v1334, %v1671
      %v1742 = vadd.f32 %v1335, %v1676
      %v1743 = vadd.f32 %v1336, %v1681
      %v1744 = vadd.f32 %v1337, %v1686
      %v1745 = vadd.f32 %v1338, %v1691
      %v1746 = vadd.f32 %v1339, %v1696
      %v1747 = vadd.f32 %v1340, %v1701
      %v1748 = vadd.f32 %v1341, %v1706
      %v1749 = vadd.f32 %v1342, %v1711
      %v1750 = vadd.f32 %v1343, %v1716
      %v1767 = vrot.slane %v1345, 1
      %v1768 = vrot.slane %v1346, 1
      %v1769 = vsel %vm268, %v1767, %v1768
      %v1770 = vrot.slane %v1347, 1
      %v1771 = vsel %vm268, %v1768, %v1770
      %v1772 = vrot.slane %v1348, 1
      %v1773 = vrot.slane %v1349, 1
      %v1774 = vsel %vm268, %v1772, %v1773
      %v1775 = vrot.slane %v1350, 1
      %v1776 = vsel %vm268, %v1773, %v1775
      %v1777 = vrot.slane %v1351, 1
      %v1778 = vrot.slane %v1352, 1
      %v1779 = vsel %vm268, %v1777, %v1778
      %v1780 = vrot.slane %v1353, 1
      %v1781 = vsel %vm268, %v1778, %v1780
      %v1782 = vrot.slane %v1354, 1
      %v1783 = vrot.slane %v1355, 1
      %v1784 = vsel %vm268, %v1782, %v1783
      %v1785 = vrot.slane %v1356, 1
      %v1786 = vsel %vm268, %v1783, %v1785
      %v1787 = vrot.slane %v1357, 1
      %v1788 = vrot.slane %v1358, 1
      %v1789 = vsel %vm268, %v1787, %v1788
      %v1790 = vrot.slane %v1359, 1
      %v1791 = vsel %vm268, %v1788, %v1790
      %v1792 = vrot.slane %v1360, 1
      %v1793 = vrot.slane %v1361, 1
      %v1794 = vsel %vm268, %v1792, %v1793
      %v1795 = vrot.slane %v1362, 1
      %v1796 = vsel %vm268, %v1793, %v1795
      %v1797 = vrot.slane %v1363, 1
      %v1798 = vrot.slane %v1364, 1
      %v1799 = vsel %vm268, %v1797, %v1798
      %v1800 = vrot.slane %v1365, 1
      %v1801 = vsel %vm268, %v1798, %v1800
      %v1802 = vrot.slane %v1366, 1
      %v1803 = vrot.slane %v1367, 1
      %v1804 = vsel %vm268, %v1802, %v1803
      %v1805 = vrot.slane %v1368, 1
      %v1806 = vsel %vm268, %v1803, %v1805
      %v1807 = vrot.slane %v1369, 1
      %v1808 = vrot.slane %v1370, 1
      %v1809 = vsel %vm268, %v1807, %v1808
      %v1810 = vrot.slane %v1371, 1
      %v1811 = vsel %vm268, %v1808, %v1810
      %v1812 = vrot.slane %v1372, 1
      %v1813 = vrot.slane %v1373, 1
      %v1814 = vsel %vm268, %v1812, %v1813
      %v1815 = vrot.slane %v1374, 1
      %v1816 = vsel %vm268, %v1813, %v1815
      %v1817 = vrot.slane %v1375, 1
      %v1818 = vrot.slane %v1376, 1
      %v1819 = vsel %vm268, %v1817, %v1818
      %v1820 = vrot.slane %v1377, 1
      %v1821 = vsel %vm268, %v1818, %v1820
      %v1822 = vrot.slane %v1378, 1
      %v1823 = vrot.slane %v1379, 1
      %v1824 = vsel %vm268, %v1822, %v1823
      %v1825 = vrot.slane %v1380, 1
      %v1826 = vsel %vm268, %v1823, %v1825
      %v1827 = vrot.slane %v1381, 1
      %v1828 = vrot.slane %v1382, 1
      %v1829 = vsel %vm268, %v1827, %v1828
      %v1830 = vrot.slane %v1383, 1
      %v1831 = vsel %vm268, %v1828, %v1830
      %v1832 = vrot.slane %v1384, 1
      %v1833 = vrot.slane %v1385, 1
      %v1834 = vsel %vm268, %v1832, %v1833
      %v1835 = vrot.slane %v1386, 1
      %v1836 = vsel %vm268, %v1833, %v1835
      %v1837 = vrot.slane %v1387, 1
      %v1838 = vrot.slane %v1388, 1
      %v1839 = vsel %vm268, %v1837, %v1838
      %v1840 = vrot.slane %v1389, 1
      %v1841 = vsel %vm268, %v1838, %v1840
      %v1842 = vrot.slane %v1390, 1
      %v1843 = vrot.slane %v1391, 1
      %v1844 = vsel %vm268, %v1842, %v1843
      %v1845 = vrot.slane %v1392, 1
      %v1846 = vsel %vm268, %v1843, %v1845
      %s1847 = scalar_lea.vmem %s1, 16
      %v1848 = vld [vmem:[%s1847] sm:$0x7]
      %v1849 = vsel %vm351, %v1769, 0
      %v1851 = vsel %vm351, %v1771, 0
      %v1853 = vsel %vm351, %v1774, 0
      %v1855 = vsel %vm351, %v1776, 0
      %v1857 = vsel %vm351, %v1779, 0
      %v1859 = vsel %vm351, %v1781, 0
      %v1861 = vsel %vm351, %v1784, 0
      %v1863 = vsel %vm351, %v1786, 0
      %v1865 = vsel %vm351, %v1789, 0
      %v1867 = vsel %vm351, %v1791, 0
      %v1869 = vsel %vm351, %v1794, 0
      %v1871 = vsel %vm351, %v1796, 0
      %v1873 = vsel %vm351, %v1799, 0
      %v1875 = vsel %vm351, %v1801, 0
      %v1877 = vsel %vm351, %v1804, 0
      %v1879 = vsel %vm351, %v1806, 0
      %v1881 = vsel %vm351, %v1809, 0
      %v1883 = vsel %vm351, %v1811, 0
      %v1885 = vsel %vm351, %v1814, 0
      %v1887 = vsel %vm351, %v1816, 0
      %v1889 = vsel %vm351, %v1819, 0
      %v1891 = vsel %vm351, %v1821, 0
      %v1893 = vsel %vm351, %v1824, 0
      %v1895 = vsel %vm351, %v1826, 0
      %v1897 = vsel %vm351, %v1829, 0
      %v1899 = vsel %vm351, %v1831, 0
      %v1901 = vsel %vm351, %v1834, 0
      %v1903 = vsel %vm351, %v1836, 0
      %v1905 = vsel %vm351, %v1839, 0
      %v1907 = vsel %vm351, %v1841, 0
      %v1909 = vsel %vm351, %v1844, 0
      %v1911 = vsel %vm351, %v1846, 0
      %v1914 = vsel %vm416, %v1848, 0
      %1916 = vmatprep.subr.mxu0 0.0
      %1917 = vmatpush1.msra.mxu0 0.0
      %1918 = vmatprep.subr.mxu0 0.0
      %1919 = vmatpush1.msra.mxu0 0.0
      %1920 = vmatprep.subr.mxu0 0.0
      %1921 = vmatpush1.msra.mxu0 0.0
      %1922 = vmatprep.subr.mxu0 0.0
      %1923 = vmatpush1.msra.mxu0 0.0
      %1924 = vmatprep.subr.mxu0 0.0
      %1925 = vmatpush1.msra.mxu0 0.0
      %1926 = vmatprep.subr.mxu0 0.0
      %1927 = vmatpush1.msra.mxu0 0.0
      %1928 = vmatprep.subr.mxu0 0.0
      %1929 = vmatpush1.msra.mxu0 0.0
      %1930 = vmatprep.subr.mxu0 0.0
      %1931 = vmatpush1.msra.mxu0 0.0
      %1932 = vmatprep.subr.mxu0 0.0
      %1933 = vmatpush1.msra.mxu0 0.0
      %1934 = vmatprep.subr.mxu0 0.0
      %1935 = vmatpush1.msra.mxu0 0.0
      %1936 = vmatprep.subr.mxu0 0.0
      %1937 = vmatpush1.msra.mxu0 0.0
      %1938 = vmatprep.subr.mxu0 0.0
      %1939 = vmatpush1.msra.mxu0 0.0
      %1940 = vmatprep.subr.mxu0 0.0
      %1941 = vmatpush1.msra.mxu0 0.0
      %1942 = vmatprep.subr.mxu0 0.0
      %1943 = vmatpush1.msra.mxu0 0.0
      %1944 = vmatprep.subr.mxu0 0.0
      %1945 = vmatpush1.msra.mxu0 0.0
      %1946 = vmatprep.subr.mxu0 0.0
      %1947 = vmatpush1.msra.mxu0 %v1914
      %1948 = vmatprep.subr.mxu0 0.0
      %1949 = vmatpush2.msra.mxu0 0.0
      %1950 = vmatprep.subr.mxu0 0.0
      %1951 = vmatpush2.msra.mxu0 0.0
      %1952 = vmatprep.subr.mxu0 0.0
      %1953 = vmatpush2.msra.mxu0 0.0
      %1954 = vmatprep.subr.mxu0 0.0
      %1955 = vmatpush2.msra.mxu0 0.0
      %1956 = vmatprep.subr.mxu0 0.0
      %1957 = vmatpush2.msra.mxu0 0.0
      %1958 = vmatprep.subr.mxu0 0.0
      %1959 = vmatpush2.msra.mxu0 0.0
      %1960 = vmatprep.subr.mxu0 0.0
      %1961 = vmatpush2.msra.mxu0 0.0
      %1962 = vmatprep.subr.mxu0 0.0
      %1963 = vmatpush2.msra.mxu0 0.0
      %1964 = vmatprep.subr.mxu0 0.0
      %1965 = vmatpush2.msra.mxu0 0.0
      %1966 = vmatprep.subr.mxu0 0.0
      %1967 = vmatpush2.msra.mxu0 0.0
      %1968 = vmatprep.subr.mxu0 0.0
      %1969 = vmatpush2.msra.mxu0 0.0
      %1970 = vmatprep.subr.mxu0 0.0
      %1971 = vmatpush2.msra.mxu0 0.0
      %1972 = vmatprep.subr.mxu0 0.0
      %1973 = vmatpush2.msra.mxu0 0.0
      %1974 = vmatprep.subr.mxu0 0.0
      %1975 = vmatpush2.msra.mxu0 0.0
      %1976 = vmatprep.subr.mxu0 0.0
      %1977 = vmatpush2.msra.mxu0 0.0
      %1978 = vmatprep.subr.mxu0 0.0
      %1979 = vmatpush2.msra.mxu0 0.0
      %1980 = vmatprep.mubr.f32.mxu0 0.0
      %1981 = vmatmul.mubr.f32.gmra.mxu0 %v1849
      %v1982 = vpop.f32.mrf.mxu0
      %v1983 = vadd.f32 0.0, %v1982
      %v1984 = vpop.f32.mrf.mxu0
      %1985 = vmatprep.mubr.f32.mxu0 0.0
      %1986 = vmatmul.mubr.f32.gmra.mxu0 %v1851
      %v1987 = vpop.f32.mrf.mxu0
      %v1988 = vadd.f32 0.0, %v1987
      %v1989 = vpop.f32.mrf.mxu0
      %1990 = vmatprep.mubr.f32.mxu0 0.0
      %1991 = vmatmul.mubr.f32.gmra.mxu0 %v1853
      %v1992 = vpop.f32.mrf.mxu0
      %v1993 = vadd.f32 0.0, %v1992
      %v1994 = vpop.f32.mrf.mxu0
      %1995 = vmatprep.mubr.f32.mxu0 0.0
      %1996 = vmatmul.mubr.f32.gmra.mxu0 %v1855
      %v1997 = vpop.f32.mrf.mxu0
      %v1998 = vadd.f32 0.0, %v1997
      %v1999 = vpop.f32.mrf.mxu0
      %2000 = vmatprep.mubr.f32.mxu0 0.0
      %2001 = vmatmul.mubr.f32.gmra.mxu0 %v1857
      %v2002 = vpop.f32.mrf.mxu0
      %v2003 = vadd.f32 0.0, %v2002
      %v2004 = vpop.f32.mrf.mxu0
      %2005 = vmatprep.mubr.f32.mxu0 0.0
      %2006 = vmatmul.mubr.f32.gmra.mxu0 %v1859
      %v2007 = vpop.f32.mrf.mxu0
      %v2008 = vadd.f32 0.0, %v2007
      %v2009 = vpop.f32.mrf.mxu0
      %2010 = vmatprep.mubr.f32.mxu0 0.0
      %2011 = vmatmul.mubr.f32.gmra.mxu0 %v1861
      %v2012 = vpop.f32.mrf.mxu0
      %v2013 = vadd.f32 0.0, %v2012
      %v2014 = vpop.f32.mrf.mxu0
      %2015 = vmatprep.mubr.f32.mxu0 0.0
      %2016 = vmatmul.mubr.f32.gmra.mxu0 %v1863
      %v2017 = vpop.f32.mrf.mxu0
      %v2018 = vadd.f32 0.0, %v2017
      %v2019 = vpop.f32.mrf.mxu0
      %2020 = vmatprep.mubr.f32.mxu0 0.0
      %2021 = vmatmul.mubr.f32.gmra.mxu0 %v1865
      %v2022 = vpop.f32.mrf.mxu0
      %v2023 = vadd.f32 0.0, %v2022
      %v2024 = vpop.f32.mrf.mxu0
      %2025 = vmatprep.mubr.f32.mxu0 0.0
      %2026 = vmatmul.mubr.f32.gmra.mxu0 %v1867
      %v2027 = vpop.f32.mrf.mxu0
      %v2028 = vadd.f32 0.0, %v2027
      %v2029 = vpop.f32.mrf.mxu0
      %2030 = vmatprep.mubr.f32.mxu0 0.0
      %2031 = vmatmul.mubr.f32.gmra.mxu0 %v1869
      %v2032 = vpop.f32.mrf.mxu0
      %v2033 = vadd.f32 0.0, %v2032
      %v2034 = vpop.f32.mrf.mxu0
      %2035 = vmatprep.mubr.f32.mxu0 0.0
      %2036 = vmatmul.mubr.f32.gmra.mxu0 %v1871
      %v2037 = vpop.f32.mrf.mxu0
      %v2038 = vadd.f32 0.0, %v2037
      %v2039 = vpop.f32.mrf.mxu0
      %2040 = vmatprep.mubr.f32.mxu0 0.0
      %2041 = vmatmul.mubr.f32.gmra.mxu0 %v1873
      %v2042 = vpop.f32.mrf.mxu0
      %v2043 = vadd.f32 0.0, %v2042
      %v2044 = vpop.f32.mrf.mxu0
      %2045 = vmatprep.mubr.f32.mxu0 0.0
      %2046 = vmatmul.mubr.f32.gmra.mxu0 %v1875
      %v2047 = vpop.f32.mrf.mxu0
      %v2048 = vadd.f32 0.0, %v2047
      %v2049 = vpop.f32.mrf.mxu0
      %2050 = vmatprep.mubr.f32.mxu0 0.0
      %2051 = vmatmul.mubr.f32.gmra.mxu0 %v1877
      %v2052 = vpop.f32.mrf.mxu0
      %v2053 = vadd.f32 0.0, %v2052
      %v2054 = vpop.f32.mrf.mxu0
      %2055 = vmatprep.mubr.f32.mxu0 0.0
      %2056 = vmatmul.mubr.f32.gmra.mxu0 %v1879
      %v2057 = vpop.f32.mrf.mxu0
      %v2058 = vadd.f32 0.0, %v2057
      %v2059 = vpop.f32.mrf.mxu0
      %2060 = vmatprep.mubr.f32.mxu0 0.0
      %2061 = vmatmul.mubr.f32.gmra.mxu0 %v1881
      %v2062 = vpop.f32.mrf.mxu0
      %v2063 = vadd.f32 0.0, %v2062
      %v2064 = vpop.f32.mrf.mxu0
      %2065 = vmatprep.mubr.f32.mxu0 0.0
      %2066 = vmatmul.mubr.f32.gmra.mxu0 %v1883
      %v2067 = vpop.f32.mrf.mxu0
      %v2068 = vadd.f32 0.0, %v2067
      %v2069 = vpop.f32.mrf.mxu0
      %2070 = vmatprep.mubr.f32.mxu0 0.0
      %2071 = vmatmul.mubr.f32.gmra.mxu0 %v1885
      %v2072 = vpop.f32.mrf.mxu0
      %v2073 = vadd.f32 0.0, %v2072
      %v2074 = vpop.f32.mrf.mxu0
      %2075 = vmatprep.mubr.f32.mxu0 0.0
      %2076 = vmatmul.mubr.f32.gmra.mxu0 %v1887
      %v2077 = vpop.f32.mrf.mxu0
      %v2078 = vadd.f32 0.0, %v2077
      %v2079 = vpop.f32.mrf.mxu0
      %2080 = vmatprep.mubr.f32.mxu0 0.0
      %2081 = vmatmul.mubr.f32.gmra.mxu0 %v1889
      %v2082 = vpop.f32.mrf.mxu0
      %v2083 = vadd.f32 0.0, %v2082
      %v2084 = vpop.f32.mrf.mxu0
      %2085 = vmatprep.mubr.f32.mxu0 0.0
      %2086 = vmatmul.mubr.f32.gmra.mxu0 %v1891
      %v2087 = vpop.f32.mrf.mxu0
      %v2088 = vadd.f32 0.0, %v2087
      %v2089 = vpop.f32.mrf.mxu0
      %2090 = vmatprep.mubr.f32.mxu0 0.0
      %2091 = vmatmul.mubr.f32.gmra.mxu0 %v1893
      %v2092 = vpop.f32.mrf.mxu0
      %v2093 = vadd.f32 0.0, %v2092
      %v2094 = vpop.f32.mrf.mxu0
      %2095 = vmatprep.mubr.f32.mxu0 0.0
      %2096 = vmatmul.mubr.f32.gmra.mxu0 %v1895
      %v2097 = vpop.f32.mrf.mxu0
      %v2098 = vadd.f32 0.0, %v2097
      %v2099 = vpop.f32.mrf.mxu0
      %2100 = vmatprep.mubr.f32.mxu0 0.0
      %2101 = vmatmul.mubr.f32.gmra.mxu0 %v1897
      %v2102 = vpop.f32.mrf.mxu0
      %v2103 = vadd.f32 0.0, %v2102
      %v2104 = vpop.f32.mrf.mxu0
      %2105 = vmatprep.mubr.f32.mxu0 0.0
      %2106 = vmatmul.mubr.f32.gmra.mxu0 %v1899
      %v2107 = vpop.f32.mrf.mxu0
      %v2108 = vadd.f32 0.0, %v2107
      %v2109 = vpop.f32.mrf.mxu0
      %2110 = vmatprep.mubr.f32.mxu0 0.0
      %2111 = vmatmul.mubr.f32.gmra.mxu0 %v1901
      %v2112 = vpop.f32.mrf.mxu0
      %v2113 = vadd.f32 0.0, %v2112
      %v2114 = vpop.f32.mrf.mxu0
      %2115 = vmatprep.mubr.f32.mxu0 0.0
      %2116 = vmatmul.mubr.f32.gmra.mxu0 %v1903
      %v2117 = vpop.f32.mrf.mxu0
      %v2118 = vadd.f32 0.0, %v2117
      %v2119 = vpop.f32.mrf.mxu0
      %2120 = vmatprep.mubr.f32.mxu0 0.0
      %2121 = vmatmul.mubr.f32.gmra.mxu0 %v1905
      %v2122 = vpop.f32.mrf.mxu0
      %v2123 = vadd.f32 0.0, %v2122
      %v2124 = vpop.f32.mrf.mxu0
      %2125 = vmatprep.mubr.f32.mxu0 0.0
      %2126 = vmatmul.mubr.f32.gmra.mxu0 %v1907
      %v2127 = vpop.f32.mrf.mxu0
      %v2128 = vadd.f32 0.0, %v2127
      %v2129 = vpop.f32.mrf.mxu0
      %2130 = vmatprep.mubr.f32.mxu0 0.0
      %2131 = vmatmul.mubr.f32.gmra.mxu0 %v1909
      %v2132 = vpop.f32.mrf.mxu0
      %v2133 = vadd.f32 0.0, %v2132
      %v2134 = vpop.f32.mrf.mxu0
      %2135 = vmatprep.mubr.f32.mxu0 0.0
      %2136 = vmatmul.mubr.f32.gmra.mxu0 %v1911
      %v2137 = vpop.f32.mrf.mxu0
      %v2138 = vadd.f32 0.0, %v2137
      %v2139 = vpop.f32.mrf.mxu0
      %2140 = vdwg.mxu0
      %v2141 = vadd.f32 %v1719, %v1983
      %v2142 = vadd.f32 %v1720, %v1988
      %v2143 = vadd.f32 %v1721, %v1993
      %v2144 = vadd.f32 %v1722, %v1998
      %v2145 = vadd.f32 %v1723, %v2003
      %v2146 = vadd.f32 %v1724, %v2008
      %v2147 = vadd.f32 %v1725, %v2013
      %v2148 = vadd.f32 %v1726, %v2018
      %v2149 = vadd.f32 %v1727, %v2023
      %v2150 = vadd.f32 %v1728, %v2028
      %v2151 = vadd.f32 %v1729, %v2033
      %v2152 = vadd.f32 %v1730, %v2038
      %v2153 = vadd.f32 %v1731, %v2043
      %v2154 = vadd.f32 %v1732, %v2048
      %v2155 = vadd.f32 %v1733, %v2053
      %v2156 = vadd.f32 %v1734, %v2058
      %v2157 = vadd.f32 %v1735, %v2063
      %v2158 = vadd.f32 %v1736, %v2068
      %v2159 = vadd.f32 %v1737, %v2073
      %v2160 = vadd.f32 %v1738, %v2078
      %v2161 = vadd.f32 %v1739, %v2083
      %v2162 = vadd.f32 %v1740, %v2088
      %v2163 = vadd.f32 %v1741, %v2093
      %v2164 = vadd.f32 %v1742, %v2098
      %v2165 = vadd.f32 %v1743, %v2103
      %v2166 = vadd.f32 %v1744, %v2108
      %v2167 = vadd.f32 %v1745, %v2113
      %v2168 = vadd.f32 %v1746, %v2118
      %v2169 = vadd.f32 %v1747, %v2123
      %v2170 = vadd.f32 %v1748, %v2128
      %v2171 = vadd.f32 %v1749, %v2133
      %v2172 = vadd.f32 %v1750, %v2138
      %v2173 = vrot.slane %v1345, 2
      %v2174 = vrot.slane %v1346, 2
      %v2175 = vsel %vm937, %v2173, %v2174
      %v2176 = vrot.slane %v1347, 2
      %v2177 = vsel %vm937, %v2174, %v2176
      %v2178 = vrot.slane %v1348, 2
      %v2179 = vrot.slane %v1349, 2
      %v2180 = vsel %vm937, %v2178, %v2179
      %v2181 = vrot.slane %v1350, 2
      %v2182 = vsel %vm937, %v2179, %v2181
      %v2183 = vrot.slane %v1351, 2
      %v2184 = vrot.slane %v1352, 2
      %v2185 = vsel %vm937, %v2183, %v2184
      %v2186 = vrot.slane %v1353, 2
      %v2187 = vsel %vm937, %v2184, %v2186
      %v2188 = vrot.slane %v1354, 2
      %v2189 = vrot.slane %v1355, 2
      %v2190 = vsel %vm937, %v2188, %v2189
      %v2191 = vrot.slane %v1356, 2
      %v2192 = vsel %vm937, %v2189, %v2191
      %v2193 = vrot.slane %v1357, 2
      %v2194 = vrot.slane %v1358, 2
      %v2195 = vsel %vm937, %v2193, %v2194
      %v2196 = vrot.slane %v1359, 2
      %v2197 = vsel %vm937, %v2194, %v2196
      %v2198 = vrot.slane %v1360, 2
      %v2199 = vrot.slane %v1361, 2
      %v2200 = vsel %vm937, %v2198, %v2199
      %v2201 = vrot.slane %v1362, 2
      %v2202 = vsel %vm937, %v2199, %v2201
      %v2203 = vrot.slane %v1363, 2
      %v2204 = vrot.slane %v1364, 2
      %v2205 = vsel %vm937, %v2203, %v2204
      %v2206 = vrot.slane %v1365, 2
      %v2207 = vsel %vm937, %v2204, %v2206
      %v2208 = vrot.slane %v1366, 2
      %v2209 = vrot.slane %v1367, 2
      %v2210 = vsel %vm937, %v2208, %v2209
      %v2211 = vrot.slane %v1368, 2
      %v2212 = vsel %vm937, %v2209, %v2211
      %v2213 = vrot.slane %v1369, 2
      %v2214 = vrot.slane %v1370, 2
      %v2215 = vsel %vm937, %v2213, %v2214
      %v2216 = vrot.slane %v1371, 2
      %v2217 = vsel %vm937, %v2214, %v2216
      %v2218 = vrot.slane %v1372, 2
      %v2219 = vrot.slane %v1373, 2
      %v2220 = vsel %vm937, %v2218, %v2219
      %v2221 = vrot.slane %v1374, 2
      %v2222 = vsel %vm937, %v2219, %v2221
      %v2223 = vrot.slane %v1375, 2
      %v2224 = vrot.slane %v1376, 2
      %v2225 = vsel %vm937, %v2223, %v2224
      %v2226 = vrot.slane %v1377, 2
      %v2227 = vsel %vm937, %v2224, %v2226
      %v2228 = vrot.slane %v1378, 2
      %v2229 = vrot.slane %v1379, 2
      %v2230 = vsel %vm937, %v2228, %v2229
      %v2231 = vrot.slane %v1380, 2
      %v2232 = vsel %vm937, %v2229, %v2231
      %v2233 = vrot.slane %v1381, 2
      %v2234 = vrot.slane %v1382, 2
      %v2235 = vsel %vm937, %v2233, %v2234
      %v2236 = vrot.slane %v1383, 2
      %v2237 = vsel %vm937, %v2234, %v2236
      %v2238 = vrot.slane %v1384, 2
      %v2239 = vrot.slane %v1385, 2
      %v2240 = vsel %vm937, %v2238, %v2239
      %v2241 = vrot.slane %v1386, 2
      %v2242 = vsel %vm937, %v2239, %v2241
      %v2243 = vrot.slane %v1387, 2
      %v2244 = vrot.slane %v1388, 2
      %v2245 = vsel %vm937, %v2243, %v2244
      %v2246 = vrot.slane %v1389, 2
      %v2247 = vsel %vm937, %v2244, %v2246
      %v2248 = vrot.slane %v1390, 2
      %v2249 = vrot.slane %v1391, 2
      %v2250 = vsel %vm937, %v2248, %v2249
      %v2251 = vrot.slane %v1392, 2
      %v2252 = vsel %vm937, %v2249, %v2251
      %s2253 = scalar_lea.vmem %s1, 20
      %v2254 = vld [vmem:[%s2253] sm:$0x7]
      %v2255 = vsel %vm351, %v2175, 0
      %v2257 = vsel %vm351, %v2177, 0
      %v2259 = vsel %vm351, %v2180, 0
      %v2261 = vsel %vm351, %v2182, 0
      %v2263 = vsel %vm351, %v2185, 0
      %v2265 = vsel %vm351, %v2187, 0
      %v2267 = vsel %vm351, %v2190, 0
      %v2269 = vsel %vm351, %v2192, 0
      %v2271 = vsel %vm351, %v2195, 0
      %v2273 = vsel %vm351, %v2197, 0
      %v2275 = vsel %vm351, %v2200, 0
      %v2277 = vsel %vm351, %v2202, 0
      %v2279 = vsel %vm351, %v2205, 0
      %v2281 = vsel %vm351, %v2207, 0
      %v2283 = vsel %vm351, %v2210, 0
      %v2285 = vsel %vm351, %v2212, 0
      %v2287 = vsel %vm351, %v2215, 0
      %v2289 = vsel %vm351, %v2217, 0
      %v2291 = vsel %vm351, %v2220, 0
      %v2293 = vsel %vm351, %v2222, 0
      %v2295 = vsel %vm351, %v2225, 0
      %v2297 = vsel %vm351, %v2227, 0
      %v2299 = vsel %vm351, %v2230, 0
      %v2301 = vsel %vm351, %v2232, 0
      %v2303 = vsel %vm351, %v2235, 0
      %v2305 = vsel %vm351, %v2237, 0
      %v2307 = vsel %vm351, %v2240, 0
      %v2309 = vsel %vm351, %v2242, 0
      %v2311 = vsel %vm351, %v2245, 0
      %v2313 = vsel %vm351, %v2247, 0
      %v2315 = vsel %vm351, %v2250, 0
      %v2317 = vsel %vm351, %v2252, 0
      %v2320 = vsel %vm416, %v2254, 0
      %2322 = vmatprep.subr.mxu0 0.0
      %2323 = vmatpush1.msra.mxu0 0.0
      %2324 = vmatprep.subr.mxu0 0.0
      %2325 = vmatpush1.msra.mxu0 0.0
      %2326 = vmatprep.subr.mxu0 0.0
      %2327 = vmatpush1.msra.mxu0 0.0
      %2328 = vmatprep.subr.mxu0 0.0
      %2329 = vmatpush1.msra.mxu0 0.0
      %2330 = vmatprep.subr.mxu0 0.0
      %2331 = vmatpush1.msra.mxu0 0.0
      %2332 = vmatprep.subr.mxu0 0.0
      %2333 = vmatpush1.msra.mxu0 0.0
      %2334 = vmatprep.subr.mxu0 0.0
      %2335 = vmatpush1.msra.mxu0 0.0
      %2336 = vmatprep.subr.mxu0 0.0
      %2337 = vmatpush1.msra.mxu0 0.0
      %2338 = vmatprep.subr.mxu0 0.0
      %2339 = vmatpush1.msra.mxu0 0.0
      %2340 = vmatprep.subr.mxu0 0.0
      %2341 = vmatpush1.msra.mxu0 0.0
      %2342 = vmatprep.subr.mxu0 0.0
      %2343 = vmatpush1.msra.mxu0 0.0
      %2344 = vmatprep.subr.mxu0 0.0
      %2345 = vmatpush1.msra.mxu0 0.0
      %2346 = vmatprep.subr.mxu0 0.0
      %2347 = vmatpush1.msra.mxu0 0.0
      %2348 = vmatprep.subr.mxu0 0.0
      %2349 = vmatpush1.msra.mxu0 0.0
      %2350 = vmatprep.subr.mxu0 0.0
      %2351 = vmatpush1.msra.mxu0 0.0
      %2352 = vmatprep.subr.mxu0 0.0
      %2353 = vmatpush1.msra.mxu0 %v2320
      %2354 = vmatprep.subr.mxu0 0.0
      %2355 = vmatpush2.msra.mxu0 0.0
      %2356 = vmatprep.subr.mxu0 0.0
      %2357 = vmatpush2.msra.mxu0 0.0
      %2358 = vmatprep.subr.mxu0 0.0
      %2359 = vmatpush2.msra.mxu0 0.0
      %2360 = vmatprep.subr.mxu0 0.0
      %2361 = vmatpush2.msra.mxu0 0.0
      %2362 = vmatprep.subr.mxu0 0.0
      %2363 = vmatpush2.msra.mxu0 0.0
      %2364 = vmatprep.subr.mxu0 0.0
      %2365 = vmatpush2.msra.mxu0 0.0
      %2366 = vmatprep.subr.mxu0 0.0
      %2367 = vmatpush2.msra.mxu0 0.0
      %2368 = vmatprep.subr.mxu0 0.0
      %2369 = vmatpush2.msra.mxu0 0.0
      %2370 = vmatprep.subr.mxu0 0.0
      %2371 = vmatpush2.msra.mxu0 0.0
      %2372 = vmatprep.subr.mxu0 0.0
      %2373 = vmatpush2.msra.mxu0 0.0
      %2374 = vmatprep.subr.mxu0 0.0
      %2375 = vmatpush2.msra.mxu0 0.0
      %2376 = vmatprep.subr.mxu0 0.0
      %2377 = vmatpush2.msra.mxu0 0.0
      %2378 = vmatprep.subr.mxu0 0.0
      %2379 = vmatpush2.msra.mxu0 0.0
      %2380 = vmatprep.subr.mxu0 0.0
      %2381 = vmatpush2.msra.mxu0 0.0
      %2382 = vmatprep.subr.mxu0 0.0
      %2383 = vmatpush2.msra.mxu0 0.0
      %2384 = vmatprep.subr.mxu0 0.0
      %2385 = vmatpush2.msra.mxu0 0.0
      %2386 = vmatprep.mubr.f32.mxu0 0.0
      %2387 = vmatmul.mubr.f32.gmra.mxu0 %v2255
      %v2388 = vpop.f32.mrf.mxu0
      %v2389 = vadd.f32 0.0, %v2388
      %v2390 = vpop.f32.mrf.mxu0
      %2391 = vmatprep.mubr.f32.mxu0 0.0
      %2392 = vmatmul.mubr.f32.gmra.mxu0 %v2257
      %v2393 = vpop.f32.mrf.mxu0
      %v2394 = vadd.f32 0.0, %v2393
      %v2395 = vpop.f32.mrf.mxu0
      %2396 = vmatprep.mubr.f32.mxu0 0.0
      %2397 = vmatmul.mubr.f32.gmra.mxu0 %v2259
      %v2398 = vpop.f32.mrf.mxu0
      %v2399 = vadd.f32 0.0, %v2398
      %v2400 = vpop.f32.mrf.mxu0
      %2401 = vmatprep.mubr.f32.mxu0 0.0
      %2402 = vmatmul.mubr.f32.gmra.mxu0 %v2261
      %v2403 = vpop.f32.mrf.mxu0
      %v2404 = vadd.f32 0.0, %v2403
      %v2405 = vpop.f32.mrf.mxu0
      %2406 = vmatprep.mubr.f32.mxu0 0.0
      %2407 = vmatmul.mubr.f32.gmra.mxu0 %v2263
      %v2408 = vpop.f32.mrf.mxu0
      %v2409 = vadd.f32 0.0, %v2408
      %v2410 = vpop.f32.mrf.mxu0
      %2411 = vmatprep.mubr.f32.mxu0 0.0
      %2412 = vmatmul.mubr.f32.gmra.mxu0 %v2265
      %v2413 = vpop.f32.mrf.mxu0
      %v2414 = vadd.f32 0.0, %v2413
      %v2415 = vpop.f32.mrf.mxu0
      %2416 = vmatprep.mubr.f32.mxu0 0.0
      %2417 = vmatmul.mubr.f32.gmra.mxu0 %v2267
      %v2418 = vpop.f32.mrf.mxu0
      %v2419 = vadd.f32 0.0, %v2418
      %v2420 = vpop.f32.mrf.mxu0
      %2421 = vmatprep.mubr.f32.mxu0 0.0
      %2422 = vmatmul.mubr.f32.gmra.mxu0 %v2269
      %v2423 = vpop.f32.mrf.mxu0
      %v2424 = vadd.f32 0.0, %v2423
      %v2425 = vpop.f32.mrf.mxu0
      %2426 = vmatprep.mubr.f32.mxu0 0.0
      %2427 = vmatmul.mubr.f32.gmra.mxu0 %v2271
      %v2428 = vpop.f32.mrf.mxu0
      %v2429 = vadd.f32 0.0, %v2428
      %v2430 = vpop.f32.mrf.mxu0
      %2431 = vmatprep.mubr.f32.mxu0 0.0
      %2432 = vmatmul.mubr.f32.gmra.mxu0 %v2273
      %v2433 = vpop.f32.mrf.mxu0
      %v2434 = vadd.f32 0.0, %v2433
      %v2435 = vpop.f32.mrf.mxu0
      %2436 = vmatprep.mubr.f32.mxu0 0.0
      %2437 = vmatmul.mubr.f32.gmra.mxu0 %v2275
      %v2438 = vpop.f32.mrf.mxu0
      %v2439 = vadd.f32 0.0, %v2438
      %v2440 = vpop.f32.mrf.mxu0
      %2441 = vmatprep.mubr.f32.mxu0 0.0
      %2442 = vmatmul.mubr.f32.gmra.mxu0 %v2277
      %v2443 = vpop.f32.mrf.mxu0
      %v2444 = vadd.f32 0.0, %v2443
      %v2445 = vpop.f32.mrf.mxu0
      %2446 = vmatprep.mubr.f32.mxu0 0.0
      %2447 = vmatmul.mubr.f32.gmra.mxu0 %v2279
      %v2448 = vpop.f32.mrf.mxu0
      %v2449 = vadd.f32 0.0, %v2448
      %v2450 = vpop.f32.mrf.mxu0
      %2451 = vmatprep.mubr.f32.mxu0 0.0
      %2452 = vmatmul.mubr.f32.gmra.mxu0 %v2281
      %v2453 = vpop.f32.mrf.mxu0
      %v2454 = vadd.f32 0.0, %v2453
      %v2455 = vpop.f32.mrf.mxu0
      %2456 = vmatprep.mubr.f32.mxu0 0.0
      %2457 = vmatmul.mubr.f32.gmra.mxu0 %v2283
      %v2458 = vpop.f32.mrf.mxu0
      %v2459 = vadd.f32 0.0, %v2458
      %v2460 = vpop.f32.mrf.mxu0
      %2461 = vmatprep.mubr.f32.mxu0 0.0
      %2462 = vmatmul.mubr.f32.gmra.mxu0 %v2285
      %v2463 = vpop.f32.mrf.mxu0
      %v2464 = vadd.f32 0.0, %v2463
      %v2465 = vpop.f32.mrf.mxu0
      %2466 = vmatprep.mubr.f32.mxu0 0.0
      %2467 = vmatmul.mubr.f32.gmra.mxu0 %v2287
      %v2468 = vpop.f32.mrf.mxu0
      %v2469 = vadd.f32 0.0, %v2468
      %v2470 = vpop.f32.mrf.mxu0
      %2471 = vmatprep.mubr.f32.mxu0 0.0
      %2472 = vmatmul.mubr.f32.gmra.mxu0 %v2289
      %v2473 = vpop.f32.mrf.mxu0
      %v2474 = vadd.f32 0.0, %v2473
      %v2475 = vpop.f32.mrf.mxu0
      %2476 = vmatprep.mubr.f32.mxu0 0.0
      %2477 = vmatmul.mubr.f32.gmra.mxu0 %v2291
      %v2478 = vpop.f32.mrf.mxu0
      %v2479 = vadd.f32 0.0, %v2478
      %v2480 = vpop.f32.mrf.mxu0
      %2481 = vmatprep.mubr.f32.mxu0 0.0
      %2482 = vmatmul.mubr.f32.gmra.mxu0 %v2293
      %v2483 = vpop.f32.mrf.mxu0
      %v2484 = vadd.f32 0.0, %v2483
      %v2485 = vpop.f32.mrf.mxu0
      %2486 = vmatprep.mubr.f32.mxu0 0.0
      %2487 = vmatmul.mubr.f32.gmra.mxu0 %v2295
      %v2488 = vpop.f32.mrf.mxu0
      %v2489 = vadd.f32 0.0, %v2488
      %v2490 = vpop.f32.mrf.mxu0
      %2491 = vmatprep.mubr.f32.mxu0 0.0
      %2492 = vmatmul.mubr.f32.gmra.mxu0 %v2297
      %v2493 = vpop.f32.mrf.mxu0
      %v2494 = vadd.f32 0.0, %v2493
      %v2495 = vpop.f32.mrf.mxu0
      %2496 = vmatprep.mubr.f32.mxu0 0.0
      %2497 = vmatmul.mubr.f32.gmra.mxu0 %v2299
      %v2498 = vpop.f32.mrf.mxu0
      %v2499 = vadd.f32 0.0, %v2498
      %v2500 = vpop.f32.mrf.mxu0
      %2501 = vmatprep.mubr.f32.mxu0 0.0
      %2502 = vmatmul.mubr.f32.gmra.mxu0 %v2301
      %v2503 = vpop.f32.mrf.mxu0
      %v2504 = vadd.f32 0.0, %v2503
      %v2505 = vpop.f32.mrf.mxu0
      %2506 = vmatprep.mubr.f32.mxu0 0.0
      %2507 = vmatmul.mubr.f32.gmra.mxu0 %v2303
      %v2508 = vpop.f32.mrf.mxu0
      %v2509 = vadd.f32 0.0, %v2508
      %v2510 = vpop.f32.mrf.mxu0
      %2511 = vmatprep.mubr.f32.mxu0 0.0
      %2512 = vmatmul.mubr.f32.gmra.mxu0 %v2305
      %v2513 = vpop.f32.mrf.mxu0
      %v2514 = vadd.f32 0.0, %v2513
      %v2515 = vpop.f32.mrf.mxu0
      %2516 = vmatprep.mubr.f32.mxu0 0.0
      %2517 = vmatmul.mubr.f32.gmra.mxu0 %v2307
      %v2518 = vpop.f32.mrf.mxu0
      %v2519 = vadd.f32 0.0, %v2518
      %v2520 = vpop.f32.mrf.mxu0
      %2521 = vmatprep.mubr.f32.mxu0 0.0
      %2522 = vmatmul.mubr.f32.gmra.mxu0 %v2309
      %v2523 = vpop.f32.mrf.mxu0
      %v2524 = vadd.f32 0.0, %v2523
      %v2525 = vpop.f32.mrf.mxu0
      %2526 = vmatprep.mubr.f32.mxu0 0.0
      %2527 = vmatmul.mubr.f32.gmra.mxu0 %v2311
      %v2528 = vpop.f32.mrf.mxu0
      %v2529 = vadd.f32 0.0, %v2528
      %v2530 = vpop.f32.mrf.mxu0
      %2531 = vmatprep.mubr.f32.mxu0 0.0
      %2532 = vmatmul.mubr.f32.gmra.mxu0 %v2313
      %v2533 = vpop.f32.mrf.mxu0
      %v2534 = vadd.f32 0.0, %v2533
      %v2535 = vpop.f32.mrf.mxu0
      %2536 = vmatprep.mubr.f32.mxu0 0.0
      %2537 = vmatmul.mubr.f32.gmra.mxu0 %v2315
      %v2538 = vpop.f32.mrf.mxu0
      %v2539 = vadd.f32 0.0, %v2538
      %v2540 = vpop.f32.mrf.mxu0
      %2541 = vmatprep.mubr.f32.mxu0 0.0
      %2542 = vmatmul.mubr.f32.gmra.mxu0 %v2317
      %v2543 = vpop.f32.mrf.mxu0
      %v2544 = vadd.f32 0.0, %v2543
      %v2545 = vpop.f32.mrf.mxu0
      %2546 = vdwg.mxu0
      %v2547 = vadd.f32 %v2141, %v2389
      %v2548 = vadd.f32 %v2142, %v2394
      %v2549 = vadd.f32 %v2143, %v2399
      %v2550 = vadd.f32 %v2144, %v2404
      %v2551 = vadd.f32 %v2145, %v2409
      %v2552 = vadd.f32 %v2146, %v2414
      %v2553 = vadd.f32 %v2147, %v2419
      %v2554 = vadd.f32 %v2148, %v2424
      %v2555 = vadd.f32 %v2149, %v2429
      %v2556 = vadd.f32 %v2150, %v2434
      %v2557 = vadd.f32 %v2151, %v2439
      %v2558 = vadd.f32 %v2152, %v2444
      %v2559 = vadd.f32 %v2153, %v2449
      %v2560 = vadd.f32 %v2154, %v2454
      %v2561 = vadd.f32 %v2155, %v2459
      %v2562 = vadd.f32 %v2156, %v2464
      %v2563 = vadd.f32 %v2157, %v2469
      %v2564 = vadd.f32 %v2158, %v2474
      %v2565 = vadd.f32 %v2159, %v2479
      %v2566 = vadd.f32 %v2160, %v2484
      %v2567 = vadd.f32 %v2161, %v2489
      %v2568 = vadd.f32 %v2162, %v2494
      %v2569 = vadd.f32 %v2163, %v2499
      %v2570 = vadd.f32 %v2164, %v2504
      %v2571 = vadd.f32 %v2165, %v2509
      %v2572 = vadd.f32 %v2166, %v2514
      %v2573 = vadd.f32 %v2167, %v2519
      %v2574 = vadd.f32 %v2168, %v2524
      %v2575 = vadd.f32 %v2169, %v2529
      %v2576 = vadd.f32 %v2170, %v2534
      %v2577 = vadd.f32 %v2171, %v2539
      %v2578 = vadd.f32 %v2172, %v2544
      %s2579 = scalar_lea.vmem %s165, 48
      %v2580 = vld [vmem:[%s2579] sm:$0xff]
      %v2581 = vld [vmem:[%s2579 + $0x8] sm:$0xff]
      %v2582 = vld [vmem:[%s2579 + $0x10] sm:$0x3]
      %v2583 = vld [vmem:[%s2579 + $0x18] sm:$0xff]
      %v2584 = vld [vmem:[%s2579 + $0x20] sm:$0xff]
      %v2585 = vld [vmem:[%s2579 + $0x28] sm:$0x3]
      %v2586 = vld [vmem:[%s2579 + $0x30] sm:$0xff]
      %v2587 = vld [vmem:[%s2579 + $0x38] sm:$0xff]
      %v2588 = vld [vmem:[%s2579 + $0x40] sm:$0x3]
      %v2589 = vld [vmem:[%s2579 + $0x48] sm:$0xff]
      %v2590 = vld [vmem:[%s2579 + $0x50] sm:$0xff]
      %v2591 = vld [vmem:[%s2579 + $0x58] sm:$0x3]
      %v2592 = vld [vmem:[%s2579 + $0x60] sm:$0xff]
      %v2593 = vld [vmem:[%s2579 + $0x68] sm:$0xff]
      %v2594 = vld [vmem:[%s2579 + $0x70] sm:$0x3]
      %v2595 = vld [vmem:[%s2579 + $0x78] sm:$0xff]
      %v2596 = vld [vmem:[%s2579 + $0x80] sm:$0xff]
      %v2597 = vld [vmem:[%s2579 + $0x88] sm:$0x3]
      %v2598 = vld [vmem:[%s2579 + $0x90] sm:$0xff]
      %v2599 = vld [vmem:[%s2579 + $0x98] sm:$0xff]
      %v2600 = vld [vmem:[%s2579 + $0xa0] sm:$0x3]
      %v2601 = vld [vmem:[%s2579 + $0xa8] sm:$0xff]
      %v2602 = vld [vmem:[%s2579 + $0xb0] sm:$0xff]
      %v2603 = vld [vmem:[%s2579 + $0xb8] sm:$0x3]
      %v2604 = vld [vmem:[%s2579 + $0xc0] sm:$0xff]
      %v2605 = vld [vmem:[%s2579 + $0xc8] sm:$0xff]
      %v2606 = vld [vmem:[%s2579 + $0xd0] sm:$0x3]
      %v2607 = vld [vmem:[%s2579 + $0xd8] sm:$0xff]
      %v2608 = vld [vmem:[%s2579 + $0xe0] sm:$0xff]
      %v2609 = vld [vmem:[%s2579 + $0xe8] sm:$0x3]
      %v2610 = vld [vmem:[%s2579 + $0xf0] sm:$0xff]
      %v2611 = vld [vmem:[%s2579 + $0xf8] sm:$0xff]
      %v2612 = vld [vmem:[%s2579 + $0x100] sm:$0x3]
      %v2613 = vld [vmem:[%s2579 + $0x108] sm:$0xff]
      %v2614 = vld [vmem:[%s2579 + $0x110] sm:$0xff]
      %v2615 = vld [vmem:[%s2579 + $0x118] sm:$0x3]
      %v2616 = vld [vmem:[%s2579 + $0x120] sm:$0xff]
      %v2617 = vld [vmem:[%s2579 + $0x128] sm:$0xff]
      %v2618 = vld [vmem:[%s2579 + $0x130] sm:$0x3]
      %v2619 = vld [vmem:[%s2579 + $0x138] sm:$0xff]
      %v2620 = vld [vmem:[%s2579 + $0x140] sm:$0xff]
      %v2621 = vld [vmem:[%s2579 + $0x148] sm:$0x3]
      %v2622 = vld [vmem:[%s2579 + $0x150] sm:$0xff]
      %v2623 = vld [vmem:[%s2579 + $0x158] sm:$0xff]
      %v2624 = vld [vmem:[%s2579 + $0x160] sm:$0x3]
      %v2625 = vld [vmem:[%s2579 + $0x168] sm:$0xff]
      %v2626 = vld [vmem:[%s2579 + $0x170] sm:$0xff]
      %v2627 = vld [vmem:[%s2579 + $0x178] sm:$0x3]
      %s2628 = scalar_lea.vmem %s1, 24
      %v2629 = vld [vmem:[%s2628] sm:$0x7]
      %v2631 = vsel %vm351, %v2580, 0
      %v2634 = vsel %vm351, %v2581, 0
      %v2637 = vsel %vm351, %v2583, 0
      %v2640 = vsel %vm351, %v2584, 0
      %v2643 = vsel %vm351, %v2586, 0
      %v2646 = vsel %vm351, %v2587, 0
      %v2649 = vsel %vm351, %v2589, 0
      %v2652 = vsel %vm351, %v2590, 0
      %v2655 = vsel %vm351, %v2592, 0
      %v2658 = vsel %vm351, %v2593, 0
      %v2661 = vsel %vm351, %v2595, 0
      %v2664 = vsel %vm351, %v2596, 0
      %v2667 = vsel %vm351, %v2598, 0
      %v2670 = vsel %vm351, %v2599, 0
      %v2673 = vsel %vm351, %v2601, 0
      %v2676 = vsel %vm351, %v2602, 0
      %v2679 = vsel %vm351, %v2604, 0
      %v2682 = vsel %vm351, %v2605, 0
      %v2685 = vsel %vm351, %v2607, 0
      %v2688 = vsel %vm351, %v2608, 0
      %v2691 = vsel %vm351, %v2610, 0
      %v2694 = vsel %vm351, %v2611, 0
      %v2697 = vsel %vm351, %v2613, 0
      %v2700 = vsel %vm351, %v2614, 0
      %v2703 = vsel %vm351, %v2616, 0
      %v2706 = vsel %vm351, %v2617, 0
      %v2709 = vsel %vm351, %v2619, 0
      %v2712 = vsel %vm351, %v2620, 0
      %v2715 = vsel %vm351, %v2622, 0
      %v2718 = vsel %vm351, %v2623, 0
      %v2721 = vsel %vm351, %v2625, 0
      %v2724 = vsel %vm351, %v2626, 0
      %v2727 = vsel %vm416, %v2629, 0
      %2729 = vmatprep.subr.mxu0 0.0
      %2730 = vmatpush1.msra.mxu0 0.0
      %2731 = vmatprep.subr.mxu0 0.0
      %2732 = vmatpush1.msra.mxu0 0.0
      %2733 = vmatprep.subr.mxu0 0.0
      %2734 = vmatpush1.msra.mxu0 0.0
      %2735 = vmatprep.subr.mxu0 0.0
      %2736 = vmatpush1.msra.mxu0 0.0
      %2737 = vmatprep.subr.mxu0 0.0
      %2738 = vmatpush1.msra.mxu0 0.0
      %2739 = vmatprep.subr.mxu0 0.0
      %2740 = vmatpush1.msra.mxu0 0.0
      %2741 = vmatprep.subr.mxu0 0.0
      %2742 = vmatpush1.msra.mxu0 0.0
      %2743 = vmatprep.subr.mxu0 0.0
      %2744 = vmatpush1.msra.mxu0 0.0
      %2745 = vmatprep.subr.mxu0 0.0
      %2746 = vmatpush1.msra.mxu0 0.0
      %2747 = vmatprep.subr.mxu0 0.0
      %2748 = vmatpush1.msra.mxu0 0.0
      %2749 = vmatprep.subr.mxu0 0.0
      %2750 = vmatpush1.msra.mxu0 0.0
      %2751 = vmatprep.subr.mxu0 0.0
      %2752 = vmatpush1.msra.mxu0 0.0
      %2753 = vmatprep.subr.mxu0 0.0
      %2754 = vmatpush1.msra.mxu0 0.0
      %2755 = vmatprep.subr.mxu0 0.0
      %2756 = vmatpush1.msra.mxu0 0.0
      %2757 = vmatprep.subr.mxu0 0.0
      %2758 = vmatpush1.msra.mxu0 0.0
      %2759 = vmatprep.subr.mxu0 0.0
      %2760 = vmatpush1.msra.mxu0 %v2727
      %2761 = vmatprep.subr.mxu0 0.0
      %2762 = vmatpush2.msra.mxu0 0.0
      %2763 = vmatprep.subr.mxu0 0.0
      %2764 = vmatpush2.msra.mxu0 0.0
      %2765 = vmatprep.subr.mxu0 0.0
      %2766 = vmatpush2.msra.mxu0 0.0
      %2767 = vmatprep.subr.mxu0 0.0
      %2768 = vmatpush2.msra.mxu0 0.0
      %2769 = vmatprep.subr.mxu0 0.0
      %2770 = vmatpush2.msra.mxu0 0.0
      %2771 = vmatprep.subr.mxu0 0.0
      %2772 = vmatpush2.msra.mxu0 0.0
      %2773 = vmatprep.subr.mxu0 0.0
      %2774 = vmatpush2.msra.mxu0 0.0
      %2775 = vmatprep.subr.mxu0 0.0
      %2776 = vmatpush2.msra.mxu0 0.0
      %2777 = vmatprep.subr.mxu0 0.0
      %2778 = vmatpush2.msra.mxu0 0.0
      %2779 = vmatprep.subr.mxu0 0.0
      %2780 = vmatpush2.msra.mxu0 0.0
      %2781 = vmatprep.subr.mxu0 0.0
      %2782 = vmatpush2.msra.mxu0 0.0
      %2783 = vmatprep.subr.mxu0 0.0
      %2784 = vmatpush2.msra.mxu0 0.0
      %2785 = vmatprep.subr.mxu0 0.0
      %2786 = vmatpush2.msra.mxu0 0.0
      %2787 = vmatprep.subr.mxu0 0.0
      %2788 = vmatpush2.msra.mxu0 0.0
      %2789 = vmatprep.subr.mxu0 0.0
      %2790 = vmatpush2.msra.mxu0 0.0
      %2791 = vmatprep.subr.mxu0 0.0
      %2792 = vmatpush2.msra.mxu0 0.0
      %2793 = vmatprep.mubr.f32.mxu0 0.0
      %2794 = vmatmul.mubr.f32.gmra.mxu0 %v2631
      %v2795 = vpop.f32.mrf.mxu0
      %v2796 = vadd.f32 0.0, %v2795
      %v2797 = vpop.f32.mrf.mxu0
      %2798 = vmatprep.mubr.f32.mxu0 0.0
      %2799 = vmatmul.mubr.f32.gmra.mxu0 %v2634
      %v2800 = vpop.f32.mrf.mxu0
      %v2801 = vadd.f32 0.0, %v2800
      %v2802 = vpop.f32.mrf.mxu0
      %2803 = vmatprep.mubr.f32.mxu0 0.0
      %2804 = vmatmul.mubr.f32.gmra.mxu0 %v2637
      %v2805 = vpop.f32.mrf.mxu0
      %v2806 = vadd.f32 0.0, %v2805
      %v2807 = vpop.f32.mrf.mxu0
      %2808 = vmatprep.mubr.f32.mxu0 0.0
      %2809 = vmatmul.mubr.f32.gmra.mxu0 %v2640
      %v2810 = vpop.f32.mrf.mxu0
      %v2811 = vadd.f32 0.0, %v2810
      %v2812 = vpop.f32.mrf.mxu0
      %2813 = vmatprep.mubr.f32.mxu0 0.0
      %2814 = vmatmul.mubr.f32.gmra.mxu0 %v2643
      %v2815 = vpop.f32.mrf.mxu0
      %v2816 = vadd.f32 0.0, %v2815
      %v2817 = vpop.f32.mrf.mxu0
      %2818 = vmatprep.mubr.f32.mxu0 0.0
      %2819 = vmatmul.mubr.f32.gmra.mxu0 %v2646
      %v2820 = vpop.f32.mrf.mxu0
      %v2821 = vadd.f32 0.0, %v2820
      %v2822 = vpop.f32.mrf.mxu0
      %2823 = vmatprep.mubr.f32.mxu0 0.0
      %2824 = vmatmul.mubr.f32.gmra.mxu0 %v2649
      %v2825 = vpop.f32.mrf.mxu0
      %v2826 = vadd.f32 0.0, %v2825
      %v2827 = vpop.f32.mrf.mxu0
      %2828 = vmatprep.mubr.f32.mxu0 0.0
      %2829 = vmatmul.mubr.f32.gmra.mxu0 %v2652
      %v2830 = vpop.f32.mrf.mxu0
      %v2831 = vadd.f32 0.0, %v2830
      %v2832 = vpop.f32.mrf.mxu0
      %2833 = vmatprep.mubr.f32.mxu0 0.0
      %2834 = vmatmul.mubr.f32.gmra.mxu0 %v2655
      %v2835 = vpop.f32.mrf.mxu0
      %v2836 = vadd.f32 0.0, %v2835
      %v2837 = vpop.f32.mrf.mxu0
      %2838 = vmatprep.mubr.f32.mxu0 0.0
      %2839 = vmatmul.mubr.f32.gmra.mxu0 %v2658
      %v2840 = vpop.f32.mrf.mxu0
      %v2841 = vadd.f32 0.0, %v2840
      %v2842 = vpop.f32.mrf.mxu0
      %2843 = vmatprep.mubr.f32.mxu0 0.0
      %2844 = vmatmul.mubr.f32.gmra.mxu0 %v2661
      %v2845 = vpop.f32.mrf.mxu0
      %v2846 = vadd.f32 0.0, %v2845
      %v2847 = vpop.f32.mrf.mxu0
      %2848 = vmatprep.mubr.f32.mxu0 0.0
      %2849 = vmatmul.mubr.f32.gmra.mxu0 %v2664
      %v2850 = vpop.f32.mrf.mxu0
      %v2851 = vadd.f32 0.0, %v2850
      %v2852 = vpop.f32.mrf.mxu0
      %2853 = vmatprep.mubr.f32.mxu0 0.0
      %2854 = vmatmul.mubr.f32.gmra.mxu0 %v2667
      %v2855 = vpop.f32.mrf.mxu0
      %v2856 = vadd.f32 0.0, %v2855
      %v2857 = vpop.f32.mrf.mxu0
      %2858 = vmatprep.mubr.f32.mxu0 0.0
      %2859 = vmatmul.mubr.f32.gmra.mxu0 %v2670
      %v2860 = vpop.f32.mrf.mxu0
      %v2861 = vadd.f32 0.0, %v2860
      %v2862 = vpop.f32.mrf.mxu0
      %2863 = vmatprep.mubr.f32.mxu0 0.0
      %2864 = vmatmul.mubr.f32.gmra.mxu0 %v2673
      %v2865 = vpop.f32.mrf.mxu0
      %v2866 = vadd.f32 0.0, %v2865
      %v2867 = vpop.f32.mrf.mxu0
      %2868 = vmatprep.mubr.f32.mxu0 0.0
      %2869 = vmatmul.mubr.f32.gmra.mxu0 %v2676
      %v2870 = vpop.f32.mrf.mxu0
      %v2871 = vadd.f32 0.0, %v2870
      %v2872 = vpop.f32.mrf.mxu0
      %2873 = vmatprep.mubr.f32.mxu0 0.0
      %2874 = vmatmul.mubr.f32.gmra.mxu0 %v2679
      %v2875 = vpop.f32.mrf.mxu0
      %v2876 = vadd.f32 0.0, %v2875
      %v2877 = vpop.f32.mrf.mxu0
      %2878 = vmatprep.mubr.f32.mxu0 0.0
      %2879 = vmatmul.mubr.f32.gmra.mxu0 %v2682
      %v2880 = vpop.f32.mrf.mxu0
      %v2881 = vadd.f32 0.0, %v2880
      %v2882 = vpop.f32.mrf.mxu0
      %2883 = vmatprep.mubr.f32.mxu0 0.0
      %2884 = vmatmul.mubr.f32.gmra.mxu0 %v2685
      %v2885 = vpop.f32.mrf.mxu0
      %v2886 = vadd.f32 0.0, %v2885
      %v2887 = vpop.f32.mrf.mxu0
      %2888 = vmatprep.mubr.f32.mxu0 0.0
      %2889 = vmatmul.mubr.f32.gmra.mxu0 %v2688
      %v2890 = vpop.f32.mrf.mxu0
      %v2891 = vadd.f32 0.0, %v2890
      %v2892 = vpop.f32.mrf.mxu0
      %2893 = vmatprep.mubr.f32.mxu0 0.0
      %2894 = vmatmul.mubr.f32.gmra.mxu0 %v2691
      %v2895 = vpop.f32.mrf.mxu0
      %v2896 = vadd.f32 0.0, %v2895
      %v2897 = vpop.f32.mrf.mxu0
      %2898 = vmatprep.mubr.f32.mxu0 0.0
      %2899 = vmatmul.mubr.f32.gmra.mxu0 %v2694
      %v2900 = vpop.f32.mrf.mxu0
      %v2901 = vadd.f32 0.0, %v2900
      %v2902 = vpop.f32.mrf.mxu0
      %2903 = vmatprep.mubr.f32.mxu0 0.0
      %2904 = vmatmul.mubr.f32.gmra.mxu0 %v2697
      %v2905 = vpop.f32.mrf.mxu0
      %v2906 = vadd.f32 0.0, %v2905
      %v2907 = vpop.f32.mrf.mxu0
      %2908 = vmatprep.mubr.f32.mxu0 0.0
      %2909 = vmatmul.mubr.f32.gmra.mxu0 %v2700
      %v2910 = vpop.f32.mrf.mxu0
      %v2911 = vadd.f32 0.0, %v2910
      %v2912 = vpop.f32.mrf.mxu0
      %2913 = vmatprep.mubr.f32.mxu0 0.0
      %2914 = vmatmul.mubr.f32.gmra.mxu0 %v2703
      %v2915 = vpop.f32.mrf.mxu0
      %v2916 = vadd.f32 0.0, %v2915
      %v2917 = vpop.f32.mrf.mxu0
      %2918 = vmatprep.mubr.f32.mxu0 0.0
      %2919 = vmatmul.mubr.f32.gmra.mxu0 %v2706
      %v2920 = vpop.f32.mrf.mxu0
      %v2921 = vadd.f32 0.0, %v2920
      %v2922 = vpop.f32.mrf.mxu0
      %2923 = vmatprep.mubr.f32.mxu0 0.0
      %2924 = vmatmul.mubr.f32.gmra.mxu0 %v2709
      %v2925 = vpop.f32.mrf.mxu0
      %v2926 = vadd.f32 0.0, %v2925
      %v2927 = vpop.f32.mrf.mxu0
      %2928 = vmatprep.mubr.f32.mxu0 0.0
      %2929 = vmatmul.mubr.f32.gmra.mxu0 %v2712
      %v2930 = vpop.f32.mrf.mxu0
      %v2931 = vadd.f32 0.0, %v2930
      %v2932 = vpop.f32.mrf.mxu0
      %2933 = vmatprep.mubr.f32.mxu0 0.0
      %2934 = vmatmul.mubr.f32.gmra.mxu0 %v2715
      %v2935 = vpop.f32.mrf.mxu0
      %v2936 = vadd.f32 0.0, %v2935
      %v2937 = vpop.f32.mrf.mxu0
      %2938 = vmatprep.mubr.f32.mxu0 0.0
      %2939 = vmatmul.mubr.f32.gmra.mxu0 %v2718
      %v2940 = vpop.f32.mrf.mxu0
      %v2941 = vadd.f32 0.0, %v2940
      %v2942 = vpop.f32.mrf.mxu0
      %2943 = vmatprep.mubr.f32.mxu0 0.0
      %2944 = vmatmul.mubr.f32.gmra.mxu0 %v2721
      %v2945 = vpop.f32.mrf.mxu0
      %v2946 = vadd.f32 0.0, %v2945
      %v2947 = vpop.f32.mrf.mxu0
      %2948 = vmatprep.mubr.f32.mxu0 0.0
      %2949 = vmatmul.mubr.f32.gmra.mxu0 %v2724
      %v2950 = vpop.f32.mrf.mxu0
      %v2951 = vadd.f32 0.0, %v2950
      %v2952 = vpop.f32.mrf.mxu0
      %2953 = vdwg.mxu0
      %v2954 = vadd.f32 %v2547, %v2796
      %v2955 = vadd.f32 %v2548, %v2801
      %v2956 = vadd.f32 %v2549, %v2806
      %v2957 = vadd.f32 %v2550, %v2811
      %v2958 = vadd.f32 %v2551, %v2816
      %v2959 = vadd.f32 %v2552, %v2821
      %v2960 = vadd.f32 %v2553, %v2826
      %v2961 = vadd.f32 %v2554, %v2831
      %v2962 = vadd.f32 %v2555, %v2836
      %v2963 = vadd.f32 %v2556, %v2841
      %v2964 = vadd.f32 %v2557, %v2846
      %v2965 = vadd.f32 %v2558, %v2851
      %v2966 = vadd.f32 %v2559, %v2856
      %v2967 = vadd.f32 %v2560, %v2861
      %v2968 = vadd.f32 %v2561, %v2866
      %v2969 = vadd.f32 %v2562, %v2871
      %v2970 = vadd.f32 %v2563, %v2876
      %v2971 = vadd.f32 %v2564, %v2881
      %v2972 = vadd.f32 %v2565, %v2886
      %v2973 = vadd.f32 %v2566, %v2891
      %v2974 = vadd.f32 %v2567, %v2896
      %v2975 = vadd.f32 %v2568, %v2901
      %v2976 = vadd.f32 %v2569, %v2906
      %v2977 = vadd.f32 %v2570, %v2911
      %v2978 = vadd.f32 %v2571, %v2916
      %v2979 = vadd.f32 %v2572, %v2921
      %v2980 = vadd.f32 %v2573, %v2926
      %v2981 = vadd.f32 %v2574, %v2931
      %v2982 = vadd.f32 %v2575, %v2936
      %v2983 = vadd.f32 %v2576, %v2941
      %v2984 = vadd.f32 %v2577, %v2946
      %v2985 = vadd.f32 %v2578, %v2951
      %v3002 = vrot.slane %v2580, 1
      %v3003 = vrot.slane %v2581, 1
      %v3004 = vsel %vm268, %v3002, %v3003
      %v3005 = vrot.slane %v2582, 1
      %v3006 = vsel %vm268, %v3003, %v3005
      %v3007 = vrot.slane %v2583, 1
      %v3008 = vrot.slane %v2584, 1
      %v3009 = vsel %vm268, %v3007, %v3008
      %v3010 = vrot.slane %v2585, 1
      %v3011 = vsel %vm268, %v3008, %v3010
      %v3012 = vrot.slane %v2586, 1
      %v3013 = vrot.slane %v2587, 1
      %v3014 = vsel %vm268, %v3012, %v3013
      %v3015 = vrot.slane %v2588, 1
      %v3016 = vsel %vm268, %v3013, %v3015
      %v3017 = vrot.slane %v2589, 1
      %v3018 = vrot.slane %v2590, 1
      %v3019 = vsel %vm268, %v3017, %v3018
      %v3020 = vrot.slane %v2591, 1
      %v3021 = vsel %vm268, %v3018, %v3020
      %v3022 = vrot.slane %v2592, 1
      %v3023 = vrot.slane %v2593, 1
      %v3024 = vsel %vm268, %v3022, %v3023
      %v3025 = vrot.slane %v2594, 1
      %v3026 = vsel %vm268, %v3023, %v3025
      %v3027 = vrot.slane %v2595, 1
      %v3028 = vrot.slane %v2596, 1
      %v3029 = vsel %vm268, %v3027, %v3028
      %v3030 = vrot.slane %v2597, 1
      %v3031 = vsel %vm268, %v3028, %v3030
      %v3032 = vrot.slane %v2598, 1
      %v3033 = vrot.slane %v2599, 1
      %v3034 = vsel %vm268, %v3032, %v3033
      %v3035 = vrot.slane %v2600, 1
      %v3036 = vsel %vm268, %v3033, %v3035
      %v3037 = vrot.slane %v2601, 1
      %v3038 = vrot.slane %v2602, 1
      %v3039 = vsel %vm268, %v3037, %v3038
      %v3040 = vrot.slane %v2603, 1
      %v3041 = vsel %vm268, %v3038, %v3040
      %v3042 = vrot.slane %v2604, 1
      %v3043 = vrot.slane %v2605, 1
      %v3044 = vsel %vm268, %v3042, %v3043
      %v3045 = vrot.slane %v2606, 1
      %v3046 = vsel %vm268, %v3043, %v3045
      %v3047 = vrot.slane %v2607, 1
      %v3048 = vrot.slane %v2608, 1
      %v3049 = vsel %vm268, %v3047, %v3048
      %v3050 = vrot.slane %v2609, 1
      %v3051 = vsel %vm268, %v3048, %v3050
      %v3052 = vrot.slane %v2610, 1
      %v3053 = vrot.slane %v2611, 1
      %v3054 = vsel %vm268, %v3052, %v3053
      %v3055 = vrot.slane %v2612, 1
      %v3056 = vsel %vm268, %v3053, %v3055
      %v3057 = vrot.slane %v2613, 1
      %v3058 = vrot.slane %v2614, 1
      %v3059 = vsel %vm268, %v3057, %v3058
      %v3060 = vrot.slane %v2615, 1
      %v3061 = vsel %vm268, %v3058, %v3060
      %v3062 = vrot.slane %v2616, 1
      %v3063 = vrot.slane %v2617, 1
      %v3064 = vsel %vm268, %v3062, %v3063
      %v3065 = vrot.slane %v2618, 1
      %v3066 = vsel %vm268, %v3063, %v3065
      %v3067 = vrot.slane %v2619, 1
      %v3068 = vrot.slane %v2620, 1
      %v3069 = vsel %vm268, %v3067, %v3068
      %v3070 = vrot.slane %v2621, 1
      %v3071 = vsel %vm268, %v3068, %v3070
      %v3072 = vrot.slane %v2622, 1
      %v3073 = vrot.slane %v2623, 1
      %v3074 = vsel %vm268, %v3072, %v3073
      %v3075 = vrot.slane %v2624, 1
      %v3076 = vsel %vm268, %v3073, %v3075
      %v3077 = vrot.slane %v2625, 1
      %v3078 = vrot.slane %v2626, 1
      %v3079 = vsel %vm268, %v3077, %v3078
      %v3080 = vrot.slane %v2627, 1
      %v3081 = vsel %vm268, %v3078, %v3080
      %s3082 = scalar_lea.vmem %s1, 28
      %v3083 = vld [vmem:[%s3082] sm:$0x7]
      %v3084 = vsel %vm351, %v3004, 0
      %v3086 = vsel %vm351, %v3006, 0
      %v3088 = vsel %vm351, %v3009, 0
      %v3090 = vsel %vm351, %v3011, 0
      %v3092 = vsel %vm351, %v3014, 0
      %v3094 = vsel %vm351, %v3016, 0
      %v3096 = vsel %vm351, %v3019, 0
      %v3098 = vsel %vm351, %v3021, 0
      %v3100 = vsel %vm351, %v3024, 0
      %v3102 = vsel %vm351, %v3026, 0
      %v3104 = vsel %vm351, %v3029, 0
      %v3106 = vsel %vm351, %v3031, 0
      %v3108 = vsel %vm351, %v3034, 0
      %v3110 = vsel %vm351, %v3036, 0
      %v3112 = vsel %vm351, %v3039, 0
      %v3114 = vsel %vm351, %v3041, 0
      %v3116 = vsel %vm351, %v3044, 0
      %v3118 = vsel %vm351, %v3046, 0
      %v3120 = vsel %vm351, %v3049, 0
      %v3122 = vsel %vm351, %v3051, 0
      %v3124 = vsel %vm351, %v3054, 0
      %v3126 = vsel %vm351, %v3056, 0
      %v3128 = vsel %vm351, %v3059, 0
      %v3130 = vsel %vm351, %v3061, 0
      %v3132 = vsel %vm351, %v3064, 0
      %v3134 = vsel %vm351, %v3066, 0
      %v3136 = vsel %vm351, %v3069, 0
      %v3138 = vsel %vm351, %v3071, 0
      %v3140 = vsel %vm351, %v3074, 0
      %v3142 = vsel %vm351, %v3076, 0
      %v3144 = vsel %vm351, %v3079, 0
      %v3146 = vsel %vm351, %v3081, 0
      %v3149 = vsel %vm416, %v3083, 0
      %3151 = vmatprep.subr.mxu0 0.0
      %3152 = vmatpush1.msra.mxu0 0.0
      %3153 = vmatprep.subr.mxu0 0.0
      %3154 = vmatpush1.msra.mxu0 0.0
      %3155 = vmatprep.subr.mxu0 0.0
      %3156 = vmatpush1.msra.mxu0 0.0
      %3157 = vmatprep.subr.mxu0 0.0
      %3158 = vmatpush1.msra.mxu0 0.0
      %3159 = vmatprep.subr.mxu0 0.0
      %3160 = vmatpush1.msra.mxu0 0.0
      %3161 = vmatprep.subr.mxu0 0.0
      %3162 = vmatpush1.msra.mxu0 0.0
      %3163 = vmatprep.subr.mxu0 0.0
      %3164 = vmatpush1.msra.mxu0 0.0
      %3165 = vmatprep.subr.mxu0 0.0
      %3166 = vmatpush1.msra.mxu0 0.0
      %3167 = vmatprep.subr.mxu0 0.0
      %3168 = vmatpush1.msra.mxu0 0.0
      %3169 = vmatprep.subr.mxu0 0.0
      %3170 = vmatpush1.msra.mxu0 0.0
      %3171 = vmatprep.subr.mxu0 0.0
      %3172 = vmatpush1.msra.mxu0 0.0
      %3173 = vmatprep.subr.mxu0 0.0
      %3174 = vmatpush1.msra.mxu0 0.0
      %3175 = vmatprep.subr.mxu0 0.0
      %3176 = vmatpush1.msra.mxu0 0.0
      %3177 = vmatprep.subr.mxu0 0.0
      %3178 = vmatpush1.msra.mxu0 0.0
      %3179 = vmatprep.subr.mxu0 0.0
      %3180 = vmatpush1.msra.mxu0 0.0
      %3181 = vmatprep.subr.mxu0 0.0
      %3182 = vmatpush1.msra.mxu0 %v3149
      %3183 = vmatprep.subr.mxu0 0.0
      %3184 = vmatpush2.msra.mxu0 0.0
      %3185 = vmatprep.subr.mxu0 0.0
      %3186 = vmatpush2.msra.mxu0 0.0
      %3187 = vmatprep.subr.mxu0 0.0
      %3188 = vmatpush2.msra.mxu0 0.0
      %3189 = vmatprep.subr.mxu0 0.0
      %3190 = vmatpush2.msra.mxu0 0.0
      %3191 = vmatprep.subr.mxu0 0.0
      %3192 = vmatpush2.msra.mxu0 0.0
      %3193 = vmatprep.subr.mxu0 0.0
      %3194 = vmatpush2.msra.mxu0 0.0
      %3195 = vmatprep.subr.mxu0 0.0
      %3196 = vmatpush2.msra.mxu0 0.0
      %3197 = vmatprep.subr.mxu0 0.0
      %3198 = vmatpush2.msra.mxu0 0.0
      %3199 = vmatprep.subr.mxu0 0.0
      %3200 = vmatpush2.msra.mxu0 0.0
      %3201 = vmatprep.subr.mxu0 0.0
      %3202 = vmatpush2.msra.mxu0 0.0
      %3203 = vmatprep.subr.mxu0 0.0
      %3204 = vmatpush2.msra.mxu0 0.0
      %3205 = vmatprep.subr.mxu0 0.0
      %3206 = vmatpush2.msra.mxu0 0.0
      %3207 = vmatprep.subr.mxu0 0.0
      %3208 = vmatpush2.msra.mxu0 0.0
      %3209 = vmatprep.subr.mxu0 0.0
      %3210 = vmatpush2.msra.mxu0 0.0
      %3211 = vmatprep.subr.mxu0 0.0
      %3212 = vmatpush2.msra.mxu0 0.0
      %3213 = vmatprep.subr.mxu0 0.0
      %3214 = vmatpush2.msra.mxu0 0.0
      %3215 = vmatprep.mubr.f32.mxu0 0.0
      %3216 = vmatmul.mubr.f32.gmra.mxu0 %v3084
      %v3217 = vpop.f32.mrf.mxu0
      %v3218 = vadd.f32 0.0, %v3217
      %v3219 = vpop.f32.mrf.mxu0
      %3220 = vmatprep.mubr.f32.mxu0 0.0
      %3221 = vmatmul.mubr.f32.gmra.mxu0 %v3086
      %v3222 = vpop.f32.mrf.mxu0
      %v3223 = vadd.f32 0.0, %v3222
      %v3224 = vpop.f32.mrf.mxu0
      %3225 = vmatprep.mubr.f32.mxu0 0.0
      %3226 = vmatmul.mubr.f32.gmra.mxu0 %v3088
      %v3227 = vpop.f32.mrf.mxu0
      %v3228 = vadd.f32 0.0, %v3227
      %v3229 = vpop.f32.mrf.mxu0
      %3230 = vmatprep.mubr.f32.mxu0 0.0
      %3231 = vmatmul.mubr.f32.gmra.mxu0 %v3090
      %v3232 = vpop.f32.mrf.mxu0
      %v3233 = vadd.f32 0.0, %v3232
      %v3234 = vpop.f32.mrf.mxu0
      %3235 = vmatprep.mubr.f32.mxu0 0.0
      %3236 = vmatmul.mubr.f32.gmra.mxu0 %v3092
      %v3237 = vpop.f32.mrf.mxu0
      %v3238 = vadd.f32 0.0, %v3237
      %v3239 = vpop.f32.mrf.mxu0
      %3240 = vmatprep.mubr.f32.mxu0 0.0
      %3241 = vmatmul.mubr.f32.gmra.mxu0 %v3094
      %v3242 = vpop.f32.mrf.mxu0
      %v3243 = vadd.f32 0.0, %v3242
      %v3244 = vpop.f32.mrf.mxu0
      %3245 = vmatprep.mubr.f32.mxu0 0.0
      %3246 = vmatmul.mubr.f32.gmra.mxu0 %v3096
      %v3247 = vpop.f32.mrf.mxu0
      %v3248 = vadd.f32 0.0, %v3247
      %v3249 = vpop.f32.mrf.mxu0
      %3250 = vmatprep.mubr.f32.mxu0 0.0
      %3251 = vmatmul.mubr.f32.gmra.mxu0 %v3098
      %v3252 = vpop.f32.mrf.mxu0
      %v3253 = vadd.f32 0.0, %v3252
      %v3254 = vpop.f32.mrf.mxu0
      %3255 = vmatprep.mubr.f32.mxu0 0.0
      %3256 = vmatmul.mubr.f32.gmra.mxu0 %v3100
      %v3257 = vpop.f32.mrf.mxu0
      %v3258 = vadd.f32 0.0, %v3257
      %v3259 = vpop.f32.mrf.mxu0
      %3260 = vmatprep.mubr.f32.mxu0 0.0
      %3261 = vmatmul.mubr.f32.gmra.mxu0 %v3102
      %v3262 = vpop.f32.mrf.mxu0
      %v3263 = vadd.f32 0.0, %v3262
      %v3264 = vpop.f32.mrf.mxu0
      %3265 = vmatprep.mubr.f32.mxu0 0.0
      %3266 = vmatmul.mubr.f32.gmra.mxu0 %v3104
      %v3267 = vpop.f32.mrf.mxu0
      %v3268 = vadd.f32 0.0, %v3267
      %v3269 = vpop.f32.mrf.mxu0
      %3270 = vmatprep.mubr.f32.mxu0 0.0
      %3271 = vmatmul.mubr.f32.gmra.mxu0 %v3106
      %v3272 = vpop.f32.mrf.mxu0
      %v3273 = vadd.f32 0.0, %v3272
      %v3274 = vpop.f32.mrf.mxu0
      %3275 = vmatprep.mubr.f32.mxu0 0.0
      %3276 = vmatmul.mubr.f32.gmra.mxu0 %v3108
      %v3277 = vpop.f32.mrf.mxu0
      %v3278 = vadd.f32 0.0, %v3277
      %v3279 = vpop.f32.mrf.mxu0
      %3280 = vmatprep.mubr.f32.mxu0 0.0
      %3281 = vmatmul.mubr.f32.gmra.mxu0 %v3110
      %v3282 = vpop.f32.mrf.mxu0
      %v3283 = vadd.f32 0.0, %v3282
      %v3284 = vpop.f32.mrf.mxu0
      %3285 = vmatprep.mubr.f32.mxu0 0.0
      %3286 = vmatmul.mubr.f32.gmra.mxu0 %v3112
      %v3287 = vpop.f32.mrf.mxu0
      %v3288 = vadd.f32 0.0, %v3287
      %v3289 = vpop.f32.mrf.mxu0
      %3290 = vmatprep.mubr.f32.mxu0 0.0
      %3291 = vmatmul.mubr.f32.gmra.mxu0 %v3114
      %v3292 = vpop.f32.mrf.mxu0
      %v3293 = vadd.f32 0.0, %v3292
      %v3294 = vpop.f32.mrf.mxu0
      %3295 = vmatprep.mubr.f32.mxu0 0.0
      %3296 = vmatmul.mubr.f32.gmra.mxu0 %v3116
      %v3297 = vpop.f32.mrf.mxu0
      %v3298 = vadd.f32 0.0, %v3297
      %v3299 = vpop.f32.mrf.mxu0
      %3300 = vmatprep.mubr.f32.mxu0 0.0
      %3301 = vmatmul.mubr.f32.gmra.mxu0 %v3118
      %v3302 = vpop.f32.mrf.mxu0
      %v3303 = vadd.f32 0.0, %v3302
      %v3304 = vpop.f32.mrf.mxu0
      %3305 = vmatprep.mubr.f32.mxu0 0.0
      %3306 = vmatmul.mubr.f32.gmra.mxu0 %v3120
      %v3307 = vpop.f32.mrf.mxu0
      %v3308 = vadd.f32 0.0, %v3307
      %v3309 = vpop.f32.mrf.mxu0
      %3310 = vmatprep.mubr.f32.mxu0 0.0
      %3311 = vmatmul.mubr.f32.gmra.mxu0 %v3122
      %v3312 = vpop.f32.mrf.mxu0
      %v3313 = vadd.f32 0.0, %v3312
      %v3314 = vpop.f32.mrf.mxu0
      %3315 = vmatprep.mubr.f32.mxu0 0.0
      %3316 = vmatmul.mubr.f32.gmra.mxu0 %v3124
      %v3317 = vpop.f32.mrf.mxu0
      %v3318 = vadd.f32 0.0, %v3317
      %v3319 = vpop.f32.mrf.mxu0
      %3320 = vmatprep.mubr.f32.mxu0 0.0
      %3321 = vmatmul.mubr.f32.gmra.mxu0 %v3126
      %v3322 = vpop.f32.mrf.mxu0
      %v3323 = vadd.f32 0.0, %v3322
      %v3324 = vpop.f32.mrf.mxu0
      %3325 = vmatprep.mubr.f32.mxu0 0.0
      %3326 = vmatmul.mubr.f32.gmra.mxu0 %v3128
      %v3327 = vpop.f32.mrf.mxu0
      %v3328 = vadd.f32 0.0, %v3327
      %v3329 = vpop.f32.mrf.mxu0
      %3330 = vmatprep.mubr.f32.mxu0 0.0
      %3331 = vmatmul.mubr.f32.gmra.mxu0 %v3130
      %v3332 = vpop.f32.mrf.mxu0
      %v3333 = vadd.f32 0.0, %v3332
      %v3334 = vpop.f32.mrf.mxu0
      %3335 = vmatprep.mubr.f32.mxu0 0.0
      %3336 = vmatmul.mubr.f32.gmra.mxu0 %v3132
      %v3337 = vpop.f32.mrf.mxu0
      %v3338 = vadd.f32 0.0, %v3337
      %v3339 = vpop.f32.mrf.mxu0
      %3340 = vmatprep.mubr.f32.mxu0 0.0
      %3341 = vmatmul.mubr.f32.gmra.mxu0 %v3134
      %v3342 = vpop.f32.mrf.mxu0
      %v3343 = vadd.f32 0.0, %v3342
      %v3344 = vpop.f32.mrf.mxu0
      %3345 = vmatprep.mubr.f32.mxu0 0.0
      %3346 = vmatmul.mubr.f32.gmra.mxu0 %v3136
      %v3347 = vpop.f32.mrf.mxu0
      %v3348 = vadd.f32 0.0, %v3347
      %v3349 = vpop.f32.mrf.mxu0
      %3350 = vmatprep.mubr.f32.mxu0 0.0
      %3351 = vmatmul.mubr.f32.gmra.mxu0 %v3138
      %v3352 = vpop.f32.mrf.mxu0
      %v3353 = vadd.f32 0.0, %v3352
      %v3354 = vpop.f32.mrf.mxu0
      %3355 = vmatprep.mubr.f32.mxu0 0.0
      %3356 = vmatmul.mubr.f32.gmra.mxu0 %v3140
      %v3357 = vpop.f32.mrf.mxu0
      %v3358 = vadd.f32 0.0, %v3357
      %v3359 = vpop.f32.mrf.mxu0
      %3360 = vmatprep.mubr.f32.mxu0 0.0
      %3361 = vmatmul.mubr.f32.gmra.mxu0 %v3142
      %v3362 = vpop.f32.mrf.mxu0
      %v3363 = vadd.f32 0.0, %v3362
      %v3364 = vpop.f32.mrf.mxu0
      %3365 = vmatprep.mubr.f32.mxu0 0.0
      %3366 = vmatmul.mubr.f32.gmra.mxu0 %v3144
      %v3367 = vpop.f32.mrf.mxu0
      %v3368 = vadd.f32 0.0, %v3367
      %v3369 = vpop.f32.mrf.mxu0
      %3370 = vmatprep.mubr.f32.mxu0 0.0
      %3371 = vmatmul.mubr.f32.gmra.mxu0 %v3146
      %v3372 = vpop.f32.mrf.mxu0
      %v3373 = vadd.f32 0.0, %v3372
      %v3374 = vpop.f32.mrf.mxu0
      %3375 = vdwg.mxu0
      %v3376 = vadd.f32 %v2954, %v3218
      %v3377 = vadd.f32 %v2955, %v3223
      %v3378 = vadd.f32 %v2956, %v3228
      %v3379 = vadd.f32 %v2957, %v3233
      %v3380 = vadd.f32 %v2958, %v3238
      %v3381 = vadd.f32 %v2959, %v3243
      %v3382 = vadd.f32 %v2960, %v3248
      %v3383 = vadd.f32 %v2961, %v3253
      %v3384 = vadd.f32 %v2962, %v3258
      %v3385 = vadd.f32 %v2963, %v3263
      %v3386 = vadd.f32 %v2964, %v3268
      %v3387 = vadd.f32 %v2965, %v3273
      %v3388 = vadd.f32 %v2966, %v3278
      %v3389 = vadd.f32 %v2967, %v3283
      %v3390 = vadd.f32 %v2968, %v3288
      %v3391 = vadd.f32 %v2969, %v3293
      %v3392 = vadd.f32 %v2970, %v3298
      %v3393 = vadd.f32 %v2971, %v3303
      %v3394 = vadd.f32 %v2972, %v3308
      %v3395 = vadd.f32 %v2973, %v3313
      %v3396 = vadd.f32 %v2974, %v3318
      %v3397 = vadd.f32 %v2975, %v3323
      %v3398 = vadd.f32 %v2976, %v3328
      %v3399 = vadd.f32 %v2977, %v3333
      %v3400 = vadd.f32 %v2978, %v3338
      %v3401 = vadd.f32 %v2979, %v3343
      %v3402 = vadd.f32 %v2980, %v3348
      %v3403 = vadd.f32 %v2981, %v3353
      %v3404 = vadd.f32 %v2982, %v3358
      %v3405 = vadd.f32 %v2983, %v3363
      %v3406 = vadd.f32 %v2984, %v3368
      %v3407 = vadd.f32 %v2985, %v3373
      %v3408 = vrot.slane %v2580, 2
      %v3409 = vrot.slane %v2581, 2
      %v3410 = vsel %vm937, %v3408, %v3409
      %v3411 = vrot.slane %v2582, 2
      %v3412 = vsel %vm937, %v3409, %v3411
      %v3413 = vrot.slane %v2583, 2
      %v3414 = vrot.slane %v2584, 2
      %v3415 = vsel %vm937, %v3413, %v3414
      %v3416 = vrot.slane %v2585, 2
      %v3417 = vsel %vm937, %v3414, %v3416
      %v3418 = vrot.slane %v2586, 2
      %v3419 = vrot.slane %v2587, 2
      %v3420 = vsel %vm937, %v3418, %v3419
      %v3421 = vrot.slane %v2588, 2
      %v3422 = vsel %vm937, %v3419, %v3421
      %v3423 = vrot.slane %v2589, 2
      %v3424 = vrot.slane %v2590, 2
      %v3425 = vsel %vm937, %v3423, %v3424
      %v3426 = vrot.slane %v2591, 2
      %v3427 = vsel %vm937, %v3424, %v3426
      %v3428 = vrot.slane %v2592, 2
      %v3429 = vrot.slane %v2593, 2
      %v3430 = vsel %vm937, %v3428, %v3429
      %v3431 = vrot.slane %v2594, 2
      %v3432 = vsel %vm937, %v3429, %v3431
      %v3433 = vrot.slane %v2595, 2
      %v3434 = vrot.slane %v2596, 2
      %v3435 = vsel %vm937, %v3433, %v3434
      %v3436 = vrot.slane %v2597, 2
      %v3437 = vsel %vm937, %v3434, %v3436
      %v3438 = vrot.slane %v2598, 2
      %v3439 = vrot.slane %v2599, 2
      %v3440 = vsel %vm937, %v3438, %v3439
      %v3441 = vrot.slane %v2600, 2
      %v3442 = vsel %vm937, %v3439, %v3441
      %v3443 = vrot.slane %v2601, 2
      %v3444 = vrot.slane %v2602, 2
      %v3445 = vsel %vm937, %v3443, %v3444
      %v3446 = vrot.slane %v2603, 2
      %v3447 = vsel %vm937, %v3444, %v3446
      %v3448 = vrot.slane %v2604, 2
      %v3449 = vrot.slane %v2605, 2
      %v3450 = vsel %vm937, %v3448, %v3449
      %v3451 = vrot.slane %v2606, 2
      %v3452 = vsel %vm937, %v3449, %v3451
      %v3453 = vrot.slane %v2607, 2
      %v3454 = vrot.slane %v2608, 2
      %v3455 = vsel %vm937, %v3453, %v3454
      %v3456 = vrot.slane %v2609, 2
      %v3457 = vsel %vm937, %v3454, %v3456
      %v3458 = vrot.slane %v2610, 2
      %v3459 = vrot.slane %v2611, 2
      %v3460 = vsel %vm937, %v3458, %v3459
      %v3461 = vrot.slane %v2612, 2
      %v3462 = vsel %vm937, %v3459, %v3461
      %v3463 = vrot.slane %v2613, 2
      %v3464 = vrot.slane %v2614, 2
      %v3465 = vsel %vm937, %v3463, %v3464
      %v3466 = vrot.slane %v2615, 2
      %v3467 = vsel %vm937, %v3464, %v3466
      %v3468 = vrot.slane %v2616, 2
      %v3469 = vrot.slane %v2617, 2
      %v3470 = vsel %vm937, %v3468, %v3469
      %v3471 = vrot.slane %v2618, 2
      %v3472 = vsel %vm937, %v3469, %v3471
      %v3473 = vrot.slane %v2619, 2
      %v3474 = vrot.slane %v2620, 2
      %v3475 = vsel %vm937, %v3473, %v3474
      %v3476 = vrot.slane %v2621, 2
      %v3477 = vsel %vm937, %v3474, %v3476
      %v3478 = vrot.slane %v2622, 2
      %v3479 = vrot.slane %v2623, 2
      %v3480 = vsel %vm937, %v3478, %v3479
      %v3481 = vrot.slane %v2624, 2
      %v3482 = vsel %vm937, %v3479, %v3481
      %v3483 = vrot.slane %v2625, 2
      %v3484 = vrot.slane %v2626, 2
      %v3485 = vsel %vm937, %v3483, %v3484
      %v3486 = vrot.slane %v2627, 2
      %v3487 = vsel %vm937, %v3484, %v3486
      %s3488 = scalar_lea.vmem %s1, 32
      %v3489 = vld [vmem:[%s3488] sm:$0x7]
      %v3490 = vsel %vm351, %v3410, 0
      %v3492 = vsel %vm351, %v3412, 0
      %v3494 = vsel %vm351, %v3415, 0
      %v3496 = vsel %vm351, %v3417, 0
      %v3498 = vsel %vm351, %v3420, 0
      %v3500 = vsel %vm351, %v3422, 0
      %v3502 = vsel %vm351, %v3425, 0
      %v3504 = vsel %vm351, %v3427, 0
      %v3506 = vsel %vm351, %v3430, 0
      %v3508 = vsel %vm351, %v3432, 0
      %v3510 = vsel %vm351, %v3435, 0
      %v3512 = vsel %vm351, %v3437, 0
      %v3514 = vsel %vm351, %v3440, 0
      %v3516 = vsel %vm351, %v3442, 0
      %v3518 = vsel %vm351, %v3445, 0
      %v3520 = vsel %vm351, %v3447, 0
      %v3522 = vsel %vm351, %v3450, 0
      %v3524 = vsel %vm351, %v3452, 0
      %v3526 = vsel %vm351, %v3455, 0
      %v3528 = vsel %vm351, %v3457, 0
      %v3530 = vsel %vm351, %v3460, 0
      %v3532 = vsel %vm351, %v3462, 0
      %v3534 = vsel %vm351, %v3465, 0
      %v3536 = vsel %vm351, %v3467, 0
      %v3538 = vsel %vm351, %v3470, 0
      %v3540 = vsel %vm351, %v3472, 0
      %v3542 = vsel %vm351, %v3475, 0
      %v3544 = vsel %vm351, %v3477, 0
      %v3546 = vsel %vm351, %v3480, 0
      %v3548 = vsel %vm351, %v3482, 0
      %v3550 = vsel %vm351, %v3485, 0
      %v3552 = vsel %vm351, %v3487, 0
      %v3555 = vsel %vm416, %v3489, 0
      %3557 = vmatprep.subr.mxu0 0.0
      %3558 = vmatpush1.msra.mxu0 0.0
      %3559 = vmatprep.subr.mxu0 0.0
      %3560 = vmatpush1.msra.mxu0 0.0
      %3561 = vmatprep.subr.mxu0 0.0
      %3562 = vmatpush1.msra.mxu0 0.0
      %3563 = vmatprep.subr.mxu0 0.0
      %3564 = vmatpush1.msra.mxu0 0.0
      %3565 = vmatprep.subr.mxu0 0.0
      %3566 = vmatpush1.msra.mxu0 0.0
      %3567 = vmatprep.subr.mxu0 0.0
      %3568 = vmatpush1.msra.mxu0 0.0
      %3569 = vmatprep.subr.mxu0 0.0
      %3570 = vmatpush1.msra.mxu0 0.0
      %3571 = vmatprep.subr.mxu0 0.0
      %3572 = vmatpush1.msra.mxu0 0.0
      %3573 = vmatprep.subr.mxu0 0.0
      %3574 = vmatpush1.msra.mxu0 0.0
      %3575 = vmatprep.subr.mxu0 0.0
      %3576 = vmatpush1.msra.mxu0 0.0
      %3577 = vmatprep.subr.mxu0 0.0
      %3578 = vmatpush1.msra.mxu0 0.0
      %3579 = vmatprep.subr.mxu0 0.0
      %3580 = vmatpush1.msra.mxu0 0.0
      %3581 = vmatprep.subr.mxu0 0.0
      %3582 = vmatpush1.msra.mxu0 0.0
      %3583 = vmatprep.subr.mxu0 0.0
      %3584 = vmatpush1.msra.mxu0 0.0
      %3585 = vmatprep.subr.mxu0 0.0
      %3586 = vmatpush1.msra.mxu0 0.0
      %3587 = vmatprep.subr.mxu0 0.0
      %3588 = vmatpush1.msra.mxu0 %v3555
      %3589 = vmatprep.subr.mxu0 0.0
      %3590 = vmatpush2.msra.mxu0 0.0
      %3591 = vmatprep.subr.mxu0 0.0
      %3592 = vmatpush2.msra.mxu0 0.0
      %3593 = vmatprep.subr.mxu0 0.0
      %3594 = vmatpush2.msra.mxu0 0.0
      %3595 = vmatprep.subr.mxu0 0.0
      %3596 = vmatpush2.msra.mxu0 0.0
      %3597 = vmatprep.subr.mxu0 0.0
      %3598 = vmatpush2.msra.mxu0 0.0
      %3599 = vmatprep.subr.mxu0 0.0
      %3600 = vmatpush2.msra.mxu0 0.0
      %3601 = vmatprep.subr.mxu0 0.0
      %3602 = vmatpush2.msra.mxu0 0.0
      %3603 = vmatprep.subr.mxu0 0.0
      %3604 = vmatpush2.msra.mxu0 0.0
      %3605 = vmatprep.subr.mxu0 0.0
      %3606 = vmatpush2.msra.mxu0 0.0
      %3607 = vmatprep.subr.mxu0 0.0
      %3608 = vmatpush2.msra.mxu0 0.0
      %3609 = vmatprep.subr.mxu0 0.0
      %3610 = vmatpush2.msra.mxu0 0.0
      %3611 = vmatprep.subr.mxu0 0.0
      %3612 = vmatpush2.msra.mxu0 0.0
      %3613 = vmatprep.subr.mxu0 0.0
      %3614 = vmatpush2.msra.mxu0 0.0
      %3615 = vmatprep.subr.mxu0 0.0
      %3616 = vmatpush2.msra.mxu0 0.0
      %3617 = vmatprep.subr.mxu0 0.0
      %3618 = vmatpush2.msra.mxu0 0.0
      %3619 = vmatprep.subr.mxu0 0.0
      %3620 = vmatpush2.msra.mxu0 0.0
      %3621 = vmatprep.mubr.f32.mxu0 0.0
      %3622 = vmatmul.mubr.f32.gmra.mxu0 %v3490
      %v3623 = vpop.f32.mrf.mxu0
      %v3624 = vadd.f32 0.0, %v3623
      %v3625 = vpop.f32.mrf.mxu0
      %3626 = vmatprep.mubr.f32.mxu0 0.0
      %3627 = vmatmul.mubr.f32.gmra.mxu0 %v3492
      %v3628 = vpop.f32.mrf.mxu0
      %v3629 = vadd.f32 0.0, %v3628
      %v3630 = vpop.f32.mrf.mxu0
      %3631 = vmatprep.mubr.f32.mxu0 0.0
      %3632 = vmatmul.mubr.f32.gmra.mxu0 %v3494
      %v3633 = vpop.f32.mrf.mxu0
      %v3634 = vadd.f32 0.0, %v3633
      %v3635 = vpop.f32.mrf.mxu0
      %3636 = vmatprep.mubr.f32.mxu0 0.0
      %3637 = vmatmul.mubr.f32.gmra.mxu0 %v3496
      %v3638 = vpop.f32.mrf.mxu0
      %v3639 = vadd.f32 0.0, %v3638
      %v3640 = vpop.f32.mrf.mxu0
      %3641 = vmatprep.mubr.f32.mxu0 0.0
      %3642 = vmatmul.mubr.f32.gmra.mxu0 %v3498
      %v3643 = vpop.f32.mrf.mxu0
      %v3644 = vadd.f32 0.0, %v3643
      %v3645 = vpop.f32.mrf.mxu0
      %3646 = vmatprep.mubr.f32.mxu0 0.0
      %3647 = vmatmul.mubr.f32.gmra.mxu0 %v3500
      %v3648 = vpop.f32.mrf.mxu0
      %v3649 = vadd.f32 0.0, %v3648
      %v3650 = vpop.f32.mrf.mxu0
      %3651 = vmatprep.mubr.f32.mxu0 0.0
      %3652 = vmatmul.mubr.f32.gmra.mxu0 %v3502
      %v3653 = vpop.f32.mrf.mxu0
      %v3654 = vadd.f32 0.0, %v3653
      %v3655 = vpop.f32.mrf.mxu0
      %3656 = vmatprep.mubr.f32.mxu0 0.0
      %3657 = vmatmul.mubr.f32.gmra.mxu0 %v3504
      %v3658 = vpop.f32.mrf.mxu0
      %v3659 = vadd.f32 0.0, %v3658
      %v3660 = vpop.f32.mrf.mxu0
      %3661 = vmatprep.mubr.f32.mxu0 0.0
      %3662 = vmatmul.mubr.f32.gmra.mxu0 %v3506
      %v3663 = vpop.f32.mrf.mxu0
      %v3664 = vadd.f32 0.0, %v3663
      %v3665 = vpop.f32.mrf.mxu0
      %3666 = vmatprep.mubr.f32.mxu0 0.0
      %3667 = vmatmul.mubr.f32.gmra.mxu0 %v3508
      %v3668 = vpop.f32.mrf.mxu0
      %v3669 = vadd.f32 0.0, %v3668
      %v3670 = vpop.f32.mrf.mxu0
      %3671 = vmatprep.mubr.f32.mxu0 0.0
      %3672 = vmatmul.mubr.f32.gmra.mxu0 %v3510
      %v3673 = vpop.f32.mrf.mxu0
      %v3674 = vadd.f32 0.0, %v3673
      %v3675 = vpop.f32.mrf.mxu0
      %3676 = vmatprep.mubr.f32.mxu0 0.0
      %3677 = vmatmul.mubr.f32.gmra.mxu0 %v3512
      %v3678 = vpop.f32.mrf.mxu0
      %v3679 = vadd.f32 0.0, %v3678
      %v3680 = vpop.f32.mrf.mxu0
      %3681 = vmatprep.mubr.f32.mxu0 0.0
      %3682 = vmatmul.mubr.f32.gmra.mxu0 %v3514
      %v3683 = vpop.f32.mrf.mxu0
      %v3684 = vadd.f32 0.0, %v3683
      %v3685 = vpop.f32.mrf.mxu0
      %3686 = vmatprep.mubr.f32.mxu0 0.0
      %3687 = vmatmul.mubr.f32.gmra.mxu0 %v3516
      %v3688 = vpop.f32.mrf.mxu0
      %v3689 = vadd.f32 0.0, %v3688
      %v3690 = vpop.f32.mrf.mxu0
      %3691 = vmatprep.mubr.f32.mxu0 0.0
      %3692 = vmatmul.mubr.f32.gmra.mxu0 %v3518
      %v3693 = vpop.f32.mrf.mxu0
      %v3694 = vadd.f32 0.0, %v3693
      %v3695 = vpop.f32.mrf.mxu0
      %3696 = vmatprep.mubr.f32.mxu0 0.0
      %3697 = vmatmul.mubr.f32.gmra.mxu0 %v3520
      %v3698 = vpop.f32.mrf.mxu0
      %v3699 = vadd.f32 0.0, %v3698
      %v3700 = vpop.f32.mrf.mxu0
      %3701 = vmatprep.mubr.f32.mxu0 0.0
      %3702 = vmatmul.mubr.f32.gmra.mxu0 %v3522
      %v3703 = vpop.f32.mrf.mxu0
      %v3704 = vadd.f32 0.0, %v3703
      %v3705 = vpop.f32.mrf.mxu0
      %3706 = vmatprep.mubr.f32.mxu0 0.0
      %3707 = vmatmul.mubr.f32.gmra.mxu0 %v3524
      %v3708 = vpop.f32.mrf.mxu0
      %v3709 = vadd.f32 0.0, %v3708
      %v3710 = vpop.f32.mrf.mxu0
      %3711 = vmatprep.mubr.f32.mxu0 0.0
      %3712 = vmatmul.mubr.f32.gmra.mxu0 %v3526
      %v3713 = vpop.f32.mrf.mxu0
      %v3714 = vadd.f32 0.0, %v3713
      %v3715 = vpop.f32.mrf.mxu0
      %3716 = vmatprep.mubr.f32.mxu0 0.0
      %3717 = vmatmul.mubr.f32.gmra.mxu0 %v3528
      %v3718 = vpop.f32.mrf.mxu0
      %v3719 = vadd.f32 0.0, %v3718
      %v3720 = vpop.f32.mrf.mxu0
      %3721 = vmatprep.mubr.f32.mxu0 0.0
      %3722 = vmatmul.mubr.f32.gmra.mxu0 %v3530
      %v3723 = vpop.f32.mrf.mxu0
      %v3724 = vadd.f32 0.0, %v3723
      %v3725 = vpop.f32.mrf.mxu0
      %3726 = vmatprep.mubr.f32.mxu0 0.0
      %3727 = vmatmul.mubr.f32.gmra.mxu0 %v3532
      %v3728 = vpop.f32.mrf.mxu0
      %v3729 = vadd.f32 0.0, %v3728
      %v3730 = vpop.f32.mrf.mxu0
      %3731 = vmatprep.mubr.f32.mxu0 0.0
      %3732 = vmatmul.mubr.f32.gmra.mxu0 %v3534
      %v3733 = vpop.f32.mrf.mxu0
      %v3734 = vadd.f32 0.0, %v3733
      %v3735 = vpop.f32.mrf.mxu0
      %3736 = vmatprep.mubr.f32.mxu0 0.0
      %3737 = vmatmul.mubr.f32.gmra.mxu0 %v3536
      %v3738 = vpop.f32.mrf.mxu0
      %v3739 = vadd.f32 0.0, %v3738
      %v3740 = vpop.f32.mrf.mxu0
      %3741 = vmatprep.mubr.f32.mxu0 0.0
      %3742 = vmatmul.mubr.f32.gmra.mxu0 %v3538
      %v3743 = vpop.f32.mrf.mxu0
      %v3744 = vadd.f32 0.0, %v3743
      %v3745 = vpop.f32.mrf.mxu0
      %3746 = vmatprep.mubr.f32.mxu0 0.0
      %3747 = vmatmul.mubr.f32.gmra.mxu0 %v3540
      %v3748 = vpop.f32.mrf.mxu0
      %v3749 = vadd.f32 0.0, %v3748
      %v3750 = vpop.f32.mrf.mxu0
      %3751 = vmatprep.mubr.f32.mxu0 0.0
      %3752 = vmatmul.mubr.f32.gmra.mxu0 %v3542
      %v3753 = vpop.f32.mrf.mxu0
      %v3754 = vadd.f32 0.0, %v3753
      %v3755 = vpop.f32.mrf.mxu0
      %3756 = vmatprep.mubr.f32.mxu0 0.0
      %3757 = vmatmul.mubr.f32.gmra.mxu0 %v3544
      %v3758 = vpop.f32.mrf.mxu0
      %v3759 = vadd.f32 0.0, %v3758
      %v3760 = vpop.f32.mrf.mxu0
      %3761 = vmatprep.mubr.f32.mxu0 0.0
      %3762 = vmatmul.mubr.f32.gmra.mxu0 %v3546
      %v3763 = vpop.f32.mrf.mxu0
      %v3764 = vadd.f32 0.0, %v3763
      %v3765 = vpop.f32.mrf.mxu0
      %3766 = vmatprep.mubr.f32.mxu0 0.0
      %3767 = vmatmul.mubr.f32.gmra.mxu0 %v3548
      %v3768 = vpop.f32.mrf.mxu0
      %v3769 = vadd.f32 0.0, %v3768
      %v3770 = vpop.f32.mrf.mxu0
      %3771 = vmatprep.mubr.f32.mxu0 0.0
      %3772 = vmatmul.mubr.f32.gmra.mxu0 %v3550
      %v3773 = vpop.f32.mrf.mxu0
      %v3774 = vadd.f32 0.0, %v3773
      %v3775 = vpop.f32.mrf.mxu0
      %3776 = vmatprep.mubr.f32.mxu0 0.0
      %3777 = vmatmul.mubr.f32.gmra.mxu0 %v3552
      %v3778 = vpop.f32.mrf.mxu0
      %v3779 = vadd.f32 0.0, %v3778
      %v3780 = vpop.f32.mrf.mxu0
      %3781 = vdwg.mxu0
      %v3782 = vadd.f32 %v3376, %v3624
      %v3783 = vadd.f32 %v3377, %v3629
      %v3784 = vadd.f32 %v3378, %v3634
      %v3785 = vadd.f32 %v3379, %v3639
      %v3786 = vadd.f32 %v3380, %v3644
      %v3787 = vadd.f32 %v3381, %v3649
      %v3788 = vadd.f32 %v3382, %v3654
      %v3789 = vadd.f32 %v3383, %v3659
      %v3790 = vadd.f32 %v3384, %v3664
      %v3791 = vadd.f32 %v3385, %v3669
      %v3792 = vadd.f32 %v3386, %v3674
      %v3793 = vadd.f32 %v3387, %v3679
      %v3794 = vadd.f32 %v3388, %v3684
      %v3795 = vadd.f32 %v3389, %v3689
      %v3796 = vadd.f32 %v3390, %v3694
      %v3797 = vadd.f32 %v3391, %v3699
      %v3798 = vadd.f32 %v3392, %v3704
      %v3799 = vadd.f32 %v3393, %v3709
      %v3800 = vadd.f32 %v3394, %v3714
      %v3801 = vadd.f32 %v3395, %v3719
      %v3802 = vadd.f32 %v3396, %v3724
      %v3803 = vadd.f32 %v3397, %v3729
      %v3804 = vadd.f32 %v3398, %v3734
      %v3805 = vadd.f32 %v3399, %v3739
      %v3806 = vadd.f32 %v3400, %v3744
      %v3807 = vadd.f32 %v3401, %v3749
      %v3808 = vadd.f32 %v3402, %v3754
      %v3809 = vadd.f32 %v3403, %v3759
      %v3810 = vadd.f32 %v3404, %v3764
      %v3811 = vadd.f32 %v3405, %v3769
      %v3812 = vadd.f32 %v3406, %v3774
      %v3813 = vadd.f32 %v3407, %v3779
      %v3814 = vld [vmem:[%s2] sm:$0x1]
      %v3816 = vlaneseq
      %v3817 = vshrl.u32 %v3816, 7
      %v3818 = vsub.s32 0, %v3817
      %v3819 = vrot.slane %v3814, %v3818
      %v3821 = vadd.f32 %v3782, %v3819
      %v3822 = vadd.f32 %v3783, %v3819
      %v3823 = vadd.f32 %v3784, %v3819
      %v3824 = vadd.f32 %v3785, %v3819
      %v3825 = vadd.f32 %v3786, %v3819
      %v3826 = vadd.f32 %v3787, %v3819
      %v3827 = vadd.f32 %v3788, %v3819
      %v3828 = vadd.f32 %v3789, %v3819
      %v3829 = vadd.f32 %v3790, %v3819
      %v3830 = vadd.f32 %v3791, %v3819
      %v3831 = vadd.f32 %v3792, %v3819
      %v3832 = vadd.f32 %v3793, %v3819
      %v3833 = vadd.f32 %v3794, %v3819
      %v3834 = vadd.f32 %v3795, %v3819
      %v3835 = vadd.f32 %v3796, %v3819
      %v3836 = vadd.f32 %v3797, %v3819
      %v3837 = vadd.f32 %v3798, %v3819
      %v3838 = vadd.f32 %v3799, %v3819
      %v3839 = vadd.f32 %v3800, %v3819
      %v3840 = vadd.f32 %v3801, %v3819
      %v3841 = vadd.f32 %v3802, %v3819
      %v3842 = vadd.f32 %v3803, %v3819
      %v3843 = vadd.f32 %v3804, %v3819
      %v3844 = vadd.f32 %v3805, %v3819
      %v3845 = vadd.f32 %v3806, %v3819
      %v3846 = vadd.f32 %v3807, %v3819
      %v3847 = vadd.f32 %v3808, %v3819
      %v3848 = vadd.f32 %v3809, %v3819
      %v3849 = vadd.f32 %v3810, %v3819
      %v3850 = vadd.f32 %v3811, %v3819
      %v3851 = vadd.f32 %v3812, %v3819
      %v3852 = vadd.f32 %v3813, %v3819
      %v3853 = vmax.f32 %v3821, 0.0
      %v3854 = vmax.f32 %v3822, 0.0
      %v3855 = vmax.f32 %v3823, 0.0
      %v3856 = vmax.f32 %v3824, 0.0
      %v3857 = vmax.f32 %v3825, 0.0
      %v3858 = vmax.f32 %v3826, 0.0
      %v3859 = vmax.f32 %v3827, 0.0
      %v3860 = vmax.f32 %v3828, 0.0
      %v3861 = vmax.f32 %v3829, 0.0
      %v3862 = vmax.f32 %v3830, 0.0
      %v3863 = vmax.f32 %v3831, 0.0
      %v3864 = vmax.f32 %v3832, 0.0
      %v3865 = vmax.f32 %v3833, 0.0
      %v3866 = vmax.f32 %v3834, 0.0
      %v3867 = vmax.f32 %v3835, 0.0
      %v3868 = vmax.f32 %v3836, 0.0
      %v3869 = vmax.f32 %v3837, 0.0
      %v3870 = vmax.f32 %v3838, 0.0
      %v3871 = vmax.f32 %v3839, 0.0
      %v3872 = vmax.f32 %v3840, 0.0
      %v3873 = vmax.f32 %v3841, 0.0
      %v3874 = vmax.f32 %v3842, 0.0
      %v3875 = vmax.f32 %v3843, 0.0
      %v3876 = vmax.f32 %v3844, 0.0
      %v3877 = vmax.f32 %v3845, 0.0
      %v3878 = vmax.f32 %v3846, 0.0
      %v3879 = vmax.f32 %v3847, 0.0
      %v3880 = vmax.f32 %v3848, 0.0
      %v3881 = vmax.f32 %v3849, 0.0
      %v3882 = vmax.f32 %v3850, 0.0
      %v3883 = vmax.f32 %v3851, 0.0
      %v3884 = vmax.f32 %v3852, 0.0
      %3885 = vst [vmem:[%s170] sm:$0xff] %v3853
      %3886 = vst [vmem:[%s170 + $0x8] sm:$0xff] %v3854
      %3887 = vst [vmem:[%s170 + $0x10] sm:$0xff] %v3855
      %3888 = vst [vmem:[%s170 + $0x18] sm:$0xff] %v3856
      %3889 = vst [vmem:[%s170 + $0x20] sm:$0xff] %v3857
      %3890 = vst [vmem:[%s170 + $0x28] sm:$0xff] %v3858
      %3891 = vst [vmem:[%s170 + $0x30] sm:$0xff] %v3859
      %3892 = vst [vmem:[%s170 + $0x38] sm:$0xff] %v3860
      %3893 = vst [vmem:[%s170 + $0x40] sm:$0xff] %v3861
      %3894 = vst [vmem:[%s170 + $0x48] sm:$0xff] %v3862
      %3895 = vst [vmem:[%s170 + $0x50] sm:$0xff] %v3863
      %3896 = vst [vmem:[%s170 + $0x58] sm:$0xff] %v3864
      %3897 = vst [vmem:[%s170 + $0x60] sm:$0xff] %v3865
      %3898 = vst [vmem:[%s170 + $0x68] sm:$0xff] %v3866
      %3899 = vst [vmem:[%s170 + $0x70] sm:$0xff] %v3867
      %3900 = vst [vmem:[%s170 + $0x78] sm:$0xff] %v3868
      %3901 = vst [vmem:[%s170 + $0x80] sm:$0xff] %v3869
      %3902 = vst [vmem:[%s170 + $0x88] sm:$0xff] %v3870
      %3903 = vst [vmem:[%s170 + $0x90] sm:$0xff] %v3871
      %3904 = vst [vmem:[%s170 + $0x98] sm:$0xff] %v3872
      %3905 = vst [vmem:[%s170 + $0xa0] sm:$0xff] %v3873
      %3906 = vst [vmem:[%s170 + $0xa8] sm:$0xff] %v3874
      %3907 = vst [vmem:[%s170 + $0xb0] sm:$0xff] %v3875
      %3908 = vst [vmem:[%s170 + $0xb8] sm:$0xff] %v3876
      %3909 = vst [vmem:[%s170 + $0xc0] sm:$0xff] %v3877
      %3910 = vst [vmem:[%s170 + $0xc8] sm:$0xff] %v3878
      %3911 = vst [vmem:[%s170 + $0xd0] sm:$0xff] %v3879
      %3912 = vst [vmem:[%s170 + $0xd8] sm:$0xff] %v3880
      %3913 = vst [vmem:[%s170 + $0xe0] sm:$0xff] %v3881
      %3914 = vst [vmem:[%s170 + $0xe8] sm:$0xff] %v3882
      %3915 = vst [vmem:[%s170 + $0xf0] sm:$0xff] %v3883
      %3916 = vst [vmem:[%s170 + $0xf8] sm:$0xff] %v3884
      %p3917 = scmp.lt.s32.totalorder %s14, 1
      %s3918 = scalar_select %p3917, %s14, 1
      %s3919 = smul.addr %s3918, 32
      %s3920 = smul.addr %s3919, 8
      %s3921 = scalar_lea.vmem %s3, %s3920
      // Predicated region
      $region33: #{net_forward.7} parent=31 // pred_check
        %p3922 = pneg %p100
      $region34: #{net_forward.7} parent=31 // pred_check_branch
        %3924 = sbr.rel (%p3922) target = $region36
      $region35: #{net_forward.7} parent=31 // pred_region
        _
      $region36: #{net_forward.7} parent=31 // pred_fallthru
        _
    $region32: #{net_forward.7} parent=5 // pred_fallthru
      _
    %p3925 = scmp.le.s32.totalorder 2, %s9
    // Predicated region
    $region37: #{net_forward.7} parent=5 // pred_check
      %p3926 = pneg %p3925
    $region38: #{net_forward.7} parent=5 // pred_check_branch
      %3928 = sbr.rel (%p3926) target = $region40
    $region39: #{net_forward.7} parent=5 // pred_region
      %s3929 = ssub.s32 %s9, 2
      // Predicated region
      $region41: #{net_forward.7} parent=39 // pred_check
        %p3930 = pneg %p106
      $region42: #{net_forward.7} parent=39 // pred_check_branch
        %3932 = sbr.rel (%p3930) target = $region44
      $region43: #{net_forward.7} parent=39 // pred_region
        %p3933 = scmp.lt.s32.totalorder %s15, 1
        %s3934 = scalar_select %p3933, %s15, 1
        %s3935 = smul.addr %s3934, 32
        %s3936 = smul.addr %s3935, 8
        %s3937 = scalar_lea.vmem %s3, %s3936
      $region44: #{net_forward.7} parent=39 // pred_fallthru
        _
    $region40: #{net_forward.7} parent=5 // pred_fallthru
      _
  $region6: #{net_forward.7} parent=0 // loop_footer
    %s13 = sadd.s32 1, %s9
  $region7: #{net_forward.7} parent=0 // loop_footer_branch
    %8 = sbr.rel target = $region3
  $region8: #{net_forward.7} parent=0 // loop_exit
    _

// kernel: net_forward.13
$region0: #{net_forward.13}
  #allocation0 [shape = 'u32[]', space=smem, size = 0x4, offset = 0x4, fixed_abs, tag = 'smem constant byte address 0x4 - core index']
  #allocation1 [shape = 'u32[144,128]{1,0:T(1,128)}', space=vmem, size = 0x12000, scoped, tag = 'internal scratch']
  %s0 = inlined_call_operand.vmem [shape: f32[2,2048], index: 0, kind: input, shape index: {}]
  %s1 = inlined_call_operand.vmem [shape: f32[2048,128], index: 1, kind: input, shape index: {}]
  %s2 = inlined_call_operand.vmem [shape: f32[1,128], index: 2, kind: input, shape index: {}]
  %s3 = inlined_call_operand.hbm [shape: f32[2,128], index: 3, kind: output, shape index: {}]
  %s4 = sld [smem:[#allocation0]]
  $region22: #{net_forward.13} parent=0
    _
  %s6 = ssub.s32 1, %s4
  %s7 = scalar_select 0, %s6, %s4
  $region1: #{net_forward.13} parent=0
    #allocation2 [shape = 'u8[1024]{0}', space=vmem, size = 0x400, scoped, tag = 'output window, operand 0, single buffered']
    #allocation3 [shape = 's32[1]{0}', space=sflag, size = 0x4, scoped, tag = 'scoped memory for net_forward.13']
    %8 = vsyncpa [#allocation3], 0
    // Predicated region
    $region2: #{net_forward.13} parent=1 // pred_check
      _
    $region3: #{net_forward.13} parent=1 // pred_check_branch
      %10 = sbr.rel (0) target = $region5
    $region4: #{net_forward.13} parent=1 // pred_region
      _
    $region5: #{net_forward.13} parent=1 // pred_fallthru
      _
    // Predicated region
    $region6: #{net_forward.13} parent=1 // pred_check
      _
    $region7: #{net_forward.13} parent=1 // pred_check_branch
      %12 = sbr.rel (0) target = $region9
    $region8: #{net_forward.13} parent=1 // pred_region
      _
    $region9: #{net_forward.13} parent=1 // pred_fallthru
      _
    // Predicated region
    $region10: #{net_forward.13} parent=1 // pred_check
      _
    $region11: #{net_forward.13} parent=1 // pred_check_branch
      %14 = sbr.rel (0) target = $region13
    $region12: #{net_forward.13} parent=1 // pred_region
      _
    $region13: #{net_forward.13} parent=1 // pred_fallthru
      _
    %v15 = vld [vmem:[%s0] sm:$0xff]
    %v16 = vld [vmem:[%s0 + $0x8] sm:$0xff]
    %v17 = vld [vmem:[%s0 + $0x10] sm:$0xff]
    %v18 = vld [vmem:[%s0 + $0x18] sm:$0xff]
    %v19 = vld [vmem:[%s1] sm:$0xff]
    %v20 = vld [vmem:[%s1 + $0x8] sm:$0xff]
    %v21 = vld [vmem:[%s1 + $0x10] sm:$0xff]
    %v22 = vld [vmem:[%s1 + $0x18] sm:$0xff]
    %v23 = vld [vmem:[%s1 + $0x20] sm:$0xff]
    %v24 = vld [vmem:[%s1 + $0x28] sm:$0xff]
    %v25 = vld [vmem:[%s1 + $0x30] sm:$0xff]
    %v26 = vld [vmem:[%s1 + $0x38] sm:$0xff]
    %v27 = vld [vmem:[%s1 + $0x40] sm:$0xff]
    %v28 = vld [vmem:[%s1 + $0x48] sm:$0xff]
    %v29 = vld [vmem:[%s1 + $0x50] sm:$0xff]
    %v30 = vld [vmem:[%s1 + $0x58] sm:$0xff]
    %v31 = vld [vmem:[%s1 + $0x60] sm:$0xff]
    %v32 = vld [vmem:[%s1 + $0x68] sm:$0xff]
    %v33 = vld [vmem:[%s1 + $0x70] sm:$0xff]
    %v34 = vld [vmem:[%s1 + $0x78] sm:$0xff]
    %v35 = vld [vmem:[%s1 + $0x80] sm:$0xff]
    %v36 = vld [vmem:[%s1 + $0x88] sm:$0xff]
    %v37 = vld [vmem:[%s1 + $0x90] sm:$0xff]
    %v38 = vld [vmem:[%s1 + $0x98] sm:$0xff]
    %v39 = vld [vmem:[%s1 + $0xa0] sm:$0xff]
    %v40 = vld [vmem:[%s1 + $0xa8] sm:$0xff]
    %v41 = vld [vmem:[%s1 + $0xb0] sm:$0xff]
    %v42 = vld [vmem:[%s1 + $0xb8] sm:$0xff]
    %v43 = vld [vmem:[%s1 + $0xc0] sm:$0xff]
    %v44 = vld [vmem:[%s1 + $0xc8] sm:$0xff]
    %v45 = vld [vmem:[%s1 + $0xd0] sm:$0xff]
    %v46 = vld [vmem:[%s1 + $0xd8] sm:$0xff]
    %v47 = vld [vmem:[%s1 + $0xe0] sm:$0xff]
    %v48 = vld [vmem:[%s1 + $0xe8] sm:$0xff]
    %v49 = vld [vmem:[%s1 + $0xf0] sm:$0xff]
    %v50 = vld [vmem:[%s1 + $0xf8] sm:$0xff]
    %v51 = vld [vmem:[%s1 + $0x100] sm:$0xff]
    %v52 = vld [vmem:[%s1 + $0x108] sm:$0xff]
    %v53 = vld [vmem:[%s1 + $0x110] sm:$0xff]
    %v54 = vld [vmem:[%s1 + $0x118] sm:$0xff]
    %v55 = vld [vmem:[%s1 + $0x120] sm:$0xff]
    %v56 = vld [vmem:[%s1 + $0x128] sm:$0xff]
    %v57 = vld [vmem:[%s1 + $0x130] sm:$0xff]
    %v58 = vld [vmem:[%s1 + $0x138] sm:$0xff]
    %v59 = vld [vmem:[%s1 + $0x140] sm:$0xff]
    %v60 = vld [vmem:[%s1 + $0x148] sm:$0xff]
    %v61 = vld [vmem:[%s1 + $0x150] sm:$0xff]
    %v62 = vld [vmem:[%s1 + $0x158] sm:$0xff]
    %v63 = vld [vmem:[%s1 + $0x160] sm:$0xff]
    %v64 = vld [vmem:[%s1 + $0x168] sm:$0xff]
    %v65 = vld [vmem:[%s1 + $0x170] sm:$0xff]
    %v66 = vld [vmem:[%s1 + $0x178] sm:$0xff]
    %v67 = vld [vmem:[%s1 + $0x180] sm:$0xff]
    %v68 = vld [vmem:[%s1 + $0x188] sm:$0xff]
    %v69 = vld [vmem:[%s1 + $0x190] sm:$0xff]
    %v70 = vld [vmem:[%s1 + $0x198] sm:$0xff]
    %v71 = vld [vmem:[%s1 + $0x1a0] sm:$0xff]
    %v72 = vld [vmem:[%s1 + $0x1a8] sm:$0xff]
    %v73 = vld [vmem:[%s1 + $0x1b0] sm:$0xff]
    %v74 = vld [vmem:[%s1 + $0x1b8] sm:$0xff]
    %v75 = vld [vmem:[%s1 + $0x1c0] sm:$0xff]
    %v76 = vld [vmem:[%s1 + $0x1c8] sm:$0xff]
    %v77 = vld [vmem:[%s1 + $0x1d0] sm:$0xff]
    %v78 = vld [vmem:[%s1 + $0x1d8] sm:$0xff]
    %v79 = vld [vmem:[%s1 + $0x1e0] sm:$0xff]
    %v80 = vld [vmem:[%s1 + $0x1e8] sm:$0xff]
    %v81 = vld [vmem:[%s1 + $0x1f0] sm:$0xff]
    %v82 = vld [vmem:[%s1 + $0x1f8] sm:$0xff]
    %v83 = vld [vmem:[%s1 + $0x200] sm:$0xff]
    %v84 = vld [vmem:[%s1 + $0x208] sm:$0xff]
    %v85 = vld [vmem:[%s1 + $0x210] sm:$0xff]
    %v86 = vld [vmem:[%s1 + $0x218] sm:$0xff]
    %v87 = vld [vmem:[%s1 + $0x220] sm:$0xff]
    %v88 = vld [vmem:[%s1 + $0x228] sm:$0xff]
    %v89 = vld [vmem:[%s1 + $0x230] sm:$0xff]
    %v90 = vld [vmem:[%s1 + $0x238] sm:$0xff]
    %v91 = vld [vmem:[%s1 + $0x240] sm:$0xff]
    %v92 = vld [vmem:[%s1 + $0x248] sm:$0xff]
    %v93 = vld [vmem:[%s1 + $0x250] sm:$0xff]
    %v94 = vld [vmem:[%s1 + $0x258] sm:$0xff]
    %v95 = vld [vmem:[%s1 + $0x260] sm:$0xff]
    %v96 = vld [vmem:[%s1 + $0x268] sm:$0xff]
    %v97 = vld [vmem:[%s1 + $0x270] sm:$0xff]
    %v98 = vld [vmem:[%s1 + $0x278] sm:$0xff]
    %v99 = vld [vmem:[%s1 + $0x280] sm:$0xff]
    %v100 = vld [vmem:[%s1 + $0x288] sm:$0xff]
    %v101 = vld [vmem:[%s1 + $0x290] sm:$0xff]
    %v102 = vld [vmem:[%s1 + $0x298] sm:$0xff]
    %v103 = vld [vmem:[%s1 + $0x2a0] sm:$0xff]
    %v104 = vld [vmem:[%s1 + $0x2a8] sm:$0xff]
    %v105 = vld [vmem:[%s1 + $0x2b0] sm:$0xff]
    %v106 = vld [vmem:[%s1 + $0x2b8] sm:$0xff]
    %v107 = vld [vmem:[%s1 + $0x2c0] sm:$0xff]
    %v108 = vld [vmem:[%s1 + $0x2c8] sm:$0xff]
    %v109 = vld [vmem:[%s1 + $0x2d0] sm:$0xff]
    %v110 = vld [vmem:[%s1 + $0x2d8] sm:$0xff]
    %v111 = vld [vmem:[%s1 + $0x2e0] sm:$0xff]
    %v112 = vld [vmem:[%s1 + $0x2e8] sm:$0xff]
    %v113 = vld [vmem:[%s1 + $0x2f0] sm:$0xff]
    %v114 = vld [vmem:[%s1 + $0x2f8] sm:$0xff]
    %v115 = vld [vmem:[%s1 + $0x300] sm:$0xff]
    %v116 = vld [vmem:[%s1 + $0x308] sm:$0xff]
    %v117 = vld [vmem:[%s1 + $0x310] sm:$0xff]
    %v118 = vld [vmem:[%s1 + $0x318] sm:$0xff]
    %v119 = vld [vmem:[%s1 + $0x320] sm:$0xff]
    %v120 = vld [vmem:[%s1 + $0x328] sm:$0xff]
    %v121 = vld [vmem:[%s1 + $0x330] sm:$0xff]
    %v122 = vld [vmem:[%s1 + $0x338] sm:$0xff]
    %v123 = vld [vmem:[%s1 + $0x340] sm:$0xff]
    %v124 = vld [vmem:[%s1 + $0x348] sm:$0xff]
    %v125 = vld [vmem:[%s1 + $0x350] sm:$0xff]
    %v126 = vld [vmem:[%s1 + $0x358] sm:$0xff]
    %v127 = vld [vmem:[%s1 + $0x360] sm:$0xff]
    %v128 = vld [vmem:[%s1 + $0x368] sm:$0xff]
    %v129 = vld [vmem:[%s1 + $0x370] sm:$0xff]
    %v130 = vld [vmem:[%s1 + $0x378] sm:$0xff]
    %v131 = vld [vmem:[%s1 + $0x380] sm:$0xff]
    %v132 = vld [vmem:[%s1 + $0x388] sm:$0xff]
    %v133 = vld [vmem:[%s1 + $0x390] sm:$0xff]
    %v134 = vld [vmem:[%s1 + $0x398] sm:$0xff]
    %v135 = vld [vmem:[%s1 + $0x3a0] sm:$0xff]
    %v136 = vld [vmem:[%s1 + $0x3a8] sm:$0xff]
    %v137 = vld [vmem:[%s1 + $0x3b0] sm:$0xff]
    %v138 = vld [vmem:[%s1 + $0x3b8] sm:$0xff]
    %v139 = vld [vmem:[%s1 + $0x3c0] sm:$0xff]
    %v140 = vld [vmem:[%s1 + $0x3c8] sm:$0xff]
    %v141 = vld [vmem:[%s1 + $0x3d0] sm:$0xff]
    %v142 = vld [vmem:[%s1 + $0x3d8] sm:$0xff]
    %v143 = vld [vmem:[%s1 + $0x3e0] sm:$0xff]
    %v144 = vld [vmem:[%s1 + $0x3e8] sm:$0xff]
    %v145 = vld [vmem:[%s1 + $0x3f0] sm:$0xff]
    %v146 = vld [vmem:[%s1 + $0x3f8] sm:$0xff]
    %v147 = vld [vmem:[%s1 + $0x400] sm:$0xff]
    %v148 = vld [vmem:[%s1 + $0x408] sm:$0xff]
    %v149 = vld [vmem:[%s1 + $0x410] sm:$0xff]
    %v150 = vld [vmem:[%s1 + $0x418] sm:$0xff]
    %v151 = vld [vmem:[%s1 + $0x420] sm:$0xff]
    %v152 = vld [vmem:[%s1 + $0x428] sm:$0xff]
    %v153 = vld [vmem:[%s1 + $0x430] sm:$0xff]
    %v154 = vld [vmem:[%s1 + $0x438] sm:$0xff]
    %v155 = vld [vmem:[%s1 + $0x440] sm:$0xff]
    %v156 = vld [vmem:[%s1 + $0x448] sm:$0xff]
    %v157 = vld [vmem:[%s1 + $0x450] sm:$0xff]
    %v158 = vld [vmem:[%s1 + $0x458] sm:$0xff]
    %v159 = vld [vmem:[%s1 + $0x460] sm:$0xff]
    %v160 = vld [vmem:[%s1 + $0x468] sm:$0xff]
    %v161 = vld [vmem:[%s1 + $0x470] sm:$0xff]
    %v162 = vld [vmem:[%s1 + $0x478] sm:$0xff]
    %v163 = vld [vmem:[%s1 + $0x480] sm:$0xff]
    %v164 = vld [vmem:[%s1 + $0x488] sm:$0xff]
    %v165 = vld [vmem:[%s1 + $0x490] sm:$0xff]
    %v166 = vld [vmem:[%s1 + $0x498] sm:$0xff]
    %v167 = vld [vmem:[%s1 + $0x4a0] sm:$0xff]
    %v168 = vld [vmem:[%s1 + $0x4a8] sm:$0xff]
    %v169 = vld [vmem:[%s1 + $0x4b0] sm:$0xff]
    %v170 = vld [vmem:[%s1 + $0x4b8] sm:$0xff]
    %v171 = vld [vmem:[%s1 + $0x4c0] sm:$0xff]
    %v172 = vld [vmem:[%s1 + $0x4c8] sm:$0xff]
    %v173 = vld [vmem:[%s1 + $0x4d0] sm:$0xff]
    %v174 = vld [vmem:[%s1 + $0x4d8] sm:$0xff]
    %v175 = vld [vmem:[%s1 + $0x4e0] sm:$0xff]
    %v176 = vld [vmem:[%s1 + $0x4e8] sm:$0xff]
    %v177 = vld [vmem:[%s1 + $0x4f0] sm:$0xff]
    %v178 = vld [vmem:[%s1 + $0x4f8] sm:$0xff]
    %v179 = vld [vmem:[%s1 + $0x500] sm:$0xff]
    %v180 = vld [vmem:[%s1 + $0x508] sm:$0xff]
    %v181 = vld [vmem:[%s1 + $0x510] sm:$0xff]
    %v182 = vld [vmem:[%s1 + $0x518] sm:$0xff]
    %v183 = vld [vmem:[%s1 + $0x520] sm:$0xff]
    %v184 = vld [vmem:[%s1 + $0x528] sm:$0xff]
    %v185 = vld [vmem:[%s1 + $0x530] sm:$0xff]
    %v186 = vld [vmem:[%s1 + $0x538] sm:$0xff]
    %v187 = vld [vmem:[%s1 + $0x540] sm:$0xff]
    %v188 = vld [vmem:[%s1 + $0x548] sm:$0xff]
    %v189 = vld [vmem:[%s1 + $0x550] sm:$0xff]
    %v190 = vld [vmem:[%s1 + $0x558] sm:$0xff]
    %v191 = vld [vmem:[%s1 + $0x560] sm:$0xff]
    %v192 = vld [vmem:[%s1 + $0x568] sm:$0xff]
    %v193 = vld [vmem:[%s1 + $0x570] sm:$0xff]
    %v194 = vld [vmem:[%s1 + $0x578] sm:$0xff]
    %v195 = vld [vmem:[%s1 + $0x580] sm:$0xff]
    %v196 = vld [vmem:[%s1 + $0x588] sm:$0xff]
    %v197 = vld [vmem:[%s1 + $0x590] sm:$0xff]
    %v198 = vld [vmem:[%s1 + $0x598] sm:$0xff]
    %v199 = vld [vmem:[%s1 + $0x5a0] sm:$0xff]
    %v200 = vld [vmem:[%s1 + $0x5a8] sm:$0xff]
    %v201 = vld [vmem:[%s1 + $0x5b0] sm:$0xff]
    %v202 = vld [vmem:[%s1 + $0x5b8] sm:$0xff]
    %v203 = vld [vmem:[%s1 + $0x5c0] sm:$0xff]
    %v204 = vld [vmem:[%s1 + $0x5c8] sm:$0xff]
    %v205 = vld [vmem:[%s1 + $0x5d0] sm:$0xff]
    %v206 = vld [vmem:[%s1 + $0x5d8] sm:$0xff]
    %v207 = vld [vmem:[%s1 + $0x5e0] sm:$0xff]
    %v208 = vld [vmem:[%s1 + $0x5e8] sm:$0xff]
    %v209 = vld [vmem:[%s1 + $0x5f0] sm:$0xff]
    %v210 = vld [vmem:[%s1 + $0x5f8] sm:$0xff]
    %v211 = vld [vmem:[%s1 + $0x600] sm:$0xff]
    %v212 = vld [vmem:[%s1 + $0x608] sm:$0xff]
    %v213 = vld [vmem:[%s1 + $0x610] sm:$0xff]
    %v214 = vld [vmem:[%s1 + $0x618] sm:$0xff]
    %v215 = vld [vmem:[%s1 + $0x620] sm:$0xff]
    %v216 = vld [vmem:[%s1 + $0x628] sm:$0xff]
    %v217 = vld [vmem:[%s1 + $0x630] sm:$0xff]
    %v218 = vld [vmem:[%s1 + $0x638] sm:$0xff]
    %v219 = vld [vmem:[%s1 + $0x640] sm:$0xff]
    %v220 = vld [vmem:[%s1 + $0x648] sm:$0xff]
    %v221 = vld [vmem:[%s1 + $0x650] sm:$0xff]
    %v222 = vld [vmem:[%s1 + $0x658] sm:$0xff]
    %v223 = vld [vmem:[%s1 + $0x660] sm:$0xff]
    %v224 = vld [vmem:[%s1 + $0x668] sm:$0xff]
    %v225 = vld [vmem:[%s1 + $0x670] sm:$0xff]
    %v226 = vld [vmem:[%s1 + $0x678] sm:$0xff]
    %v227 = vld [vmem:[%s1 + $0x680] sm:$0xff]
    %v228 = vld [vmem:[%s1 + $0x688] sm:$0xff]
    %v229 = vld [vmem:[%s1 + $0x690] sm:$0xff]
    %v230 = vld [vmem:[%s1 + $0x698] sm:$0xff]
    %v231 = vld [vmem:[%s1 + $0x6a0] sm:$0xff]
    %v232 = vld [vmem:[%s1 + $0x6a8] sm:$0xff]
    %v233 = vld [vmem:[%s1 + $0x6b0] sm:$0xff]
    %v234 = vld [vmem:[%s1 + $0x6b8] sm:$0xff]
    %v235 = vld [vmem:[%s1 + $0x6c0] sm:$0xff]
    %v236 = vld [vmem:[%s1 + $0x6c8] sm:$0xff]
    %v237 = vld [vmem:[%s1 + $0x6d0] sm:$0xff]
    %v238 = vld [vmem:[%s1 + $0x6d8] sm:$0xff]
    %v239 = vld [vmem:[%s1 + $0x6e0] sm:$0xff]
    %v240 = vld [vmem:[%s1 + $0x6e8] sm:$0xff]
    %v241 = vld [vmem:[%s1 + $0x6f0] sm:$0xff]
    %v242 = vld [vmem:[%s1 + $0x6f8] sm:$0xff]
    %v243 = vld [vmem:[%s1 + $0x700] sm:$0xff]
    %v244 = vld [vmem:[%s1 + $0x708] sm:$0xff]
    %v245 = vld [vmem:[%s1 + $0x710] sm:$0xff]
    %v246 = vld [vmem:[%s1 + $0x718] sm:$0xff]
    %v247 = vld [vmem:[%s1 + $0x720] sm:$0xff]
    %v248 = vld [vmem:[%s1 + $0x728] sm:$0xff]
    %v249 = vld [vmem:[%s1 + $0x730] sm:$0xff]
    %v250 = vld [vmem:[%s1 + $0x738] sm:$0xff]
    %v251 = vld [vmem:[%s1 + $0x740] sm:$0xff]
    %v252 = vld [vmem:[%s1 + $0x748] sm:$0xff]
    %v253 = vld [vmem:[%s1 + $0x750] sm:$0xff]
    %v254 = vld [vmem:[%s1 + $0x758] sm:$0xff]
    %v255 = vld [vmem:[%s1 + $0x760] sm:$0xff]
    %v256 = vld [vmem:[%s1 + $0x768] sm:$0xff]
    %v257 = vld [vmem:[%s1 + $0x770] sm:$0xff]
    %v258 = vld [vmem:[%s1 + $0x778] sm:$0xff]
    %v259 = vld [vmem:[%s1 + $0x780] sm:$0xff]
    %v260 = vld [vmem:[%s1 + $0x788] sm:$0xff]
    %v261 = vld [vmem:[%s1 + $0x790] sm:$0xff]
    %v262 = vld [vmem:[%s1 + $0x798] sm:$0xff]
    %v263 = vld [vmem:[%s1 + $0x7a0] sm:$0xff]
    %v264 = vld [vmem:[%s1 + $0x7a8] sm:$0xff]
    %v265 = vld [vmem:[%s1 + $0x7b0] sm:$0xff]
    %v266 = vld [vmem:[%s1 + $0x7b8] sm:$0xff]
    %v267 = vld [vmem:[%s1 + $0x7c0] sm:$0xff]
    %v268 = vld [vmem:[%s1 + $0x7c8] sm:$0xff]
    %v269 = vld [vmem:[%s1 + $0x7d0] sm:$0xff]
    %v270 = vld [vmem:[%s1 + $0x7d8] sm:$0xff]
    %v271 = vld [vmem:[%s1 + $0x7e0] sm:$0xff]
    %v272 = vld [vmem:[%s1 + $0x7e8] sm:$0xff]
    %v273 = vld [vmem:[%s1 + $0x7f0] sm:$0xff]
    %v274 = vld [vmem:[%s1 + $0x7f8] sm:$0xff]
    %v275 = vld [vmem:[%s2] sm:$0x1]
    %v277 = vlaneseq
    %v278 = vshrl.u32 %v277, 7
    %v279 = vsub.s32 0, %v278
    %v280 = vrot.slane %v275, %v279
    %v286 = vcombine.high %v15, %v15
    %v288 = vunpack.c.l.s4 1983009808
    %v289 = vunpack.c.0.s8 %v288
    %v290 = vlaneseq
    %v291 = vshrl.u32 %v290, 7
    %v292 = vsub.s32 %v289, %v291
    %v293 = vrot.slane %v15, %v292
    %v295 = vunpack.c.l.s4 1983009808
    %v296 = vunpack.c.0.s8 %v295
    %v297 = vlaneseq
    %v298 = vshrl.u32 %v297, 7
    %v299 = vsub.s32 %v296, %v298
    %v300 = vrot.slane %v286, %v299
    %v301 = vcombine.high %v293, %v293
    %v302 = vcombine.high %v300, %v300
    %v303 = vcombine.high %v16, %v16
    %v305 = vunpack.c.l.s4 1983009808
    %v306 = vunpack.c.0.s8 %v305
    %v307 = vlaneseq
    %v308 = vshrl.u32 %v307, 7
    %v309 = vsub.s32 %v306, %v308
    %v310 = vrot.slane %v16, %v309
    %v312 = vunpack.c.l.s4 1983009808
    %v313 = vunpack.c.0.s8 %v312
    %v314 = vlaneseq
    %v315 = vshrl.u32 %v314, 7
    %v316 = vsub.s32 %v313, %v315
    %v317 = vrot.slane %v303, %v316
    %v318 = vcombine.high %v310, %v310
    %v319 = vcombine.high %v317, %v317
    %v320 = vcombine.high %v17, %v17
    %v322 = vunpack.c.l.s4 1983009808
    %v323 = vunpack.c.0.s8 %v322
    %v324 = vlaneseq
    %v325 = vshrl.u32 %v324, 7
    %v326 = vsub.s32 %v323, %v325
    %v327 = vrot.slane %v17, %v326
    %v329 = vunpack.c.l.s4 1983009808
    %v330 = vunpack.c.0.s8 %v329
    %v331 = vlaneseq
    %v332 = vshrl.u32 %v331, 7
    %v333 = vsub.s32 %v330, %v332
    %v334 = vrot.slane %v320, %v333
    %v335 = vcombine.high %v327, %v327
    %v336 = vcombine.high %v334, %v334
    %v337 = vcombine.high %v18, %v18
    %v339 = vunpack.c.l.s4 1983009808
    %v340 = vunpack.c.0.s8 %v339
    %v341 = vlaneseq
    %v342 = vshrl.u32 %v341, 7
    %v343 = vsub.s32 %v340, %v342
    %v344 = vrot.slane %v18, %v343
    %v346 = vunpack.c.l.s4 1983009808
    %v347 = vunpack.c.0.s8 %v346
    %v348 = vlaneseq
    %v349 = vshrl.u32 %v348, 7
    %v350 = vsub.s32 %v347, %v349
    %v351 = vrot.slane %v337, %v350
    %v352 = vcombine.high %v344, %v344
    %v353 = vcombine.high %v351, %v351
    %370 = vmatprep.subr.mxu0 0.0
    %371 = vmatpush1.msra.mxu0 %v34
    %372 = vmatprep.subr.mxu0 0.0
    %373 = vmatpush1.msra.mxu0 %v33
    %374 = vmatprep.subr.mxu0 0.0
    %375 = vmatpush1.msra.mxu0 %v32
    %376 = vmatprep.subr.mxu0 0.0
    %377 = vmatpush1.msra.mxu0 %v31
    %378 = vmatprep.subr.mxu0 0.0
    %379 = vmatpush1.msra.mxu0 %v30
    %380 = vmatprep.subr.mxu0 0.0
    %381 = vmatpush1.msra.mxu0 %v29
    %382 = vmatprep.subr.mxu0 0.0
    %383 = vmatpush1.msra.mxu0 %v28
    %384 = vmatprep.subr.mxu0 0.0
    %385 = vmatpush1.msra.mxu0 %v27
    %386 = vmatprep.subr.mxu0 0.0
    %387 = vmatpush1.msra.mxu0 %v26
    %388 = vmatprep.subr.mxu0 0.0
    %389 = vmatpush1.msra.mxu0 %v25
    %390 = vmatprep.subr.mxu0 0.0
    %391 = vmatpush1.msra.mxu0 %v24
    %392 = vmatprep.subr.mxu0 0.0
    %393 = vmatpush1.msra.mxu0 %v23
    %394 = vmatprep.subr.mxu0 0.0
    %395 = vmatpush1.msra.mxu0 %v22
    %396 = vmatprep.subr.mxu0 0.0
    %397 = vmatpush1.msra.mxu0 %v21
    %398 = vmatprep.subr.mxu0 0.0
    %399 = vmatpush1.msra.mxu0 %v20
    %400 = vmatprep.subr.mxu0 0.0
    %401 = vmatpush1.msra.mxu0 %v19
    %402 = vmatprep.subr.mxu0 0.0
    %403 = vmatpush2.msra.mxu0 %v50
    %404 = vmatprep.subr.mxu0 0.0
    %405 = vmatpush2.msra.mxu0 %v49
    %406 = vmatprep.subr.mxu0 0.0
    %407 = vmatpush2.msra.mxu0 %v48
    %408 = vmatprep.subr.mxu0 0.0
    %409 = vmatpush2.msra.mxu0 %v47
    %410 = vmatprep.subr.mxu0 0.0
    %411 = vmatpush2.msra.mxu0 %v46
    %412 = vmatprep.subr.mxu0 0.0
    %413 = vmatpush2.msra.mxu0 %v45
    %414 = vmatprep.subr.mxu0 0.0
    %415 = vmatpush2.msra.mxu0 %v44
    %416 = vmatprep.subr.mxu0 0.0
    %417 = vmatpush2.msra.mxu0 %v43
    %418 = vmatprep.subr.mxu0 0.0
    %419 = vmatpush2.msra.mxu0 %v42
    %420 = vmatprep.subr.mxu0 0.0
    %421 = vmatpush2.msra.mxu0 %v41
    %422 = vmatprep.subr.mxu0 0.0
    %423 = vmatpush2.msra.mxu0 %v40
    %424 = vmatprep.subr.mxu0 0.0
    %425 = vmatpush2.msra.mxu0 %v39
    %426 = vmatprep.subr.mxu0 0.0
    %427 = vmatpush2.msra.mxu0 %v38
    %428 = vmatprep.subr.mxu0 0.0
    %429 = vmatpush2.msra.mxu0 %v37
    %430 = vmatprep.subr.mxu0 0.0
    %431 = vmatpush2.msra.mxu0 %v36
    %432 = vmatprep.subr.mxu0 0.0
    %433 = vmatpush2.msra.mxu0 %v35
    %434 = vmatprep.mubr.f32.mxu0 %v301
    %435 = vmatmul.mubr.f32.gmra.mxu0 %v293
    %v436 = vpop.f32.mrf.mxu0
    %v437 = vadd.f32 %v280, %v436
    %v438 = vpop.f32.mrf.mxu0
    %439 = vdwg.mxu0
    %440 = vmatprep.subr.mxu0 0.0
    %441 = vmatpush1.msra.mxu0 %v66
    %442 = vmatprep.subr.mxu0 0.0
    %443 = vmatpush1.msra.mxu0 %v65
    %444 = vmatprep.subr.mxu0 0.0
    %445 = vmatpush1.msra.mxu0 %v64
    %446 = vmatprep.subr.mxu0 0.0
    %447 = vmatpush1.msra.mxu0 %v63
    %448 = vmatprep.subr.mxu0 0.0
    %449 = vmatpush1.msra.mxu0 %v62
    %450 = vmatprep.subr.mxu0 0.0
    %451 = vmatpush1.msra.mxu0 %v61
    %452 = vmatprep.subr.mxu0 0.0
    %453 = vmatpush1.msra.mxu0 %v60
    %454 = vmatprep.subr.mxu0 0.0
    %455 = vmatpush1.msra.mxu0 %v59
    %456 = vmatprep.subr.mxu0 0.0
    %457 = vmatpush1.msra.mxu0 %v58
    %458 = vmatprep.subr.mxu0 0.0
    %459 = vmatpush1.msra.mxu0 %v57
    %460 = vmatprep.subr.mxu0 0.0
    %461 = vmatpush1.msra.mxu0 %v56
    %462 = vmatprep.subr.mxu0 0.0
    %463 = vmatpush1.msra.mxu0 %v55
    %464 = vmatprep.subr.mxu0 0.0
    %465 = vmatpush1.msra.mxu0 %v54
    %466 = vmatprep.subr.mxu0 0.0
    %467 = vmatpush1.msra.mxu0 %v53
    %468 = vmatprep.subr.mxu0 0.0
    %469 = vmatpush1.msra.mxu0 %v52
    %470 = vmatprep.subr.mxu0 0.0
    %471 = vmatpush1.msra.mxu0 %v51
    %472 = vmatprep.subr.mxu0 0.0
    %473 = vmatpush2.msra.mxu0 %v82
    %474 = vmatprep.subr.mxu0 0.0
    %475 = vmatpush2.msra.mxu0 %v81
    %476 = vmatprep.subr.mxu0 0.0
    %477 = vmatpush2.msra.mxu0 %v80
    %478 = vmatprep.subr.mxu0 0.0
    %479 = vmatpush2.msra.mxu0 %v79
    %480 = vmatprep.subr.mxu0 0.0
    %481 = vmatpush2.msra.mxu0 %v78
    %482 = vmatprep.subr.mxu0 0.0
    %483 = vmatpush2.msra.mxu0 %v77
    %484 = vmatprep.subr.mxu0 0.0
    %485 = vmatpush2.msra.mxu0 %v76
    %486 = vmatprep.subr.mxu0 0.0
    %487 = vmatpush2.msra.mxu0 %v75
    %488 = vmatprep.subr.mxu0 0.0
    %489 = vmatpush2.msra.mxu0 %v74
    %490 = vmatprep.subr.mxu0 0.0
    %491 = vmatpush2.msra.mxu0 %v73
    %492 = vmatprep.subr.mxu0 0.0
    %493 = vmatpush2.msra.mxu0 %v72
    %494 = vmatprep.subr.mxu0 0.0
    %495 = vmatpush2.msra.mxu0 %v71
    %496 = vmatprep.subr.mxu0 0.0
    %497 = vmatpush2.msra.mxu0 %v70
    %498 = vmatprep.subr.mxu0 0.0
    %499 = vmatpush2.msra.mxu0 %v69
    %500 = vmatprep.subr.mxu0 0.0
    %501 = vmatpush2.msra.mxu0 %v68
    %502 = vmatprep.subr.mxu0 0.0
    %503 = vmatpush2.msra.mxu0 %v67
    %504 = vmatprep.mubr.f32.mxu0 %v302
    %505 = vmatmul.mubr.f32.gmra.mxu0 %v300
    %v506 = vpop.f32.mrf.mxu0
    %v507 = vadd.f32 %v437, %v506
    %v508 = vpop.f32.mrf.mxu0
    %509 = vdwg.mxu0
    %510 = vmatprep.subr.mxu0 0.0
    %511 = vmatpush1.msra.mxu0 %v98
    %512 = vmatprep.subr.mxu0 0.0
    %513 = vmatpush1.msra.mxu0 %v97
    %514 = vmatprep.subr.mxu0 0.0
    %515 = vmatpush1.msra.mxu0 %v96
    %516 = vmatprep.subr.mxu0 0.0
    %517 = vmatpush1.msra.mxu0 %v95
    %518 = vmatprep.subr.mxu0 0.0
    %519 = vmatpush1.msra.mxu0 %v94
    %520 = vmatprep.subr.mxu0 0.0
    %521 = vmatpush1.msra.mxu0 %v93
    %522 = vmatprep.subr.mxu0 0.0
    %523 = vmatpush1.msra.mxu0 %v92
    %524 = vmatprep.subr.mxu0 0.0
    %525 = vmatpush1.msra.mxu0 %v91
    %526 = vmatprep.subr.mxu0 0.0
    %527 = vmatpush1.msra.mxu0 %v90
    %528 = vmatprep.subr.mxu0 0.0
    %529 = vmatpush1.msra.mxu0 %v89
    %530 = vmatprep.subr.mxu0 0.0
    %531 = vmatpush1.msra.mxu0 %v88
    %532 = vmatprep.subr.mxu0 0.0
    %533 = vmatpush1.msra.mxu0 %v87
    %534 = vmatprep.subr.mxu0 0.0
    %535 = vmatpush1.msra.mxu0 %v86
    %536 = vmatprep.subr.mxu0 0.0
    %537 = vmatpush1.msra.mxu0 %v85
    %538 = vmatprep.subr.mxu0 0.0
    %539 = vmatpush1.msra.mxu0 %v84
    %540 = vmatprep.subr.mxu0 0.0
    %541 = vmatpush1.msra.mxu0 %v83
    %542 = vmatprep.subr.mxu0 0.0
    %543 = vmatpush2.msra.mxu0 %v114
    %544 = vmatprep.subr.mxu0 0.0
    %545 = vmatpush2.msra.mxu0 %v113
    %546 = vmatprep.subr.mxu0 0.0
    %547 = vmatpush2.msra.mxu0 %v112
    %548 = vmatprep.subr.mxu0 0.0
    %549 = vmatpush2.msra.mxu0 %v111
    %550 = vmatprep.subr.mxu0 0.0
    %551 = vmatpush2.msra.mxu0 %v110
    %552 = vmatprep.subr.mxu0 0.0
    %553 = vmatpush2.msra.mxu0 %v109
    %554 = vmatprep.subr.mxu0 0.0
    %555 = vmatpush2.msra.mxu0 %v108
    %556 = vmatprep.subr.mxu0 0.0
    %557 = vmatpush2.msra.mxu0 %v107
    %558 = vmatprep.subr.mxu0 0.0
    %559 = vmatpush2.msra.mxu0 %v106
    %560 = vmatprep.subr.mxu0 0.0
    %561 = vmatpush2.msra.mxu0 %v105
    %562 = vmatprep.subr.mxu0 0.0
    %563 = vmatpush2.msra.mxu0 %v104
    %564 = vmatprep.subr.mxu0 0.0
    %565 = vmatpush2.msra.mxu0 %v103
    %566 = vmatprep.subr.mxu0 0.0
    %567 = vmatpush2.msra.mxu0 %v102
    %568 = vmatprep.subr.mxu0 0.0
    %569 = vmatpush2.msra.mxu0 %v101
    %570 = vmatprep.subr.mxu0 0.0
    %571 = vmatpush2.msra.mxu0 %v100
    %572 = vmatprep.subr.mxu0 0.0
    %573 = vmatpush2.msra.mxu0 %v99
    %574 = vmatprep.mubr.f32.mxu0 %v318
    %575 = vmatmul.mubr.f32.gmra.mxu0 %v310
    %v576 = vpop.f32.mrf.mxu0
    %v577 = vadd.f32 %v507, %v576
    %v578 = vpop.f32.mrf.mxu0
    %579 = vdwg.mxu0
    %580 = vmatprep.subr.mxu0 0.0
    %581 = vmatpush1.msra.mxu0 %v130
    %582 = vmatprep.subr.mxu0 0.0
    %583 = vmatpush1.msra.mxu0 %v129
    %584 = vmatprep.subr.mxu0 0.0
    %585 = vmatpush1.msra.mxu0 %v128
    %586 = vmatprep.subr.mxu0 0.0
    %587 = vmatpush1.msra.mxu0 %v127
    %588 = vmatprep.subr.mxu0 0.0
    %589 = vmatpush1.msra.mxu0 %v126
    %590 = vmatprep.subr.mxu0 0.0
    %591 = vmatpush1.msra.mxu0 %v125
    %592 = vmatprep.subr.mxu0 0.0
    %593 = vmatpush1.msra.mxu0 %v124
    %594 = vmatprep.subr.mxu0 0.0
    %595 = vmatpush1.msra.mxu0 %v123
    %596 = vmatprep.subr.mxu0 0.0
    %597 = vmatpush1.msra.mxu0 %v122
    %598 = vmatprep.subr.mxu0 0.0
    %599 = vmatpush1.msra.mxu0 %v121
    %600 = vmatprep.subr.mxu0 0.0
    %601 = vmatpush1.msra.mxu0 %v120
    %602 = vmatprep.subr.mxu0 0.0
    %603 = vmatpush1.msra.mxu0 %v119
    %604 = vmatprep.subr.mxu0 0.0
    %605 = vmatpush1.msra.mxu0 %v118
    %606 = vmatprep.subr.mxu0 0.0
    %607 = vmatpush1.msra.mxu0 %v117
    %608 = vmatprep.subr.mxu0 0.0
    %609 = vmatpush1.msra.mxu0 %v116
    %610 = vmatprep.subr.mxu0 0.0
    %611 = vmatpush1.msra.mxu0 %v115
    %612 = vmatprep.subr.mxu0 0.0
    %613 = vmatpush2.msra.mxu0 %v146
    %614 = vmatprep.subr.mxu0 0.0
    %615 = vmatpush2.msra.mxu0 %v145
    %616 = vmatprep.subr.mxu0 0.0
    %617 = vmatpush2.msra.mxu0 %v144
    %618 = vmatprep.subr.mxu0 0.0
    %619 = vmatpush2.msra.mxu0 %v143
    %620 = vmatprep.subr.mxu0 0.0
    %621 = vmatpush2.msra.mxu0 %v142
    %622 = vmatprep.subr.mxu0 0.0
    %623 = vmatpush2.msra.mxu0 %v141
    %624 = vmatprep.subr.mxu0 0.0
    %625 = vmatpush2.msra.mxu0 %v140
    %626 = vmatprep.subr.mxu0 0.0
    %627 = vmatpush2.msra.mxu0 %v139
    %628 = vmatprep.subr.mxu0 0.0
    %629 = vmatpush2.msra.mxu0 %v138
    %630 = vmatprep.subr.mxu0 0.0
    %631 = vmatpush2.msra.mxu0 %v137
    %632 = vmatprep.subr.mxu0 0.0
    %633 = vmatpush2.msra.mxu0 %v136
    %634 = vmatprep.subr.mxu0 0.0
    %635 = vmatpush2.msra.mxu0 %v135
    %636 = vmatprep.subr.mxu0 0.0
    %637 = vmatpush2.msra.mxu0 %v134
    %638 = vmatprep.subr.mxu0 0.0
    %639 = vmatpush2.msra.mxu0 %v133
    %640 = vmatprep.subr.mxu0 0.0
    %641 = vmatpush2.msra.mxu0 %v132
    %642 = vmatprep.subr.mxu0 0.0
    %643 = vmatpush2.msra.mxu0 %v131
    %644 = vmatprep.mubr.f32.mxu0 %v319
    %645 = vmatmul.mubr.f32.gmra.mxu0 %v317
    %v646 = vpop.f32.mrf.mxu0
    %v647 = vadd.f32 %v577, %v646
    %v648 = vpop.f32.mrf.mxu0
    %649 = vdwg.mxu0
    %650 = vmatprep.subr.mxu0 0.0
    %651 = vmatpush1.msra.mxu0 %v162
    %652 = vmatprep.subr.mxu0 0.0
    %653 = vmatpush1.msra.mxu0 %v161
    %654 = vmatprep.subr.mxu0 0.0
    %655 = vmatpush1.msra.mxu0 %v160
    %656 = vmatprep.subr.mxu0 0.0
    %657 = vmatpush1.msra.mxu0 %v159
    %658 = vmatprep.subr.mxu0 0.0
    %659 = vmatpush1.msra.mxu0 %v158
    %660 = vmatprep.subr.mxu0 0.0
    %661 = vmatpush1.msra.mxu0 %v157
    %662 = vmatprep.subr.mxu0 0.0
    %663 = vmatpush1.msra.mxu0 %v156
    %664 = vmatprep.subr.mxu0 0.0
    %665 = vmatpush1.msra.mxu0 %v155
    %666 = vmatprep.subr.mxu0 0.0
    %667 = vmatpush1.msra.mxu0 %v154
    %668 = vmatprep.subr.mxu0 0.0
    %669 = vmatpush1.msra.mxu0 %v153
    %670 = vmatprep.subr.mxu0 0.0
    %671 = vmatpush1.msra.mxu0 %v152
    %672 = vmatprep.subr.mxu0 0.0
    %673 = vmatpush1.msra.mxu0 %v151
    %674 = vmatprep.subr.mxu0 0.0
    %675 = vmatpush1.msra.mxu0 %v150
    %676 = vmatprep.subr.mxu0 0.0
    %677 = vmatpush1.msra.mxu0 %v149
    %678 = vmatprep.subr.mxu0 0.0
    %679 = vmatpush1.msra.mxu0 %v148
    %680 = vmatprep.subr.mxu0 0.0
    %681 = vmatpush1.msra.mxu0 %v147
    %682 = vmatprep.subr.mxu0 0.0
    %683 = vmatpush2.msra.mxu0 %v178
    %684 = vmatprep.subr.mxu0 0.0
    %685 = vmatpush2.msra.mxu0 %v177
    %686 = vmatprep.subr.mxu0 0.0
    %687 = vmatpush2.msra.mxu0 %v176
    %688 = vmatprep.subr.mxu0 0.0
    %689 = vmatpush2.msra.mxu0 %v175
    %690 = vmatprep.subr.mxu0 0.0
    %691 = vmatpush2.msra.mxu0 %v174
    %692 = vmatprep.subr.mxu0 0.0
    %693 = vmatpush2.msra.mxu0 %v173
    %694 = vmatprep.subr.mxu0 0.0
    %695 = vmatpush2.msra.mxu0 %v172
    %696 = vmatprep.subr.mxu0 0.0
    %697 = vmatpush2.msra.mxu0 %v171
    %698 = vmatprep.subr.mxu0 0.0
    %699 = vmatpush2.msra.mxu0 %v170
    %700 = vmatprep.subr.mxu0 0.0
    %701 = vmatpush2.msra.mxu0 %v169
    %702 = vmatprep.subr.mxu0 0.0
    %703 = vmatpush2.msra.mxu0 %v168
    %704 = vmatprep.subr.mxu0 0.0
    %705 = vmatpush2.msra.mxu0 %v167
    %706 = vmatprep.subr.mxu0 0.0
    %707 = vmatpush2.msra.mxu0 %v166
    %708 = vmatprep.subr.mxu0 0.0
    %709 = vmatpush2.msra.mxu0 %v165
    %710 = vmatprep.subr.mxu0 0.0
    %711 = vmatpush2.msra.mxu0 %v164
    %712 = vmatprep.subr.mxu0 0.0
    %713 = vmatpush2.msra.mxu0 %v163
    %714 = vmatprep.mubr.f32.mxu0 %v335
    %715 = vmatmul.mubr.f32.gmra.mxu0 %v327
    %v716 = vpop.f32.mrf.mxu0
    %v717 = vadd.f32 %v647, %v716
    %v718 = vpop.f32.mrf.mxu0
    %719 = vdwg.mxu0
    %720 = vmatprep.subr.mxu0 0.0
    %721 = vmatpush1.msra.mxu0 %v194
    %722 = vmatprep.subr.mxu0 0.0
    %723 = vmatpush1.msra.mxu0 %v193
    %724 = vmatprep.subr.mxu0 0.0
    %725 = vmatpush1.msra.mxu0 %v192
    %726 = vmatprep.subr.mxu0 0.0
    %727 = vmatpush1.msra.mxu0 %v191
    %728 = vmatprep.subr.mxu0 0.0
    %729 = vmatpush1.msra.mxu0 %v190
    %730 = vmatprep.subr.mxu0 0.0
    %731 = vmatpush1.msra.mxu0 %v189
    %732 = vmatprep.subr.mxu0 0.0
    %733 = vmatpush1.msra.mxu0 %v188
    %734 = vmatprep.subr.mxu0 0.0
    %735 = vmatpush1.msra.mxu0 %v187
    %736 = vmatprep.subr.mxu0 0.0
    %737 = vmatpush1.msra.mxu0 %v186
    %738 = vmatprep.subr.mxu0 0.0
    %739 = vmatpush1.msra.mxu0 %v185
    %740 = vmatprep.subr.mxu0 0.0
    %741 = vmatpush1.msra.mxu0 %v184
    %742 = vmatprep.subr.mxu0 0.0
    %743 = vmatpush1.msra.mxu0 %v183
    %744 = vmatprep.subr.mxu0 0.0
    %745 = vmatpush1.msra.mxu0 %v182
    %746 = vmatprep.subr.mxu0 0.0
    %747 = vmatpush1.msra.mxu0 %v181
    %748 = vmatprep.subr.mxu0 0.0
    %749 = vmatpush1.msra.mxu0 %v180
    %750 = vmatprep.subr.mxu0 0.0
    %751 = vmatpush1.msra.mxu0 %v179
    %752 = vmatprep.subr.mxu0 0.0
    %753 = vmatpush2.msra.mxu0 %v210
    %754 = vmatprep.subr.mxu0 0.0
    %755 = vmatpush2.msra.mxu0 %v209
    %756 = vmatprep.subr.mxu0 0.0
    %757 = vmatpush2.msra.mxu0 %v208
    %758 = vmatprep.subr.mxu0 0.0
    %759 = vmatpush2.msra.mxu0 %v207
    %760 = vmatprep.subr.mxu0 0.0
    %761 = vmatpush2.msra.mxu0 %v206
    %762 = vmatprep.subr.mxu0 0.0
    %763 = vmatpush2.msra.mxu0 %v205
    %764 = vmatprep.subr.mxu0 0.0
    %765 = vmatpush2.msra.mxu0 %v204
    %766 = vmatprep.subr.mxu0 0.0
    %767 = vmatpush2.msra.mxu0 %v203
    %768 = vmatprep.subr.mxu0 0.0
    %769 = vmatpush2.msra.mxu0 %v202
    %770 = vmatprep.subr.mxu0 0.0
    %771 = vmatpush2.msra.mxu0 %v201
    %772 = vmatprep.subr.mxu0 0.0
    %773 = vmatpush2.msra.mxu0 %v200
    %774 = vmatprep.subr.mxu0 0.0
    %775 = vmatpush2.msra.mxu0 %v199
    %776 = vmatprep.subr.mxu0 0.0
    %777 = vmatpush2.msra.mxu0 %v198
    %778 = vmatprep.subr.mxu0 0.0
    %779 = vmatpush2.msra.mxu0 %v197
    %780 = vmatprep.subr.mxu0 0.0
    %781 = vmatpush2.msra.mxu0 %v196
    %782 = vmatprep.subr.mxu0 0.0
    %783 = vmatpush2.msra.mxu0 %v195
    %784 = vmatprep.mubr.f32.mxu0 %v336
    %785 = vmatmul.mubr.f32.gmra.mxu0 %v334
    %v786 = vpop.f32.mrf.mxu0
    %v787 = vadd.f32 %v717, %v786
    %v788 = vpop.f32.mrf.mxu0
    %789 = vdwg.mxu0
    %790 = vmatprep.subr.mxu0 0.0
    %791 = vmatpush1.msra.mxu0 %v226
    %792 = vmatprep.subr.mxu0 0.0
    %793 = vmatpush1.msra.mxu0 %v225
    %794 = vmatprep.subr.mxu0 0.0
    %795 = vmatpush1.msra.mxu0 %v224
    %796 = vmatprep.subr.mxu0 0.0
    %797 = vmatpush1.msra.mxu0 %v223
    %798 = vmatprep.subr.mxu0 0.0
    %799 = vmatpush1.msra.mxu0 %v222
    %800 = vmatprep.subr.mxu0 0.0
    %801 = vmatpush1.msra.mxu0 %v221
    %802 = vmatprep.subr.mxu0 0.0
    %803 = vmatpush1.msra.mxu0 %v220
    %804 = vmatprep.subr.mxu0 0.0
    %805 = vmatpush1.msra.mxu0 %v219
    %806 = vmatprep.subr.mxu0 0.0
    %807 = vmatpush1.msra.mxu0 %v218
    %808 = vmatprep.subr.mxu0 0.0
    %809 = vmatpush1.msra.mxu0 %v217
    %810 = vmatprep.subr.mxu0 0.0
    %811 = vmatpush1.msra.mxu0 %v216
    %812 = vmatprep.subr.mxu0 0.0
    %813 = vmatpush1.msra.mxu0 %v215
    %814 = vmatprep.subr.mxu0 0.0
    %815 = vmatpush1.msra.mxu0 %v214
    %816 = vmatprep.subr.mxu0 0.0
    %817 = vmatpush1.msra.mxu0 %v213
    %818 = vmatprep.subr.mxu0 0.0
    %819 = vmatpush1.msra.mxu0 %v212
    %820 = vmatprep.subr.mxu0 0.0
    %821 = vmatpush1.msra.mxu0 %v211
    %822 = vmatprep.subr.mxu0 0.0
    %823 = vmatpush2.msra.mxu0 %v242
    %824 = vmatprep.subr.mxu0 0.0
    %825 = vmatpush2.msra.mxu0 %v241
    %826 = vmatprep.subr.mxu0 0.0
    %827 = vmatpush2.msra.mxu0 %v240
    %828 = vmatprep.subr.mxu0 0.0
    %829 = vmatpush2.msra.mxu0 %v239
    %830 = vmatprep.subr.mxu0 0.0
    %831 = vmatpush2.msra.mxu0 %v238
    %832 = vmatprep.subr.mxu0 0.0
    %833 = vmatpush2.msra.mxu0 %v237
    %834 = vmatprep.subr.mxu0 0.0
    %835 = vmatpush2.msra.mxu0 %v236
    %836 = vmatprep.subr.mxu0 0.0
    %837 = vmatpush2.msra.mxu0 %v235
    %838 = vmatprep.subr.mxu0 0.0
    %839 = vmatpush2.msra.mxu0 %v234
    %840 = vmatprep.subr.mxu0 0.0
    %841 = vmatpush2.msra.mxu0 %v233
    %842 = vmatprep.subr.mxu0 0.0
    %843 = vmatpush2.msra.mxu0 %v232
    %844 = vmatprep.subr.mxu0 0.0
    %845 = vmatpush2.msra.mxu0 %v231
    %846 = vmatprep.subr.mxu0 0.0
    %847 = vmatpush2.msra.mxu0 %v230
    %848 = vmatprep.subr.mxu0 0.0
    %849 = vmatpush2.msra.mxu0 %v229
    %850 = vmatprep.subr.mxu0 0.0
    %851 = vmatpush2.msra.mxu0 %v228
    %852 = vmatprep.subr.mxu0 0.0
    %853 = vmatpush2.msra.mxu0 %v227
    %854 = vmatprep.mubr.f32.mxu0 %v352
    %855 = vmatmul.mubr.f32.gmra.mxu0 %v344
    %v856 = vpop.f32.mrf.mxu0
    %v857 = vadd.f32 %v787, %v856
    %v858 = vpop.f32.mrf.mxu0
    %859 = vdwg.mxu0
    %860 = vmatprep.subr.mxu0 0.0
    %861 = vmatpush1.msra.mxu0 %v258
    %862 = vmatprep.subr.mxu0 0.0
    %863 = vmatpush1.msra.mxu0 %v257
    %864 = vmatprep.subr.mxu0 0.0
    %865 = vmatpush1.msra.mxu0 %v256
    %866 = vmatprep.subr.mxu0 0.0
    %867 = vmatpush1.msra.mxu0 %v255
    %868 = vmatprep.subr.mxu0 0.0
    %869 = vmatpush1.msra.mxu0 %v254
    %870 = vmatprep.subr.mxu0 0.0
    %871 = vmatpush1.msra.mxu0 %v253
    %872 = vmatprep.subr.mxu0 0.0
    %873 = vmatpush1.msra.mxu0 %v252
    %874 = vmatprep.subr.mxu0 0.0
    %875 = vmatpush1.msra.mxu0 %v251
    %876 = vmatprep.subr.mxu0 0.0
    %877 = vmatpush1.msra.mxu0 %v250
    %878 = vmatprep.subr.mxu0 0.0
    %879 = vmatpush1.msra.mxu0 %v249
    %880 = vmatprep.subr.mxu0 0.0
    %881 = vmatpush1.msra.mxu0 %v248
    %882 = vmatprep.subr.mxu0 0.0
    %883 = vmatpush1.msra.mxu0 %v247
    %884 = vmatprep.subr.mxu0 0.0
    %885 = vmatpush1.msra.mxu0 %v246
    %886 = vmatprep.subr.mxu0 0.0
    %887 = vmatpush1.msra.mxu0 %v245
    %888 = vmatprep.subr.mxu0 0.0
    %889 = vmatpush1.msra.mxu0 %v244
    %890 = vmatprep.subr.mxu0 0.0
    %891 = vmatpush1.msra.mxu0 %v243
    %892 = vmatprep.subr.mxu0 0.0
    %893 = vmatpush2.msra.mxu0 %v274
    %894 = vmatprep.subr.mxu0 0.0
    %895 = vmatpush2.msra.mxu0 %v273
    %896 = vmatprep.subr.mxu0 0.0
    %897 = vmatpush2.msra.mxu0 %v272
    %898 = vmatprep.subr.mxu0 0.0
    %899 = vmatpush2.msra.mxu0 %v271
    %900 = vmatprep.subr.mxu0 0.0
    %901 = vmatpush2.msra.mxu0 %v270
    %902 = vmatprep.subr.mxu0 0.0
    %903 = vmatpush2.msra.mxu0 %v269
    %904 = vmatprep.subr.mxu0 0.0
    %905 = vmatpush2.msra.mxu0 %v268
    %906 = vmatprep.subr.mxu0 0.0
    %907 = vmatpush2.msra.mxu0 %v267
    %908 = vmatprep.subr.mxu0 0.0
    %909 = vmatpush2.msra.mxu0 %v266
    %910 = vmatprep.subr.mxu0 0.0
    %911 = vmatpush2.msra.mxu0 %v265
    %912 = vmatprep.subr.mxu0 0.0
    %913 = vmatpush2.msra.mxu0 %v264
    %914 = vmatprep.subr.mxu0 0.0
    %915 = vmatpush2.msra.mxu0 %v263
    %916 = vmatprep.subr.mxu0 0.0
    %917 = vmatpush2.msra.mxu0 %v262
    %918 = vmatprep.subr.mxu0 0.0
    %919 = vmatpush2.msra.mxu0 %v261
    %920 = vmatprep.subr.mxu0 0.0
    %921 = vmatpush2.msra.mxu0 %v260
    %922 = vmatprep.subr.mxu0 0.0
    %923 = vmatpush2.msra.mxu0 %v259
    %924 = vmatprep.mubr.f32.mxu0 %v353
    %925 = vmatmul.mubr.f32.gmra.mxu0 %v351
    %v926 = vpop.f32.mrf.mxu0
    %v927 = vadd.f32 %v857, %v926
    %v928 = vpop.f32.mrf.mxu0
    %929 = vdwg.mxu0
    %930 = vst [vmem:[#allocation2] sm:$0x3] %v927
    // Predicated region
    $region14: #{net_forward.13} parent=1 // pred_check
      _
    $region15: #{net_forward.13} parent=1 // pred_check_branch
      %932 = sbr.rel (0) target = $region17
    $region16: #{net_forward.13} parent=1 // pred_region
      %s934 = ssub.s32 32, 32
      %935 = vsyncadd [#allocation3], %s934
      %s937 = sshll.u32 [#allocation2], 4
      %s938 = int_to_ptr.vmem [resolvable:$true] %s937
      %940 = dma.vmem_to_hbm [thread:$0]  %s938, 32, %s3, [#allocation3]
    $region17: #{net_forward.13} parent=1 // pred_fallthru
      _
    // Predicated region
    $region18: #{net_forward.13} parent=1 // pred_check
      _
    $region19: #{net_forward.13} parent=1 // pred_check_branch
      %942 = sbr.rel (0) target = $region21
    $region20: #{net_forward.13} parent=1 // pred_region
      %943 = dma.done [#allocation3], 32
    $region21: #{net_forward.13} parent=1 // pred_fallthru
      _
    %944 = vsyncpa [#allocation3], 1

</llo_original>
